<compile_context>
chip_gen: v7x
topology: tpu7x:2x2x1
jax: 0.10.0
libtpu: 0.0.40
codegen_flags: <defaults>
</compile_context>

<pallas_src>
import functools

import numpy as np
import jax
import jax.numpy as jnp
from jax.experimental import pallas as pl
from jax.experimental.pallas import tpu as pltpu


def _round_up(n, m):
    return ((n + m - 1) // m) * m


# ---------------------------------------------------------------------------
# Init-time weight preparation (PyTorch layout -> matmul layout)
# ---------------------------------------------------------------------------
def _conv_g(w, w_in, stride, pad, n_out_pad=None):
    """Conv2d weight (O, I, kh, kw) -> per-y-tap folded column weights
    G (kh, W_in*C_in, W_out*C_out[padded]) for  out_rows = sum_ky slab_ky @ G_ky."""
    w = np.asarray(w, np.float32)
    c_out, c_in, kh, kw = w.shape
    w_out = (w_in + 2 * pad - kw) // stride + 1
    n_out = w_out * c_out
    n_pad = n_out if n_out_pad is None else n_out_pad
    G = np.zeros((kh, w_in * c_in, n_pad), np.float32)
    for ky in range(kh):
        for ox in range(w_out):
            for kx in range(kw):
                ix = stride * ox + kx - pad
                if 0 <= ix < w_in:
                    G[ky, ix * c_in:(ix + 1) * c_in,
                      ox * c_out:(ox + 1) * c_out] = w[:, :, ky, kx].T
    return G


def _deconv_g(w, w_in, stride, pad, n_out_pad=None):
    """ConvTranspose2d weight (I, O, kh, kw) -> G (kh, W_in*C_in, W_out*C_out[padded])
    for the direct (no zero-insertion) transposed-conv formulation."""
    w = np.asarray(w, np.float32)
    c_in, c_out, kh, kw = w.shape
    w_out = (w_in - 1) * stride - 2 * pad + kw
    n_out = w_out * c_out
    n_pad = n_out if n_out_pad is None else n_out_pad
    G = np.zeros((kh, w_in * c_in, n_pad), np.float32)
    for ky in range(kh):
        for ix in range(w_in):
            for kx in range(kw):
                ox = stride * ix + kx - pad
                if 0 <= ox < w_out:
                    G[ky, ix * c_in:(ix + 1) * c_in,
                      ox * c_out:(ox + 1) * c_out] = w[:, :, ky, kx]
    return G


def _row_plan(h_in, h_out, k, stride, pad, transposed):
    """Static per-y-tap input-row ids (or -1 for a zero/padding row) per output row."""
    plans = []
    for ky in range(k):
        rows = []
        for oy in range(h_out):
            if not transposed:
                iy = stride * oy + ky - pad
                rows.append(iy if 0 <= iy < h_in else -1)
            else:
                r = oy + pad - ky
                iy = r // stride
                rows.append(iy if (r % stride == 0 and 0 <= iy < h_in) else -1)
        plans.append(tuple(rows))
    return tuple(plans)


_WEIGHT_ORDER = ("g1", "b1", "g2", "b2", "wfc1", "bfc1", "wml", "bml",
                 "wdfc", "bdfc", "g3", "b3", "g4", "b4")


def prepare_params(params, *, q=3, latent_dim=2, img=28, compute_dtype=jnp.bfloat16):
    """One-time conversion of PyTorch-layout parameters into kernel layout."""
    f = lambda a: np.asarray(a, np.float32)
    h1, h2 = img // 2, img // 4            # 14, 7
    c2 = params["enc_conv2_w"].shape[0]    # 32
    nh = params["enc_fc1_w"].shape[0]      # 64

    g1 = _conv_g(f(params["enc_conv1_w"]), img, 2, 1)
    g2 = _conv_g(f(params["enc_conv2_w"]), h1, 2, 1)
    g3 = _deconv_g(f(params["dec_conv1_w"]), h2, 2, 1)

    # Lane-dense recon: pad last layer's columns (28*q = 84) up to a 128 multiple.
    n_out4 = img * q
    pad_to = _round_up(n_out4, 128)
    g4 = _deconv_g(f(params["dec_conv2_w"]), h1, 2, 1, n_out_pad=pad_to)

    b1 = np.tile(f(params["enc_conv1_b"]), h1).reshape(1, -1)   # (1, 14*16)
    b2 = np.tile(f(params["enc_conv2_b"]), h2).reshape(1, -1)   # (1, 7*32)
    b3 = np.tile(f(params["dec_conv1_b"]), h1).reshape(1, -1)   # (1, 14*16)
    b4 = np.zeros((1, pad_to), np.float32)
    b4[0, :n_out4] = np.tile(f(params["dec_conv2_b"]), img)     # (1, 128)

    # enc_fc1: PyTorch flattens NCHW (c, y, x); our a2 row-block y has lanes x*C2 + c.
    wfc1 = f(params["enc_fc1_w"]).reshape(nh, c2, h2, h2)       # (o, c, y, x)
    wfc1 = wfc1.transpose(2, 3, 1, 0).reshape(h2, h2 * c2, nh)  # (y, x*32+c, o)
    bfc1 = f(params["enc_fc1_b"]).reshape(1, -1)

    # fused fc_mu / fc_logvar
    wml = np.concatenate([f(params["fc_mu_w"]).T,
                          f(params["fc_logvar_w"]).T], axis=1)  # (64, 2*latent)
    bml = np.concatenate([f(params["fc_mu_b"]),
                          f(params["fc_logvar_b"])]).reshape(1, -1)

    # dec_fc1: output is viewed as NCHW (c, y, x); pre-permute to (y, latent, x*32+c).
    wdfc = f(params["dec_fc1_w"]).reshape(c2, h2, h2, latent_dim)   # (c, y, x, l)
    wdfc = wdfc.transpose(1, 3, 2, 0).reshape(h2, latent_dim, h2 * c2)
    bdfc = f(params["dec_fc1_b"]).reshape(c2, h2, h2)
    bdfc = bdfc.transpose(1, 2, 0).reshape(h2, 1, h2 * c2)          # (7, 1, 224)

    cd = lambda a: jnp.asarray(a, compute_dtype)
    f32 = lambda a: jnp.asarray(a, jnp.float32)
    return {
        "g1": cd(g1), "b1": f32(b1), "g2": cd(g2), "b2": f32(b2),
        "wfc1": cd(wfc1), "bfc1": f32(bfc1), "wml": cd(wml), "bml": f32(bml),
        "wdfc": f32(wdfc), "bdfc": f32(bdfc),        # used on the VPU -> keep f32
        "g3": cd(g3), "b3": f32(b3), "g4": cd(g4), "b4": f32(b4),
    }


# ---------------------------------------------------------------------------
# The fused, batch-tiled Pallas kernel (one grid step == TB samples)
# ---------------------------------------------------------------------------
def _convvae_kernel(x_ref, eps_ref,
                    g1_ref, b1_ref, g2_ref, b2_ref,
                    wfc1_ref, bfc1_ref, wml_ref, bml_ref,
                    wdfc_ref, bdfc_ref,
                    g3_ref, b3_ref, g4_ref, b4_ref,
                    recon_ref, ml_ref,
                    *, plans):
    plan1, plan2, plan3, plan4 = plans
    tb, latent = eps_ref.shape
    cdt = g1_ref.dtype                      # bf16 MXU operand dtype

    def spatial(a, g_ref, b_ref, plan, relu):
        # a: (H_in*tb, W_in*C_in) f32  ->  (H_out*tb, W_out*C_out) f32.
        # Per y-tap: gather input rows by STATIC sublane-block slices (zero blocks
        # for padding), then one big matmul with M = H_out*tb against folded G_ky.
        k_in = a.shape[1]
        zero_blk = jnp.zeros((tb, k_in), jnp.float32)
        acc = None
        for t, rows in enumerate(plan):
            parts = [a[iy * tb:(iy + 1) * tb, :] if iy >= 0 else zero_blk
                     for iy in rows]
            slab = jnp.concatenate(parts, axis=0).astype(cdt)
            contrib = jnp.dot(slab, g_ref[t], preferred_element_type=jnp.float32)
            acc = contrib if acc is None else acc + contrib
        acc = acc + b_ref[...]
        return jnp.maximum(acc, 0.0) if relu else acc

    # ---------------- encoder ----------------
    x = x_ref[...].astype(jnp.float32)                       # (28*tb, 28*q)
    a1 = spatial(x, g1_ref, b1_ref, plan1, relu=True)        # (14*tb, 14*16)
    a2 = spatial(a1, g2_ref, b2_ref, plan2, relu=True)       # (7*tb,  7*32)

    # enc_fc1 over the flattened conv activation (weights pre-permuted, so the
    # NCHW flatten is a per-row accumulation of M=tb matmuls -- no reshapes).
    h = jnp.zeros((tb, wfc1_ref.shape[2]), jnp.float32)
    for y in range(wfc1_ref.shape[0]):
        h = h + jnp.dot(a2[y * tb:(y + 1) * tb, :].astype(cdt), wfc1_ref[y],
                        preferred_element_type=jnp.float32)
    h = jnp.maximum(h + bfc1_ref[...], 0.0)                   # (tb, 64)

    # fused fc_mu / fc_logvar + reparameterization epilogue (exp -> EUP).
    ml = jnp.dot(h.astype(cdt), wml_ref[...],
                 preferred_element_type=jnp.float32) + bml_ref[...]   # (tb, 2*latent)
    ml_ref[...] = ml
    mu = ml[:, 0:latent]
    logvar = ml[:, latent:2 * latent]
    z = mu + eps_ref[...].astype(jnp.float32) * jnp.exp(0.5 * logvar)  # (tb, latent)

    # ---------------- decoder ----------------
    # dec_fc1 as a VPU outer product over the tiny latent dim (no scratch, no
    # M=1 matmuls); comes out directly in the (y, x*C) layout the deconv consumes.
    hd_blocks = []
    for y in range(wdfc_ref.shape[0]):
        w_y = wdfc_ref[y]                                      # (latent, 7*32)
        blk = bdfc_ref[y]                                      # (1, 7*32)
        for l in range(latent):
            blk = blk + z[:, l:l + 1] * w_y[l:l + 1, :]
        hd_blocks.append(jnp.maximum(blk, 0.0))
    hd = jnp.concatenate(hd_blocks, axis=0)                    # (7*tb, 7*32)

    a3 = spatial(hd, g3_ref, b3_ref, plan3, relu=True)         # (14*tb, 14*16)
    recon_ref[...] = spatial(a3, g4_ref, b4_ref, plan4, relu=False)  # (28*tb, 128)


# ---------------------------------------------------------------------------
# Wrapper
# ---------------------------------------------------------------------------
def convvae_forward(prep, x, eps, *, block_batch=None):
    """x: (B, q, H, W) NCHW; eps: (B, latent).  Returns (recon_logits, mu, logvar)."""
    B, q, H, W = x.shape
    latent = eps.shape[-1]
    assert H % 4 == 0 and W % 4 == 0
    assert prep["g1"].shape[1] == W * q, "prepared params do not match input shape"

    # Batch tile: TB samples per grid step (multiple of 8 so sublane slices stay
    # tile-aligned).  For production B, TB in [32, 128] keeps matmul M >= 128/256.
    tb = min(64, _round_up(B, 8)) if block_batch is None else int(block_batch)
    assert tb % 8 == 0 and tb >= 8, "block_batch must be a positive multiple of 8"
    nb = -(-B // tb)
    Bp = nb * tb

    # Static per-layer y-tap plans (encoder convs k=3 s=2 p=1, decoder deconvs k=4).
    h1, h2 = H // 2, H // 4
    plans = (_row_plan(H, h1, 3, 2, 1, False),
             _row_plan(h1, h2, 3, 2, 1, False),
             _row_plan(h2, h1, 4, 2, 1, True),
             _row_plan(h1, H, 4, 2, 1, True))

    # (B, q, H, W) -> (nb, H*tb, W*q): per grid step an H-major, batch-minor slab.
    xp = jnp.pad(x, ((0, Bp - B), (0, 0), (0, 0), (0, 0))) if Bp != B else x
    x_fmt = (xp.astype(jnp.float32)
             .reshape(nb, tb, q, H, W).transpose(0, 3, 1, 4, 2)
             .reshape(nb, H * tb, W * q))
    ep = jnp.pad(eps, ((0, Bp - B), (0, 0))) if Bp != B else eps
    eps_fmt = ep.reshape(nb, tb, latent).astype(jnp.float32)

    weights = [prep[k] for k in _WEIGHT_ORDER]
    n_pad = prep["g4"].shape[2]              # 128: lane-dense recon columns
    n_true = W * q                           # 84

    def w_spec(a):
        nd = a.ndim
        return pl.BlockSpec(a.shape, lambda s, _nd=nd: (0,) * _nd)

    in_specs = ([pl.BlockSpec((None, H * tb, W * q), lambda s: (s, 0, 0)),
                 pl.BlockSpec((None, tb, latent), lambda s: (s, 0, 0))]
                + [w_spec(a) for a in weights])
    out_specs = (pl.BlockSpec((None, H * tb, n_pad), lambda s: (s, 0, 0)),
                 pl.BlockSpec((None, tb, 2 * latent), lambda s: (s, 0, 0)))
    out_shape = (jax.ShapeDtypeStruct((nb, H * tb, n_pad), jnp.float32),
                 jax.ShapeDtypeStruct((nb, tb, 2 * latent), jnp.float32))

    kernel = functools.partial(_convvae_kernel, plans=plans)
    recon_fold, ml = pl.pallas_call(
        kernel,
        grid=(nb,),
        in_specs=in_specs,
        out_specs=out_specs,
        out_shape=out_shape,
        compiler_params=pltpu.CompilerParams(
            dimension_semantics=("parallel",),       # even nb -> both v7x TCs work
            vmem_limit_bytes=32 * 1024 * 1024),
    )(x_fmt, eps_fmt, *weights)

    # Unfold: (nb, 28*tb, 128) -> (B, q, 28, 28); split fused mu|logvar.
    recon = (recon_fold.reshape(nb, H, tb, n_pad)[:, :, :, :n_true]
             .reshape(nb, H, tb, W, q).transpose(0, 2, 4, 1, 3)
             .reshape(Bp, q, H, W)[:B])
    ml2 = ml.reshape(Bp, 2 * latent)[:B]
    return recon, ml2[:, :latent], ml2[:, latent:]


# ---------------------------------------------------------------------------
# Parameters (PyTorch layouts) and a pure-JAX reference for validation
# ---------------------------------------------------------------------------
def init_params(key, latent_dim=2, q=3):
    ks = jax.random.split(key, 16)
    s = 0.05
    n = lambda k, shape: s * jax.random.normal(k, shape, jnp.float32)
    return {
        "enc_conv1_w": n(ks[0], (16, q, 3, 3)),    "enc_conv1_b": n(ks[1], (16,)),
        "enc_conv2_w": n(ks[2], (32, 16, 3, 3)),   "enc_conv2_b": n(ks[3], (32,)),
        "enc_fc1_w":   n(ks[4], (64, 32 * 7 * 7)), "enc_fc1_b":   n(ks[5], (64,)),
        "fc_mu_w":     n(ks[6], (latent_dim, 64)), "fc_mu_b":     n(ks[7], (latent_dim,)),
        "fc_logvar_w": n(ks[8], (latent_dim, 64)), "fc_logvar_b": n(ks[9], (latent_dim,)),
        "dec_fc1_w":   n(ks[10], (32 * 7 * 7, latent_dim)),
        "dec_fc1_b":   n(ks[11], (32 * 7 * 7,)),
        "dec_conv1_w": n(ks[12], (32, 16, 4, 4)),  "dec_conv1_b": n(ks[13], (16,)),
        "dec_conv2_w": n(ks[14], (16, q, 4, 4)),   "dec_conv2_b": n(ks[15], (q,)),
    }


def reference_forward(params, x, eps):
    """Plain-XLA reference matching the PyTorch module (f32)."""
    def conv(x, w, b, stride, pad):
        dn = jax.lax.conv_dimension_numbers(x.shape, w.shape, ("NCHW", "OIHW", "NCHW"))
        y = jax.lax.conv_general_dilated(x, w, (stride, stride),
                                         [(pad, pad), (pad, pad)],
                                         dimension_numbers=dn)
        return y + b.reshape(1, -1, 1, 1)

    def deconv(x, wT, b, stride, pad):
        w = jnp.flip(wT, (2, 3)).transpose(1, 0, 2, 3)
        p = w.shape[2] - 1 - pad
        dn = jax.lax.conv_dimension_numbers(x.shape, w.shape, ("NCHW", "OIHW", "NCHW"))
        y = jax.lax.conv_general_dilated(x, w, (1, 1), [(p, p), (p, p)],
                                         lhs_dilation=(stride, stride),
                                         dimension_numbers=dn)
        return y + b.reshape(1, -1, 1, 1)

    h = jax.nn.relu(conv(x, params["enc_conv1_w"], params["enc_conv1_b"], 2, 1))
    h = jax.nn.relu(conv(h, params["enc_conv2_w"], params["enc_conv2_b"], 2, 1))
    flat = h.reshape(h.shape[0], -1)
    h = jax.nn.relu(flat @ params["enc_fc1_w"].T + params["enc_fc1_b"])
    mu = h @ params["fc_mu_w"].T + params["fc_mu_b"]
    logvar = h @ params["fc_logvar_w"].T + params["fc_logvar_b"]
    z = mu + eps * jnp.exp(0.5 * logvar)
    hd = jax.nn.relu(z @ params["dec_fc1_w"].T + params["dec_fc1_b"])
    hd = hd.reshape(-1, 32, 7, 7)
    hd = jax.nn.relu(deconv(hd, params["dec_conv1_w"], params["dec_conv1_b"], 2, 1))
    recon = deconv(hd, params["dec_conv2_w"], params["dec_conv2_b"], 2, 1)
    return recon, mu, logvar


def _assert_close(a, b, name, rel=0.05, atol=2e-3):
    err = float(jnp.max(jnp.abs(a - b)))
    scale = float(jnp.max(jnp.abs(b)))
    assert err <= rel * scale + atol, f"{name}: max err {err:.3e} vs scale {scale:.3e}"


if __name__ == "__main__":
    # 28x28 spatial size is implied by Linear(32*7*7, 64).  B=16 with TB=8 gives an
    # even grid of 2 steps (both v7x TensorCores busy); for production use TB=32-128.
    B, q, H, W, latent_dim = 16, 3, 28, 28, 2
    TB = 8

    key = jax.random.PRNGKey(0)
    k_params, k_x, k_eps = jax.random.split(key, 3)

    params = init_params(k_params, latent_dim=latent_dim, q=q)
    prep = prepare_params(params, q=q, latent_dim=latent_dim, img=H)

    # Potts configs are one-hot over q states; deterministic one-hot input.
    states = jax.random.randint(k_x, (B, H, W), 0, q)
    x = jax.nn.one_hot(states, q, dtype=jnp.float32).transpose(0, 3, 1, 2)   # (B, q, 28, 28)
    eps = jax.random.normal(k_eps, (B, latent_dim), jnp.float32)             # randn_like(std)

    fwd = jax.jit(convvae_forward, static_argnames=("block_batch",))
    recon_logits, mu, logvar = fwd(prep, x, eps, block_batch=TB)
    jax.block_until_ready((recon_logits, mu, logvar))

    assert recon_logits.shape == (B, q, H, W)
    assert mu.shape == (B, latent_dim) and logvar.shape == (B, latent_dim)
    assert bool(jnp.all(jnp.isfinite(recon_logits)))

    # Validate against the plain-XLA reference (bf16 MXU operands -> few-% tolerance).
    ref_recon, ref_mu, ref_logvar = jax.jit(reference_forward)(params, x, eps)
    _assert_close(mu, ref_mu, "mu")
    _assert_close(logvar, ref_logvar, "logvar")
    _assert_close(recon_logits, ref_recon, "recon")

    print("KERNEL_OK")
</pallas_src>

<mosaic_0001>
module attributes {stable_mosaic.version = 11 : i64} {
  func.func @_convvae_kernel(%arg0: i32, %arg1: memref<1x224x84xf32, #tpu.memory_space<vmem>>, %arg2: memref<1x8x2xf32, #tpu.memory_space<vmem>>, %arg3: memref<3x84x224xbf16, #tpu.memory_space<vmem>>, %arg4: memref<1x224xf32, #tpu.memory_space<vmem>>, %arg5: memref<3x224x224xbf16, #tpu.memory_space<vmem>>, %arg6: memref<1x224xf32, #tpu.memory_space<vmem>>, %arg7: memref<7x224x64xbf16, #tpu.memory_space<vmem>>, %arg8: memref<1x64xf32, #tpu.memory_space<vmem>>, %arg9: memref<64x4xbf16, #tpu.memory_space<vmem>>, %arg10: memref<1x4xf32, #tpu.memory_space<vmem>>, %arg11: memref<7x2x224xf32, #tpu.memory_space<vmem>>, %arg12: memref<7x1x224xf32, #tpu.memory_space<vmem>>, %arg13: memref<4x224x224xbf16, #tpu.memory_space<vmem>>, %arg14: memref<1x224xf32, #tpu.memory_space<vmem>>, %arg15: memref<4x224x128xbf16, #tpu.memory_space<vmem>>, %arg16: memref<1x128xf32, #tpu.memory_space<vmem>>, %arg17: memref<1x224x128xf32, #tpu.memory_space<vmem>>, %arg18: memref<1x8x4xf32, #tpu.memory_space<vmem>>) attributes {dimension_semantics = [#tpu.dimension_semantics<parallel>], iteration_bounds = array<i64: 2>, scalar_prefetch = 0 : i64, scratch_operands = 0 : i64, tpu.core_type = #tpu.core_type<tc>, window_params = [{transform_indices = @transform_0, window_bounds = array<i64: 1, 224, 84>}, {transform_indices = @transform_1, window_bounds = array<i64: 1, 8, 2>}, {pipeline_mode = #tpu.pipeline_mode<synchronous>, transform_indices = @transform_2, window_bounds = array<i64: 3, 84, 224>}, {pipeline_mode = #tpu.pipeline_mode<synchronous>, transform_indices = @transform_3, window_bounds = array<i64: 1, 224>}, {pipeline_mode = #tpu.pipeline_mode<synchronous>, transform_indices = @transform_4, window_bounds = array<i64: 3, 224, 224>}, {pipeline_mode = #tpu.pipeline_mode<synchronous>, transform_indices = @transform_5, window_bounds = array<i64: 1, 224>}, {pipeline_mode = #tpu.pipeline_mode<synchronous>, transform_indices = @transform_6, window_bounds = array<i64: 7, 224, 64>}, {pipeline_mode = #tpu.pipeline_mode<synchronous>, transform_indices = @transform_7, window_bounds = array<i64: 1, 64>}, {pipeline_mode = #tpu.pipeline_mode<synchronous>, transform_indices = @transform_8, window_bounds = array<i64: 64, 4>}, {pipeline_mode = #tpu.pipeline_mode<synchronous>, transform_indices = @transform_9, window_bounds = array<i64: 1, 4>}, {pipeline_mode = #tpu.pipeline_mode<synchronous>, transform_indices = @transform_10, window_bounds = array<i64: 7, 2, 224>}, {pipeline_mode = #tpu.pipeline_mode<synchronous>, transform_indices = @transform_11, window_bounds = array<i64: 7, 1, 224>}, {pipeline_mode = #tpu.pipeline_mode<synchronous>, transform_indices = @transform_12, window_bounds = array<i64: 4, 224, 224>}, {pipeline_mode = #tpu.pipeline_mode<synchronous>, transform_indices = @transform_13, window_bounds = array<i64: 1, 224>}, {pipeline_mode = #tpu.pipeline_mode<synchronous>, transform_indices = @transform_14, window_bounds = array<i64: 4, 224, 128>}, {pipeline_mode = #tpu.pipeline_mode<synchronous>, transform_indices = @transform_15, window_bounds = array<i64: 1, 128>}, {transform_indices = @transform_16, window_bounds = array<i64: 1, 224, 128>}, {transform_indices = @transform_17, window_bounds = array<i64: 1, 8, 4>}]} {
    %c0 = arith.constant 0 : index
    %c0_0 = arith.constant 0 : index
    %c0_1 = arith.constant 0 : index
    %0 = vector.load %arg1[%c0, %c0_0, %c0_1] : memref<1x224x84xf32, #tpu.memory_space<vmem>>, vector<1x224x84xf32>
    %1 = vector.shape_cast %0 : vector<1x224x84xf32> to vector<224x84xf32>
    %cst = arith.constant 0.000000e+00 : f32
    %2 = vector.broadcast %cst : f32 to vector<8x84xf32>
    %3 = vector.extract_strided_slice %1 {offsets = [8, 0], sizes = [8, 84], strides = [1, 1]} : vector<224x84xf32> to vector<8x84xf32>
    %4 = vector.extract_strided_slice %1 {offsets = [24, 0], sizes = [8, 84], strides = [1, 1]} : vector<224x84xf32> to vector<8x84xf32>
    %5 = vector.extract_strided_slice %1 {offsets = [40, 0], sizes = [8, 84], strides = [1, 1]} : vector<224x84xf32> to vector<8x84xf32>
    %6 = vector.extract_strided_slice %1 {offsets = [56, 0], sizes = [8, 84], strides = [1, 1]} : vector<224x84xf32> to vector<8x84xf32>
    %7 = vector.extract_strided_slice %1 {offsets = [72, 0], sizes = [8, 84], strides = [1, 1]} : vector<224x84xf32> to vector<8x84xf32>
    %8 = vector.extract_strided_slice %1 {offsets = [88, 0], sizes = [8, 84], strides = [1, 1]} : vector<224x84xf32> to vector<8x84xf32>
    %9 = vector.extract_strided_slice %1 {offsets = [104, 0], sizes = [8, 84], strides = [1, 1]} : vector<224x84xf32> to vector<8x84xf32>
    %10 = vector.extract_strided_slice %1 {offsets = [120, 0], sizes = [8, 84], strides = [1, 1]} : vector<224x84xf32> to vector<8x84xf32>
    %11 = vector.extract_strided_slice %1 {offsets = [136, 0], sizes = [8, 84], strides = [1, 1]} : vector<224x84xf32> to vector<8x84xf32>
    %12 = vector.extract_strided_slice %1 {offsets = [152, 0], sizes = [8, 84], strides = [1, 1]} : vector<224x84xf32> to vector<8x84xf32>
    %13 = vector.extract_strided_slice %1 {offsets = [168, 0], sizes = [8, 84], strides = [1, 1]} : vector<224x84xf32> to vector<8x84xf32>
    %14 = vector.extract_strided_slice %1 {offsets = [184, 0], sizes = [8, 84], strides = [1, 1]} : vector<224x84xf32> to vector<8x84xf32>
    %15 = vector.extract_strided_slice %1 {offsets = [200, 0], sizes = [8, 84], strides = [1, 1]} : vector<224x84xf32> to vector<8x84xf32>
    %16 = tpu.concatenate %2, %3, %4, %5, %6, %7, %8, %9, %10, %11, %12, %13, %14, %15 in 0 : vector<8x84xf32>, vector<8x84xf32>, vector<8x84xf32>, vector<8x84xf32>, vector<8x84xf32>, vector<8x84xf32>, vector<8x84xf32>, vector<8x84xf32>, vector<8x84xf32>, vector<8x84xf32>, vector<8x84xf32>, vector<8x84xf32>, vector<8x84xf32>, vector<8x84xf32> -> vector<112x84xf32>
    %17 = arith.truncf %16 : vector<112x84xf32> to vector<112x84xbf16>
    %c0_2 = arith.constant 0 : index
    %c0_3 = arith.constant 0 : index
    %c0_4 = arith.constant 0 : index
    %18 = vector.load %arg3[%c0_2, %c0_3, %c0_4] : memref<3x84x224xbf16, #tpu.memory_space<vmem>>, vector<1x84x224xbf16>
    %19 = vector.shape_cast %18 : vector<1x84x224xbf16> to vector<84x224xbf16>
    %cst_5 = arith.constant dense<0.000000e+00> : vector<112x224xf32>
    %20 = tpu.matmul %17, %19, %cst_5 {dimension_numbers = #tpu.dot_dimension_numbers<[1], [0], [0], [1], [0, 0, 1, 1], [], []>} : vector<112x84xbf16>, vector<84x224xbf16>, vector<112x224xf32> -> vector<112x224xf32>
    %21 = vector.extract_strided_slice %1 {offsets = [0, 0], sizes = [8, 84], strides = [1, 1]} : vector<224x84xf32> to vector<8x84xf32>
    %22 = vector.extract_strided_slice %1 {offsets = [16, 0], sizes = [8, 84], strides = [1, 1]} : vector<224x84xf32> to vector<8x84xf32>
    %23 = vector.extract_strided_slice %1 {offsets = [32, 0], sizes = [8, 84], strides = [1, 1]} : vector<224x84xf32> to vector<8x84xf32>
    %24 = vector.extract_strided_slice %1 {offsets = [48, 0], sizes = [8, 84], strides = [1, 1]} : vector<224x84xf32> to vector<8x84xf32>
    %25 = vector.extract_strided_slice %1 {offsets = [64, 0], sizes = [8, 84], strides = [1, 1]} : vector<224x84xf32> to vector<8x84xf32>
    %26 = vector.extract_strided_slice %1 {offsets = [80, 0], sizes = [8, 84], strides = [1, 1]} : vector<224x84xf32> to vector<8x84xf32>
    %27 = vector.extract_strided_slice %1 {offsets = [96, 0], sizes = [8, 84], strides = [1, 1]} : vector<224x84xf32> to vector<8x84xf32>
    %28 = vector.extract_strided_slice %1 {offsets = [112, 0], sizes = [8, 84], strides = [1, 1]} : vector<224x84xf32> to vector<8x84xf32>
    %29 = vector.extract_strided_slice %1 {offsets = [128, 0], sizes = [8, 84], strides = [1, 1]} : vector<224x84xf32> to vector<8x84xf32>
    %30 = vector.extract_strided_slice %1 {offsets = [144, 0], sizes = [8, 84], strides = [1, 1]} : vector<224x84xf32> to vector<8x84xf32>
    %31 = vector.extract_strided_slice %1 {offsets = [160, 0], sizes = [8, 84], strides = [1, 1]} : vector<224x84xf32> to vector<8x84xf32>
    %32 = vector.extract_strided_slice %1 {offsets = [176, 0], sizes = [8, 84], strides = [1, 1]} : vector<224x84xf32> to vector<8x84xf32>
    %33 = vector.extract_strided_slice %1 {offsets = [192, 0], sizes = [8, 84], strides = [1, 1]} : vector<224x84xf32> to vector<8x84xf32>
    %34 = vector.extract_strided_slice %1 {offsets = [208, 0], sizes = [8, 84], strides = [1, 1]} : vector<224x84xf32> to vector<8x84xf32>
    %35 = tpu.concatenate %21, %22, %23, %24, %25, %26, %27, %28, %29, %30, %31, %32, %33, %34 in 0 : vector<8x84xf32>, vector<8x84xf32>, vector<8x84xf32>, vector<8x84xf32>, vector<8x84xf32>, vector<8x84xf32>, vector<8x84xf32>, vector<8x84xf32>, vector<8x84xf32>, vector<8x84xf32>, vector<8x84xf32>, vector<8x84xf32>, vector<8x84xf32>, vector<8x84xf32> -> vector<112x84xf32>
    %36 = arith.truncf %35 : vector<112x84xf32> to vector<112x84xbf16>
    %c1 = arith.constant 1 : index
    %c0_6 = arith.constant 0 : index
    %c0_7 = arith.constant 0 : index
    %37 = vector.load %arg3[%c1, %c0_6, %c0_7] : memref<3x84x224xbf16, #tpu.memory_space<vmem>>, vector<1x84x224xbf16>
    %38 = vector.shape_cast %37 : vector<1x84x224xbf16> to vector<84x224xbf16>
    %cst_8 = arith.constant dense<0.000000e+00> : vector<112x224xf32>
    %39 = tpu.matmul %36, %38, %cst_8 {dimension_numbers = #tpu.dot_dimension_numbers<[1], [0], [0], [1], [0, 0, 1, 1], [], []>} : vector<112x84xbf16>, vector<84x224xbf16>, vector<112x224xf32> -> vector<112x224xf32>
    %40 = arith.addf %20, %39 : vector<112x224xf32>
    %41 = vector.extract_strided_slice %1 {offsets = [8, 0], sizes = [8, 84], strides = [1, 1]} : vector<224x84xf32> to vector<8x84xf32>
    %42 = vector.extract_strided_slice %1 {offsets = [24, 0], sizes = [8, 84], strides = [1, 1]} : vector<224x84xf32> to vector<8x84xf32>
    %43 = vector.extract_strided_slice %1 {offsets = [40, 0], sizes = [8, 84], strides = [1, 1]} : vector<224x84xf32> to vector<8x84xf32>
    %44 = vector.extract_strided_slice %1 {offsets = [56, 0], sizes = [8, 84], strides = [1, 1]} : vector<224x84xf32> to vector<8x84xf32>
    %45 = vector.extract_strided_slice %1 {offsets = [72, 0], sizes = [8, 84], strides = [1, 1]} : vector<224x84xf32> to vector<8x84xf32>
    %46 = vector.extract_strided_slice %1 {offsets = [88, 0], sizes = [8, 84], strides = [1, 1]} : vector<224x84xf32> to vector<8x84xf32>
    %47 = vector.extract_strided_slice %1 {offsets = [104, 0], sizes = [8, 84], strides = [1, 1]} : vector<224x84xf32> to vector<8x84xf32>
    %48 = vector.extract_strided_slice %1 {offsets = [120, 0], sizes = [8, 84], strides = [1, 1]} : vector<224x84xf32> to vector<8x84xf32>
    %49 = vector.extract_strided_slice %1 {offsets = [136, 0], sizes = [8, 84], strides = [1, 1]} : vector<224x84xf32> to vector<8x84xf32>
    %50 = vector.extract_strided_slice %1 {offsets = [152, 0], sizes = [8, 84], strides = [1, 1]} : vector<224x84xf32> to vector<8x84xf32>
    %51 = vector.extract_strided_slice %1 {offsets = [168, 0], sizes = [8, 84], strides = [1, 1]} : vector<224x84xf32> to vector<8x84xf32>
    %52 = vector.extract_strided_slice %1 {offsets = [184, 0], sizes = [8, 84], strides = [1, 1]} : vector<224x84xf32> to vector<8x84xf32>
    %53 = vector.extract_strided_slice %1 {offsets = [200, 0], sizes = [8, 84], strides = [1, 1]} : vector<224x84xf32> to vector<8x84xf32>
    %54 = vector.extract_strided_slice %1 {offsets = [216, 0], sizes = [8, 84], strides = [1, 1]} : vector<224x84xf32> to vector<8x84xf32>
    %55 = tpu.concatenate %41, %42, %43, %44, %45, %46, %47, %48, %49, %50, %51, %52, %53, %54 in 0 : vector<8x84xf32>, vector<8x84xf32>, vector<8x84xf32>, vector<8x84xf32>, vector<8x84xf32>, vector<8x84xf32>, vector<8x84xf32>, vector<8x84xf32>, vector<8x84xf32>, vector<8x84xf32>, vector<8x84xf32>, vector<8x84xf32>, vector<8x84xf32>, vector<8x84xf32> -> vector<112x84xf32>
    %56 = arith.truncf %55 : vector<112x84xf32> to vector<112x84xbf16>
    %c2 = arith.constant 2 : index
    %c0_9 = arith.constant 0 : index
    %c0_10 = arith.constant 0 : index
    %57 = vector.load %arg3[%c2, %c0_9, %c0_10] : memref<3x84x224xbf16, #tpu.memory_space<vmem>>, vector<1x84x224xbf16>
    %58 = vector.shape_cast %57 : vector<1x84x224xbf16> to vector<84x224xbf16>
    %cst_11 = arith.constant dense<0.000000e+00> : vector<112x224xf32>
    %59 = tpu.matmul %56, %58, %cst_11 {dimension_numbers = #tpu.dot_dimension_numbers<[1], [0], [0], [1], [0, 0, 1, 1], [], []>} : vector<112x84xbf16>, vector<84x224xbf16>, vector<112x224xf32> -> vector<112x224xf32>
    %60 = arith.addf %40, %59 : vector<112x224xf32>
    %c0_12 = arith.constant 0 : index
    %c0_13 = arith.constant 0 : index
    %61 = vector.load %arg4[%c0_12, %c0_13] : memref<1x224xf32, #tpu.memory_space<vmem>>, vector<1x224xf32>
    %62 = vector.broadcast %61 : vector<1x224xf32> to vector<112x224xf32>
    %63 = arith.addf %60, %62 : vector<112x224xf32>
    %cst_14 = arith.constant 0.000000e+00 : f32
    %64 = vector.broadcast %cst_14 : f32 to vector<112x224xf32>
    %65 = arith.maximumf %63, %64 : vector<112x224xf32>
    %cst_15 = arith.constant 0.000000e+00 : f32
    %66 = vector.broadcast %cst_15 : f32 to vector<8x224xf32>
    %67 = vector.extract_strided_slice %65 {offsets = [8, 0], sizes = [8, 224], strides = [1, 1]} : vector<112x224xf32> to vector<8x224xf32>
    %68 = vector.extract_strided_slice %65 {offsets = [24, 0], sizes = [8, 224], strides = [1, 1]} : vector<112x224xf32> to vector<8x224xf32>
    %69 = vector.extract_strided_slice %65 {offsets = [40, 0], sizes = [8, 224], strides = [1, 1]} : vector<112x224xf32> to vector<8x224xf32>
    %70 = vector.extract_strided_slice %65 {offsets = [56, 0], sizes = [8, 224], strides = [1, 1]} : vector<112x224xf32> to vector<8x224xf32>
    %71 = vector.extract_strided_slice %65 {offsets = [72, 0], sizes = [8, 224], strides = [1, 1]} : vector<112x224xf32> to vector<8x224xf32>
    %72 = vector.extract_strided_slice %65 {offsets = [88, 0], sizes = [8, 224], strides = [1, 1]} : vector<112x224xf32> to vector<8x224xf32>
    %73 = tpu.concatenate %66, %67, %68, %69, %70, %71, %72 in 0 : vector<8x224xf32>, vector<8x224xf32>, vector<8x224xf32>, vector<8x224xf32>, vector<8x224xf32>, vector<8x224xf32>, vector<8x224xf32> -> vector<56x224xf32>
    %74 = arith.truncf %73 : vector<56x224xf32> to vector<56x224xbf16>
    %c0_16 = arith.constant 0 : index
    %c0_17 = arith.constant 0 : index
    %c0_18 = arith.constant 0 : index
    %75 = vector.load %arg5[%c0_16, %c0_17, %c0_18] : memref<3x224x224xbf16, #tpu.memory_space<vmem>>, vector<1x224x224xbf16>
    %76 = vector.shape_cast %75 : vector<1x224x224xbf16> to vector<224x224xbf16>
    %cst_19 = arith.constant dense<0.000000e+00> : vector<56x224xf32>
    %77 = tpu.matmul %74, %76, %cst_19 {dimension_numbers = #tpu.dot_dimension_numbers<[1], [0], [0], [1], [0, 0, 1, 1], [], []>} : vector<56x224xbf16>, vector<224x224xbf16>, vector<56x224xf32> -> vector<56x224xf32>
    %78 = vector.extract_strided_slice %65 {offsets = [0, 0], sizes = [8, 224], strides = [1, 1]} : vector<112x224xf32> to vector<8x224xf32>
    %79 = vector.extract_strided_slice %65 {offsets = [16, 0], sizes = [8, 224], strides = [1, 1]} : vector<112x224xf32> to vector<8x224xf32>
    %80 = vector.extract_strided_slice %65 {offsets = [32, 0], sizes = [8, 224], strides = [1, 1]} : vector<112x224xf32> to vector<8x224xf32>
    %81 = vector.extract_strided_slice %65 {offsets = [48, 0], sizes = [8, 224], strides = [1, 1]} : vector<112x224xf32> to vector<8x224xf32>
    %82 = vector.extract_strided_slice %65 {offsets = [64, 0], sizes = [8, 224], strides = [1, 1]} : vector<112x224xf32> to vector<8x224xf32>
    %83 = vector.extract_strided_slice %65 {offsets = [80, 0], sizes = [8, 224], strides = [1, 1]} : vector<112x224xf32> to vector<8x224xf32>
    %84 = vector.extract_strided_slice %65 {offsets = [96, 0], sizes = [8, 224], strides = [1, 1]} : vector<112x224xf32> to vector<8x224xf32>
    %85 = tpu.concatenate %78, %79, %80, %81, %82, %83, %84 in 0 : vector<8x224xf32>, vector<8x224xf32>, vector<8x224xf32>, vector<8x224xf32>, vector<8x224xf32>, vector<8x224xf32>, vector<8x224xf32> -> vector<56x224xf32>
    %86 = arith.truncf %85 : vector<56x224xf32> to vector<56x224xbf16>
    %c1_20 = arith.constant 1 : index
    %c0_21 = arith.constant 0 : index
    %c0_22 = arith.constant 0 : index
    %87 = vector.load %arg5[%c1_20, %c0_21, %c0_22] : memref<3x224x224xbf16, #tpu.memory_space<vmem>>, vector<1x224x224xbf16>
    %88 = vector.shape_cast %87 : vector<1x224x224xbf16> to vector<224x224xbf16>
    %cst_23 = arith.constant dense<0.000000e+00> : vector<56x224xf32>
    %89 = tpu.matmul %86, %88, %cst_23 {dimension_numbers = #tpu.dot_dimension_numbers<[1], [0], [0], [1], [0, 0, 1, 1], [], []>} : vector<56x224xbf16>, vector<224x224xbf16>, vector<56x224xf32> -> vector<56x224xf32>
    %90 = arith.addf %77, %89 : vector<56x224xf32>
    %91 = vector.extract_strided_slice %65 {offsets = [8, 0], sizes = [8, 224], strides = [1, 1]} : vector<112x224xf32> to vector<8x224xf32>
    %92 = vector.extract_strided_slice %65 {offsets = [24, 0], sizes = [8, 224], strides = [1, 1]} : vector<112x224xf32> to vector<8x224xf32>
    %93 = vector.extract_strided_slice %65 {offsets = [40, 0], sizes = [8, 224], strides = [1, 1]} : vector<112x224xf32> to vector<8x224xf32>
    %94 = vector.extract_strided_slice %65 {offsets = [56, 0], sizes = [8, 224], strides = [1, 1]} : vector<112x224xf32> to vector<8x224xf32>
    %95 = vector.extract_strided_slice %65 {offsets = [72, 0], sizes = [8, 224], strides = [1, 1]} : vector<112x224xf32> to vector<8x224xf32>
    %96 = vector.extract_strided_slice %65 {offsets = [88, 0], sizes = [8, 224], strides = [1, 1]} : vector<112x224xf32> to vector<8x224xf32>
    %97 = vector.extract_strided_slice %65 {offsets = [104, 0], sizes = [8, 224], strides = [1, 1]} : vector<112x224xf32> to vector<8x224xf32>
    %98 = tpu.concatenate %91, %92, %93, %94, %95, %96, %97 in 0 : vector<8x224xf32>, vector<8x224xf32>, vector<8x224xf32>, vector<8x224xf32>, vector<8x224xf32>, vector<8x224xf32>, vector<8x224xf32> -> vector<56x224xf32>
    %99 = arith.truncf %98 : vector<56x224xf32> to vector<56x224xbf16>
    %c2_24 = arith.constant 2 : index
    %c0_25 = arith.constant 0 : index
    %c0_26 = arith.constant 0 : index
    %100 = vector.load %arg5[%c2_24, %c0_25, %c0_26] : memref<3x224x224xbf16, #tpu.memory_space<vmem>>, vector<1x224x224xbf16>
    %101 = vector.shape_cast %100 : vector<1x224x224xbf16> to vector<224x224xbf16>
    %cst_27 = arith.constant dense<0.000000e+00> : vector<56x224xf32>
    %102 = tpu.matmul %99, %101, %cst_27 {dimension_numbers = #tpu.dot_dimension_numbers<[1], [0], [0], [1], [0, 0, 1, 1], [], []>} : vector<56x224xbf16>, vector<224x224xbf16>, vector<56x224xf32> -> vector<56x224xf32>
    %103 = arith.addf %90, %102 : vector<56x224xf32>
    %c0_28 = arith.constant 0 : index
    %c0_29 = arith.constant 0 : index
    %104 = vector.load %arg6[%c0_28, %c0_29] : memref<1x224xf32, #tpu.memory_space<vmem>>, vector<1x224xf32>
    %105 = vector.broadcast %104 : vector<1x224xf32> to vector<56x224xf32>
    %106 = arith.addf %103, %105 : vector<56x224xf32>
    %cst_30 = arith.constant 0.000000e+00 : f32
    %107 = vector.broadcast %cst_30 : f32 to vector<56x224xf32>
    %108 = arith.maximumf %106, %107 : vector<56x224xf32>
    %cst_31 = arith.constant 0.000000e+00 : f32
    %109 = vector.broadcast %cst_31 : f32 to vector<8x64xf32>
    %110 = vector.extract_strided_slice %108 {offsets = [0, 0], sizes = [8, 224], strides = [1, 1]} : vector<56x224xf32> to vector<8x224xf32>
    %111 = arith.truncf %110 : vector<8x224xf32> to vector<8x224xbf16>
    %c0_32 = arith.constant 0 : index
    %c0_33 = arith.constant 0 : index
    %c0_34 = arith.constant 0 : index
    %112 = vector.load %arg7[%c0_32, %c0_33, %c0_34] : memref<7x224x64xbf16, #tpu.memory_space<vmem>>, vector<1x224x64xbf16>
    %113 = vector.shape_cast %112 : vector<1x224x64xbf16> to vector<224x64xbf16>
    %cst_35 = arith.constant dense<0.000000e+00> : vector<8x64xf32>
    %114 = tpu.matmul %111, %113, %cst_35 {dimension_numbers = #tpu.dot_dimension_numbers<[1], [0], [0], [1], [0, 0, 1, 1], [], []>} : vector<8x224xbf16>, vector<224x64xbf16>, vector<8x64xf32> -> vector<8x64xf32>
    %115 = arith.addf %109, %114 : vector<8x64xf32>
    %116 = vector.extract_strided_slice %108 {offsets = [8, 0], sizes = [8, 224], strides = [1, 1]} : vector<56x224xf32> to vector<8x224xf32>
    %117 = arith.truncf %116 : vector<8x224xf32> to vector<8x224xbf16>
    %c1_36 = arith.constant 1 : index
    %c0_37 = arith.constant 0 : index
    %c0_38 = arith.constant 0 : index
    %118 = vector.load %arg7[%c1_36, %c0_37, %c0_38] : memref<7x224x64xbf16, #tpu.memory_space<vmem>>, vector<1x224x64xbf16>
    %119 = vector.shape_cast %118 : vector<1x224x64xbf16> to vector<224x64xbf16>
    %cst_39 = arith.constant dense<0.000000e+00> : vector<8x64xf32>
    %120 = tpu.matmul %117, %119, %cst_39 {dimension_numbers = #tpu.dot_dimension_numbers<[1], [0], [0], [1], [0, 0, 1, 1], [], []>} : vector<8x224xbf16>, vector<224x64xbf16>, vector<8x64xf32> -> vector<8x64xf32>
    %121 = arith.addf %115, %120 : vector<8x64xf32>
    %122 = vector.extract_strided_slice %108 {offsets = [16, 0], sizes = [8, 224], strides = [1, 1]} : vector<56x224xf32> to vector<8x224xf32>
    %123 = arith.truncf %122 : vector<8x224xf32> to vector<8x224xbf16>
    %c2_40 = arith.constant 2 : index
    %c0_41 = arith.constant 0 : index
    %c0_42 = arith.constant 0 : index
    %124 = vector.load %arg7[%c2_40, %c0_41, %c0_42] : memref<7x224x64xbf16, #tpu.memory_space<vmem>>, vector<1x224x64xbf16>
    %125 = vector.shape_cast %124 : vector<1x224x64xbf16> to vector<224x64xbf16>
    %cst_43 = arith.constant dense<0.000000e+00> : vector<8x64xf32>
    %126 = tpu.matmul %123, %125, %cst_43 {dimension_numbers = #tpu.dot_dimension_numbers<[1], [0], [0], [1], [0, 0, 1, 1], [], []>} : vector<8x224xbf16>, vector<224x64xbf16>, vector<8x64xf32> -> vector<8x64xf32>
    %127 = arith.addf %121, %126 : vector<8x64xf32>
    %128 = vector.extract_strided_slice %108 {offsets = [24, 0], sizes = [8, 224], strides = [1, 1]} : vector<56x224xf32> to vector<8x224xf32>
    %129 = arith.truncf %128 : vector<8x224xf32> to vector<8x224xbf16>
    %c3 = arith.constant 3 : index
    %c0_44 = arith.constant 0 : index
    %c0_45 = arith.constant 0 : index
    %130 = vector.load %arg7[%c3, %c0_44, %c0_45] : memref<7x224x64xbf16, #tpu.memory_space<vmem>>, vector<1x224x64xbf16>
    %131 = vector.shape_cast %130 : vector<1x224x64xbf16> to vector<224x64xbf16>
    %cst_46 = arith.constant dense<0.000000e+00> : vector<8x64xf32>
    %132 = tpu.matmul %129, %131, %cst_46 {dimension_numbers = #tpu.dot_dimension_numbers<[1], [0], [0], [1], [0, 0, 1, 1], [], []>} : vector<8x224xbf16>, vector<224x64xbf16>, vector<8x64xf32> -> vector<8x64xf32>
    %133 = arith.addf %127, %132 : vector<8x64xf32>
    %134 = vector.extract_strided_slice %108 {offsets = [32, 0], sizes = [8, 224], strides = [1, 1]} : vector<56x224xf32> to vector<8x224xf32>
    %135 = arith.truncf %134 : vector<8x224xf32> to vector<8x224xbf16>
    %c4 = arith.constant 4 : index
    %c0_47 = arith.constant 0 : index
    %c0_48 = arith.constant 0 : index
    %136 = vector.load %arg7[%c4, %c0_47, %c0_48] : memref<7x224x64xbf16, #tpu.memory_space<vmem>>, vector<1x224x64xbf16>
    %137 = vector.shape_cast %136 : vector<1x224x64xbf16> to vector<224x64xbf16>
    %cst_49 = arith.constant dense<0.000000e+00> : vector<8x64xf32>
    %138 = tpu.matmul %135, %137, %cst_49 {dimension_numbers = #tpu.dot_dimension_numbers<[1], [0], [0], [1], [0, 0, 1, 1], [], []>} : vector<8x224xbf16>, vector<224x64xbf16>, vector<8x64xf32> -> vector<8x64xf32>
    %139 = arith.addf %133, %138 : vector<8x64xf32>
    %140 = vector.extract_strided_slice %108 {offsets = [40, 0], sizes = [8, 224], strides = [1, 1]} : vector<56x224xf32> to vector<8x224xf32>
    %141 = arith.truncf %140 : vector<8x224xf32> to vector<8x224xbf16>
    %c5 = arith.constant 5 : index
    %c0_50 = arith.constant 0 : index
    %c0_51 = arith.constant 0 : index
    %142 = vector.load %arg7[%c5, %c0_50, %c0_51] : memref<7x224x64xbf16, #tpu.memory_space<vmem>>, vector<1x224x64xbf16>
    %143 = vector.shape_cast %142 : vector<1x224x64xbf16> to vector<224x64xbf16>
    %cst_52 = arith.constant dense<0.000000e+00> : vector<8x64xf32>
    %144 = tpu.matmul %141, %143, %cst_52 {dimension_numbers = #tpu.dot_dimension_numbers<[1], [0], [0], [1], [0, 0, 1, 1], [], []>} : vector<8x224xbf16>, vector<224x64xbf16>, vector<8x64xf32> -> vector<8x64xf32>
    %145 = arith.addf %139, %144 : vector<8x64xf32>
    %146 = vector.extract_strided_slice %108 {offsets = [48, 0], sizes = [8, 224], strides = [1, 1]} : vector<56x224xf32> to vector<8x224xf32>
    %147 = arith.truncf %146 : vector<8x224xf32> to vector<8x224xbf16>
    %c6 = arith.constant 6 : index
    %c0_53 = arith.constant 0 : index
    %c0_54 = arith.constant 0 : index
    %148 = vector.load %arg7[%c6, %c0_53, %c0_54] : memref<7x224x64xbf16, #tpu.memory_space<vmem>>, vector<1x224x64xbf16>
    %149 = vector.shape_cast %148 : vector<1x224x64xbf16> to vector<224x64xbf16>
    %cst_55 = arith.constant dense<0.000000e+00> : vector<8x64xf32>
    %150 = tpu.matmul %147, %149, %cst_55 {dimension_numbers = #tpu.dot_dimension_numbers<[1], [0], [0], [1], [0, 0, 1, 1], [], []>} : vector<8x224xbf16>, vector<224x64xbf16>, vector<8x64xf32> -> vector<8x64xf32>
    %151 = arith.addf %145, %150 : vector<8x64xf32>
    %c0_56 = arith.constant 0 : index
    %c0_57 = arith.constant 0 : index
    %152 = vector.load %arg8[%c0_56, %c0_57] : memref<1x64xf32, #tpu.memory_space<vmem>>, vector<1x64xf32>
    %153 = vector.broadcast %152 : vector<1x64xf32> to vector<8x64xf32>
    %154 = arith.addf %151, %153 : vector<8x64xf32>
    %cst_58 = arith.constant 0.000000e+00 : f32
    %155 = vector.broadcast %cst_58 : f32 to vector<8x64xf32>
    %156 = arith.maximumf %154, %155 : vector<8x64xf32>
    %157 = arith.truncf %156 : vector<8x64xf32> to vector<8x64xbf16>
    %c0_59 = arith.constant 0 : index
    %c0_60 = arith.constant 0 : index
    %158 = vector.load %arg9[%c0_59, %c0_60] : memref<64x4xbf16, #tpu.memory_space<vmem>>, vector<64x4xbf16>
    %cst_61 = arith.constant dense<0.000000e+00> : vector<8x4xf32>
    %159 = tpu.matmul %157, %158, %cst_61 {dimension_numbers = #tpu.dot_dimension_numbers<[1], [0], [0], [1], [0, 0, 1, 1], [], []>} : vector<8x64xbf16>, vector<64x4xbf16>, vector<8x4xf32> -> vector<8x4xf32>
    %c0_62 = arith.constant 0 : index
    %c0_63 = arith.constant 0 : index
    %160 = vector.load %arg10[%c0_62, %c0_63] : memref<1x4xf32, #tpu.memory_space<vmem>>, vector<1x4xf32>
    %161 = vector.broadcast %160 : vector<1x4xf32> to vector<8x4xf32>
    %162 = arith.addf %159, %161 : vector<8x4xf32>
    %c0_64 = arith.constant 0 : index
    %c0_65 = arith.constant 0 : index
    %c0_66 = arith.constant 0 : index
    %163 = vector.load %arg18[%c0_64, %c0_65, %c0_66] : memref<1x8x4xf32, #tpu.memory_space<vmem>>, vector<1x8x4xf32>
    %164 = vector.shape_cast %163 : vector<1x8x4xf32> to vector<8x4xf32>
    %165 = vector.shape_cast %162 : vector<8x4xf32> to vector<1x8x4xf32>
    tpu.vector_store %arg18[%c0_64, %c0_65, %c0_66], %165 {strides = array<i32>} : memref<1x8x4xf32, #tpu.memory_space<vmem>>, vector<1x8x4xf32>,
    %166 = vector.extract_strided_slice %162 {offsets = [0, 0], sizes = [8, 2], strides = [1, 1]} : vector<8x4xf32> to vector<8x2xf32>
    %167 = vector.extract_strided_slice %162 {offsets = [0, 2], sizes = [8, 2], strides = [1, 1]} : vector<8x4xf32> to vector<8x2xf32>
    %c0_67 = arith.constant 0 : index
    %c0_68 = arith.constant 0 : index
    %c0_69 = arith.constant 0 : index
    %168 = vector.load %arg2[%c0_67, %c0_68, %c0_69] : memref<1x8x2xf32, #tpu.memory_space<vmem>>, vector<1x8x2xf32>
    %169 = vector.shape_cast %168 : vector<1x8x2xf32> to vector<8x2xf32>
    %cst_70 = arith.constant 5.000000e-01 : f32
    %170 = vector.broadcast %cst_70 : f32 to vector<8x2xf32>
    %171 = arith.mulf %170, %167 : vector<8x2xf32>
    %172 = math.exp %171 : vector<8x2xf32>
    %173 = arith.mulf %169, %172 : vector<8x2xf32>
    %174 = arith.addf %166, %173 : vector<8x2xf32>
    %c0_71 = arith.constant 0 : index
    %c0_72 = arith.constant 0 : index
    %c0_73 = arith.constant 0 : index
    %175 = vector.load %arg11[%c0_71, %c0_72, %c0_73] : memref<7x2x224xf32, #tpu.memory_space<vmem>>, vector<1x2x224xf32>
    %176 = vector.shape_cast %175 : vector<1x2x224xf32> to vector<2x224xf32>
    %c0_74 = arith.constant 0 : index
    %c0_75 = arith.constant 0 : index
    %c0_76 = arith.constant 0 : index
    %177 = vector.load %arg12[%c0_74, %c0_75, %c0_76] : memref<7x1x224xf32, #tpu.memory_space<vmem>>, vector<1x1x224xf32>
    %178 = vector.shape_cast %177 : vector<1x1x224xf32> to vector<1x224xf32>
    %179 = vector.extract_strided_slice %174 {offsets = [0, 0], sizes = [8, 1], strides = [1, 1]} : vector<8x2xf32> to vector<8x1xf32>
    %180 = vector.extract_strided_slice %176 {offsets = [0, 0], sizes = [1, 224], strides = [1, 1]} : vector<2x224xf32> to vector<1x224xf32>
    %181 = vector.broadcast %179 : vector<8x1xf32> to vector<8x224xf32>
    %182 = vector.broadcast %180 : vector<1x224xf32> to vector<8x224xf32>
    %183 = arith.mulf %181, %182 : vector<8x224xf32>
    %184 = vector.broadcast %178 : vector<1x224xf32> to vector<8x224xf32>
    %185 = arith.addf %184, %183 : vector<8x224xf32>
    %186 = vector.extract_strided_slice %174 {offsets = [0, 1], sizes = [8, 1], strides = [1, 1]} : vector<8x2xf32> to vector<8x1xf32>
    %187 = vector.extract_strided_slice %176 {offsets = [1, 0], sizes = [1, 224], strides = [1, 1]} : vector<2x224xf32> to vector<1x224xf32>
    %188 = vector.broadcast %186 : vector<8x1xf32> to vector<8x224xf32>
    %189 = vector.broadcast %187 : vector<1x224xf32> to vector<8x224xf32>
    %190 = arith.mulf %188, %189 : vector<8x224xf32>
    %191 = arith.addf %185, %190 : vector<8x224xf32>
    %cst_77 = arith.constant 0.000000e+00 : f32
    %192 = vector.broadcast %cst_77 : f32 to vector<8x224xf32>
    %193 = arith.maximumf %191, %192 : vector<8x224xf32>
    %c1_78 = arith.constant 1 : index
    %c0_79 = arith.constant 0 : index
    %c0_80 = arith.constant 0 : index
    %194 = vector.load %arg11[%c1_78, %c0_79, %c0_80] : memref<7x2x224xf32, #tpu.memory_space<vmem>>, vector<1x2x224xf32>
    %195 = vector.shape_cast %194 : vector<1x2x224xf32> to vector<2x224xf32>
    %c1_81 = arith.constant 1 : index
    %c0_82 = arith.constant 0 : index
    %c0_83 = arith.constant 0 : index
    %196 = vector.load %arg12[%c1_81, %c0_82, %c0_83] : memref<7x1x224xf32, #tpu.memory_space<vmem>>, vector<1x1x224xf32>
    %197 = vector.shape_cast %196 : vector<1x1x224xf32> to vector<1x224xf32>
    %198 = vector.extract_strided_slice %174 {offsets = [0, 0], sizes = [8, 1], strides = [1, 1]} : vector<8x2xf32> to vector<8x1xf32>
    %199 = vector.extract_strided_slice %195 {offsets = [0, 0], sizes = [1, 224], strides = [1, 1]} : vector<2x224xf32> to vector<1x224xf32>
    %200 = vector.broadcast %198 : vector<8x1xf32> to vector<8x224xf32>
    %201 = vector.broadcast %199 : vector<1x224xf32> to vector<8x224xf32>
    %202 = arith.mulf %200, %201 : vector<8x224xf32>
    %203 = vector.broadcast %197 : vector<1x224xf32> to vector<8x224xf32>
    %204 = arith.addf %203, %202 : vector<8x224xf32>
    %205 = vector.extract_strided_slice %174 {offsets = [0, 1], sizes = [8, 1], strides = [1, 1]} : vector<8x2xf32> to vector<8x1xf32>
    %206 = vector.extract_strided_slice %195 {offsets = [1, 0], sizes = [1, 224], strides = [1, 1]} : vector<2x224xf32> to vector<1x224xf32>
    %207 = vector.broadcast %205 : vector<8x1xf32> to vector<8x224xf32>
    %208 = vector.broadcast %206 : vector<1x224xf32> to vector<8x224xf32>
    %209 = arith.mulf %207, %208 : vector<8x224xf32>
    %210 = arith.addf %204, %209 : vector<8x224xf32>
    %cst_84 = arith.constant 0.000000e+00 : f32
    %211 = vector.broadcast %cst_84 : f32 to vector<8x224xf32>
    %212 = arith.maximumf %210, %211 : vector<8x224xf32>
    %c2_85 = arith.constant 2 : index
    %c0_86 = arith.constant 0 : index
    %c0_87 = arith.constant 0 : index
    %213 = vector.load %arg11[%c2_85, %c0_86, %c0_87] : memref<7x2x224xf32, #tpu.memory_space<vmem>>, vector<1x2x224xf32>
    %214 = vector.shape_cast %213 : vector<1x2x224xf32> to vector<2x224xf32>
    %c2_88 = arith.constant 2 : index
    %c0_89 = arith.constant 0 : index
    %c0_90 = arith.constant 0 : index
    %215 = vector.load %arg12[%c2_88, %c0_89, %c0_90] : memref<7x1x224xf32, #tpu.memory_space<vmem>>, vector<1x1x224xf32>
    %216 = vector.shape_cast %215 : vector<1x1x224xf32> to vector<1x224xf32>
    %217 = vector.extract_strided_slice %174 {offsets = [0, 0], sizes = [8, 1], strides = [1, 1]} : vector<8x2xf32> to vector<8x1xf32>
    %218 = vector.extract_strided_slice %214 {offsets = [0, 0], sizes = [1, 224], strides = [1, 1]} : vector<2x224xf32> to vector<1x224xf32>
    %219 = vector.broadcast %217 : vector<8x1xf32> to vector<8x224xf32>
    %220 = vector.broadcast %218 : vector<1x224xf32> to vector<8x224xf32>
    %221 = arith.mulf %219, %220 : vector<8x224xf32>
    %222 = vector.broadcast %216 : vector<1x224xf32> to vector<8x224xf32>
    %223 = arith.addf %222, %221 : vector<8x224xf32>
    %224 = vector.extract_strided_slice %174 {offsets = [0, 1], sizes = [8, 1], strides = [1, 1]} : vector<8x2xf32> to vector<8x1xf32>
    %225 = vector.extract_strided_slice %214 {offsets = [1, 0], sizes = [1, 224], strides = [1, 1]} : vector<2x224xf32> to vector<1x224xf32>
    %226 = vector.broadcast %224 : vector<8x1xf32> to vector<8x224xf32>
    %227 = vector.broadcast %225 : vector<1x224xf32> to vector<8x224xf32>
    %228 = arith.mulf %226, %227 : vector<8x224xf32>
    %229 = arith.addf %223, %228 : vector<8x224xf32>
    %cst_91 = arith.constant 0.000000e+00 : f32
    %230 = vector.broadcast %cst_91 : f32 to vector<8x224xf32>
    %231 = arith.maximumf %229, %230 : vector<8x224xf32>
    %c3_92 = arith.constant 3 : index
    %c0_93 = arith.constant 0 : index
    %c0_94 = arith.constant 0 : index
    %232 = vector.load %arg11[%c3_92, %c0_93, %c0_94] : memref<7x2x224xf32, #tpu.memory_space<vmem>>, vector<1x2x224xf32>
    %233 = vector.shape_cast %232 : vector<1x2x224xf32> to vector<2x224xf32>
    %c3_95 = arith.constant 3 : index
    %c0_96 = arith.constant 0 : index
    %c0_97 = arith.constant 0 : index
    %234 = vector.load %arg12[%c3_95, %c0_96, %c0_97] : memref<7x1x224xf32, #tpu.memory_space<vmem>>, vector<1x1x224xf32>
    %235 = vector.shape_cast %234 : vector<1x1x224xf32> to vector<1x224xf32>
    %236 = vector.extract_strided_slice %174 {offsets = [0, 0], sizes = [8, 1], strides = [1, 1]} : vector<8x2xf32> to vector<8x1xf32>
    %237 = vector.extract_strided_slice %233 {offsets = [0, 0], sizes = [1, 224], strides = [1, 1]} : vector<2x224xf32> to vector<1x224xf32>
    %238 = vector.broadcast %236 : vector<8x1xf32> to vector<8x224xf32>
    %239 = vector.broadcast %237 : vector<1x224xf32> to vector<8x224xf32>
    %240 = arith.mulf %238, %239 : vector<8x224xf32>
    %241 = vector.broadcast %235 : vector<1x224xf32> to vector<8x224xf32>
    %242 = arith.addf %241, %240 : vector<8x224xf32>
    %243 = vector.extract_strided_slice %174 {offsets = [0, 1], sizes = [8, 1], strides = [1, 1]} : vector<8x2xf32> to vector<8x1xf32>
    %244 = vector.extract_strided_slice %233 {offsets = [1, 0], sizes = [1, 224], strides = [1, 1]} : vector<2x224xf32> to vector<1x224xf32>
    %245 = vector.broadcast %243 : vector<8x1xf32> to vector<8x224xf32>
    %246 = vector.broadcast %244 : vector<1x224xf32> to vector<8x224xf32>
    %247 = arith.mulf %245, %246 : vector<8x224xf32>
    %248 = arith.addf %242, %247 : vector<8x224xf32>
    %cst_98 = arith.constant 0.000000e+00 : f32
    %249 = vector.broadcast %cst_98 : f32 to vector<8x224xf32>
    %250 = arith.maximumf %248, %249 : vector<8x224xf32>
    %c4_99 = arith.constant 4 : index
    %c0_100 = arith.constant 0 : index
    %c0_101 = arith.constant 0 : index
    %251 = vector.load %arg11[%c4_99, %c0_100, %c0_101] : memref<7x2x224xf32, #tpu.memory_space<vmem>>, vector<1x2x224xf32>
    %252 = vector.shape_cast %251 : vector<1x2x224xf32> to vector<2x224xf32>
    %c4_102 = arith.constant 4 : index
    %c0_103 = arith.constant 0 : index
    %c0_104 = arith.constant 0 : index
    %253 = vector.load %arg12[%c4_102, %c0_103, %c0_104] : memref<7x1x224xf32, #tpu.memory_space<vmem>>, vector<1x1x224xf32>
    %254 = vector.shape_cast %253 : vector<1x1x224xf32> to vector<1x224xf32>
    %255 = vector.extract_strided_slice %174 {offsets = [0, 0], sizes = [8, 1], strides = [1, 1]} : vector<8x2xf32> to vector<8x1xf32>
    %256 = vector.extract_strided_slice %252 {offsets = [0, 0], sizes = [1, 224], strides = [1, 1]} : vector<2x224xf32> to vector<1x224xf32>
    %257 = vector.broadcast %255 : vector<8x1xf32> to vector<8x224xf32>
    %258 = vector.broadcast %256 : vector<1x224xf32> to vector<8x224xf32>
    %259 = arith.mulf %257, %258 : vector<8x224xf32>
    %260 = vector.broadcast %254 : vector<1x224xf32> to vector<8x224xf32>
    %261 = arith.addf %260, %259 : vector<8x224xf32>
    %262 = vector.extract_strided_slice %174 {offsets = [0, 1], sizes = [8, 1], strides = [1, 1]} : vector<8x2xf32> to vector<8x1xf32>
    %263 = vector.extract_strided_slice %252 {offsets = [1, 0], sizes = [1, 224], strides = [1, 1]} : vector<2x224xf32> to vector<1x224xf32>
    %264 = vector.broadcast %262 : vector<8x1xf32> to vector<8x224xf32>
    %265 = vector.broadcast %263 : vector<1x224xf32> to vector<8x224xf32>
    %266 = arith.mulf %264, %265 : vector<8x224xf32>
    %267 = arith.addf %261, %266 : vector<8x224xf32>
    %cst_105 = arith.constant 0.000000e+00 : f32
    %268 = vector.broadcast %cst_105 : f32 to vector<8x224xf32>
    %269 = arith.maximumf %267, %268 : vector<8x224xf32>
    %c5_106 = arith.constant 5 : index
    %c0_107 = arith.constant 0 : index
    %c0_108 = arith.constant 0 : index
    %270 = vector.load %arg11[%c5_106, %c0_107, %c0_108] : memref<7x2x224xf32, #tpu.memory_space<vmem>>, vector<1x2x224xf32>
    %271 = vector.shape_cast %270 : vector<1x2x224xf32> to vector<2x224xf32>
    %c5_109 = arith.constant 5 : index
    %c0_110 = arith.constant 0 : index
    %c0_111 = arith.constant 0 : index
    %272 = vector.load %arg12[%c5_109, %c0_110, %c0_111] : memref<7x1x224xf32, #tpu.memory_space<vmem>>, vector<1x1x224xf32>
    %273 = vector.shape_cast %272 : vector<1x1x224xf32> to vector<1x224xf32>
    %274 = vector.extract_strided_slice %174 {offsets = [0, 0], sizes = [8, 1], strides = [1, 1]} : vector<8x2xf32> to vector<8x1xf32>
    %275 = vector.extract_strided_slice %271 {offsets = [0, 0], sizes = [1, 224], strides = [1, 1]} : vector<2x224xf32> to vector<1x224xf32>
    %276 = vector.broadcast %274 : vector<8x1xf32> to vector<8x224xf32>
    %277 = vector.broadcast %275 : vector<1x224xf32> to vector<8x224xf32>
    %278 = arith.mulf %276, %277 : vector<8x224xf32>
    %279 = vector.broadcast %273 : vector<1x224xf32> to vector<8x224xf32>
    %280 = arith.addf %279, %278 : vector<8x224xf32>
    %281 = vector.extract_strided_slice %174 {offsets = [0, 1], sizes = [8, 1], strides = [1, 1]} : vector<8x2xf32> to vector<8x1xf32>
    %282 = vector.extract_strided_slice %271 {offsets = [1, 0], sizes = [1, 224], strides = [1, 1]} : vector<2x224xf32> to vector<1x224xf32>
    %283 = vector.broadcast %281 : vector<8x1xf32> to vector<8x224xf32>
    %284 = vector.broadcast %282 : vector<1x224xf32> to vector<8x224xf32>
    %285 = arith.mulf %283, %284 : vector<8x224xf32>
    %286 = arith.addf %280, %285 : vector<8x224xf32>
    %cst_112 = arith.constant 0.000000e+00 : f32
    %287 = vector.broadcast %cst_112 : f32 to vector<8x224xf32>
    %288 = arith.maximumf %286, %287 : vector<8x224xf32>
    %c6_113 = arith.constant 6 : index
    %c0_114 = arith.constant 0 : index
    %c0_115 = arith.constant 0 : index
    %289 = vector.load %arg11[%c6_113, %c0_114, %c0_115] : memref<7x2x224xf32, #tpu.memory_space<vmem>>, vector<1x2x224xf32>
    %290 = vector.shape_cast %289 : vector<1x2x224xf32> to vector<2x224xf32>
    %c6_116 = arith.constant 6 : index
    %c0_117 = arith.constant 0 : index
    %c0_118 = arith.constant 0 : index
    %291 = vector.load %arg12[%c6_116, %c0_117, %c0_118] : memref<7x1x224xf32, #tpu.memory_space<vmem>>, vector<1x1x224xf32>
    %292 = vector.shape_cast %291 : vector<1x1x224xf32> to vector<1x224xf32>
    %293 = vector.extract_strided_slice %174 {offsets = [0, 0], sizes = [8, 1], strides = [1, 1]} : vector<8x2xf32> to vector<8x1xf32>
    %294 = vector.extract_strided_slice %290 {offsets = [0, 0], sizes = [1, 224], strides = [1, 1]} : vector<2x224xf32> to vector<1x224xf32>
    %295 = vector.broadcast %293 : vector<8x1xf32> to vector<8x224xf32>
    %296 = vector.broadcast %294 : vector<1x224xf32> to vector<8x224xf32>
    %297 = arith.mulf %295, %296 : vector<8x224xf32>
    %298 = vector.broadcast %292 : vector<1x224xf32> to vector<8x224xf32>
    %299 = arith.addf %298, %297 : vector<8x224xf32>
    %300 = vector.extract_strided_slice %174 {offsets = [0, 1], sizes = [8, 1], strides = [1, 1]} : vector<8x2xf32> to vector<8x1xf32>
    %301 = vector.extract_strided_slice %290 {offsets = [1, 0], sizes = [1, 224], strides = [1, 1]} : vector<2x224xf32> to vector<1x224xf32>
    %302 = vector.broadcast %300 : vector<8x1xf32> to vector<8x224xf32>
    %303 = vector.broadcast %301 : vector<1x224xf32> to vector<8x224xf32>
    %304 = arith.mulf %302, %303 : vector<8x224xf32>
    %305 = arith.addf %299, %304 : vector<8x224xf32>
    %cst_119 = arith.constant 0.000000e+00 : f32
    %306 = vector.broadcast %cst_119 : f32 to vector<8x224xf32>
    %307 = arith.maximumf %305, %306 : vector<8x224xf32>
    %308 = tpu.concatenate %193, %212, %231, %250, %269, %288, %307 in 0 : vector<8x224xf32>, vector<8x224xf32>, vector<8x224xf32>, vector<8x224xf32>, vector<8x224xf32>, vector<8x224xf32>, vector<8x224xf32> -> vector<56x224xf32>
    %cst_120 = arith.constant 0.000000e+00 : f32
    %309 = vector.broadcast %cst_120 : f32 to vector<8x224xf32>
    %310 = vector.extract_strided_slice %308 {offsets = [8, 0], sizes = [8, 224], strides = [1, 1]} : vector<56x224xf32> to vector<8x224xf32>
    %311 = vector.extract_strided_slice %308 {offsets = [16, 0], sizes = [8, 224], strides = [1, 1]} : vector<56x224xf32> to vector<8x224xf32>
    %312 = vector.extract_strided_slice %308 {offsets = [24, 0], sizes = [8, 224], strides = [1, 1]} : vector<56x224xf32> to vector<8x224xf32>
    %313 = vector.extract_strided_slice %308 {offsets = [32, 0], sizes = [8, 224], strides = [1, 1]} : vector<56x224xf32> to vector<8x224xf32>
    %314 = vector.extract_strided_slice %308 {offsets = [40, 0], sizes = [8, 224], strides = [1, 1]} : vector<56x224xf32> to vector<8x224xf32>
    %315 = vector.extract_strided_slice %308 {offsets = [48, 0], sizes = [8, 224], strides = [1, 1]} : vector<56x224xf32> to vector<8x224xf32>
    %316 = tpu.concatenate %309, %310, %309, %311, %309, %312, %309, %313, %309, %314, %309, %315, %309, %309 in 0 : vector<8x224xf32>, vector<8x224xf32>, vector<8x224xf32>, vector<8x224xf32>, vector<8x224xf32>, vector<8x224xf32>, vector<8x224xf32>, vector<8x224xf32>, vector<8x224xf32>, vector<8x224xf32>, vector<8x224xf32>, vector<8x224xf32>, vector<8x224xf32>, vector<8x224xf32> -> vector<112x224xf32>
    %317 = arith.truncf %316 : vector<112x224xf32> to vector<112x224xbf16>
    %c0_121 = arith.constant 0 : index
    %c0_122 = arith.constant 0 : index
    %c0_123 = arith.constant 0 : index
    %318 = vector.load %arg13[%c0_121, %c0_122, %c0_123] : memref<4x224x224xbf16, #tpu.memory_space<vmem>>, vector<1x224x224xbf16>
    %319 = vector.shape_cast %318 : vector<1x224x224xbf16> to vector<224x224xbf16>
    %cst_124 = arith.constant dense<0.000000e+00> : vector<112x224xf32>
    %320 = tpu.matmul %317, %319, %cst_124 {dimension_numbers = #tpu.dot_dimension_numbers<[1], [0], [0], [1], [0, 0, 1, 1], [], []>} : vector<112x224xbf16>, vector<224x224xbf16>, vector<112x224xf32> -> vector<112x224xf32>
    %321 = vector.extract_strided_slice %308 {offsets = [0, 0], sizes = [8, 224], strides = [1, 1]} : vector<56x224xf32> to vector<8x224xf32>
    %322 = vector.extract_strided_slice %308 {offsets = [8, 0], sizes = [8, 224], strides = [1, 1]} : vector<56x224xf32> to vector<8x224xf32>
    %323 = vector.extract_strided_slice %308 {offsets = [16, 0], sizes = [8, 224], strides = [1, 1]} : vector<56x224xf32> to vector<8x224xf32>
    %324 = vector.extract_strided_slice %308 {offsets = [24, 0], sizes = [8, 224], strides = [1, 1]} : vector<56x224xf32> to vector<8x224xf32>
    %325 = vector.extract_strided_slice %308 {offsets = [32, 0], sizes = [8, 224], strides = [1, 1]} : vector<56x224xf32> to vector<8x224xf32>
    %326 = vector.extract_strided_slice %308 {offsets = [40, 0], sizes = [8, 224], strides = [1, 1]} : vector<56x224xf32> to vector<8x224xf32>
    %327 = vector.extract_strided_slice %308 {offsets = [48, 0], sizes = [8, 224], strides = [1, 1]} : vector<56x224xf32> to vector<8x224xf32>
    %328 = tpu.concatenate %321, %309, %322, %309, %323, %309, %324, %309, %325, %309, %326, %309, %327, %309 in 0 : vector<8x224xf32>, vector<8x224xf32>, vector<8x224xf32>, vector<8x224xf32>, vector<8x224xf32>, vector<8x224xf32>, vector<8x224xf32>, vector<8x224xf32>, vector<8x224xf32>, vector<8x224xf32>, vector<8x224xf32>, vector<8x224xf32>, vector<8x224xf32>, vector<8x224xf32> -> vector<112x224xf32>
    %329 = arith.truncf %328 : vector<112x224xf32> to vector<112x224xbf16>
    %c1_125 = arith.constant 1 : index
    %c0_126 = arith.constant 0 : index
    %c0_127 = arith.constant 0 : index
    %330 = vector.load %arg13[%c1_125, %c0_126, %c0_127] : memref<4x224x224xbf16, #tpu.memory_space<vmem>>, vector<1x224x224xbf16>
    %331 = vector.shape_cast %330 : vector<1x224x224xbf16> to vector<224x224xbf16>
    %cst_128 = arith.constant dense<0.000000e+00> : vector<112x224xf32>
    %332 = tpu.matmul %329, %331, %cst_128 {dimension_numbers = #tpu.dot_dimension_numbers<[1], [0], [0], [1], [0, 0, 1, 1], [], []>} : vector<112x224xbf16>, vector<224x224xbf16>, vector<112x224xf32> -> vector<112x224xf32>
    %333 = arith.addf %320, %332 : vector<112x224xf32>
    %334 = vector.extract_strided_slice %308 {offsets = [0, 0], sizes = [8, 224], strides = [1, 1]} : vector<56x224xf32> to vector<8x224xf32>
    %335 = vector.extract_strided_slice %308 {offsets = [8, 0], sizes = [8, 224], strides = [1, 1]} : vector<56x224xf32> to vector<8x224xf32>
    %336 = vector.extract_strided_slice %308 {offsets = [16, 0], sizes = [8, 224], strides = [1, 1]} : vector<56x224xf32> to vector<8x224xf32>
    %337 = vector.extract_strided_slice %308 {offsets = [24, 0], sizes = [8, 224], strides = [1, 1]} : vector<56x224xf32> to vector<8x224xf32>
    %338 = vector.extract_strided_slice %308 {offsets = [32, 0], sizes = [8, 224], strides = [1, 1]} : vector<56x224xf32> to vector<8x224xf32>
    %339 = vector.extract_strided_slice %308 {offsets = [40, 0], sizes = [8, 224], strides = [1, 1]} : vector<56x224xf32> to vector<8x224xf32>
    %340 = vector.extract_strided_slice %308 {offsets = [48, 0], sizes = [8, 224], strides = [1, 1]} : vector<56x224xf32> to vector<8x224xf32>
    %341 = tpu.concatenate %309, %334, %309, %335, %309, %336, %309, %337, %309, %338, %309, %339, %309, %340 in 0 : vector<8x224xf32>, vector<8x224xf32>, vector<8x224xf32>, vector<8x224xf32>, vector<8x224xf32>, vector<8x224xf32>, vector<8x224xf32>, vector<8x224xf32>, vector<8x224xf32>, vector<8x224xf32>, vector<8x224xf32>, vector<8x224xf32>, vector<8x224xf32>, vector<8x224xf32> -> vector<112x224xf32>
    %342 = arith.truncf %341 : vector<112x224xf32> to vector<112x224xbf16>
    %c2_129 = arith.constant 2 : index
    %c0_130 = arith.constant 0 : index
    %c0_131 = arith.constant 0 : index
    %343 = vector.load %arg13[%c2_129, %c0_130, %c0_131] : memref<4x224x224xbf16, #tpu.memory_space<vmem>>, vector<1x224x224xbf16>
    %344 = vector.shape_cast %343 : vector<1x224x224xbf16> to vector<224x224xbf16>
    %cst_132 = arith.constant dense<0.000000e+00> : vector<112x224xf32>
    %345 = tpu.matmul %342, %344, %cst_132 {dimension_numbers = #tpu.dot_dimension_numbers<[1], [0], [0], [1], [0, 0, 1, 1], [], []>} : vector<112x224xbf16>, vector<224x224xbf16>, vector<112x224xf32> -> vector<112x224xf32>
    %346 = arith.addf %333, %345 : vector<112x224xf32>
    %347 = vector.extract_strided_slice %308 {offsets = [0, 0], sizes = [8, 224], strides = [1, 1]} : vector<56x224xf32> to vector<8x224xf32>
    %348 = vector.extract_strided_slice %308 {offsets = [8, 0], sizes = [8, 224], strides = [1, 1]} : vector<56x224xf32> to vector<8x224xf32>
    %349 = vector.extract_strided_slice %308 {offsets = [16, 0], sizes = [8, 224], strides = [1, 1]} : vector<56x224xf32> to vector<8x224xf32>
    %350 = vector.extract_strided_slice %308 {offsets = [24, 0], sizes = [8, 224], strides = [1, 1]} : vector<56x224xf32> to vector<8x224xf32>
    %351 = vector.extract_strided_slice %308 {offsets = [32, 0], sizes = [8, 224], strides = [1, 1]} : vector<56x224xf32> to vector<8x224xf32>
    %352 = vector.extract_strided_slice %308 {offsets = [40, 0], sizes = [8, 224], strides = [1, 1]} : vector<56x224xf32> to vector<8x224xf32>
    %353 = tpu.concatenate %309, %309, %347, %309, %348, %309, %349, %309, %350, %309, %351, %309, %352, %309 in 0 : vector<8x224xf32>, vector<8x224xf32>, vector<8x224xf32>, vector<8x224xf32>, vector<8x224xf32>, vector<8x224xf32>, vector<8x224xf32>, vector<8x224xf32>, vector<8x224xf32>, vector<8x224xf32>, vector<8x224xf32>, vector<8x224xf32>, vector<8x224xf32>, vector<8x224xf32> -> vector<112x224xf32>
    %354 = arith.truncf %353 : vector<112x224xf32> to vector<112x224xbf16>
    %c3_133 = arith.constant 3 : index
    %c0_134 = arith.constant 0 : index
    %c0_135 = arith.constant 0 : index
    %355 = vector.load %arg13[%c3_133, %c0_134, %c0_135] : memref<4x224x224xbf16, #tpu.memory_space<vmem>>, vector<1x224x224xbf16>
    %356 = vector.shape_cast %355 : vector<1x224x224xbf16> to vector<224x224xbf16>
    %cst_136 = arith.constant dense<0.000000e+00> : vector<112x224xf32>
    %357 = tpu.matmul %354, %356, %cst_136 {dimension_numbers = #tpu.dot_dimension_numbers<[1], [0], [0], [1], [0, 0, 1, 1], [], []>} : vector<112x224xbf16>, vector<224x224xbf16>, vector<112x224xf32> -> vector<112x224xf32>
    %358 = arith.addf %346, %357 : vector<112x224xf32>
    %c0_137 = arith.constant 0 : index
    %c0_138 = arith.constant 0 : index
    %359 = vector.load %arg14[%c0_137, %c0_138] : memref<1x224xf32, #tpu.memory_space<vmem>>, vector<1x224xf32>
    %360 = vector.broadcast %359 : vector<1x224xf32> to vector<112x224xf32>
    %361 = arith.addf %358, %360 : vector<112x224xf32>
    %cst_139 = arith.constant 0.000000e+00 : f32
    %362 = vector.broadcast %cst_139 : f32 to vector<112x224xf32>
    %363 = arith.maximumf %361, %362 : vector<112x224xf32>
    %cst_140 = arith.constant 0.000000e+00 : f32
    %364 = vector.broadcast %cst_140 : f32 to vector<8x224xf32>
    %365 = vector.extract_strided_slice %363 {offsets = [8, 0], sizes = [8, 224], strides = [1, 1]} : vector<112x224xf32> to vector<8x224xf32>
    %366 = vector.extract_strided_slice %363 {offsets = [16, 0], sizes = [8, 224], strides = [1, 1]} : vector<112x224xf32> to vector<8x224xf32>
    %367 = vector.extract_strided_slice %363 {offsets = [24, 0], sizes = [8, 224], strides = [1, 1]} : vector<112x224xf32> to vector<8x224xf32>
    %368 = vector.extract_strided_slice %363 {offsets = [32, 0], sizes = [8, 224], strides = [1, 1]} : vector<112x224xf32> to vector<8x224xf32>
    %369 = vector.extract_strided_slice %363 {offsets = [40, 0], sizes = [8, 224], strides = [1, 1]} : vector<112x224xf32> to vector<8x224xf32>
    %370 = vector.extract_strided_slice %363 {offsets = [48, 0], sizes = [8, 224], strides = [1, 1]} : vector<112x224xf32> to vector<8x224xf32>
    %371 = vector.extract_strided_slice %363 {offsets = [56, 0], sizes = [8, 224], strides = [1, 1]} : vector<112x224xf32> to vector<8x224xf32>
    %372 = vector.extract_strided_slice %363 {offsets = [64, 0], sizes = [8, 224], strides = [1, 1]} : vector<112x224xf32> to vector<8x224xf32>
    %373 = vector.extract_strided_slice %363 {offsets = [72, 0], sizes = [8, 224], strides = [1, 1]} : vector<112x224xf32> to vector<8x224xf32>
    %374 = vector.extract_strided_slice %363 {offsets = [80, 0], sizes = [8, 224], strides = [1, 1]} : vector<112x224xf32> to vector<8x224xf32>
    %375 = vector.extract_strided_slice %363 {offsets = [88, 0], sizes = [8, 224], strides = [1, 1]} : vector<112x224xf32> to vector<8x224xf32>
    %376 = vector.extract_strided_slice %363 {offsets = [96, 0], sizes = [8, 224], strides = [1, 1]} : vector<112x224xf32> to vector<8x224xf32>
    %377 = vector.extract_strided_slice %363 {offsets = [104, 0], sizes = [8, 224], strides = [1, 1]} : vector<112x224xf32> to vector<8x224xf32>
    %378 = tpu.concatenate %364, %365, %364, %366, %364, %367, %364, %368, %364, %369, %364, %370, %364, %371, %364, %372 in 0 : vector<8x224xf32>, vector<8x224xf32>, vector<8x224xf32>, vector<8x224xf32>, vector<8x224xf32>, vector<8x224xf32>, vector<8x224xf32>, vector<8x224xf32>, vector<8x224xf32>, vector<8x224xf32>, vector<8x224xf32>, vector<8x224xf32>, vector<8x224xf32>, vector<8x224xf32>, vector<8x224xf32>, vector<8x224xf32> -> vector<128x224xf32>
    %379 = tpu.concatenate %364, %373, %364, %374, %364, %375, %364, %376, %364, %377, %364, %364 in 0 : vector<8x224xf32>, vector<8x224xf32>, vector<8x224xf32>, vector<8x224xf32>, vector<8x224xf32>, vector<8x224xf32>, vector<8x224xf32>, vector<8x224xf32>, vector<8x224xf32>, vector<8x224xf32>, vector<8x224xf32>, vector<8x224xf32> -> vector<96x224xf32>
    %380 = tpu.concatenate %378, %379 in 0 : vector<128x224xf32>, vector<96x224xf32> -> vector<224x224xf32>
    %381 = arith.truncf %380 : vector<224x224xf32> to vector<224x224xbf16>
    %c0_141 = arith.constant 0 : index
    %c0_142 = arith.constant 0 : index
    %c0_143 = arith.constant 0 : index
    %382 = vector.load %arg15[%c0_141, %c0_142, %c0_143] : memref<4x224x128xbf16, #tpu.memory_space<vmem>>, vector<1x224x128xbf16>
    %383 = vector.shape_cast %382 : vector<1x224x128xbf16> to vector<224x128xbf16>
    %cst_144 = arith.constant dense<0.000000e+00> : vector<224x128xf32>
    %384 = tpu.matmul %381, %383, %cst_144 {dimension_numbers = #tpu.dot_dimension_numbers<[1], [0], [0], [1], [0, 0, 1, 1], [], []>} : vector<224x224xbf16>, vector<224x128xbf16>, vector<224x128xf32> -> vector<224x128xf32>
    %385 = vector.extract_strided_slice %363 {offsets = [0, 0], sizes = [8, 224], strides = [1, 1]} : vector<112x224xf32> to vector<8x224xf32>
    %386 = vector.extract_strided_slice %363 {offsets = [8, 0], sizes = [8, 224], strides = [1, 1]} : vector<112x224xf32> to vector<8x224xf32>
    %387 = vector.extract_strided_slice %363 {offsets = [16, 0], sizes = [8, 224], strides = [1, 1]} : vector<112x224xf32> to vector<8x224xf32>
    %388 = vector.extract_strided_slice %363 {offsets = [24, 0], sizes = [8, 224], strides = [1, 1]} : vector<112x224xf32> to vector<8x224xf32>
    %389 = vector.extract_strided_slice %363 {offsets = [32, 0], sizes = [8, 224], strides = [1, 1]} : vector<112x224xf32> to vector<8x224xf32>
    %390 = vector.extract_strided_slice %363 {offsets = [40, 0], sizes = [8, 224], strides = [1, 1]} : vector<112x224xf32> to vector<8x224xf32>
    %391 = vector.extract_strided_slice %363 {offsets = [48, 0], sizes = [8, 224], strides = [1, 1]} : vector<112x224xf32> to vector<8x224xf32>
    %392 = vector.extract_strided_slice %363 {offsets = [56, 0], sizes = [8, 224], strides = [1, 1]} : vector<112x224xf32> to vector<8x224xf32>
    %393 = vector.extract_strided_slice %363 {offsets = [64, 0], sizes = [8, 224], strides = [1, 1]} : vector<112x224xf32> to vector<8x224xf32>
    %394 = vector.extract_strided_slice %363 {offsets = [72, 0], sizes = [8, 224], strides = [1, 1]} : vector<112x224xf32> to vector<8x224xf32>
    %395 = vector.extract_strided_slice %363 {offsets = [80, 0], sizes = [8, 224], strides = [1, 1]} : vector<112x224xf32> to vector<8x224xf32>
    %396 = vector.extract_strided_slice %363 {offsets = [88, 0], sizes = [8, 224], strides = [1, 1]} : vector<112x224xf32> to vector<8x224xf32>
    %397 = vector.extract_strided_slice %363 {offsets = [96, 0], sizes = [8, 224], strides = [1, 1]} : vector<112x224xf32> to vector<8x224xf32>
    %398 = vector.extract_strided_slice %363 {offsets = [104, 0], sizes = [8, 224], strides = [1, 1]} : vector<112x224xf32> to vector<8x224xf32>
    %399 = tpu.concatenate %385, %364, %386, %364, %387, %364, %388, %364, %389, %364, %390, %364, %391, %364, %392, %364 in 0 : vector<8x224xf32>, vector<8x224xf32>, vector<8x224xf32>, vector<8x224xf32>, vector<8x224xf32>, vector<8x224xf32>, vector<8x224xf32>, vector<8x224xf32>, vector<8x224xf32>, vector<8x224xf32>, vector<8x224xf32>, vector<8x224xf32>, vector<8x224xf32>, vector<8x224xf32>, vector<8x224xf32>, vector<8x224xf32> -> vector<128x224xf32>
    %400 = tpu.concatenate %393, %364, %394, %364, %395, %364, %396, %364, %397, %364, %398, %364 in 0 : vector<8x224xf32>, vector<8x224xf32>, vector<8x224xf32>, vector<8x224xf32>, vector<8x224xf32>, vector<8x224xf32>, vector<8x224xf32>, vector<8x224xf32>, vector<8x224xf32>, vector<8x224xf32>, vector<8x224xf32>, vector<8x224xf32> -> vector<96x224xf32>
    %401 = tpu.concatenate %399, %400 in 0 : vector<128x224xf32>, vector<96x224xf32> -> vector<224x224xf32>
    %402 = arith.truncf %401 : vector<224x224xf32> to vector<224x224xbf16>
    %c1_145 = arith.constant 1 : index
    %c0_146 = arith.constant 0 : index
    %c0_147 = arith.constant 0 : index
    %403 = vector.load %arg15[%c1_145, %c0_146, %c0_147] : memref<4x224x128xbf16, #tpu.memory_space<vmem>>, vector<1x224x128xbf16>
    %404 = vector.shape_cast %403 : vector<1x224x128xbf16> to vector<224x128xbf16>
    %cst_148 = arith.constant dense<0.000000e+00> : vector<224x128xf32>
    %405 = tpu.matmul %402, %404, %cst_148 {dimension_numbers = #tpu.dot_dimension_numbers<[1], [0], [0], [1], [0, 0, 1, 1], [], []>} : vector<224x224xbf16>, vector<224x128xbf16>, vector<224x128xf32> -> vector<224x128xf32>
    %406 = arith.addf %384, %405 : vector<224x128xf32>
    %407 = vector.extract_strided_slice %363 {offsets = [0, 0], sizes = [8, 224], strides = [1, 1]} : vector<112x224xf32> to vector<8x224xf32>
    %408 = vector.extract_strided_slice %363 {offsets = [8, 0], sizes = [8, 224], strides = [1, 1]} : vector<112x224xf32> to vector<8x224xf32>
    %409 = vector.extract_strided_slice %363 {offsets = [16, 0], sizes = [8, 224], strides = [1, 1]} : vector<112x224xf32> to vector<8x224xf32>
    %410 = vector.extract_strided_slice %363 {offsets = [24, 0], sizes = [8, 224], strides = [1, 1]} : vector<112x224xf32> to vector<8x224xf32>
    %411 = vector.extract_strided_slice %363 {offsets = [32, 0], sizes = [8, 224], strides = [1, 1]} : vector<112x224xf32> to vector<8x224xf32>
    %412 = vector.extract_strided_slice %363 {offsets = [40, 0], sizes = [8, 224], strides = [1, 1]} : vector<112x224xf32> to vector<8x224xf32>
    %413 = vector.extract_strided_slice %363 {offsets = [48, 0], sizes = [8, 224], strides = [1, 1]} : vector<112x224xf32> to vector<8x224xf32>
    %414 = vector.extract_strided_slice %363 {offsets = [56, 0], sizes = [8, 224], strides = [1, 1]} : vector<112x224xf32> to vector<8x224xf32>
    %415 = vector.extract_strided_slice %363 {offsets = [64, 0], sizes = [8, 224], strides = [1, 1]} : vector<112x224xf32> to vector<8x224xf32>
    %416 = vector.extract_strided_slice %363 {offsets = [72, 0], sizes = [8, 224], strides = [1, 1]} : vector<112x224xf32> to vector<8x224xf32>
    %417 = vector.extract_strided_slice %363 {offsets = [80, 0], sizes = [8, 224], strides = [1, 1]} : vector<112x224xf32> to vector<8x224xf32>
    %418 = vector.extract_strided_slice %363 {offsets = [88, 0], sizes = [8, 224], strides = [1, 1]} : vector<112x224xf32> to vector<8x224xf32>
    %419 = vector.extract_strided_slice %363 {offsets = [96, 0], sizes = [8, 224], strides = [1, 1]} : vector<112x224xf32> to vector<8x224xf32>
    %420 = vector.extract_strided_slice %363 {offsets = [104, 0], sizes = [8, 224], strides = [1, 1]} : vector<112x224xf32> to vector<8x224xf32>
    %421 = tpu.concatenate %364, %407, %364, %408, %364, %409, %364, %410, %364, %411, %364, %412, %364, %413, %364, %414 in 0 : vector<8x224xf32>, vector<8x224xf32>, vector<8x224xf32>, vector<8x224xf32>, vector<8x224xf32>, vector<8x224xf32>, vector<8x224xf32>, vector<8x224xf32>, vector<8x224xf32>, vector<8x224xf32>, vector<8x224xf32>, vector<8x224xf32>, vector<8x224xf32>, vector<8x224xf32>, vector<8x224xf32>, vector<8x224xf32> -> vector<128x224xf32>
    %422 = tpu.concatenate %364, %415, %364, %416, %364, %417, %364, %418, %364, %419, %364, %420 in 0 : vector<8x224xf32>, vector<8x224xf32>, vector<8x224xf32>, vector<8x224xf32>, vector<8x224xf32>, vector<8x224xf32>, vector<8x224xf32>, vector<8x224xf32>, vector<8x224xf32>, vector<8x224xf32>, vector<8x224xf32>, vector<8x224xf32> -> vector<96x224xf32>
    %423 = tpu.concatenate %421, %422 in 0 : vector<128x224xf32>, vector<96x224xf32> -> vector<224x224xf32>
    %424 = arith.truncf %423 : vector<224x224xf32> to vector<224x224xbf16>
    %c2_149 = arith.constant 2 : index
    %c0_150 = arith.constant 0 : index
    %c0_151 = arith.constant 0 : index
    %425 = vector.load %arg15[%c2_149, %c0_150, %c0_151] : memref<4x224x128xbf16, #tpu.memory_space<vmem>>, vector<1x224x128xbf16>
    %426 = vector.shape_cast %425 : vector<1x224x128xbf16> to vector<224x128xbf16>
    %cst_152 = arith.constant dense<0.000000e+00> : vector<224x128xf32>
    %427 = tpu.matmul %424, %426, %cst_152 {dimension_numbers = #tpu.dot_dimension_numbers<[1], [0], [0], [1], [0, 0, 1, 1], [], []>} : vector<224x224xbf16>, vector<224x128xbf16>, vector<224x128xf32> -> vector<224x128xf32>
    %428 = arith.addf %406, %427 : vector<224x128xf32>
    %429 = vector.extract_strided_slice %363 {offsets = [0, 0], sizes = [8, 224], strides = [1, 1]} : vector<112x224xf32> to vector<8x224xf32>
    %430 = vector.extract_strided_slice %363 {offsets = [8, 0], sizes = [8, 224], strides = [1, 1]} : vector<112x224xf32> to vector<8x224xf32>
    %431 = vector.extract_strided_slice %363 {offsets = [16, 0], sizes = [8, 224], strides = [1, 1]} : vector<112x224xf32> to vector<8x224xf32>
    %432 = vector.extract_strided_slice %363 {offsets = [24, 0], sizes = [8, 224], strides = [1, 1]} : vector<112x224xf32> to vector<8x224xf32>
    %433 = vector.extract_strided_slice %363 {offsets = [32, 0], sizes = [8, 224], strides = [1, 1]} : vector<112x224xf32> to vector<8x224xf32>
    %434 = vector.extract_strided_slice %363 {offsets = [40, 0], sizes = [8, 224], strides = [1, 1]} : vector<112x224xf32> to vector<8x224xf32>
    %435 = vector.extract_strided_slice %363 {offsets = [48, 0], sizes = [8, 224], strides = [1, 1]} : vector<112x224xf32> to vector<8x224xf32>
    %436 = vector.extract_strided_slice %363 {offsets = [56, 0], sizes = [8, 224], strides = [1, 1]} : vector<112x224xf32> to vector<8x224xf32>
    %437 = vector.extract_strided_slice %363 {offsets = [64, 0], sizes = [8, 224], strides = [1, 1]} : vector<112x224xf32> to vector<8x224xf32>
    %438 = vector.extract_strided_slice %363 {offsets = [72, 0], sizes = [8, 224], strides = [1, 1]} : vector<112x224xf32> to vector<8x224xf32>
    %439 = vector.extract_strided_slice %363 {offsets = [80, 0], sizes = [8, 224], strides = [1, 1]} : vector<112x224xf32> to vector<8x224xf32>
    %440 = vector.extract_strided_slice %363 {offsets = [88, 0], sizes = [8, 224], strides = [1, 1]} : vector<112x224xf32> to vector<8x224xf32>
    %441 = vector.extract_strided_slice %363 {offsets = [96, 0], sizes = [8, 224], strides = [1, 1]} : vector<112x224xf32> to vector<8x224xf32>
    %442 = tpu.concatenate %364, %364, %429, %364, %430, %364, %431, %364, %432, %364, %433, %364, %434, %364, %435, %364 in 0 : vector<8x224xf32>, vector<8x224xf32>, vector<8x224xf32>, vector<8x224xf32>, vector<8x224xf32>, vector<8x224xf32>, vector<8x224xf32>, vector<8x224xf32>, vector<8x224xf32>, vector<8x224xf32>, vector<8x224xf32>, vector<8x224xf32>, vector<8x224xf32>, vector<8x224xf32>, vector<8x224xf32>, vector<8x224xf32> -> vector<128x224xf32>
    %443 = tpu.concatenate %436, %364, %437, %364, %438, %364, %439, %364, %440, %364, %441, %364 in 0 : vector<8x224xf32>, vector<8x224xf32>, vector<8x224xf32>, vector<8x224xf32>, vector<8x224xf32>, vector<8x224xf32>, vector<8x224xf32>, vector<8x224xf32>, vector<8x224xf32>, vector<8x224xf32>, vector<8x224xf32>, vector<8x224xf32> -> vector<96x224xf32>
    %444 = tpu.concatenate %442, %443 in 0 : vector<128x224xf32>, vector<96x224xf32> -> vector<224x224xf32>
    %445 = arith.truncf %444 : vector<224x224xf32> to vector<224x224xbf16>
    %c3_153 = arith.constant 3 : index
    %c0_154 = arith.constant 0 : index
    %c0_155 = arith.constant 0 : index
    %446 = vector.load %arg15[%c3_153, %c0_154, %c0_155] : memref<4x224x128xbf16, #tpu.memory_space<vmem>>, vector<1x224x128xbf16>
    %447 = vector.shape_cast %446 : vector<1x224x128xbf16> to vector<224x128xbf16>
    %cst_156 = arith.constant dense<0.000000e+00> : vector<224x128xf32>
    %448 = tpu.matmul %445, %447, %cst_156 {dimension_numbers = #tpu.dot_dimension_numbers<[1], [0], [0], [1], [0, 0, 1, 1], [], []>} : vector<224x224xbf16>, vector<224x128xbf16>, vector<224x128xf32> -> vector<224x128xf32>
    %449 = arith.addf %428, %448 : vector<224x128xf32>
    %c0_157 = arith.constant 0 : index
    %c0_158 = arith.constant 0 : index
    %450 = vector.load %arg16[%c0_157, %c0_158] : memref<1x128xf32, #tpu.memory_space<vmem>>, vector<1x128xf32>
    %451 = vector.broadcast %450 : vector<1x128xf32> to vector<224x128xf32>
    %452 = arith.addf %449, %451 : vector<224x128xf32>
    %c0_159 = arith.constant 0 : index
    %c0_160 = arith.constant 0 : index
    %c0_161 = arith.constant 0 : index
    %453 = vector.load %arg17[%c0_159, %c0_160, %c0_161] : memref<1x224x128xf32, #tpu.memory_space<vmem>>, vector<1x224x128xf32>
    %454 = vector.shape_cast %453 : vector<1x224x128xf32> to vector<224x128xf32>
    %455 = vector.shape_cast %452 : vector<224x128xf32> to vector<1x224x128xf32>
    tpu.vector_store %arg17[%c0_159, %c0_160, %c0_161], %455 {strides = array<i32>} : memref<1x224x128xf32, #tpu.memory_space<vmem>>, vector<1x224x128xf32>,
    return
  }
  func.func @transform_0(%arg0: i32) -> (i32, i32, i32) {
    %c0_i32 = arith.constant 0 : i32
    %c0_i32_0 = arith.constant 0 : i32
    %c0_i32_1 = arith.constant 0 : i32
    return %arg0, %c0_i32, %c0_i32_0 : i32, i32, i32
  }
  func.func @transform_1(%arg0: i32) -> (i32, i32, i32) {
    %c0_i32 = arith.constant 0 : i32
    %c0_i32_0 = arith.constant 0 : i32
    %c0_i32_1 = arith.constant 0 : i32
    return %arg0, %c0_i32, %c0_i32_0 : i32, i32, i32
  }
  func.func @transform_2(%arg0: i32) -> (i32, i32, i32) {
    %c0_i32 = arith.constant 0 : i32
    %c0_i32_0 = arith.constant 0 : i32
    %c0_i32_1 = arith.constant 0 : i32
    %c0_i32_2 = arith.constant 0 : i32
    return %c0_i32, %c0_i32_0, %c0_i32_1 : i32, i32, i32
  }
  func.func @transform_3(%arg0: i32) -> (i32, i32) {
    %c0_i32 = arith.constant 0 : i32
    %c0_i32_0 = arith.constant 0 : i32
    %c0_i32_1 = arith.constant 0 : i32
    return %c0_i32, %c0_i32_0 : i32, i32
  }
  func.func @transform_4(%arg0: i32) -> (i32, i32, i32) {
    %c0_i32 = arith.constant 0 : i32
    %c0_i32_0 = arith.constant 0 : i32
    %c0_i32_1 = arith.constant 0 : i32
    %c0_i32_2 = arith.constant 0 : i32
    return %c0_i32, %c0_i32_0, %c0_i32_1 : i32, i32, i32
  }
  func.func @transform_5(%arg0: i32) -> (i32, i32) {
    %c0_i32 = arith.constant 0 : i32
    %c0_i32_0 = arith.constant 0 : i32
    %c0_i32_1 = arith.constant 0 : i32
    return %c0_i32, %c0_i32_0 : i32, i32
  }
  func.func @transform_6(%arg0: i32) -> (i32, i32, i32) {
    %c0_i32 = arith.constant 0 : i32
    %c0_i32_0 = arith.constant 0 : i32
    %c0_i32_1 = arith.constant 0 : i32
    %c0_i32_2 = arith.constant 0 : i32
    return %c0_i32, %c0_i32_0, %c0_i32_1 : i32, i32, i32
  }
  func.func @transform_7(%arg0: i32) -> (i32, i32) {
    %c0_i32 = arith.constant 0 : i32
    %c0_i32_0 = arith.constant 0 : i32
    %c0_i32_1 = arith.constant 0 : i32
    return %c0_i32, %c0_i32_0 : i32, i32
  }
  func.func @transform_8(%arg0: i32) -> (i32, i32) {
    %c0_i32 = arith.constant 0 : i32
    %c0_i32_0 = arith.constant 0 : i32
    %c0_i32_1 = arith.constant 0 : i32
    return %c0_i32, %c0_i32_0 : i32, i32
  }
  func.func @transform_9(%arg0: i32) -> (i32, i32) {
    %c0_i32 = arith.constant 0 : i32
    %c0_i32_0 = arith.constant 0 : i32
    %c0_i32_1 = arith.constant 0 : i32
    return %c0_i32, %c0_i32_0 : i32, i32
  }
  func.func @transform_10(%arg0: i32) -> (i32, i32, i32) {
    %c0_i32 = arith.constant 0 : i32
    %c0_i32_0 = arith.constant 0 : i32
    %c0_i32_1 = arith.constant 0 : i32
    %c0_i32_2 = arith.constant 0 : i32
    return %c0_i32, %c0_i32_0, %c0_i32_1 : i32, i32, i32
  }
  func.func @transform_11(%arg0: i32) -> (i32, i32, i32) {
    %c0_i32 = arith.constant 0 : i32
    %c0_i32_0 = arith.constant 0 : i32
    %c0_i32_1 = arith.constant 0 : i32
    %c0_i32_2 = arith.constant 0 : i32
    return %c0_i32, %c0_i32_0, %c0_i32_1 : i32, i32, i32
  }
  func.func @transform_12(%arg0: i32) -> (i32, i32, i32) {
    %c0_i32 = arith.constant 0 : i32
    %c0_i32_0 = arith.constant 0 : i32
    %c0_i32_1 = arith.constant 0 : i32
    %c0_i32_2 = arith.constant 0 : i32
    return %c0_i32, %c0_i32_0, %c0_i32_1 : i32, i32, i32
  }
  func.func @transform_13(%arg0: i32) -> (i32, i32) {
    %c0_i32 = arith.constant 0 : i32
    %c0_i32_0 = arith.constant 0 : i32
    %c0_i32_1 = arith.constant 0 : i32
    return %c0_i32, %c0_i32_0 : i32, i32
  }
  func.func @transform_14(%arg0: i32) -> (i32, i32, i32) {
    %c0_i32 = arith.constant 0 : i32
    %c0_i32_0 = arith.constant 0 : i32
    %c0_i32_1 = arith.constant 0 : i32
    %c0_i32_2 = arith.constant 0 : i32
    return %c0_i32, %c0_i32_0, %c0_i32_1 : i32, i32, i32
  }
  func.func @transform_15(%arg0: i32) -> (i32, i32) {
    %c0_i32 = arith.constant 0 : i32
    %c0_i32_0 = arith.constant 0 : i32
    %c0_i32_1 = arith.constant 0 : i32
    return %c0_i32, %c0_i32_0 : i32, i32
  }
  func.func @transform_16(%arg0: i32) -> (i32, i32, i32) {
    %c0_i32 = arith.constant 0 : i32
    %c0_i32_0 = arith.constant 0 : i32
    %c0_i32_1 = arith.constant 0 : i32
    return %arg0, %c0_i32, %c0_i32_0 : i32, i32, i32
  }
  func.func @transform_17(%arg0: i32) -> (i32, i32, i32) {
    %c0_i32 = arith.constant 0 : i32
    %c0_i32_0 = arith.constant 0 : i32
    %c0_i32_1 = arith.constant 0 : i32
    return %arg0, %c0_i32, %c0_i32_0 : i32, i32, i32
  }
}

</mosaic_0001>

<llo_original>
// kernel: convvae_forward.1
$region0: #{convvae_forward.1}
  #allocation0 [shape = 'u32[]', space=smem, size = 0x4, offset = 0x4, fixed_abs, tag = 'smem constant byte address 0x4 - core index']
  #allocation1 [shape = 'u32[144,128]{1,0:T(1,128)}', space=vmem, size = 0x12000, scoped, tag = 'internal scratch']
  %s0 = inlined_call_operand.vmem [shape: f32[2,224,84], index: 0, kind: input, shape index: {}]
  %s1 = inlined_call_operand.vmem [shape: f32[2,8,2], index: 1, kind: input, shape index: {}]
  %s2 = inlined_call_operand.vmem [shape: bf16[3,84,224], index: 2, kind: input, shape index: {}]
  %s3 = inlined_call_operand.vmem [shape: f32[1,224], index: 3, kind: input, shape index: {}]
  %s4 = inlined_call_operand.vmem [shape: bf16[3,224,224], index: 4, kind: input, shape index: {}]
  %s5 = inlined_call_operand.vmem [shape: f32[1,224], index: 5, kind: input, shape index: {}]
  %s6 = inlined_call_operand.vmem [shape: bf16[7,224,64], index: 6, kind: input, shape index: {}]
  %s7 = inlined_call_operand.vmem [shape: f32[1,64], index: 7, kind: input, shape index: {}]
  %s8 = inlined_call_operand.vmem [shape: bf16[64,4], index: 8, kind: input, shape index: {}]
  %s9 = inlined_call_operand.vmem [shape: f32[1,4], index: 9, kind: input, shape index: {}]
  %s10 = inlined_call_operand.vmem [shape: f32[7,2,224], index: 10, kind: input, shape index: {}]
  %s11 = inlined_call_operand.vmem [shape: f32[7,1,224], index: 11, kind: input, shape index: {}]
  %s12 = inlined_call_operand.vmem [shape: bf16[4,224,224], index: 12, kind: input, shape index: {}]
  %s13 = inlined_call_operand.vmem [shape: f32[1,224], index: 13, kind: input, shape index: {}]
  %s14 = inlined_call_operand.vmem [shape: bf16[4,224,128], index: 14, kind: input, shape index: {}]
  %s15 = inlined_call_operand.vmem [shape: f32[1,128], index: 15, kind: input, shape index: {}]
  %s16 = inlined_call_operand.vmem [shape: f32[2,224,128], index: 16, kind: output, shape index: {0}]
  %s17 = inlined_call_operand.vmem [shape: f32[2,8,4], index: 17, kind: output, shape index: {1}]
  %18 = xla_tuple %s16, %s17
  %s19 = sld [smem:[#allocation0]]
  $region105: #{convvae_forward.1} parent=0
    _
  %s21 = ssub.s32 1, %s19
  %s22 = scalar_select 0, %s21, %s19
  loop: start=0, step=1, limit=4
  $region2: #{convvae_forward.1} parent=0 // loop_pre_header
    _
  $region3: #{convvae_forward.1} parent=0 // loop_header
    %s24 = sphi 0, %s28
    %p25 = scmp.ge.s32.totalorder %s24, 4
    %s34 = sphi 0, %s36
    %s37 = sphi 0, %s34
    %s38 = sphi 0, %s37
    %s54 = sphi 0, %s38
    %s60 = sphi 0, %s62
    %s63 = sphi 0, %s60
    %s64 = sphi 0, %s63
    %s80 = sphi 0, %s64
    %s84 = sphi 0, %s84
    %s86 = sphi 0, %s84
    %s87 = sphi 0, %s86
    %s101 = sphi 0, %s87
    %s105 = sphi 0, %s105
    %s107 = sphi 0, %s105
    %s108 = sphi 0, %s107
    %s122 = sphi 0, %s108
    %s126 = sphi 0, %s126
    %s128 = sphi 0, %s126
    %s129 = sphi 0, %s128
    %s143 = sphi 0, %s129
    %s147 = sphi 0, %s147
    %s149 = sphi 0, %s147
    %s150 = sphi 0, %s149
    %s164 = sphi 0, %s150
    %s168 = sphi 0, %s168
    %s170 = sphi 0, %s168
    %s171 = sphi 0, %s170
    %s185 = sphi 0, %s171
    %s189 = sphi 0, %s189
    %s191 = sphi 0, %s189
    %s192 = sphi 0, %s191
    %s206 = sphi 0, %s192
    %s210 = sphi 0, %s210
    %s212 = sphi 0, %s210
    %s213 = sphi 0, %s212
    %s227 = sphi 0, %s213
    %s231 = sphi 0, %s231
    %s233 = sphi 0, %s231
    %s234 = sphi 0, %s233
    %s248 = sphi 0, %s234
    %s252 = sphi 0, %s252
    %s254 = sphi 0, %s252
    %s255 = sphi 0, %s254
    %s269 = sphi 0, %s255
    %s273 = sphi 0, %s273
    %s275 = sphi 0, %s273
    %s276 = sphi 0, %s275
    %s290 = sphi 0, %s276
    %s294 = sphi 0, %s294
    %s296 = sphi 0, %s294
    %s297 = sphi 0, %s296
    %s311 = sphi 0, %s297
    %s315 = sphi 0, %s315
    %s317 = sphi 0, %s315
    %s318 = sphi 0, %s317
    %s332 = sphi 0, %s318
    %s336 = sphi 0, %s336
    %s338 = sphi 0, %s336
    %s339 = sphi 0, %s338
    %s353 = sphi 0, %s339
    %s357 = sphi 0, %s357
    %s359 = sphi 0, %s357
    %s360 = sphi 0, %s359
    %s374 = sphi 0, %s360
    %s380 = sphi 0, %s382
    %s383 = sphi 0, %s380
    %s384 = sphi 0, %s383
    %s400 = sphi 0, %s384
    %s406 = sphi 0, %s408
    %s409 = sphi 0, %s406
    %s410 = sphi 0, %s409
    %s426 = sphi 0, %s410
  $region4: #{convvae_forward.1} parent=0 // loop_header_branch
    %27 = sbr.rel (%p25) target = $region8
  $region5: #{convvae_forward.1} parent=0 // loop_body
    %s29 = ssub.s32 %s24, 1
    %s30 = ssub.s32 %s24, 2
    %s31 = sadd.s32 %s24, 1
    %s32 = ssub.s32 %s24, %s31
    %p33 = scmp.eq.s32.totalorder %s32, 0
    %s35 = sadd.s32 %s34, 1
    %s36 = scalar_select %p33, %s34, %s35
    %p39 = pneg %p33
    %p40 = scmp.eq.s32.totalorder %s24, 1
    %p41 = por %p39, %p40
    %p42 = scmp.ne.s32.totalorder %s34, %s37
    %p43 = scmp.eq.s32.totalorder %s24, 0
    %p44 = por %p42, %p43
    %p45 = scmp.ne.s32.totalorder %s34, %s37
    %p46 = scmp.eq.s32.totalorder %s29, 1
    %p47 = por %p45, %p46
    %p48 = scmp.ne.s32.totalorder %s37, %s38
    %p49 = scmp.eq.s32.totalorder %s29, 0
    %p50 = por %p48, %p49
    %p51 = scmp.ne.s32.totalorder %s37, %s38
    %p52 = scmp.eq.s32.totalorder %s30, 1
    %p53 = por %p51, %p52
    %p55 = scmp.ne.s32.totalorder %s38, %s54
    %p56 = scmp.eq.s32.totalorder %s30, 0
    %p57 = por %p55, %p56
    %s58 = ssub.s32 %s24, %s31
    %p59 = scmp.eq.s32.totalorder %s58, 0
    %s61 = sadd.s32 %s60, 1
    %s62 = scalar_select %p59, %s60, %s61
    %p65 = pneg %p59
    %p66 = scmp.eq.s32.totalorder %s24, 1
    %p67 = por %p65, %p66
    %p68 = scmp.ne.s32.totalorder %s60, %s63
    %p69 = scmp.eq.s32.totalorder %s24, 0
    %p70 = por %p68, %p69
    %p71 = scmp.ne.s32.totalorder %s60, %s63
    %p72 = scmp.eq.s32.totalorder %s29, 1
    %p73 = por %p71, %p72
    %p74 = scmp.ne.s32.totalorder %s63, %s64
    %p75 = scmp.eq.s32.totalorder %s29, 0
    %p76 = por %p74, %p75
    %p77 = scmp.ne.s32.totalorder %s63, %s64
    %p78 = scmp.eq.s32.totalorder %s30, 1
    %p79 = por %p77, %p78
    %p81 = scmp.ne.s32.totalorder %s64, %s80
    %p82 = scmp.eq.s32.totalorder %s30, 0
    %p83 = por %p81, %p82
    %s85 = sadd.s32 %s84, 1
    %p88 = scmp.eq.s32.totalorder %s24, 1
    %p89 = scmp.ne.s32.totalorder %s84, %s86
    %p90 = scmp.eq.s32.totalorder %s24, 0
    %p91 = por %p89, %p90
    %p92 = scmp.ne.s32.totalorder %s84, %s86
    %p93 = scmp.eq.s32.totalorder %s29, 1
    %p94 = por %p92, %p93
    %p95 = scmp.ne.s32.totalorder %s86, %s87
    %p96 = scmp.eq.s32.totalorder %s29, 0
    %p97 = por %p95, %p96
    %p98 = scmp.ne.s32.totalorder %s86, %s87
    %p99 = scmp.eq.s32.totalorder %s30, 1
    %p100 = por %p98, %p99
    %p102 = scmp.ne.s32.totalorder %s87, %s101
    %p103 = scmp.eq.s32.totalorder %s30, 0
    %p104 = por %p102, %p103
    %s106 = sadd.s32 %s105, 1
    %p109 = scmp.eq.s32.totalorder %s24, 1
    %p110 = scmp.ne.s32.totalorder %s105, %s107
    %p111 = scmp.eq.s32.totalorder %s24, 0
    %p112 = por %p110, %p111
    %p113 = scmp.ne.s32.totalorder %s105, %s107
    %p114 = scmp.eq.s32.totalorder %s29, 1
    %p115 = por %p113, %p114
    %p116 = scmp.ne.s32.totalorder %s107, %s108
    %p117 = scmp.eq.s32.totalorder %s29, 0
    %p118 = por %p116, %p117
    %p119 = scmp.ne.s32.totalorder %s107, %s108
    %p120 = scmp.eq.s32.totalorder %s30, 1
    %p121 = por %p119, %p120
    %p123 = scmp.ne.s32.totalorder %s108, %s122
    %p124 = scmp.eq.s32.totalorder %s30, 0
    %p125 = por %p123, %p124
    %s127 = sadd.s32 %s126, 1
    %p130 = scmp.eq.s32.totalorder %s24, 1
    %p131 = scmp.ne.s32.totalorder %s126, %s128
    %p132 = scmp.eq.s32.totalorder %s24, 0
    %p133 = por %p131, %p132
    %p134 = scmp.ne.s32.totalorder %s126, %s128
    %p135 = scmp.eq.s32.totalorder %s29, 1
    %p136 = por %p134, %p135
    %p137 = scmp.ne.s32.totalorder %s128, %s129
    %p138 = scmp.eq.s32.totalorder %s29, 0
    %p139 = por %p137, %p138
    %p140 = scmp.ne.s32.totalorder %s128, %s129
    %p141 = scmp.eq.s32.totalorder %s30, 1
    %p142 = por %p140, %p141
    %p144 = scmp.ne.s32.totalorder %s129, %s143
    %p145 = scmp.eq.s32.totalorder %s30, 0
    %p146 = por %p144, %p145
    %s148 = sadd.s32 %s147, 1
    %p151 = scmp.eq.s32.totalorder %s24, 1
    %p152 = scmp.ne.s32.totalorder %s147, %s149
    %p153 = scmp.eq.s32.totalorder %s24, 0
    %p154 = por %p152, %p153
    %p155 = scmp.ne.s32.totalorder %s147, %s149
    %p156 = scmp.eq.s32.totalorder %s29, 1
    %p157 = por %p155, %p156
    %p158 = scmp.ne.s32.totalorder %s149, %s150
    %p159 = scmp.eq.s32.totalorder %s29, 0
    %p160 = por %p158, %p159
    %p161 = scmp.ne.s32.totalorder %s149, %s150
    %p162 = scmp.eq.s32.totalorder %s30, 1
    %p163 = por %p161, %p162
    %p165 = scmp.ne.s32.totalorder %s150, %s164
    %p166 = scmp.eq.s32.totalorder %s30, 0
    %p167 = por %p165, %p166
    %s169 = sadd.s32 %s168, 1
    %p172 = scmp.eq.s32.totalorder %s24, 1
    %p173 = scmp.ne.s32.totalorder %s168, %s170
    %p174 = scmp.eq.s32.totalorder %s24, 0
    %p175 = por %p173, %p174
    %p176 = scmp.ne.s32.totalorder %s168, %s170
    %p177 = scmp.eq.s32.totalorder %s29, 1
    %p178 = por %p176, %p177
    %p179 = scmp.ne.s32.totalorder %s170, %s171
    %p180 = scmp.eq.s32.totalorder %s29, 0
    %p181 = por %p179, %p180
    %p182 = scmp.ne.s32.totalorder %s170, %s171
    %p183 = scmp.eq.s32.totalorder %s30, 1
    %p184 = por %p182, %p183
    %p186 = scmp.ne.s32.totalorder %s171, %s185
    %p187 = scmp.eq.s32.totalorder %s30, 0
    %p188 = por %p186, %p187
    %s190 = sadd.s32 %s189, 1
    %p193 = scmp.eq.s32.totalorder %s24, 1
    %p194 = scmp.ne.s32.totalorder %s189, %s191
    %p195 = scmp.eq.s32.totalorder %s24, 0
    %p196 = por %p194, %p195
    %p197 = scmp.ne.s32.totalorder %s189, %s191
    %p198 = scmp.eq.s32.totalorder %s29, 1
    %p199 = por %p197, %p198
    %p200 = scmp.ne.s32.totalorder %s191, %s192
    %p201 = scmp.eq.s32.totalorder %s29, 0
    %p202 = por %p200, %p201
    %p203 = scmp.ne.s32.totalorder %s191, %s192
    %p204 = scmp.eq.s32.totalorder %s30, 1
    %p205 = por %p203, %p204
    %p207 = scmp.ne.s32.totalorder %s192, %s206
    %p208 = scmp.eq.s32.totalorder %s30, 0
    %p209 = por %p207, %p208
    %s211 = sadd.s32 %s210, 1
    %p214 = scmp.eq.s32.totalorder %s24, 1
    %p215 = scmp.ne.s32.totalorder %s210, %s212
    %p216 = scmp.eq.s32.totalorder %s24, 0
    %p217 = por %p215, %p216
    %p218 = scmp.ne.s32.totalorder %s210, %s212
    %p219 = scmp.eq.s32.totalorder %s29, 1
    %p220 = por %p218, %p219
    %p221 = scmp.ne.s32.totalorder %s212, %s213
    %p222 = scmp.eq.s32.totalorder %s29, 0
    %p223 = por %p221, %p222
    %p224 = scmp.ne.s32.totalorder %s212, %s213
    %p225 = scmp.eq.s32.totalorder %s30, 1
    %p226 = por %p224, %p225
    %p228 = scmp.ne.s32.totalorder %s213, %s227
    %p229 = scmp.eq.s32.totalorder %s30, 0
    %p230 = por %p228, %p229
    %s232 = sadd.s32 %s231, 1
    %p235 = scmp.eq.s32.totalorder %s24, 1
    %p236 = scmp.ne.s32.totalorder %s231, %s233
    %p237 = scmp.eq.s32.totalorder %s24, 0
    %p238 = por %p236, %p237
    %p239 = scmp.ne.s32.totalorder %s231, %s233
    %p240 = scmp.eq.s32.totalorder %s29, 1
    %p241 = por %p239, %p240
    %p242 = scmp.ne.s32.totalorder %s233, %s234
    %p243 = scmp.eq.s32.totalorder %s29, 0
    %p244 = por %p242, %p243
    %p245 = scmp.ne.s32.totalorder %s233, %s234
    %p246 = scmp.eq.s32.totalorder %s30, 1
    %p247 = por %p245, %p246
    %p249 = scmp.ne.s32.totalorder %s234, %s248
    %p250 = scmp.eq.s32.totalorder %s30, 0
    %p251 = por %p249, %p250
    %s253 = sadd.s32 %s252, 1
    %p256 = scmp.eq.s32.totalorder %s24, 1
    %p257 = scmp.ne.s32.totalorder %s252, %s254
    %p258 = scmp.eq.s32.totalorder %s24, 0
    %p259 = por %p257, %p258
    %p260 = scmp.ne.s32.totalorder %s252, %s254
    %p261 = scmp.eq.s32.totalorder %s29, 1
    %p262 = por %p260, %p261
    %p263 = scmp.ne.s32.totalorder %s254, %s255
    %p264 = scmp.eq.s32.totalorder %s29, 0
    %p265 = por %p263, %p264
    %p266 = scmp.ne.s32.totalorder %s254, %s255
    %p267 = scmp.eq.s32.totalorder %s30, 1
    %p268 = por %p266, %p267
    %p270 = scmp.ne.s32.totalorder %s255, %s269
    %p271 = scmp.eq.s32.totalorder %s30, 0
    %p272 = por %p270, %p271
    %s274 = sadd.s32 %s273, 1
    %p277 = scmp.eq.s32.totalorder %s24, 1
    %p278 = scmp.ne.s32.totalorder %s273, %s275
    %p279 = scmp.eq.s32.totalorder %s24, 0
    %p280 = por %p278, %p279
    %p281 = scmp.ne.s32.totalorder %s273, %s275
    %p282 = scmp.eq.s32.totalorder %s29, 1
    %p283 = por %p281, %p282
    %p284 = scmp.ne.s32.totalorder %s275, %s276
    %p285 = scmp.eq.s32.totalorder %s29, 0
    %p286 = por %p284, %p285
    %p287 = scmp.ne.s32.totalorder %s275, %s276
    %p288 = scmp.eq.s32.totalorder %s30, 1
    %p289 = por %p287, %p288
    %p291 = scmp.ne.s32.totalorder %s276, %s290
    %p292 = scmp.eq.s32.totalorder %s30, 0
    %p293 = por %p291, %p292
    %s295 = sadd.s32 %s294, 1
    %p298 = scmp.eq.s32.totalorder %s24, 1
    %p299 = scmp.ne.s32.totalorder %s294, %s296
    %p300 = scmp.eq.s32.totalorder %s24, 0
    %p301 = por %p299, %p300
    %p302 = scmp.ne.s32.totalorder %s294, %s296
    %p303 = scmp.eq.s32.totalorder %s29, 1
    %p304 = por %p302, %p303
    %p305 = scmp.ne.s32.totalorder %s296, %s297
    %p306 = scmp.eq.s32.totalorder %s29, 0
    %p307 = por %p305, %p306
    %p308 = scmp.ne.s32.totalorder %s296, %s297
    %p309 = scmp.eq.s32.totalorder %s30, 1
    %p310 = por %p308, %p309
    %p312 = scmp.ne.s32.totalorder %s297, %s311
    %p313 = scmp.eq.s32.totalorder %s30, 0
    %p314 = por %p312, %p313
    %s316 = sadd.s32 %s315, 1
    %p319 = scmp.eq.s32.totalorder %s24, 1
    %p320 = scmp.ne.s32.totalorder %s315, %s317
    %p321 = scmp.eq.s32.totalorder %s24, 0
    %p322 = por %p320, %p321
    %p323 = scmp.ne.s32.totalorder %s315, %s317
    %p324 = scmp.eq.s32.totalorder %s29, 1
    %p325 = por %p323, %p324
    %p326 = scmp.ne.s32.totalorder %s317, %s318
    %p327 = scmp.eq.s32.totalorder %s29, 0
    %p328 = por %p326, %p327
    %p329 = scmp.ne.s32.totalorder %s317, %s318
    %p330 = scmp.eq.s32.totalorder %s30, 1
    %p331 = por %p329, %p330
    %p333 = scmp.ne.s32.totalorder %s318, %s332
    %p334 = scmp.eq.s32.totalorder %s30, 0
    %p335 = por %p333, %p334
    %s337 = sadd.s32 %s336, 1
    %p340 = scmp.eq.s32.totalorder %s24, 1
    %p341 = scmp.ne.s32.totalorder %s336, %s338
    %p342 = scmp.eq.s32.totalorder %s24, 0
    %p343 = por %p341, %p342
    %p344 = scmp.ne.s32.totalorder %s336, %s338
    %p345 = scmp.eq.s32.totalorder %s29, 1
    %p346 = por %p344, %p345
    %p347 = scmp.ne.s32.totalorder %s338, %s339
    %p348 = scmp.eq.s32.totalorder %s29, 0
    %p349 = por %p347, %p348
    %p350 = scmp.ne.s32.totalorder %s338, %s339
    %p351 = scmp.eq.s32.totalorder %s30, 1
    %p352 = por %p350, %p351
    %p354 = scmp.ne.s32.totalorder %s339, %s353
    %p355 = scmp.eq.s32.totalorder %s30, 0
    %p356 = por %p354, %p355
    %s358 = sadd.s32 %s357, 1
    %p361 = scmp.eq.s32.totalorder %s24, 1
    %p362 = scmp.ne.s32.totalorder %s357, %s359
    %p363 = scmp.eq.s32.totalorder %s24, 0
    %p364 = por %p362, %p363
    %p365 = scmp.ne.s32.totalorder %s357, %s359
    %p366 = scmp.eq.s32.totalorder %s29, 1
    %p367 = por %p365, %p366
    %p368 = scmp.ne.s32.totalorder %s359, %s360
    %p369 = scmp.eq.s32.totalorder %s29, 0
    %p370 = por %p368, %p369
    %p371 = scmp.ne.s32.totalorder %s359, %s360
    %p372 = scmp.eq.s32.totalorder %s30, 1
    %p373 = por %p371, %p372
    %p375 = scmp.ne.s32.totalorder %s360, %s374
    %p376 = scmp.eq.s32.totalorder %s30, 0
    %p377 = por %p375, %p376
    %s378 = ssub.s32 %s24, %s31
    %p379 = scmp.eq.s32.totalorder %s378, 0
    %s381 = sadd.s32 %s380, 1
    %s382 = scalar_select %p379, %s380, %s381
    %p385 = pneg %p379
    %p386 = scmp.eq.s32.totalorder %s24, 1
    %p387 = por %p385, %p386
    %p388 = scmp.ne.s32.totalorder %s380, %s383
    %p389 = scmp.eq.s32.totalorder %s24, 0
    %p390 = por %p388, %p389
    %p391 = scmp.ne.s32.totalorder %s380, %s383
    %p392 = scmp.eq.s32.totalorder %s29, 1
    %p393 = por %p391, %p392
    %p394 = scmp.ne.s32.totalorder %s383, %s384
    %p395 = scmp.eq.s32.totalorder %s29, 0
    %p396 = por %p394, %p395
    %p397 = scmp.ne.s32.totalorder %s383, %s384
    %p398 = scmp.eq.s32.totalorder %s30, 1
    %p399 = por %p397, %p398
    %p401 = scmp.ne.s32.totalorder %s384, %s400
    %p402 = scmp.eq.s32.totalorder %s30, 0
    %p403 = por %p401, %p402
    %s404 = ssub.s32 %s24, %s31
    %p405 = scmp.eq.s32.totalorder %s404, 0
    %s407 = sadd.s32 %s406, 1
    %s408 = scalar_select %p405, %s406, %s407
    %p411 = pneg %p405
    %p412 = scmp.eq.s32.totalorder %s24, 1
    %p413 = por %p411, %p412
    %p414 = scmp.ne.s32.totalorder %s406, %s409
    %p415 = scmp.eq.s32.totalorder %s24, 0
    %p416 = por %p414, %p415
    %p417 = scmp.ne.s32.totalorder %s406, %s409
    %p418 = scmp.eq.s32.totalorder %s29, 1
    %p419 = por %p417, %p418
    %p420 = scmp.ne.s32.totalorder %s409, %s410
    %p421 = scmp.eq.s32.totalorder %s29, 0
    %p422 = por %p420, %p421
    %p423 = scmp.ne.s32.totalorder %s409, %s410
    %p424 = scmp.eq.s32.totalorder %s30, 1
    %p425 = por %p423, %p424
    %p427 = scmp.ne.s32.totalorder %s410, %s426
    %p428 = scmp.eq.s32.totalorder %s30, 0
    %p429 = por %p427, %p428
    %p430 = scmp.le.s32.totalorder 1, %s24
    %p431 = scmp.lt.s32.totalorder %s24, 3
    %p432 = pnand %p430, %p431
    %p433 = pneg %p432
    // Predicated region
    $region9: #{convvae_forward.1} parent=5 // pred_check
      _
    $region10: #{convvae_forward.1} parent=5 // pred_check_branch
      %435 = sbr.rel (%p432) target = $region12
    $region11: #{convvae_forward.1} parent=5 // pred_region
      %s436 = ssub.s32 %s24, 1
      // Predicated region
      $region13: #{convvae_forward.1} parent=11 // pred_check
        %p437 = pneg %p97
      $region14: #{convvae_forward.1} parent=11 // pred_check_branch
        %439 = sbr.rel (%p437) target = $region16
      $region15: #{convvae_forward.1} parent=11 // pred_region
        _
      $region16: #{convvae_forward.1} parent=11 // pred_fallthru
        _
      // Predicated region
      $region17: #{convvae_forward.1} parent=11 // pred_check
        %p440 = pneg %p118
      $region18: #{convvae_forward.1} parent=11 // pred_check_branch
        %442 = sbr.rel (%p440) target = $region20
      $region19: #{convvae_forward.1} parent=11 // pred_region
        _
      $region20: #{convvae_forward.1} parent=11 // pred_fallthru
        _
      // Predicated region
      $region21: #{convvae_forward.1} parent=11 // pred_check
        %p443 = pneg %p139
      $region22: #{convvae_forward.1} parent=11 // pred_check_branch
        %445 = sbr.rel (%p443) target = $region24
      $region23: #{convvae_forward.1} parent=11 // pred_region
        _
      $region24: #{convvae_forward.1} parent=11 // pred_fallthru
        _
      // Predicated region
      $region25: #{convvae_forward.1} parent=11 // pred_check
        %p446 = pneg %p160
      $region26: #{convvae_forward.1} parent=11 // pred_check_branch
        %448 = sbr.rel (%p446) target = $region28
      $region27: #{convvae_forward.1} parent=11 // pred_region
        _
      $region28: #{convvae_forward.1} parent=11 // pred_fallthru
        _
      // Predicated region
      $region29: #{convvae_forward.1} parent=11 // pred_check
        %p449 = pneg %p181
      $region30: #{convvae_forward.1} parent=11 // pred_check_branch
        %451 = sbr.rel (%p449) target = $region32
      $region31: #{convvae_forward.1} parent=11 // pred_region
        _
      $region32: #{convvae_forward.1} parent=11 // pred_fallthru
        _
      // Predicated region
      $region33: #{convvae_forward.1} parent=11 // pred_check
        %p452 = pneg %p202
      $region34: #{convvae_forward.1} parent=11 // pred_check_branch
        %454 = sbr.rel (%p452) target = $region36
      $region35: #{convvae_forward.1} parent=11 // pred_region
        _
      $region36: #{convvae_forward.1} parent=11 // pred_fallthru
        _
      // Predicated region
      $region37: #{convvae_forward.1} parent=11 // pred_check
        %p455 = pneg %p223
      $region38: #{convvae_forward.1} parent=11 // pred_check_branch
        %457 = sbr.rel (%p455) target = $region40
      $region39: #{convvae_forward.1} parent=11 // pred_region
        _
      $region40: #{convvae_forward.1} parent=11 // pred_fallthru
        _
      // Predicated region
      $region41: #{convvae_forward.1} parent=11 // pred_check
        %p458 = pneg %p244
      $region42: #{convvae_forward.1} parent=11 // pred_check_branch
        %460 = sbr.rel (%p458) target = $region44
      $region43: #{convvae_forward.1} parent=11 // pred_region
        _
      $region44: #{convvae_forward.1} parent=11 // pred_fallthru
        _
      // Predicated region
      $region45: #{convvae_forward.1} parent=11 // pred_check
        %p461 = pneg %p265
      $region46: #{convvae_forward.1} parent=11 // pred_check_branch
        %463 = sbr.rel (%p461) target = $region48
      $region47: #{convvae_forward.1} parent=11 // pred_region
        _
      $region48: #{convvae_forward.1} parent=11 // pred_fallthru
        _
      // Predicated region
      $region49: #{convvae_forward.1} parent=11 // pred_check
        %p464 = pneg %p286
      $region50: #{convvae_forward.1} parent=11 // pred_check_branch
        %466 = sbr.rel (%p464) target = $region52
      $region51: #{convvae_forward.1} parent=11 // pred_region
        _
      $region52: #{convvae_forward.1} parent=11 // pred_fallthru
        _
      // Predicated region
      $region53: #{convvae_forward.1} parent=11 // pred_check
        %p467 = pneg %p307
      $region54: #{convvae_forward.1} parent=11 // pred_check_branch
        %469 = sbr.rel (%p467) target = $region56
      $region55: #{convvae_forward.1} parent=11 // pred_region
        _
      $region56: #{convvae_forward.1} parent=11 // pred_fallthru
        _
      // Predicated region
      $region57: #{convvae_forward.1} parent=11 // pred_check
        %p470 = pneg %p328
      $region58: #{convvae_forward.1} parent=11 // pred_check_branch
        %472 = sbr.rel (%p470) target = $region60
      $region59: #{convvae_forward.1} parent=11 // pred_region
        _
      $region60: #{convvae_forward.1} parent=11 // pred_fallthru
        _
      // Predicated region
      $region61: #{convvae_forward.1} parent=11 // pred_check
        %p473 = pneg %p349
      $region62: #{convvae_forward.1} parent=11 // pred_check_branch
        %475 = sbr.rel (%p473) target = $region64
      $region63: #{convvae_forward.1} parent=11 // pred_region
        _
      $region64: #{convvae_forward.1} parent=11 // pred_fallthru
        _
      // Predicated region
      $region65: #{convvae_forward.1} parent=11 // pred_check
        %p476 = pneg %p370
      $region66: #{convvae_forward.1} parent=11 // pred_check_branch
        %478 = sbr.rel (%p476) target = $region68
      $region67: #{convvae_forward.1} parent=11 // pred_region
        _
      $region68: #{convvae_forward.1} parent=11 // pred_fallthru
        _
    $region12: #{convvae_forward.1} parent=5 // pred_fallthru
      _
    %p479 = scmp.lt.s32.totalorder %s24, 2
    // Predicated region
    $region69: #{convvae_forward.1} parent=5 // pred_check
      %p480 = pneg %p479
    $region70: #{convvae_forward.1} parent=5 // pred_check_branch
      %482 = sbr.rel (%p480) target = $region72
    $region71: #{convvae_forward.1} parent=5 // pred_region
      // Predicated region
      $region73: #{convvae_forward.1} parent=71 // pred_check
        %p483 = pneg %p44
      $region74: #{convvae_forward.1} parent=71 // pred_check_branch
        %485 = sbr.rel (%p483) target = $region76
      $region75: #{convvae_forward.1} parent=71 // pred_region
        %p486 = scmp.lt.s32.totalorder %s24, 1
        %s487 = scalar_select %p486, %s24, 1
        %s488 = smul.addr %s487, 28
        %s489 = smul.addr %s488, 8
        %s490 = scalar_lea.vmem %s0, %s489
      $region76: #{convvae_forward.1} parent=71 // pred_fallthru
        _
      // Predicated region
      $region77: #{convvae_forward.1} parent=71 // pred_check
        %p491 = pneg %p70
      $region78: #{convvae_forward.1} parent=71 // pred_check_branch
        %493 = sbr.rel (%p491) target = $region80
      $region79: #{convvae_forward.1} parent=71 // pred_region
        %p494 = scmp.lt.s32.totalorder %s24, 1
        %s495 = scalar_select %p494, %s24, 1
        %s496 = smul.addr %s495, 8
        %s497 = scalar_lea.vmem %s1, %s496
      $region80: #{convvae_forward.1} parent=71 // pred_fallthru
        _
    $region72: #{convvae_forward.1} parent=5 // pred_fallthru
      _
    %p498 = scmp.le.s32.totalorder 1, %s24
    %p499 = scmp.lt.s32.totalorder %s24, 3
    %p500 = pnand %p498, %p499
    %p501 = pneg %p500
    // Predicated region
    $region81: #{convvae_forward.1} parent=5 // pred_check
      _
    $region82: #{convvae_forward.1} parent=5 // pred_check_branch
      %503 = sbr.rel (%p500) target = $region84
    $region83: #{convvae_forward.1} parent=5 // pred_region
      %s504 = ssub.s32 %s24, 1
      %p505 = scmp.lt.s32.totalorder %s29, 1
      %s506 = scalar_select %p505, %s29, 1
      %s507 = smul.addr %s506, 28
      %s508 = smul.addr %s507, 8
      %s509 = scalar_lea.vmem %s0, %s508
      %p510 = pneg %p50
      %p511 = pneg %p47
      %p512 = scmp.lt.s32.totalorder %s29, 1
      %s513 = scalar_select %p512, %s29, 1
      %s514 = smul.addr %s513, 8
      %s515 = scalar_lea.vmem %s1, %s514
      %p516 = pneg %p76
      %p517 = pneg %p73
      %p518 = pneg %p97
      %p519 = pneg %p94
      %p520 = pneg %p118
      %p521 = pneg %p115
      %p522 = pneg %p139
      %p523 = pneg %p136
      %p524 = pneg %p160
      %p525 = pneg %p157
      %p526 = pneg %p181
      %p527 = pneg %p178
      %p528 = pneg %p202
      %p529 = pneg %p199
      %p530 = pneg %p223
      %p531 = pneg %p220
      %p532 = pneg %p244
      %p533 = pneg %p241
      %p534 = pneg %p265
      %p535 = pneg %p262
      %p536 = pneg %p286
      %p537 = pneg %p283
      %p538 = pneg %p307
      %p539 = pneg %p304
      %p540 = pneg %p328
      %p541 = pneg %p325
      %p542 = pneg %p349
      %p543 = pneg %p346
      %p544 = pneg %p370
      %p545 = pneg %p367
      %p546 = pneg %p396
      %p547 = pneg %p393
      %p548 = scmp.lt.s32.totalorder %s29, 1
      %s549 = scalar_select %p548, %s29, 1
      %s550 = smul.addr %s549, 28
      %s551 = smul.addr %s550, 8
      %s552 = scalar_lea.vmem %s16, %s551
      %p553 = pneg %p422
      %p554 = pneg %p419
      %p555 = scmp.lt.s32.totalorder %s29, 1
      %s556 = scalar_select %p555, %s29, 1
      %s557 = smul.addr %s556, 8
      %s558 = scalar_lea.vmem %s17, %s557
      %p559 = scmp.lt.s32.totalorder %s29, 1
      %s560 = scalar_select %p559, %s29, 1
      %s561 = smul.addr %s560, 28
      %s562 = smul.addr %s561, 8
      %s563 = scalar_lea.vmem %s0, %s562
      %p564 = scmp.lt.s32.totalorder %s29, 1
      %s565 = scalar_select %p564, %s29, 1
      %s566 = smul.addr %s565, 8
      %s567 = scalar_lea.vmem %s1, %s566
      %p568 = scmp.lt.s32.totalorder %s29, 1
      %s569 = scalar_select %p568, %s29, 1
      %s570 = smul.addr %s569, 28
      %s571 = smul.addr %s570, 8
      %s572 = scalar_lea.vmem %s16, %s571
      %p573 = scmp.lt.s32.totalorder %s29, 1
      %s574 = scalar_select %p573, %s29, 1
      %s575 = smul.addr %s574, 8
      %s576 = scalar_lea.vmem %s17, %s575
      %v578 = vld [vmem:[%s563] sm:$0xff]
      %v579 = vld [vmem:[%s563 + $0x8] sm:$0xff]
      %v580 = vld [vmem:[%s563 + $0x10] sm:$0xff]
      %v581 = vld [vmem:[%s563 + $0x18] sm:$0xff]
      %v582 = vld [vmem:[%s563 + $0x20] sm:$0xff]
      %v583 = vld [vmem:[%s563 + $0x28] sm:$0xff]
      %v584 = vld [vmem:[%s563 + $0x30] sm:$0xff]
      %v585 = vld [vmem:[%s563 + $0x38] sm:$0xff]
      %v586 = vld [vmem:[%s563 + $0x40] sm:$0xff]
      %v587 = vld [vmem:[%s563 + $0x48] sm:$0xff]
      %v588 = vld [vmem:[%s563 + $0x50] sm:$0xff]
      %v589 = vld [vmem:[%s563 + $0x58] sm:$0xff]
      %v590 = vld [vmem:[%s563 + $0x60] sm:$0xff]
      %v591 = vld [vmem:[%s563 + $0x68] sm:$0xff]
      %v592 = vld [vmem:[%s563 + $0x70] sm:$0xff]
      %v593 = vld [vmem:[%s563 + $0x78] sm:$0xff]
      %v594 = vld [vmem:[%s563 + $0x80] sm:$0xff]
      %v595 = vld [vmem:[%s563 + $0x88] sm:$0xff]
      %v596 = vld [vmem:[%s563 + $0x90] sm:$0xff]
      %v597 = vld [vmem:[%s563 + $0x98] sm:$0xff]
      %v598 = vld [vmem:[%s563 + $0xa0] sm:$0xff]
      %v599 = vld [vmem:[%s563 + $0xa8] sm:$0xff]
      %v600 = vld [vmem:[%s563 + $0xb0] sm:$0xff]
      %v601 = vld [vmem:[%s563 + $0xb8] sm:$0xff]
      %v602 = vld [vmem:[%s563 + $0xc0] sm:$0xff]
      %v603 = vld [vmem:[%s563 + $0xc8] sm:$0xff]
      %v604 = vld [vmem:[%s563 + $0xd0] sm:$0xff]
      %v605 = vld [vmem:[%s563 + $0xd8] sm:$0xff]
      %v606 = vpack.c.bf16 %v579, 0.0
      %v607 = vpack.c.bf16 %v583, %v581
      %v608 = vpack.c.bf16 %v587, %v585
      %v609 = vpack.c.bf16 %v591, %v589
      %v610 = vpack.c.bf16 %v595, %v593
      %v611 = vpack.c.bf16 %v599, %v597
      %v612 = vpack.c.bf16 %v603, %v601
      %v613 = vld [vmem:[%s2] sm:$0xff]
      %v614 = vld [vmem:[%s2 + $0x8] sm:$0xff]
      %v615 = vld [vmem:[%s2 + $0x10] sm:$0xff]
      %v616 = vld [vmem:[%s2 + $0x18] sm:$0xff]
      %v617 = vld [vmem:[%s2 + $0x20] sm:$0xff]
      %v618 = vld [vmem:[%s2 + $0x28] sm:$0xff]
      %v619 = vld [vmem:[%s2 + $0x30] sm:$0xff]
      %v620 = vld [vmem:[%s2 + $0x38] sm:$0xff]
      %v621 = vld [vmem:[%s2 + $0x40] sm:$0xff]
      %v622 = vld [vmem:[%s2 + $0x48] sm:$0xff]
      %v623 = vld [vmem:[%s2 + $0x50] sm:$0x33]
      %v624 = vpack.c.bf16 %v580, %v578
      %v625 = vpack.c.bf16 %v584, %v582
      %v626 = vpack.c.bf16 %v588, %v586
      %v627 = vpack.c.bf16 %v592, %v590
      %v628 = vpack.c.bf16 %v596, %v594
      %v629 = vpack.c.bf16 %v600, %v598
      %v630 = vpack.c.bf16 %v604, %v602
      %s631 = scalar_lea.vmem %s2, 88
      %v632 = vld [vmem:[%s631] sm:$0xff]
      %v633 = vld [vmem:[%s631 + $0x8] sm:$0xff]
      %v634 = vld [vmem:[%s631 + $0x10] sm:$0xff]
      %v635 = vld [vmem:[%s631 + $0x18] sm:$0xff]
      %v636 = vld [vmem:[%s631 + $0x20] sm:$0xff]
      %v637 = vld [vmem:[%s631 + $0x28] sm:$0xff]
      %v638 = vld [vmem:[%s631 + $0x30] sm:$0xff]
      %v639 = vld [vmem:[%s631 + $0x38] sm:$0xff]
      %v640 = vld [vmem:[%s631 + $0x40] sm:$0xff]
      %v641 = vld [vmem:[%s631 + $0x48] sm:$0xff]
      %v642 = vld [vmem:[%s631 + $0x50] sm:$0x33]
      %v654 = vunpack.c.l.b16 %v632
      %v655 = vunpack.c.h.b16 %v632
      %v656 = vunpack.c.l.b16 %v633
      %v657 = vunpack.c.h.b16 %v633
      %v658 = vunpack.c.l.b16 %v634
      %v659 = vunpack.c.h.b16 %v634
      %v660 = vunpack.c.l.b16 %v635
      %v661 = vunpack.c.h.b16 %v635
      %v662 = vunpack.c.l.b16 %v636
      %v663 = vunpack.c.h.b16 %v636
      %v664 = vunpack.c.l.b16 %v637
      %v665 = vunpack.c.h.b16 %v637
      %v666 = vunpack.c.l.b16 %v638
      %v667 = vunpack.c.h.b16 %v638
      %v668 = vunpack.c.l.b16 %v639
      %v669 = vunpack.c.h.b16 %v639
      %v670 = vunpack.c.l.b16 %v640
      %v671 = vunpack.c.h.b16 %v640
      %v672 = vunpack.c.l.b16 %v641
      %v673 = vunpack.c.h.b16 %v641
      %v674 = vunpack.c.l.b16 %v642
      %v675 = vunpack.c.h.b16 %v642
      %v676 = vpack.c.b16 %v656, %v654
      %v677 = vpack.c.b16 %v657, %v655
      %v678 = vpack.c.b16 %v660, %v658
      %v679 = vpack.c.b16 %v661, %v659
      %v680 = vpack.c.b16 %v664, %v662
      %v681 = vpack.c.b16 %v665, %v663
      %v682 = vpack.c.b16 %v668, %v666
      %v683 = vpack.c.b16 %v669, %v667
      %v684 = vpack.c.b16 %v672, %v670
      %v685 = vpack.c.b16 %v673, %v671
      %v686 = vpack.c.b16 %v674, %v674
      %v687 = vpack.c.b16 %v675, %v675
      %vm698 = vcmask 687104
      %v700 = vsel %vm698, %v624, 0
      %v703 = vsel %vm698, %v625, 0
      %v706 = vsel %vm698, %v626, 0
      %v709 = vsel %vm698, %v627, 0
      %v712 = vsel %vm698, %v628, 0
      %v715 = vsel %vm698, %v629, 0
      %v718 = vsel %vm698, %v630, 0
      %vm720 = vcmask 1041408
      %v722 = vsel %vm720, %v686, 0
      %v725 = vsel %vm720, %v687, 0
      %727 = vmatprep.subr.bf16.mxu0 %v677
      %728 = vmatpush1.bf16.msra.mxu0 %v676
      %729 = vmatprep.subr.bf16.mxu0 %v679
      %730 = vmatpush1.bf16.msra.mxu0 %v678
      %731 = vmatprep.subr.bf16.mxu0 %v681
      %732 = vmatpush1.bf16.msra.mxu0 %v680
      %733 = vmatprep.subr.bf16.mxu0 %v683
      %734 = vmatpush1.bf16.msra.mxu0 %v682
      %735 = vmatprep.subr.bf16.mxu0 %v685
      %736 = vmatpush1.bf16.msra.mxu0 %v684
      %737 = vmatprep.subr.bf16.mxu0 %v725
      %738 = vmatpush1.bf16.msra.mxu0 %v722
      %739 = vmatprep.subr.bf16.mxu0 0
      %740 = vmatpush1.bf16.msra.mxu0 0
      %741 = vmatprep.subr.bf16.mxu0 0
      %742 = vmatpush1.bf16.msra.mxu0 0
      %743 = vmatprep.subr.bf16.mxu0 0
      %744 = vmatpush1.bf16.msra.mxu0 0
      %745 = vmatprep.subr.bf16.mxu0 0
      %746 = vmatpush1.bf16.msra.mxu0 0
      %747 = vmatprep.subr.bf16.mxu0 0
      %748 = vmatpush1.bf16.msra.mxu0 0
      %749 = vmatprep.subr.bf16.mxu0 0
      %750 = vmatpush1.bf16.msra.mxu0 0
      %751 = vmatprep.subr.bf16.mxu0 0
      %752 = vmatpush1.bf16.msra.mxu0 0
      %753 = vmatprep.subr.bf16.mxu0 0
      %754 = vmatpush1.bf16.msra.mxu0 0
      %755 = vmatprep.subr.bf16.mxu0 0
      %756 = vmatpush1.bf16.msra.mxu0 0
      %757 = vmatprep.subr.bf16.mxu0 0
      %758 = vmatpush1.bf16.msra.mxu0 0
      %759 = vmatprep.mubr.bf16.mxu0 0
      %760 = vmatmul.mubr.bf16.gmra.mrb[0].mxu0 %v700
      %v761 = vpop.f32.mrb[0].mxu0
      %v762 = vadd.f32 0.0, %v761
      %v763 = vpop.f32.mrb[0].mxu0
      %v764 = vadd.f32 0.0, %v763
      %v765 = vpop.f32.mrb[0].mxu0
      %v766 = vadd.f32 0.0, %v765
      %v767 = vpop.f32.mrb[0].mxu0
      %v768 = vadd.f32 0.0, %v767
      %769 = vmatprep.mubr.bf16.mxu0 0
      %770 = vmatmul.mubr.bf16.gmra.mrb[0].mxu0 %v703
      %v771 = vpop.f32.mrb[0].mxu0
      %v772 = vadd.f32 0.0, %v771
      %v773 = vpop.f32.mrb[0].mxu0
      %v774 = vadd.f32 0.0, %v773
      %v775 = vpop.f32.mrb[0].mxu0
      %v776 = vadd.f32 0.0, %v775
      %v777 = vpop.f32.mrb[0].mxu0
      %v778 = vadd.f32 0.0, %v777
      %779 = vmatprep.mubr.bf16.mxu0 0
      %780 = vmatmul.mubr.bf16.gmra.mrb[0].mxu0 %v706
      %v781 = vpop.f32.mrb[0].mxu0
      %v782 = vadd.f32 0.0, %v781
      %v783 = vpop.f32.mrb[0].mxu0
      %v784 = vadd.f32 0.0, %v783
      %v785 = vpop.f32.mrb[0].mxu0
      %v786 = vadd.f32 0.0, %v785
      %v787 = vpop.f32.mrb[0].mxu0
      %v788 = vadd.f32 0.0, %v787
      %789 = vmatprep.mubr.bf16.mxu0 0
      %790 = vmatmul.mubr.bf16.gmra.mrb[0].mxu0 %v709
      %v791 = vpop.f32.mrb[0].mxu0
      %v792 = vadd.f32 0.0, %v791
      %v793 = vpop.f32.mrb[0].mxu0
      %v794 = vadd.f32 0.0, %v793
      %v795 = vpop.f32.mrb[0].mxu0
      %v796 = vadd.f32 0.0, %v795
      %v797 = vpop.f32.mrb[0].mxu0
      %v798 = vadd.f32 0.0, %v797
      %799 = vmatprep.mubr.bf16.mxu0 0
      %800 = vmatmul.mubr.bf16.gmra.mrb[0].mxu0 %v712
      %v801 = vpop.f32.mrb[0].mxu0
      %v802 = vadd.f32 0.0, %v801
      %v803 = vpop.f32.mrb[0].mxu0
      %v804 = vadd.f32 0.0, %v803
      %v805 = vpop.f32.mrb[0].mxu0
      %v806 = vadd.f32 0.0, %v805
      %v807 = vpop.f32.mrb[0].mxu0
      %v808 = vadd.f32 0.0, %v807
      %809 = vmatprep.mubr.bf16.mxu0 0
      %810 = vmatmul.mubr.bf16.gmra.mrb[0].mxu0 %v715
      %v811 = vpop.f32.mrb[0].mxu0
      %v812 = vadd.f32 0.0, %v811
      %v813 = vpop.f32.mrb[0].mxu0
      %v814 = vadd.f32 0.0, %v813
      %v815 = vpop.f32.mrb[0].mxu0
      %v816 = vadd.f32 0.0, %v815
      %v817 = vpop.f32.mrb[0].mxu0
      %v818 = vadd.f32 0.0, %v817
      %819 = vmatprep.mubr.bf16.mxu0 0
      %820 = vmatmul.mubr.bf16.gmra.mrb[0].mxu0 %v718
      %v821 = vpop.f32.mrb[0].mxu0
      %v822 = vadd.f32 0.0, %v821
      %v823 = vpop.f32.mrb[0].mxu0
      %v824 = vadd.f32 0.0, %v823
      %v825 = vpop.f32.mrb[0].mxu0
      %v826 = vadd.f32 0.0, %v825
      %v827 = vpop.f32.mrb[0].mxu0
      %v828 = vadd.f32 0.0, %v827
      %829 = vdwg.mxu0
      %v841 = vunpack.c.l.b16 %v613
      %v842 = vunpack.c.h.b16 %v613
      %v843 = vunpack.c.l.b16 %v614
      %v844 = vunpack.c.h.b16 %v614
      %v845 = vunpack.c.l.b16 %v615
      %v846 = vunpack.c.h.b16 %v615
      %v847 = vunpack.c.l.b16 %v616
      %v848 = vunpack.c.h.b16 %v616
      %v849 = vunpack.c.l.b16 %v617
      %v850 = vunpack.c.h.b16 %v617
      %v851 = vunpack.c.l.b16 %v618
      %v852 = vunpack.c.h.b16 %v618
      %v853 = vunpack.c.l.b16 %v619
      %v854 = vunpack.c.h.b16 %v619
      %v855 = vunpack.c.l.b16 %v620
      %v856 = vunpack.c.h.b16 %v620
      %v857 = vunpack.c.l.b16 %v621
      %v858 = vunpack.c.h.b16 %v621
      %v859 = vunpack.c.l.b16 %v622
      %v860 = vunpack.c.h.b16 %v622
      %v861 = vunpack.c.l.b16 %v623
      %v862 = vunpack.c.h.b16 %v623
      %v863 = vpack.c.b16 %v843, %v841
      %v864 = vpack.c.b16 %v844, %v842
      %v865 = vpack.c.b16 %v847, %v845
      %v866 = vpack.c.b16 %v848, %v846
      %v867 = vpack.c.b16 %v851, %v849
      %v868 = vpack.c.b16 %v852, %v850
      %v869 = vpack.c.b16 %v855, %v853
      %v870 = vpack.c.b16 %v856, %v854
      %v871 = vpack.c.b16 %v859, %v857
      %v872 = vpack.c.b16 %v860, %v858
      %v873 = vpack.c.b16 %v861, %v861
      %v874 = vpack.c.b16 %v862, %v862
      %v886 = vsel %vm698, %v606, 0
      %v889 = vsel %vm698, %v607, 0
      %v892 = vsel %vm698, %v608, 0
      %v895 = vsel %vm698, %v609, 0
      %v898 = vsel %vm698, %v610, 0
      %v901 = vsel %vm698, %v611, 0
      %v904 = vsel %vm698, %v612, 0
      %v907 = vsel %vm720, %v873, 0
      %v910 = vsel %vm720, %v874, 0
      %912 = vmatprep.subr.bf16.mxu0 %v864
      %913 = vmatpush1.bf16.msra.mxu0 %v863
      %914 = vmatprep.subr.bf16.mxu0 %v866
      %915 = vmatpush1.bf16.msra.mxu0 %v865
      %916 = vmatprep.subr.bf16.mxu0 %v868
      %917 = vmatpush1.bf16.msra.mxu0 %v867
      %918 = vmatprep.subr.bf16.mxu0 %v870
      %919 = vmatpush1.bf16.msra.mxu0 %v869
      %920 = vmatprep.subr.bf16.mxu0 %v872
      %921 = vmatpush1.bf16.msra.mxu0 %v871
      %922 = vmatprep.subr.bf16.mxu0 %v910
      %923 = vmatpush1.bf16.msra.mxu0 %v907
      %924 = vmatprep.subr.bf16.mxu0 0
      %925 = vmatpush1.bf16.msra.mxu0 0
      %926 = vmatprep.subr.bf16.mxu0 0
      %927 = vmatpush1.bf16.msra.mxu0 0
      %928 = vmatprep.subr.bf16.mxu0 0
      %929 = vmatpush1.bf16.msra.mxu0 0
      %930 = vmatprep.subr.bf16.mxu0 0
      %931 = vmatpush1.bf16.msra.mxu0 0
      %932 = vmatprep.subr.bf16.mxu0 0
      %933 = vmatpush1.bf16.msra.mxu0 0
      %934 = vmatprep.subr.bf16.mxu0 0
      %935 = vmatpush1.bf16.msra.mxu0 0
      %936 = vmatprep.subr.bf16.mxu0 0
      %937 = vmatpush1.bf16.msra.mxu0 0
      %938 = vmatprep.subr.bf16.mxu0 0
      %939 = vmatpush1.bf16.msra.mxu0 0
      %940 = vmatprep.subr.bf16.mxu0 0
      %941 = vmatpush1.bf16.msra.mxu0 0
      %942 = vmatprep.subr.bf16.mxu0 0
      %943 = vmatpush1.bf16.msra.mxu0 0
      %944 = vmatprep.mubr.bf16.mxu0 0
      %945 = vmatmul.mubr.bf16.gmra.mrb[0].mxu0 %v886
      %v946 = vpop.f32.mrb[0].mxu0
      %v947 = vadd.f32 %v762, %v946
      %v948 = vpop.f32.mrb[0].mxu0
      %v949 = vadd.f32 %v764, %v948
      %v950 = vpop.f32.mrb[0].mxu0
      %v951 = vadd.f32 %v766, %v950
      %v952 = vpop.f32.mrb[0].mxu0
      %v953 = vadd.f32 %v768, %v952
      %954 = vmatprep.mubr.bf16.mxu0 0
      %955 = vmatmul.mubr.bf16.gmra.mrb[0].mxu0 %v889
      %v956 = vpop.f32.mrb[0].mxu0
      %v957 = vadd.f32 %v772, %v956
      %v958 = vpop.f32.mrb[0].mxu0
      %v959 = vadd.f32 %v774, %v958
      %v960 = vpop.f32.mrb[0].mxu0
      %v961 = vadd.f32 %v776, %v960
      %v962 = vpop.f32.mrb[0].mxu0
      %v963 = vadd.f32 %v778, %v962
      %964 = vmatprep.mubr.bf16.mxu0 0
      %965 = vmatmul.mubr.bf16.gmra.mrb[0].mxu0 %v892
      %v966 = vpop.f32.mrb[0].mxu0
      %v967 = vadd.f32 %v782, %v966
      %v968 = vpop.f32.mrb[0].mxu0
      %v969 = vadd.f32 %v784, %v968
      %v970 = vpop.f32.mrb[0].mxu0
      %v971 = vadd.f32 %v786, %v970
      %v972 = vpop.f32.mrb[0].mxu0
      %v973 = vadd.f32 %v788, %v972
      %974 = vmatprep.mubr.bf16.mxu0 0
      %975 = vmatmul.mubr.bf16.gmra.mrb[0].mxu0 %v895
      %v976 = vpop.f32.mrb[0].mxu0
      %v977 = vadd.f32 %v792, %v976
      %v978 = vpop.f32.mrb[0].mxu0
      %v979 = vadd.f32 %v794, %v978
      %v980 = vpop.f32.mrb[0].mxu0
      %v981 = vadd.f32 %v796, %v980
      %v982 = vpop.f32.mrb[0].mxu0
      %v983 = vadd.f32 %v798, %v982
      %984 = vmatprep.mubr.bf16.mxu0 0
      %985 = vmatmul.mubr.bf16.gmra.mrb[0].mxu0 %v898
      %v986 = vpop.f32.mrb[0].mxu0
      %v987 = vadd.f32 %v802, %v986
      %v988 = vpop.f32.mrb[0].mxu0
      %v989 = vadd.f32 %v804, %v988
      %v990 = vpop.f32.mrb[0].mxu0
      %v991 = vadd.f32 %v806, %v990
      %v992 = vpop.f32.mrb[0].mxu0
      %v993 = vadd.f32 %v808, %v992
      %994 = vmatprep.mubr.bf16.mxu0 0
      %995 = vmatmul.mubr.bf16.gmra.mrb[0].mxu0 %v901
      %v996 = vpop.f32.mrb[0].mxu0
      %v997 = vadd.f32 %v812, %v996
      %v998 = vpop.f32.mrb[0].mxu0
      %v999 = vadd.f32 %v814, %v998
      %v1000 = vpop.f32.mrb[0].mxu0
      %v1001 = vadd.f32 %v816, %v1000
      %v1002 = vpop.f32.mrb[0].mxu0
      %v1003 = vadd.f32 %v818, %v1002
      %1004 = vmatprep.mubr.bf16.mxu0 0
      %1005 = vmatmul.mubr.bf16.gmra.mrb[0].mxu0 %v904
      %v1006 = vpop.f32.mrb[0].mxu0
      %v1007 = vadd.f32 %v822, %v1006
      %v1008 = vpop.f32.mrb[0].mxu0
      %v1009 = vadd.f32 %v824, %v1008
      %v1010 = vpop.f32.mrb[0].mxu0
      %v1011 = vadd.f32 %v826, %v1010
      %v1012 = vpop.f32.mrb[0].mxu0
      %v1013 = vadd.f32 %v828, %v1012
      %1014 = vdwg.mxu0
      %v1015 = vpack.c.bf16 %v581, %v579
      %v1016 = vpack.c.bf16 %v585, %v583
      %v1017 = vpack.c.bf16 %v589, %v587
      %v1018 = vpack.c.bf16 %v593, %v591
      %v1019 = vpack.c.bf16 %v597, %v595
      %v1020 = vpack.c.bf16 %v601, %v599
      %v1021 = vpack.c.bf16 %v605, %v603
      %s1022 = scalar_lea.vmem %s2, 176
      %v1023 = vld [vmem:[%s1022] sm:$0xff]
      %v1024 = vld [vmem:[%s1022 + $0x8] sm:$0xff]
      %v1025 = vld [vmem:[%s1022 + $0x10] sm:$0xff]
      %v1026 = vld [vmem:[%s1022 + $0x18] sm:$0xff]
      %v1027 = vld [vmem:[%s1022 + $0x20] sm:$0xff]
      %v1028 = vld [vmem:[%s1022 + $0x28] sm:$0xff]
      %v1029 = vld [vmem:[%s1022 + $0x30] sm:$0xff]
      %v1030 = vld [vmem:[%s1022 + $0x38] sm:$0xff]
      %v1031 = vld [vmem:[%s1022 + $0x40] sm:$0xff]
      %v1032 = vld [vmem:[%s1022 + $0x48] sm:$0xff]
      %v1033 = vld [vmem:[%s1022 + $0x50] sm:$0x33]
      %v1045 = vunpack.c.l.b16 %v1023
      %v1046 = vunpack.c.h.b16 %v1023
      %v1047 = vunpack.c.l.b16 %v1024
      %v1048 = vunpack.c.h.b16 %v1024
      %v1049 = vunpack.c.l.b16 %v1025
      %v1050 = vunpack.c.h.b16 %v1025
      %v1051 = vunpack.c.l.b16 %v1026
      %v1052 = vunpack.c.h.b16 %v1026
      %v1053 = vunpack.c.l.b16 %v1027
      %v1054 = vunpack.c.h.b16 %v1027
      %v1055 = vunpack.c.l.b16 %v1028
      %v1056 = vunpack.c.h.b16 %v1028
      %v1057 = vunpack.c.l.b16 %v1029
      %v1058 = vunpack.c.h.b16 %v1029
      %v1059 = vunpack.c.l.b16 %v1030
      %v1060 = vunpack.c.h.b16 %v1030
      %v1061 = vunpack.c.l.b16 %v1031
      %v1062 = vunpack.c.h.b16 %v1031
      %v1063 = vunpack.c.l.b16 %v1032
      %v1064 = vunpack.c.h.b16 %v1032
      %v1065 = vunpack.c.l.b16 %v1033
      %v1066 = vunpack.c.h.b16 %v1033
      %v1067 = vpack.c.b16 %v1047, %v1045
      %v1068 = vpack.c.b16 %v1048, %v1046
      %v1069 = vpack.c.b16 %v1051, %v1049
      %v1070 = vpack.c.b16 %v1052, %v1050
      %v1071 = vpack.c.b16 %v1055, %v1053
      %v1072 = vpack.c.b16 %v1056, %v1054
      %v1073 = vpack.c.b16 %v1059, %v1057
      %v1074 = vpack.c.b16 %v1060, %v1058
      %v1075 = vpack.c.b16 %v1063, %v1061
      %v1076 = vpack.c.b16 %v1064, %v1062
      %v1077 = vpack.c.b16 %v1065, %v1065
      %v1078 = vpack.c.b16 %v1066, %v1066
      %v1090 = vsel %vm698, %v1015, 0
      %v1093 = vsel %vm698, %v1016, 0
      %v1096 = vsel %vm698, %v1017, 0
      %v1099 = vsel %vm698, %v1018, 0
      %v1102 = vsel %vm698, %v1019, 0
      %v1105 = vsel %vm698, %v1020, 0
      %v1108 = vsel %vm698, %v1021, 0
      %v1111 = vsel %vm720, %v1077, 0
      %v1114 = vsel %vm720, %v1078, 0
      %1116 = vmatprep.subr.bf16.mxu0 %v1068
      %1117 = vmatpush1.bf16.msra.mxu0 %v1067
      %1118 = vmatprep.subr.bf16.mxu0 %v1070
      %1119 = vmatpush1.bf16.msra.mxu0 %v1069
      %1120 = vmatprep.subr.bf16.mxu0 %v1072
      %1121 = vmatpush1.bf16.msra.mxu0 %v1071
      %1122 = vmatprep.subr.bf16.mxu0 %v1074
      %1123 = vmatpush1.bf16.msra.mxu0 %v1073
      %1124 = vmatprep.subr.bf16.mxu0 %v1076
      %1125 = vmatpush1.bf16.msra.mxu0 %v1075
      %1126 = vmatprep.subr.bf16.mxu0 %v1114
      %1127 = vmatpush1.bf16.msra.mxu0 %v1111
      %1128 = vmatprep.subr.bf16.mxu0 0
      %1129 = vmatpush1.bf16.msra.mxu0 0
      %1130 = vmatprep.subr.bf16.mxu0 0
      %1131 = vmatpush1.bf16.msra.mxu0 0
      %1132 = vmatprep.subr.bf16.mxu0 0
      %1133 = vmatpush1.bf16.msra.mxu0 0
      %1134 = vmatprep.subr.bf16.mxu0 0
      %1135 = vmatpush1.bf16.msra.mxu0 0
      %1136 = vmatprep.subr.bf16.mxu0 0
      %1137 = vmatpush1.bf16.msra.mxu0 0
      %1138 = vmatprep.subr.bf16.mxu0 0
      %1139 = vmatpush1.bf16.msra.mxu0 0
      %1140 = vmatprep.subr.bf16.mxu0 0
      %1141 = vmatpush1.bf16.msra.mxu0 0
      %1142 = vmatprep.subr.bf16.mxu0 0
      %1143 = vmatpush1.bf16.msra.mxu0 0
      %1144 = vmatprep.subr.bf16.mxu0 0
      %1145 = vmatpush1.bf16.msra.mxu0 0
      %1146 = vmatprep.subr.bf16.mxu0 0
      %1147 = vmatpush1.bf16.msra.mxu0 0
      %1148 = vmatprep.mubr.bf16.mxu0 0
      %1149 = vmatmul.mubr.bf16.gmra.mrb[0].mxu0 %v1090
      %v1150 = vpop.f32.mrb[0].mxu0
      %v1151 = vadd.f32 0.0, %v1150
      %v1152 = vpop.f32.mrb[0].mxu0
      %v1153 = vadd.f32 0.0, %v1152
      %v1154 = vpop.f32.mrb[0].mxu0
      %v1155 = vadd.f32 0.0, %v1154
      %v1156 = vpop.f32.mrb[0].mxu0
      %v1157 = vadd.f32 0.0, %v1156
      %1158 = vmatprep.mubr.bf16.mxu0 0
      %1159 = vmatmul.mubr.bf16.gmra.mrb[0].mxu0 %v1093
      %v1160 = vpop.f32.mrb[0].mxu0
      %v1161 = vadd.f32 0.0, %v1160
      %v1162 = vpop.f32.mrb[0].mxu0
      %v1163 = vadd.f32 0.0, %v1162
      %v1164 = vpop.f32.mrb[0].mxu0
      %v1165 = vadd.f32 0.0, %v1164
      %v1166 = vpop.f32.mrb[0].mxu0
      %v1167 = vadd.f32 0.0, %v1166
      %1168 = vmatprep.mubr.bf16.mxu0 0
      %1169 = vmatmul.mubr.bf16.gmra.mrb[0].mxu0 %v1096
      %v1170 = vpop.f32.mrb[0].mxu0
      %v1171 = vadd.f32 0.0, %v1170
      %v1172 = vpop.f32.mrb[0].mxu0
      %v1173 = vadd.f32 0.0, %v1172
      %v1174 = vpop.f32.mrb[0].mxu0
      %v1175 = vadd.f32 0.0, %v1174
      %v1176 = vpop.f32.mrb[0].mxu0
      %v1177 = vadd.f32 0.0, %v1176
      %1178 = vmatprep.mubr.bf16.mxu0 0
      %1179 = vmatmul.mubr.bf16.gmra.mrb[0].mxu0 %v1099
      %v1180 = vpop.f32.mrb[0].mxu0
      %v1181 = vadd.f32 0.0, %v1180
      %v1182 = vpop.f32.mrb[0].mxu0
      %v1183 = vadd.f32 0.0, %v1182
      %v1184 = vpop.f32.mrb[0].mxu0
      %v1185 = vadd.f32 0.0, %v1184
      %v1186 = vpop.f32.mrb[0].mxu0
      %v1187 = vadd.f32 0.0, %v1186
      %1188 = vmatprep.mubr.bf16.mxu0 0
      %1189 = vmatmul.mubr.bf16.gmra.mrb[0].mxu0 %v1102
      %v1190 = vpop.f32.mrb[0].mxu0
      %v1191 = vadd.f32 0.0, %v1190
      %v1192 = vpop.f32.mrb[0].mxu0
      %v1193 = vadd.f32 0.0, %v1192
      %v1194 = vpop.f32.mrb[0].mxu0
      %v1195 = vadd.f32 0.0, %v1194
      %v1196 = vpop.f32.mrb[0].mxu0
      %v1197 = vadd.f32 0.0, %v1196
      %1198 = vmatprep.mubr.bf16.mxu0 0
      %1199 = vmatmul.mubr.bf16.gmra.mrb[0].mxu0 %v1105
      %v1200 = vpop.f32.mrb[0].mxu0
      %v1201 = vadd.f32 0.0, %v1200
      %v1202 = vpop.f32.mrb[0].mxu0
      %v1203 = vadd.f32 0.0, %v1202
      %v1204 = vpop.f32.mrb[0].mxu0
      %v1205 = vadd.f32 0.0, %v1204
      %v1206 = vpop.f32.mrb[0].mxu0
      %v1207 = vadd.f32 0.0, %v1206
      %1208 = vmatprep.mubr.bf16.mxu0 0
      %1209 = vmatmul.mubr.bf16.gmra.mrb[0].mxu0 %v1108
      %v1210 = vpop.f32.mrb[0].mxu0
      %v1211 = vadd.f32 0.0, %v1210
      %v1212 = vpop.f32.mrb[0].mxu0
      %v1213 = vadd.f32 0.0, %v1212
      %v1214 = vpop.f32.mrb[0].mxu0
      %v1215 = vadd.f32 0.0, %v1214
      %v1216 = vpop.f32.mrb[0].mxu0
      %v1217 = vadd.f32 0.0, %v1216
      %1218 = vdwg.mxu0
      %v1219 = vadd.f32 %v947, %v1151
      %v1220 = vadd.f32 %v949, %v1153
      %v1221 = vadd.f32 %v951, %v1155
      %v1222 = vadd.f32 %v953, %v1157
      %v1223 = vadd.f32 %v957, %v1161
      %v1224 = vadd.f32 %v959, %v1163
      %v1225 = vadd.f32 %v961, %v1165
      %v1226 = vadd.f32 %v963, %v1167
      %v1227 = vadd.f32 %v967, %v1171
      %v1228 = vadd.f32 %v969, %v1173
      %v1229 = vadd.f32 %v971, %v1175
      %v1230 = vadd.f32 %v973, %v1177
      %v1231 = vadd.f32 %v977, %v1181
      %v1232 = vadd.f32 %v979, %v1183
      %v1233 = vadd.f32 %v981, %v1185
      %v1234 = vadd.f32 %v983, %v1187
      %v1235 = vadd.f32 %v987, %v1191
      %v1236 = vadd.f32 %v989, %v1193
      %v1237 = vadd.f32 %v991, %v1195
      %v1238 = vadd.f32 %v993, %v1197
      %v1239 = vadd.f32 %v997, %v1201
      %v1240 = vadd.f32 %v999, %v1203
      %v1241 = vadd.f32 %v1001, %v1205
      %v1242 = vadd.f32 %v1003, %v1207
      %v1243 = vadd.f32 %v1007, %v1211
      %v1244 = vadd.f32 %v1009, %v1213
      %v1245 = vadd.f32 %v1011, %v1215
      %v1246 = vadd.f32 %v1013, %v1217
      %v1247 = vld [vmem:[%s3] sm:$0x3]
      %v1249 = vlaneseq
      %v1250 = vshrl.u32 %v1249, 7
      %v1251 = vsub.s32 0, %v1250
      %v1252 = vrot.slane %v1247, %v1251
      %v1253 = vlaneseq
      %v1254 = vshrl.u32 %v1253, 7
      %v1255 = vsub.s32 1, %v1254
      %v1256 = vrot.slane %v1247, %v1255
      %v1259 = vadd.f32 %v1219, %v1252
      %v1260 = vadd.f32 %v1220, %v1256
      %v1261 = vadd.f32 %v1221, %v1252
      %v1262 = vadd.f32 %v1222, %v1256
      %v1263 = vadd.f32 %v1223, %v1252
      %v1264 = vadd.f32 %v1224, %v1256
      %v1265 = vadd.f32 %v1225, %v1252
      %v1266 = vadd.f32 %v1226, %v1256
      %v1267 = vadd.f32 %v1227, %v1252
      %v1268 = vadd.f32 %v1228, %v1256
      %v1269 = vadd.f32 %v1229, %v1252
      %v1270 = vadd.f32 %v1230, %v1256
      %v1271 = vadd.f32 %v1231, %v1252
      %v1272 = vadd.f32 %v1232, %v1256
      %v1273 = vadd.f32 %v1233, %v1252
      %v1274 = vadd.f32 %v1234, %v1256
      %v1275 = vadd.f32 %v1235, %v1252
      %v1276 = vadd.f32 %v1236, %v1256
      %v1277 = vadd.f32 %v1237, %v1252
      %v1278 = vadd.f32 %v1238, %v1256
      %v1279 = vadd.f32 %v1239, %v1252
      %v1280 = vadd.f32 %v1240, %v1256
      %v1281 = vadd.f32 %v1241, %v1252
      %v1282 = vadd.f32 %v1242, %v1256
      %v1283 = vadd.f32 %v1243, %v1252
      %v1284 = vadd.f32 %v1244, %v1256
      %v1285 = vadd.f32 %v1245, %v1252
      %v1286 = vadd.f32 %v1246, %v1256
      %v1287 = vmax.f32 %v1259, 0.0
      %v1288 = vmax.f32 %v1260, 0.0
      %v1289 = vmax.f32 %v1261, 0.0
      %v1290 = vmax.f32 %v1262, 0.0
      %v1291 = vmax.f32 %v1263, 0.0
      %v1292 = vmax.f32 %v1264, 0.0
      %v1293 = vmax.f32 %v1265, 0.0
      %v1294 = vmax.f32 %v1266, 0.0
      %v1295 = vmax.f32 %v1267, 0.0
      %v1296 = vmax.f32 %v1268, 0.0
      %v1297 = vmax.f32 %v1269, 0.0
      %v1298 = vmax.f32 %v1270, 0.0
      %v1299 = vmax.f32 %v1271, 0.0
      %v1300 = vmax.f32 %v1272, 0.0
      %v1301 = vmax.f32 %v1273, 0.0
      %v1302 = vmax.f32 %v1274, 0.0
      %v1303 = vmax.f32 %v1275, 0.0
      %v1304 = vmax.f32 %v1276, 0.0
      %v1305 = vmax.f32 %v1277, 0.0
      %v1306 = vmax.f32 %v1278, 0.0
      %v1307 = vmax.f32 %v1279, 0.0
      %v1308 = vmax.f32 %v1280, 0.0
      %v1309 = vmax.f32 %v1281, 0.0
      %v1310 = vmax.f32 %v1282, 0.0
      %v1311 = vmax.f32 %v1283, 0.0
      %v1312 = vmax.f32 %v1284, 0.0
      %v1313 = vmax.f32 %v1285, 0.0
      %v1314 = vmax.f32 %v1286, 0.0
      %v1315 = vpack.c.bf16 %v1289, 0.0
      %v1316 = vpack.c.bf16 %v1290, 0.0
      %v1317 = vpack.c.bf16 %v1297, %v1293
      %v1318 = vpack.c.bf16 %v1298, %v1294
      %v1319 = vpack.c.bf16 %v1305, %v1301
      %v1320 = vpack.c.bf16 %v1306, %v1302
      %v1321 = vpack.c.bf16 %v1309, %v1309
      %v1322 = vpack.c.bf16 %v1310, %v1310
      %v1323 = vld [vmem:[%s4] sm:$0xff]
      %v1324 = vld [vmem:[%s4 + $0x8] sm:$0xff]
      %v1325 = vld [vmem:[%s4 + $0x10] sm:$0xff]
      %v1326 = vld [vmem:[%s4 + $0x18] sm:$0xff]
      %v1327 = vld [vmem:[%s4 + $0x20] sm:$0xff]
      %v1328 = vld [vmem:[%s4 + $0x28] sm:$0xff]
      %v1329 = vld [vmem:[%s4 + $0x30] sm:$0xff]
      %v1330 = vld [vmem:[%s4 + $0x38] sm:$0xff]
      %v1331 = vld [vmem:[%s4 + $0x40] sm:$0xff]
      %v1332 = vld [vmem:[%s4 + $0x48] sm:$0xff]
      %v1333 = vld [vmem:[%s4 + $0x50] sm:$0xff]
      %v1334 = vld [vmem:[%s4 + $0x58] sm:$0xff]
      %v1335 = vld [vmem:[%s4 + $0x60] sm:$0xff]
      %v1336 = vld [vmem:[%s4 + $0x68] sm:$0xff]
      %v1337 = vld [vmem:[%s4 + $0x70] sm:$0xff]
      %v1338 = vld [vmem:[%s4 + $0x78] sm:$0xff]
      %v1339 = vld [vmem:[%s4 + $0x80] sm:$0xff]
      %v1340 = vld [vmem:[%s4 + $0x88] sm:$0xff]
      %v1341 = vld [vmem:[%s4 + $0x90] sm:$0xff]
      %v1342 = vld [vmem:[%s4 + $0x98] sm:$0xff]
      %v1343 = vld [vmem:[%s4 + $0xa0] sm:$0xff]
      %v1344 = vld [vmem:[%s4 + $0xa8] sm:$0xff]
      %v1345 = vld [vmem:[%s4 + $0xb0] sm:$0xff]
      %v1346 = vld [vmem:[%s4 + $0xb8] sm:$0xff]
      %v1347 = vld [vmem:[%s4 + $0xc0] sm:$0xff]
      %v1348 = vld [vmem:[%s4 + $0xc8] sm:$0xff]
      %v1349 = vld [vmem:[%s4 + $0xd0] sm:$0xff]
      %v1350 = vld [vmem:[%s4 + $0xd8] sm:$0xff]
      %v1351 = vpack.c.bf16 %v1291, %v1287
      %v1352 = vpack.c.bf16 %v1292, %v1288
      %v1353 = vpack.c.bf16 %v1299, %v1295
      %v1354 = vpack.c.bf16 %v1300, %v1296
      %v1355 = vpack.c.bf16 %v1307, %v1303
      %v1356 = vpack.c.bf16 %v1308, %v1304
      %v1357 = vpack.c.bf16 %v1311, %v1311
      %v1358 = vpack.c.bf16 %v1312, %v1312
      %s1359 = scalar_lea.vmem %s4, 224
      %v1360 = vld [vmem:[%s1359] sm:$0xff]
      %v1361 = vld [vmem:[%s1359 + $0x8] sm:$0xff]
      %v1362 = vld [vmem:[%s1359 + $0x10] sm:$0xff]
      %v1363 = vld [vmem:[%s1359 + $0x18] sm:$0xff]
      %v1364 = vld [vmem:[%s1359 + $0x20] sm:$0xff]
      %v1365 = vld [vmem:[%s1359 + $0x28] sm:$0xff]
      %v1366 = vld [vmem:[%s1359 + $0x30] sm:$0xff]
      %v1367 = vld [vmem:[%s1359 + $0x38] sm:$0xff]
      %v1368 = vld [vmem:[%s1359 + $0x40] sm:$0xff]
      %v1369 = vld [vmem:[%s1359 + $0x48] sm:$0xff]
      %v1370 = vld [vmem:[%s1359 + $0x50] sm:$0xff]
      %v1371 = vld [vmem:[%s1359 + $0x58] sm:$0xff]
      %v1372 = vld [vmem:[%s1359 + $0x60] sm:$0xff]
      %v1373 = vld [vmem:[%s1359 + $0x68] sm:$0xff]
      %v1374 = vld [vmem:[%s1359 + $0x70] sm:$0xff]
      %v1375 = vld [vmem:[%s1359 + $0x78] sm:$0xff]
      %v1376 = vld [vmem:[%s1359 + $0x80] sm:$0xff]
      %v1377 = vld [vmem:[%s1359 + $0x88] sm:$0xff]
      %v1378 = vld [vmem:[%s1359 + $0x90] sm:$0xff]
      %v1379 = vld [vmem:[%s1359 + $0x98] sm:$0xff]
      %v1380 = vld [vmem:[%s1359 + $0xa0] sm:$0xff]
      %v1381 = vld [vmem:[%s1359 + $0xa8] sm:$0xff]
      %v1382 = vld [vmem:[%s1359 + $0xb0] sm:$0xff]
      %v1383 = vld [vmem:[%s1359 + $0xb8] sm:$0xff]
      %v1384 = vld [vmem:[%s1359 + $0xc0] sm:$0xff]
      %v1385 = vld [vmem:[%s1359 + $0xc8] sm:$0xff]
      %v1386 = vld [vmem:[%s1359 + $0xd0] sm:$0xff]
      %v1387 = vld [vmem:[%s1359 + $0xd8] sm:$0xff]
      %v1416 = vunpack.c.l.b16 %v1360
      %v1417 = vunpack.c.h.b16 %v1360
      %v1418 = vunpack.c.l.b16 %v1361
      %v1419 = vunpack.c.h.b16 %v1361
      %v1420 = vunpack.c.l.b16 %v1362
      %v1421 = vunpack.c.h.b16 %v1362
      %v1422 = vunpack.c.l.b16 %v1363
      %v1423 = vunpack.c.h.b16 %v1363
      %v1424 = vunpack.c.l.b16 %v1364
      %v1425 = vunpack.c.h.b16 %v1364
      %v1426 = vunpack.c.l.b16 %v1365
      %v1427 = vunpack.c.h.b16 %v1365
      %v1428 = vunpack.c.l.b16 %v1366
      %v1429 = vunpack.c.h.b16 %v1366
      %v1430 = vunpack.c.l.b16 %v1367
      %v1431 = vunpack.c.h.b16 %v1367
      %v1432 = vunpack.c.l.b16 %v1368
      %v1433 = vunpack.c.h.b16 %v1368
      %v1434 = vunpack.c.l.b16 %v1369
      %v1435 = vunpack.c.h.b16 %v1369
      %v1436 = vunpack.c.l.b16 %v1370
      %v1437 = vunpack.c.h.b16 %v1370
      %v1438 = vunpack.c.l.b16 %v1371
      %v1439 = vunpack.c.h.b16 %v1371
      %v1440 = vunpack.c.l.b16 %v1372
      %v1441 = vunpack.c.h.b16 %v1372
      %v1442 = vunpack.c.l.b16 %v1373
      %v1443 = vunpack.c.h.b16 %v1373
      %v1444 = vunpack.c.l.b16 %v1374
      %v1445 = vunpack.c.h.b16 %v1374
      %v1446 = vunpack.c.l.b16 %v1375
      %v1447 = vunpack.c.h.b16 %v1375
      %v1448 = vunpack.c.l.b16 %v1376
      %v1449 = vunpack.c.h.b16 %v1376
      %v1450 = vunpack.c.l.b16 %v1377
      %v1451 = vunpack.c.h.b16 %v1377
      %v1452 = vunpack.c.l.b16 %v1378
      %v1453 = vunpack.c.h.b16 %v1378
      %v1454 = vunpack.c.l.b16 %v1379
      %v1455 = vunpack.c.h.b16 %v1379
      %v1456 = vunpack.c.l.b16 %v1380
      %v1457 = vunpack.c.h.b16 %v1380
      %v1458 = vunpack.c.l.b16 %v1381
      %v1459 = vunpack.c.h.b16 %v1381
      %v1460 = vunpack.c.l.b16 %v1382
      %v1461 = vunpack.c.h.b16 %v1382
      %v1462 = vunpack.c.l.b16 %v1383
      %v1463 = vunpack.c.h.b16 %v1383
      %v1464 = vunpack.c.l.b16 %v1384
      %v1465 = vunpack.c.h.b16 %v1384
      %v1466 = vunpack.c.l.b16 %v1385
      %v1467 = vunpack.c.h.b16 %v1385
      %v1468 = vunpack.c.l.b16 %v1386
      %v1469 = vunpack.c.h.b16 %v1386
      %v1470 = vunpack.c.l.b16 %v1387
      %v1471 = vunpack.c.h.b16 %v1387
      %v1472 = vpack.c.b16 %v1418, %v1416
      %v1473 = vpack.c.b16 %v1419, %v1417
      %v1474 = vpack.c.b16 %v1422, %v1420
      %v1475 = vpack.c.b16 %v1423, %v1421
      %v1476 = vpack.c.b16 %v1426, %v1424
      %v1477 = vpack.c.b16 %v1427, %v1425
      %v1478 = vpack.c.b16 %v1430, %v1428
      %v1479 = vpack.c.b16 %v1431, %v1429
      %v1480 = vpack.c.b16 %v1434, %v1432
      %v1481 = vpack.c.b16 %v1435, %v1433
      %v1482 = vpack.c.b16 %v1438, %v1436
      %v1483 = vpack.c.b16 %v1439, %v1437
      %v1484 = vpack.c.b16 %v1442, %v1440
      %v1485 = vpack.c.b16 %v1443, %v1441
      %v1486 = vpack.c.b16 %v1446, %v1444
      %v1487 = vpack.c.b16 %v1447, %v1445
      %v1488 = vpack.c.b16 %v1450, %v1448
      %v1489 = vpack.c.b16 %v1451, %v1449
      %v1490 = vpack.c.b16 %v1454, %v1452
      %v1491 = vpack.c.b16 %v1455, %v1453
      %v1492 = vpack.c.b16 %v1458, %v1456
      %v1493 = vpack.c.b16 %v1459, %v1457
      %v1494 = vpack.c.b16 %v1462, %v1460
      %v1495 = vpack.c.b16 %v1463, %v1461
      %v1496 = vpack.c.b16 %v1466, %v1464
      %v1497 = vpack.c.b16 %v1467, %v1465
      %v1498 = vpack.c.b16 %v1470, %v1468
      %v1499 = vpack.c.b16 %v1471, %v1469
      %vm1528 = vcmask 785408
      %v1530 = vsel %vm1528, %v1352, 0
      %v1533 = vsel %vm1528, %v1354, 0
      %v1536 = vsel %vm1528, %v1356, 0
      %v1539 = vsel %vm1528, %v1358, 0
      %1541 = vmatprep.subr.bf16.mxu0 %v1473
      %1542 = vmatpush1.bf16.msra.mxu0 %v1472
      %1543 = vmatprep.subr.bf16.mxu0 %v1475
      %1544 = vmatpush1.bf16.msra.mxu0 %v1474
      %1545 = vmatprep.subr.bf16.mxu0 %v1477
      %1546 = vmatpush1.bf16.msra.mxu0 %v1476
      %1547 = vmatprep.subr.bf16.mxu0 %v1479
      %1548 = vmatpush1.bf16.msra.mxu0 %v1478
      %1549 = vmatprep.subr.bf16.mxu0 %v1481
      %1550 = vmatpush1.bf16.msra.mxu0 %v1480
      %1551 = vmatprep.subr.bf16.mxu0 %v1483
      %1552 = vmatpush1.bf16.msra.mxu0 %v1482
      %1553 = vmatprep.subr.bf16.mxu0 %v1485
      %1554 = vmatpush1.bf16.msra.mxu0 %v1484
      %1555 = vmatprep.subr.bf16.mxu0 %v1487
      %1556 = vmatpush1.bf16.msra.mxu0 %v1486
      %1557 = vmatprep.subr.bf16.mxu0 %v1489
      %1558 = vmatpush1.bf16.msra.mxu0 %v1488
      %1559 = vmatprep.subr.bf16.mxu0 %v1491
      %1560 = vmatpush1.bf16.msra.mxu0 %v1490
      %1561 = vmatprep.subr.bf16.mxu0 %v1493
      %1562 = vmatpush1.bf16.msra.mxu0 %v1492
      %1563 = vmatprep.subr.bf16.mxu0 %v1495
      %1564 = vmatpush1.bf16.msra.mxu0 %v1494
      %1565 = vmatprep.subr.bf16.mxu0 %v1497
      %1566 = vmatpush1.bf16.msra.mxu0 %v1496
      %1567 = vmatprep.subr.bf16.mxu0 %v1499
      %1568 = vmatpush1.bf16.msra.mxu0 %v1498
      %1569 = vmatprep.subr.bf16.mxu0 0
      %1570 = vmatpush1.bf16.msra.mxu0 0
      %1571 = vmatprep.subr.bf16.mxu0 0
      %1572 = vmatpush1.bf16.msra.mxu0 0
      %1573 = vmatprep.mubr.bf16.mxu0 %v1530
      %1574 = vmatmul.mubr.bf16.gmra.mrb[0].mxu0 %v1351
      %v1575 = vpop.f32.mrb[0].mxu0
      %v1576 = vadd.f32 0.0, %v1575
      %v1577 = vpop.f32.mrb[0].mxu0
      %v1578 = vadd.f32 0.0, %v1577
      %v1579 = vpop.f32.mrb[0].mxu0
      %v1580 = vadd.f32 0.0, %v1579
      %v1581 = vpop.f32.mrb[0].mxu0
      %v1582 = vadd.f32 0.0, %v1581
      %1583 = vmatprep.mubr.bf16.mxu0 %v1533
      %1584 = vmatmul.mubr.bf16.gmra.mrb[0].mxu0 %v1353
      %v1585 = vpop.f32.mrb[0].mxu0
      %v1586 = vadd.f32 0.0, %v1585
      %v1587 = vpop.f32.mrb[0].mxu0
      %v1588 = vadd.f32 0.0, %v1587
      %v1589 = vpop.f32.mrb[0].mxu0
      %v1590 = vadd.f32 0.0, %v1589
      %v1591 = vpop.f32.mrb[0].mxu0
      %v1592 = vadd.f32 0.0, %v1591
      %1593 = vmatprep.mubr.bf16.mxu0 %v1536
      %1594 = vmatmul.mubr.bf16.gmra.mrb[0].mxu0 %v1355
      %v1595 = vpop.f32.mrb[0].mxu0
      %v1596 = vadd.f32 0.0, %v1595
      %v1597 = vpop.f32.mrb[0].mxu0
      %v1598 = vadd.f32 0.0, %v1597
      %v1599 = vpop.f32.mrb[0].mxu0
      %v1600 = vadd.f32 0.0, %v1599
      %v1601 = vpop.f32.mrb[0].mxu0
      %v1602 = vadd.f32 0.0, %v1601
      %1603 = vmatprep.mubr.bf16.mxu0 %v1539
      %1604 = vmatmul.mubr.bf16.gmra.mrb[0].mxu0 %v1357
      %v1605 = vpop.f32.mrb[0].mxu0
      %v1606 = vadd.f32 0.0, %v1605
      %v1607 = vpop.f32.mrb[0].mxu0
      %v1608 = vadd.f32 0.0, %v1607
      %v1609 = vpop.f32.mrb[0].mxu0
      %v1610 = vpop.f32.mrb[0].mxu0
      %1611 = vdwg.mxu0
      %v1640 = vunpack.c.l.b16 %v1323
      %v1641 = vunpack.c.h.b16 %v1323
      %v1642 = vunpack.c.l.b16 %v1324
      %v1643 = vunpack.c.h.b16 %v1324
      %v1644 = vunpack.c.l.b16 %v1325
      %v1645 = vunpack.c.h.b16 %v1325
      %v1646 = vunpack.c.l.b16 %v1326
      %v1647 = vunpack.c.h.b16 %v1326
      %v1648 = vunpack.c.l.b16 %v1327
      %v1649 = vunpack.c.h.b16 %v1327
      %v1650 = vunpack.c.l.b16 %v1328
      %v1651 = vunpack.c.h.b16 %v1328
      %v1652 = vunpack.c.l.b16 %v1329
      %v1653 = vunpack.c.h.b16 %v1329
      %v1654 = vunpack.c.l.b16 %v1330
      %v1655 = vunpack.c.h.b16 %v1330
      %v1656 = vunpack.c.l.b16 %v1331
      %v1657 = vunpack.c.h.b16 %v1331
      %v1658 = vunpack.c.l.b16 %v1332
      %v1659 = vunpack.c.h.b16 %v1332
      %v1660 = vunpack.c.l.b16 %v1333
      %v1661 = vunpack.c.h.b16 %v1333
      %v1662 = vunpack.c.l.b16 %v1334
      %v1663 = vunpack.c.h.b16 %v1334
      %v1664 = vunpack.c.l.b16 %v1335
      %v1665 = vunpack.c.h.b16 %v1335
      %v1666 = vunpack.c.l.b16 %v1336
      %v1667 = vunpack.c.h.b16 %v1336
      %v1668 = vunpack.c.l.b16 %v1337
      %v1669 = vunpack.c.h.b16 %v1337
      %v1670 = vunpack.c.l.b16 %v1338
      %v1671 = vunpack.c.h.b16 %v1338
      %v1672 = vunpack.c.l.b16 %v1339
      %v1673 = vunpack.c.h.b16 %v1339
      %v1674 = vunpack.c.l.b16 %v1340
      %v1675 = vunpack.c.h.b16 %v1340
      %v1676 = vunpack.c.l.b16 %v1341
      %v1677 = vunpack.c.h.b16 %v1341
      %v1678 = vunpack.c.l.b16 %v1342
      %v1679 = vunpack.c.h.b16 %v1342
      %v1680 = vunpack.c.l.b16 %v1343
      %v1681 = vunpack.c.h.b16 %v1343
      %v1682 = vunpack.c.l.b16 %v1344
      %v1683 = vunpack.c.h.b16 %v1344
      %v1684 = vunpack.c.l.b16 %v1345
      %v1685 = vunpack.c.h.b16 %v1345
      %v1686 = vunpack.c.l.b16 %v1346
      %v1687 = vunpack.c.h.b16 %v1346
      %v1688 = vunpack.c.l.b16 %v1347
      %v1689 = vunpack.c.h.b16 %v1347
      %v1690 = vunpack.c.l.b16 %v1348
      %v1691 = vunpack.c.h.b16 %v1348
      %v1692 = vunpack.c.l.b16 %v1349
      %v1693 = vunpack.c.h.b16 %v1349
      %v1694 = vunpack.c.l.b16 %v1350
      %v1695 = vunpack.c.h.b16 %v1350
      %v1696 = vpack.c.b16 %v1642, %v1640
      %v1697 = vpack.c.b16 %v1643, %v1641
      %v1698 = vpack.c.b16 %v1646, %v1644
      %v1699 = vpack.c.b16 %v1647, %v1645
      %v1700 = vpack.c.b16 %v1650, %v1648
      %v1701 = vpack.c.b16 %v1651, %v1649
      %v1702 = vpack.c.b16 %v1654, %v1652
      %v1703 = vpack.c.b16 %v1655, %v1653
      %v1704 = vpack.c.b16 %v1658, %v1656
      %v1705 = vpack.c.b16 %v1659, %v1657
      %v1706 = vpack.c.b16 %v1662, %v1660
      %v1707 = vpack.c.b16 %v1663, %v1661
      %v1708 = vpack.c.b16 %v1666, %v1664
      %v1709 = vpack.c.b16 %v1667, %v1665
      %v1710 = vpack.c.b16 %v1670, %v1668
      %v1711 = vpack.c.b16 %v1671, %v1669
      %v1712 = vpack.c.b16 %v1674, %v1672
      %v1713 = vpack.c.b16 %v1675, %v1673
      %v1714 = vpack.c.b16 %v1678, %v1676
      %v1715 = vpack.c.b16 %v1679, %v1677
      %v1716 = vpack.c.b16 %v1682, %v1680
      %v1717 = vpack.c.b16 %v1683, %v1681
      %v1718 = vpack.c.b16 %v1686, %v1684
      %v1719 = vpack.c.b16 %v1687, %v1685
      %v1720 = vpack.c.b16 %v1690, %v1688
      %v1721 = vpack.c.b16 %v1691, %v1689
      %v1722 = vpack.c.b16 %v1694, %v1692
      %v1723 = vpack.c.b16 %v1695, %v1693
      %v1753 = vsel %vm1528, %v1316, 0
      %v1756 = vsel %vm1528, %v1318, 0
      %v1759 = vsel %vm1528, %v1320, 0
      %v1762 = vsel %vm1528, %v1322, 0
      %1764 = vmatprep.subr.bf16.mxu0 %v1697
      %1765 = vmatpush1.bf16.msra.mxu0 %v1696
      %1766 = vmatprep.subr.bf16.mxu0 %v1699
      %1767 = vmatpush1.bf16.msra.mxu0 %v1698
      %1768 = vmatprep.subr.bf16.mxu0 %v1701
      %1769 = vmatpush1.bf16.msra.mxu0 %v1700
      %1770 = vmatprep.subr.bf16.mxu0 %v1703
      %1771 = vmatpush1.bf16.msra.mxu0 %v1702
      %1772 = vmatprep.subr.bf16.mxu0 %v1705
      %1773 = vmatpush1.bf16.msra.mxu0 %v1704
      %1774 = vmatprep.subr.bf16.mxu0 %v1707
      %1775 = vmatpush1.bf16.msra.mxu0 %v1706
      %1776 = vmatprep.subr.bf16.mxu0 %v1709
      %1777 = vmatpush1.bf16.msra.mxu0 %v1708
      %1778 = vmatprep.subr.bf16.mxu0 %v1711
      %1779 = vmatpush1.bf16.msra.mxu0 %v1710
      %1780 = vmatprep.subr.bf16.mxu0 %v1713
      %1781 = vmatpush1.bf16.msra.mxu0 %v1712
      %1782 = vmatprep.subr.bf16.mxu0 %v1715
      %1783 = vmatpush1.bf16.msra.mxu0 %v1714
      %1784 = vmatprep.subr.bf16.mxu0 %v1717
      %1785 = vmatpush1.bf16.msra.mxu0 %v1716
      %1786 = vmatprep.subr.bf16.mxu0 %v1719
      %1787 = vmatpush1.bf16.msra.mxu0 %v1718
      %1788 = vmatprep.subr.bf16.mxu0 %v1721
      %1789 = vmatpush1.bf16.msra.mxu0 %v1720
      %1790 = vmatprep.subr.bf16.mxu0 %v1723
      %1791 = vmatpush1.bf16.msra.mxu0 %v1722
      %1792 = vmatprep.subr.bf16.mxu0 0
      %1793 = vmatpush1.bf16.msra.mxu0 0
      %1794 = vmatprep.subr.bf16.mxu0 0
      %1795 = vmatpush1.bf16.msra.mxu0 0
      %1796 = vmatprep.mubr.bf16.mxu0 %v1753
      %1797 = vmatmul.mubr.bf16.gmra.mrb[0].mxu0 %v1315
      %v1798 = vpop.f32.mrb[0].mxu0
      %v1799 = vadd.f32 %v1576, %v1798
      %v1800 = vpop.f32.mrb[0].mxu0
      %v1801 = vadd.f32 %v1578, %v1800
      %v1802 = vpop.f32.mrb[0].mxu0
      %v1803 = vadd.f32 %v1580, %v1802
      %v1804 = vpop.f32.mrb[0].mxu0
      %v1805 = vadd.f32 %v1582, %v1804
      %1806 = vmatprep.mubr.bf16.mxu0 %v1756
      %1807 = vmatmul.mubr.bf16.gmra.mrb[0].mxu0 %v1317
      %v1808 = vpop.f32.mrb[0].mxu0
      %v1809 = vadd.f32 %v1586, %v1808
      %v1810 = vpop.f32.mrb[0].mxu0
      %v1811 = vadd.f32 %v1588, %v1810
      %v1812 = vpop.f32.mrb[0].mxu0
      %v1813 = vadd.f32 %v1590, %v1812
      %v1814 = vpop.f32.mrb[0].mxu0
      %v1815 = vadd.f32 %v1592, %v1814
      %1816 = vmatprep.mubr.bf16.mxu0 %v1759
      %1817 = vmatmul.mubr.bf16.gmra.mrb[0].mxu0 %v1319
      %v1818 = vpop.f32.mrb[0].mxu0
      %v1819 = vadd.f32 %v1596, %v1818
      %v1820 = vpop.f32.mrb[0].mxu0
      %v1821 = vadd.f32 %v1598, %v1820
      %v1822 = vpop.f32.mrb[0].mxu0
      %v1823 = vadd.f32 %v1600, %v1822
      %v1824 = vpop.f32.mrb[0].mxu0
      %v1825 = vadd.f32 %v1602, %v1824
      %1826 = vmatprep.mubr.bf16.mxu0 %v1762
      %1827 = vmatmul.mubr.bf16.gmra.mrb[0].mxu0 %v1321
      %v1828 = vpop.f32.mrb[0].mxu0
      %v1829 = vadd.f32 %v1606, %v1828
      %v1830 = vpop.f32.mrb[0].mxu0
      %v1831 = vadd.f32 %v1608, %v1830
      %v1832 = vpop.f32.mrb[0].mxu0
      %v1833 = vpop.f32.mrb[0].mxu0
      %1834 = vdwg.mxu0
      %v1835 = vpack.c.bf16 %v1293, %v1289
      %v1836 = vpack.c.bf16 %v1294, %v1290
      %v1837 = vpack.c.bf16 %v1301, %v1297
      %v1838 = vpack.c.bf16 %v1302, %v1298
      %v1839 = vpack.c.bf16 %v1309, %v1305
      %v1840 = vpack.c.bf16 %v1310, %v1306
      %v1841 = vpack.c.bf16 %v1313, %v1313
      %v1842 = vpack.c.bf16 %v1314, %v1314
      %s1843 = scalar_lea.vmem %s4, 448
      %v1844 = vld [vmem:[%s1843] sm:$0xff]
      %v1845 = vld [vmem:[%s1843 + $0x8] sm:$0xff]
      %v1846 = vld [vmem:[%s1843 + $0x10] sm:$0xff]
      %v1847 = vld [vmem:[%s1843 + $0x18] sm:$0xff]
      %v1848 = vld [vmem:[%s1843 + $0x20] sm:$0xff]
      %v1849 = vld [vmem:[%s1843 + $0x28] sm:$0xff]
      %v1850 = vld [vmem:[%s1843 + $0x30] sm:$0xff]
      %v1851 = vld [vmem:[%s1843 + $0x38] sm:$0xff]
      %v1852 = vld [vmem:[%s1843 + $0x40] sm:$0xff]
      %v1853 = vld [vmem:[%s1843 + $0x48] sm:$0xff]
      %v1854 = vld [vmem:[%s1843 + $0x50] sm:$0xff]
      %v1855 = vld [vmem:[%s1843 + $0x58] sm:$0xff]
      %v1856 = vld [vmem:[%s1843 + $0x60] sm:$0xff]
      %v1857 = vld [vmem:[%s1843 + $0x68] sm:$0xff]
      %v1858 = vld [vmem:[%s1843 + $0x70] sm:$0xff]
      %v1859 = vld [vmem:[%s1843 + $0x78] sm:$0xff]
      %v1860 = vld [vmem:[%s1843 + $0x80] sm:$0xff]
      %v1861 = vld [vmem:[%s1843 + $0x88] sm:$0xff]
      %v1862 = vld [vmem:[%s1843 + $0x90] sm:$0xff]
      %v1863 = vld [vmem:[%s1843 + $0x98] sm:$0xff]
      %v1864 = vld [vmem:[%s1843 + $0xa0] sm:$0xff]
      %v1865 = vld [vmem:[%s1843 + $0xa8] sm:$0xff]
      %v1866 = vld [vmem:[%s1843 + $0xb0] sm:$0xff]
      %v1867 = vld [vmem:[%s1843 + $0xb8] sm:$0xff]
      %v1868 = vld [vmem:[%s1843 + $0xc0] sm:$0xff]
      %v1869 = vld [vmem:[%s1843 + $0xc8] sm:$0xff]
      %v1870 = vld [vmem:[%s1843 + $0xd0] sm:$0xff]
      %v1871 = vld [vmem:[%s1843 + $0xd8] sm:$0xff]
      %v1900 = vunpack.c.l.b16 %v1844
      %v1901 = vunpack.c.h.b16 %v1844
      %v1902 = vunpack.c.l.b16 %v1845
      %v1903 = vunpack.c.h.b16 %v1845
      %v1904 = vunpack.c.l.b16 %v1846
      %v1905 = vunpack.c.h.b16 %v1846
      %v1906 = vunpack.c.l.b16 %v1847
      %v1907 = vunpack.c.h.b16 %v1847
      %v1908 = vunpack.c.l.b16 %v1848
      %v1909 = vunpack.c.h.b16 %v1848
      %v1910 = vunpack.c.l.b16 %v1849
      %v1911 = vunpack.c.h.b16 %v1849
      %v1912 = vunpack.c.l.b16 %v1850
      %v1913 = vunpack.c.h.b16 %v1850
      %v1914 = vunpack.c.l.b16 %v1851
      %v1915 = vunpack.c.h.b16 %v1851
      %v1916 = vunpack.c.l.b16 %v1852
      %v1917 = vunpack.c.h.b16 %v1852
      %v1918 = vunpack.c.l.b16 %v1853
      %v1919 = vunpack.c.h.b16 %v1853
      %v1920 = vunpack.c.l.b16 %v1854
      %v1921 = vunpack.c.h.b16 %v1854
      %v1922 = vunpack.c.l.b16 %v1855
      %v1923 = vunpack.c.h.b16 %v1855
      %v1924 = vunpack.c.l.b16 %v1856
      %v1925 = vunpack.c.h.b16 %v1856
      %v1926 = vunpack.c.l.b16 %v1857
      %v1927 = vunpack.c.h.b16 %v1857
      %v1928 = vunpack.c.l.b16 %v1858
      %v1929 = vunpack.c.h.b16 %v1858
      %v1930 = vunpack.c.l.b16 %v1859
      %v1931 = vunpack.c.h.b16 %v1859
      %v1932 = vunpack.c.l.b16 %v1860
      %v1933 = vunpack.c.h.b16 %v1860
      %v1934 = vunpack.c.l.b16 %v1861
      %v1935 = vunpack.c.h.b16 %v1861
      %v1936 = vunpack.c.l.b16 %v1862
      %v1937 = vunpack.c.h.b16 %v1862
      %v1938 = vunpack.c.l.b16 %v1863
      %v1939 = vunpack.c.h.b16 %v1863
      %v1940 = vunpack.c.l.b16 %v1864
      %v1941 = vunpack.c.h.b16 %v1864
      %v1942 = vunpack.c.l.b16 %v1865
      %v1943 = vunpack.c.h.b16 %v1865
      %v1944 = vunpack.c.l.b16 %v1866
      %v1945 = vunpack.c.h.b16 %v1866
      %v1946 = vunpack.c.l.b16 %v1867
      %v1947 = vunpack.c.h.b16 %v1867
      %v1948 = vunpack.c.l.b16 %v1868
      %v1949 = vunpack.c.h.b16 %v1868
      %v1950 = vunpack.c.l.b16 %v1869
      %v1951 = vunpack.c.h.b16 %v1869
      %v1952 = vunpack.c.l.b16 %v1870
      %v1953 = vunpack.c.h.b16 %v1870
      %v1954 = vunpack.c.l.b16 %v1871
      %v1955 = vunpack.c.h.b16 %v1871
      %v1956 = vpack.c.b16 %v1902, %v1900
      %v1957 = vpack.c.b16 %v1903, %v1901
      %v1958 = vpack.c.b16 %v1906, %v1904
      %v1959 = vpack.c.b16 %v1907, %v1905
      %v1960 = vpack.c.b16 %v1910, %v1908
      %v1961 = vpack.c.b16 %v1911, %v1909
      %v1962 = vpack.c.b16 %v1914, %v1912
      %v1963 = vpack.c.b16 %v1915, %v1913
      %v1964 = vpack.c.b16 %v1918, %v1916
      %v1965 = vpack.c.b16 %v1919, %v1917
      %v1966 = vpack.c.b16 %v1922, %v1920
      %v1967 = vpack.c.b16 %v1923, %v1921
      %v1968 = vpack.c.b16 %v1926, %v1924
      %v1969 = vpack.c.b16 %v1927, %v1925
      %v1970 = vpack.c.b16 %v1930, %v1928
      %v1971 = vpack.c.b16 %v1931, %v1929
      %v1972 = vpack.c.b16 %v1934, %v1932
      %v1973 = vpack.c.b16 %v1935, %v1933
      %v1974 = vpack.c.b16 %v1938, %v1936
      %v1975 = vpack.c.b16 %v1939, %v1937
      %v1976 = vpack.c.b16 %v1942, %v1940
      %v1977 = vpack.c.b16 %v1943, %v1941
      %v1978 = vpack.c.b16 %v1946, %v1944
      %v1979 = vpack.c.b16 %v1947, %v1945
      %v1980 = vpack.c.b16 %v1950, %v1948
      %v1981 = vpack.c.b16 %v1951, %v1949
      %v1982 = vpack.c.b16 %v1954, %v1952
      %v1983 = vpack.c.b16 %v1955, %v1953
      %v2013 = vsel %vm1528, %v1836, 0
      %v2016 = vsel %vm1528, %v1838, 0
      %v2019 = vsel %vm1528, %v1840, 0
      %v2022 = vsel %vm1528, %v1842, 0
      %2024 = vmatprep.subr.bf16.mxu0 %v1957
      %2025 = vmatpush1.bf16.msra.mxu0 %v1956
      %2026 = vmatprep.subr.bf16.mxu0 %v1959
      %2027 = vmatpush1.bf16.msra.mxu0 %v1958
      %2028 = vmatprep.subr.bf16.mxu0 %v1961
      %2029 = vmatpush1.bf16.msra.mxu0 %v1960
      %2030 = vmatprep.subr.bf16.mxu0 %v1963
      %2031 = vmatpush1.bf16.msra.mxu0 %v1962
      %2032 = vmatprep.subr.bf16.mxu0 %v1965
      %2033 = vmatpush1.bf16.msra.mxu0 %v1964
      %2034 = vmatprep.subr.bf16.mxu0 %v1967
      %2035 = vmatpush1.bf16.msra.mxu0 %v1966
      %2036 = vmatprep.subr.bf16.mxu0 %v1969
      %2037 = vmatpush1.bf16.msra.mxu0 %v1968
      %2038 = vmatprep.subr.bf16.mxu0 %v1971
      %2039 = vmatpush1.bf16.msra.mxu0 %v1970
      %2040 = vmatprep.subr.bf16.mxu0 %v1973
      %2041 = vmatpush1.bf16.msra.mxu0 %v1972
      %2042 = vmatprep.subr.bf16.mxu0 %v1975
      %2043 = vmatpush1.bf16.msra.mxu0 %v1974
      %2044 = vmatprep.subr.bf16.mxu0 %v1977
      %2045 = vmatpush1.bf16.msra.mxu0 %v1976
      %2046 = vmatprep.subr.bf16.mxu0 %v1979
      %2047 = vmatpush1.bf16.msra.mxu0 %v1978
      %2048 = vmatprep.subr.bf16.mxu0 %v1981
      %2049 = vmatpush1.bf16.msra.mxu0 %v1980
      %2050 = vmatprep.subr.bf16.mxu0 %v1983
      %2051 = vmatpush1.bf16.msra.mxu0 %v1982
      %2052 = vmatprep.subr.bf16.mxu0 0
      %2053 = vmatpush1.bf16.msra.mxu0 0
      %2054 = vmatprep.subr.bf16.mxu0 0
      %2055 = vmatpush1.bf16.msra.mxu0 0
      %2056 = vmatprep.mubr.bf16.mxu0 %v2013
      %2057 = vmatmul.mubr.bf16.gmra.mrb[0].mxu0 %v1835
      %v2058 = vpop.f32.mrb[0].mxu0
      %v2059 = vadd.f32 0.0, %v2058
      %v2060 = vpop.f32.mrb[0].mxu0
      %v2061 = vadd.f32 0.0, %v2060
      %v2062 = vpop.f32.mrb[0].mxu0
      %v2063 = vadd.f32 0.0, %v2062
      %v2064 = vpop.f32.mrb[0].mxu0
      %v2065 = vadd.f32 0.0, %v2064
      %2066 = vmatprep.mubr.bf16.mxu0 %v2016
      %2067 = vmatmul.mubr.bf16.gmra.mrb[0].mxu0 %v1837
      %v2068 = vpop.f32.mrb[0].mxu0
      %v2069 = vadd.f32 0.0, %v2068
      %v2070 = vpop.f32.mrb[0].mxu0
      %v2071 = vadd.f32 0.0, %v2070
      %v2072 = vpop.f32.mrb[0].mxu0
      %v2073 = vadd.f32 0.0, %v2072
      %v2074 = vpop.f32.mrb[0].mxu0
      %v2075 = vadd.f32 0.0, %v2074
      %2076 = vmatprep.mubr.bf16.mxu0 %v2019
      %2077 = vmatmul.mubr.bf16.gmra.mrb[0].mxu0 %v1839
      %v2078 = vpop.f32.mrb[0].mxu0
      %v2079 = vadd.f32 0.0, %v2078
      %v2080 = vpop.f32.mrb[0].mxu0
      %v2081 = vadd.f32 0.0, %v2080
      %v2082 = vpop.f32.mrb[0].mxu0
      %v2083 = vadd.f32 0.0, %v2082
      %v2084 = vpop.f32.mrb[0].mxu0
      %v2085 = vadd.f32 0.0, %v2084
      %2086 = vmatprep.mubr.bf16.mxu0 %v2022
      %2087 = vmatmul.mubr.bf16.gmra.mrb[0].mxu0 %v1841
      %v2088 = vpop.f32.mrb[0].mxu0
      %v2089 = vadd.f32 0.0, %v2088
      %v2090 = vpop.f32.mrb[0].mxu0
      %v2091 = vadd.f32 0.0, %v2090
      %v2092 = vpop.f32.mrb[0].mxu0
      %v2093 = vpop.f32.mrb[0].mxu0
      %2094 = vdwg.mxu0
      %v2095 = vadd.f32 %v1799, %v2059
      %v2096 = vadd.f32 %v1801, %v2061
      %v2097 = vadd.f32 %v1803, %v2063
      %v2098 = vadd.f32 %v1805, %v2065
      %v2099 = vadd.f32 %v1809, %v2069
      %v2100 = vadd.f32 %v1811, %v2071
      %v2101 = vadd.f32 %v1813, %v2073
      %v2102 = vadd.f32 %v1815, %v2075
      %v2103 = vadd.f32 %v1819, %v2079
      %v2104 = vadd.f32 %v1821, %v2081
      %v2105 = vadd.f32 %v1823, %v2083
      %v2106 = vadd.f32 %v1825, %v2085
      %v2107 = vadd.f32 %v1829, %v2089
      %v2108 = vadd.f32 %v1831, %v2091
      %v2109 = vld [vmem:[%s5] sm:$0x3]
      %v2111 = vlaneseq
      %v2112 = vshrl.u32 %v2111, 7
      %v2113 = vsub.s32 0, %v2112
      %v2114 = vrot.slane %v2109, %v2113
      %v2115 = vlaneseq
      %v2116 = vshrl.u32 %v2115, 7
      %v2117 = vsub.s32 1, %v2116
      %v2118 = vrot.slane %v2109, %v2117
      %v2121 = vadd.f32 %v2095, %v2114
      %v2122 = vadd.f32 %v2096, %v2118
      %v2123 = vadd.f32 %v2097, %v2114
      %v2124 = vadd.f32 %v2098, %v2118
      %v2125 = vadd.f32 %v2099, %v2114
      %v2126 = vadd.f32 %v2100, %v2118
      %v2127 = vadd.f32 %v2101, %v2114
      %v2128 = vadd.f32 %v2102, %v2118
      %v2129 = vadd.f32 %v2103, %v2114
      %v2130 = vadd.f32 %v2104, %v2118
      %v2131 = vadd.f32 %v2105, %v2114
      %v2132 = vadd.f32 %v2106, %v2118
      %v2133 = vadd.f32 %v2107, %v2114
      %v2134 = vadd.f32 %v2108, %v2118
      %v2135 = vmax.f32 %v2121, 0.0
      %v2136 = vmax.f32 %v2122, 0.0
      %v2137 = vmax.f32 %v2123, 0.0
      %v2138 = vmax.f32 %v2124, 0.0
      %v2139 = vmax.f32 %v2125, 0.0
      %v2140 = vmax.f32 %v2126, 0.0
      %v2141 = vmax.f32 %v2127, 0.0
      %v2142 = vmax.f32 %v2128, 0.0
      %v2143 = vmax.f32 %v2129, 0.0
      %v2144 = vmax.f32 %v2130, 0.0
      %v2145 = vmax.f32 %v2131, 0.0
      %v2146 = vmax.f32 %v2132, 0.0
      %v2147 = vmax.f32 %v2133, 0.0
      %v2148 = vmax.f32 %v2134, 0.0
      %v2149 = vpack.c.bf16 %v2135, %v2135
      %v2150 = vpack.c.bf16 %v2136, %v2136
      %v2151 = vld [vmem:[%s6] sm:$0xf]
      %v2152 = vld [vmem:[%s6 + $0x4] sm:$0xf]
      %v2153 = vld [vmem:[%s6 + $0x8] sm:$0xf]
      %v2154 = vld [vmem:[%s6 + $0xc] sm:$0xf]
      %v2155 = vld [vmem:[%s6 + $0x10] sm:$0xf]
      %v2156 = vld [vmem:[%s6 + $0x14] sm:$0xf]
      %v2157 = vld [vmem:[%s6 + $0x18] sm:$0xf]
      %v2158 = vld [vmem:[%s6 + $0x1c] sm:$0xf]
      %v2159 = vld [vmem:[%s6 + $0x20] sm:$0xf]
      %v2160 = vld [vmem:[%s6 + $0x24] sm:$0xf]
      %v2161 = vld [vmem:[%s6 + $0x28] sm:$0xf]
      %v2162 = vld [vmem:[%s6 + $0x2c] sm:$0xf]
      %v2163 = vld [vmem:[%s6 + $0x30] sm:$0xf]
      %v2164 = vld [vmem:[%s6 + $0x34] sm:$0xf]
      %v2165 = vld [vmem:[%s6 + $0x38] sm:$0xf]
      %v2166 = vld [vmem:[%s6 + $0x3c] sm:$0xf]
      %v2167 = vld [vmem:[%s6 + $0x40] sm:$0xf]
      %v2168 = vld [vmem:[%s6 + $0x44] sm:$0xf]
      %v2169 = vld [vmem:[%s6 + $0x48] sm:$0xf]
      %v2170 = vld [vmem:[%s6 + $0x4c] sm:$0xf]
      %v2171 = vld [vmem:[%s6 + $0x50] sm:$0xf]
      %v2172 = vld [vmem:[%s6 + $0x54] sm:$0xf]
      %v2173 = vld [vmem:[%s6 + $0x58] sm:$0xf]
      %v2174 = vld [vmem:[%s6 + $0x5c] sm:$0xf]
      %v2175 = vld [vmem:[%s6 + $0x60] sm:$0xf]
      %v2176 = vld [vmem:[%s6 + $0x64] sm:$0xf]
      %v2177 = vld [vmem:[%s6 + $0x68] sm:$0xf]
      %v2178 = vld [vmem:[%s6 + $0x6c] sm:$0xf]
      %v2179 = vpack.c.bf16 %v2137, %v2137
      %v2180 = vpack.c.bf16 %v2138, %v2138
      %s2181 = scalar_lea.vmem %s6, 112
      %v2182 = vld [vmem:[%s2181] sm:$0xf]
      %v2183 = vld [vmem:[%s2181 + $0x4] sm:$0xf]
      %v2184 = vld [vmem:[%s2181 + $0x8] sm:$0xf]
      %v2185 = vld [vmem:[%s2181 + $0xc] sm:$0xf]
      %v2186 = vld [vmem:[%s2181 + $0x10] sm:$0xf]
      %v2187 = vld [vmem:[%s2181 + $0x14] sm:$0xf]
      %v2188 = vld [vmem:[%s2181 + $0x18] sm:$0xf]
      %v2189 = vld [vmem:[%s2181 + $0x1c] sm:$0xf]
      %v2190 = vld [vmem:[%s2181 + $0x20] sm:$0xf]
      %v2191 = vld [vmem:[%s2181 + $0x24] sm:$0xf]
      %v2192 = vld [vmem:[%s2181 + $0x28] sm:$0xf]
      %v2193 = vld [vmem:[%s2181 + $0x2c] sm:$0xf]
      %v2194 = vld [vmem:[%s2181 + $0x30] sm:$0xf]
      %v2195 = vld [vmem:[%s2181 + $0x34] sm:$0xf]
      %v2196 = vld [vmem:[%s2181 + $0x38] sm:$0xf]
      %v2197 = vld [vmem:[%s2181 + $0x3c] sm:$0xf]
      %v2198 = vld [vmem:[%s2181 + $0x40] sm:$0xf]
      %v2199 = vld [vmem:[%s2181 + $0x44] sm:$0xf]
      %v2200 = vld [vmem:[%s2181 + $0x48] sm:$0xf]
      %v2201 = vld [vmem:[%s2181 + $0x4c] sm:$0xf]
      %v2202 = vld [vmem:[%s2181 + $0x50] sm:$0xf]
      %v2203 = vld [vmem:[%s2181 + $0x54] sm:$0xf]
      %v2204 = vld [vmem:[%s2181 + $0x58] sm:$0xf]
      %v2205 = vld [vmem:[%s2181 + $0x5c] sm:$0xf]
      %v2206 = vld [vmem:[%s2181 + $0x60] sm:$0xf]
      %v2207 = vld [vmem:[%s2181 + $0x64] sm:$0xf]
      %v2208 = vld [vmem:[%s2181 + $0x68] sm:$0xf]
      %v2209 = vld [vmem:[%s2181 + $0x6c] sm:$0xf]
      %v2238 = vunpack.c.l.b16 %v2182
      %v2239 = vunpack.c.l.b16 %v2183
      %v2240 = vunpack.c.l.b16 %v2184
      %v2241 = vunpack.c.l.b16 %v2185
      %v2242 = vunpack.c.l.b16 %v2186
      %v2243 = vunpack.c.l.b16 %v2187
      %v2244 = vunpack.c.l.b16 %v2188
      %v2245 = vunpack.c.l.b16 %v2189
      %v2246 = vunpack.c.l.b16 %v2190
      %v2247 = vunpack.c.l.b16 %v2191
      %v2248 = vunpack.c.l.b16 %v2192
      %v2249 = vunpack.c.l.b16 %v2193
      %v2250 = vunpack.c.l.b16 %v2194
      %v2251 = vunpack.c.l.b16 %v2195
      %v2252 = vunpack.c.l.b16 %v2196
      %v2253 = vunpack.c.l.b16 %v2197
      %v2254 = vunpack.c.l.b16 %v2198
      %v2255 = vunpack.c.l.b16 %v2199
      %v2256 = vunpack.c.l.b16 %v2200
      %v2257 = vunpack.c.l.b16 %v2201
      %v2258 = vunpack.c.l.b16 %v2202
      %v2259 = vunpack.c.l.b16 %v2203
      %v2260 = vunpack.c.l.b16 %v2204
      %v2261 = vunpack.c.l.b16 %v2205
      %v2262 = vunpack.c.l.b16 %v2206
      %v2263 = vunpack.c.l.b16 %v2207
      %v2264 = vunpack.c.l.b16 %v2208
      %v2265 = vunpack.c.l.b16 %v2209
      %v2266 = vpack.c.b16 %v2239, %v2238
      %v2267 = vpack.c.b16 %v2241, %v2240
      %v2268 = vpack.c.b16 %v2243, %v2242
      %v2269 = vpack.c.b16 %v2245, %v2244
      %v2270 = vpack.c.b16 %v2247, %v2246
      %v2271 = vpack.c.b16 %v2249, %v2248
      %v2272 = vpack.c.b16 %v2251, %v2250
      %v2273 = vpack.c.b16 %v2253, %v2252
      %v2274 = vpack.c.b16 %v2255, %v2254
      %v2275 = vpack.c.b16 %v2257, %v2256
      %v2276 = vpack.c.b16 %v2259, %v2258
      %v2277 = vpack.c.b16 %v2261, %v2260
      %v2278 = vpack.c.b16 %v2263, %v2262
      %v2279 = vpack.c.b16 %v2265, %v2264
      %v2295 = vsel %vm1528, %v2180, 0
      %2297 = vmatprep.subr.bf16.mxu0 0
      %2298 = vmatpush1.bf16.msra.mxu0 %v2266
      %2299 = vmatprep.subr.bf16.mxu0 0
      %2300 = vmatpush1.bf16.msra.mxu0 %v2267
      %2301 = vmatprep.subr.bf16.mxu0 0
      %2302 = vmatpush1.bf16.msra.mxu0 %v2268
      %2303 = vmatprep.subr.bf16.mxu0 0
      %2304 = vmatpush1.bf16.msra.mxu0 %v2269
      %2305 = vmatprep.subr.bf16.mxu0 0
      %2306 = vmatpush1.bf16.msra.mxu0 %v2270
      %2307 = vmatprep.subr.bf16.mxu0 0
      %2308 = vmatpush1.bf16.msra.mxu0 %v2271
      %2309 = vmatprep.subr.bf16.mxu0 0
      %2310 = vmatpush1.bf16.msra.mxu0 %v2272
      %2311 = vmatprep.subr.bf16.mxu0 0
      %2312 = vmatpush1.bf16.msra.mxu0 %v2273
      %2313 = vmatprep.subr.bf16.mxu0 0
      %2314 = vmatpush1.bf16.msra.mxu0 %v2274
      %2315 = vmatprep.subr.bf16.mxu0 0
      %2316 = vmatpush1.bf16.msra.mxu0 %v2275
      %2317 = vmatprep.subr.bf16.mxu0 0
      %2318 = vmatpush1.bf16.msra.mxu0 %v2276
      %2319 = vmatprep.subr.bf16.mxu0 0
      %2320 = vmatpush1.bf16.msra.mxu0 %v2277
      %2321 = vmatprep.subr.bf16.mxu0 0
      %2322 = vmatpush1.bf16.msra.mxu0 %v2278
      %2323 = vmatprep.subr.bf16.mxu0 0
      %2324 = vmatpush1.bf16.msra.mxu0 %v2279
      %2325 = vmatprep.subr.bf16.mxu0 0
      %2326 = vmatpush1.bf16.msra.mxu0 0
      %2327 = vmatprep.subr.bf16.mxu0 0
      %2328 = vmatpush1.bf16.msra.mxu0 0
      %2329 = vmatprep.mubr.bf16.mxu0 %v2295
      %2330 = vmatmul.mubr.bf16.gmra.mrb[0].mxu0 %v2179
      %v2331 = vpop.f32.mrb[0].mxu0
      %v2332 = vadd.f32 0.0, %v2331
      %v2333 = vpop.f32.mrb[0].mxu0
      %v2334 = vpop.f32.mrb[0].mxu0
      %v2335 = vpop.f32.mrb[0].mxu0
      %2336 = vdwg.mxu0
      %v2365 = vunpack.c.l.b16 %v2151
      %v2366 = vunpack.c.l.b16 %v2152
      %v2367 = vunpack.c.l.b16 %v2153
      %v2368 = vunpack.c.l.b16 %v2154
      %v2369 = vunpack.c.l.b16 %v2155
      %v2370 = vunpack.c.l.b16 %v2156
      %v2371 = vunpack.c.l.b16 %v2157
      %v2372 = vunpack.c.l.b16 %v2158
      %v2373 = vunpack.c.l.b16 %v2159
      %v2374 = vunpack.c.l.b16 %v2160
      %v2375 = vunpack.c.l.b16 %v2161
      %v2376 = vunpack.c.l.b16 %v2162
      %v2377 = vunpack.c.l.b16 %v2163
      %v2378 = vunpack.c.l.b16 %v2164
      %v2379 = vunpack.c.l.b16 %v2165
      %v2380 = vunpack.c.l.b16 %v2166
      %v2381 = vunpack.c.l.b16 %v2167
      %v2382 = vunpack.c.l.b16 %v2168
      %v2383 = vunpack.c.l.b16 %v2169
      %v2384 = vunpack.c.l.b16 %v2170
      %v2385 = vunpack.c.l.b16 %v2171
      %v2386 = vunpack.c.l.b16 %v2172
      %v2387 = vunpack.c.l.b16 %v2173
      %v2388 = vunpack.c.l.b16 %v2174
      %v2389 = vunpack.c.l.b16 %v2175
      %v2390 = vunpack.c.l.b16 %v2176
      %v2391 = vunpack.c.l.b16 %v2177
      %v2392 = vunpack.c.l.b16 %v2178
      %v2393 = vpack.c.b16 %v2366, %v2365
      %v2394 = vpack.c.b16 %v2368, %v2367
      %v2395 = vpack.c.b16 %v2370, %v2369
      %v2396 = vpack.c.b16 %v2372, %v2371
      %v2397 = vpack.c.b16 %v2374, %v2373
      %v2398 = vpack.c.b16 %v2376, %v2375
      %v2399 = vpack.c.b16 %v2378, %v2377
      %v2400 = vpack.c.b16 %v2380, %v2379
      %v2401 = vpack.c.b16 %v2382, %v2381
      %v2402 = vpack.c.b16 %v2384, %v2383
      %v2403 = vpack.c.b16 %v2386, %v2385
      %v2404 = vpack.c.b16 %v2388, %v2387
      %v2405 = vpack.c.b16 %v2390, %v2389
      %v2406 = vpack.c.b16 %v2392, %v2391
      %v2422 = vsel %vm1528, %v2150, 0
      %2424 = vmatprep.subr.bf16.mxu0 0
      %2425 = vmatpush1.bf16.msra.mxu0 %v2393
      %2426 = vmatprep.subr.bf16.mxu0 0
      %2427 = vmatpush1.bf16.msra.mxu0 %v2394
      %2428 = vmatprep.subr.bf16.mxu0 0
      %2429 = vmatpush1.bf16.msra.mxu0 %v2395
      %2430 = vmatprep.subr.bf16.mxu0 0
      %2431 = vmatpush1.bf16.msra.mxu0 %v2396
      %2432 = vmatprep.subr.bf16.mxu0 0
      %2433 = vmatpush1.bf16.msra.mxu0 %v2397
      %2434 = vmatprep.subr.bf16.mxu0 0
      %2435 = vmatpush1.bf16.msra.mxu0 %v2398
      %2436 = vmatprep.subr.bf16.mxu0 0
      %2437 = vmatpush1.bf16.msra.mxu0 %v2399
      %2438 = vmatprep.subr.bf16.mxu0 0
      %2439 = vmatpush1.bf16.msra.mxu0 %v2400
      %2440 = vmatprep.subr.bf16.mxu0 0
      %2441 = vmatpush1.bf16.msra.mxu0 %v2401
      %2442 = vmatprep.subr.bf16.mxu0 0
      %2443 = vmatpush1.bf16.msra.mxu0 %v2402
      %2444 = vmatprep.subr.bf16.mxu0 0
      %2445 = vmatpush1.bf16.msra.mxu0 %v2403
      %2446 = vmatprep.subr.bf16.mxu0 0
      %2447 = vmatpush1.bf16.msra.mxu0 %v2404
      %2448 = vmatprep.subr.bf16.mxu0 0
      %2449 = vmatpush1.bf16.msra.mxu0 %v2405
      %2450 = vmatprep.subr.bf16.mxu0 0
      %2451 = vmatpush1.bf16.msra.mxu0 %v2406
      %2452 = vmatprep.subr.bf16.mxu0 0
      %2453 = vmatpush1.bf16.msra.mxu0 0
      %2454 = vmatprep.subr.bf16.mxu0 0
      %2455 = vmatpush1.bf16.msra.mxu0 0
      %2456 = vmatprep.mubr.bf16.mxu0 %v2422
      %2457 = vmatmul.mubr.bf16.gmra.mrb[0].mxu0 %v2149
      %v2458 = vpop.f32.mrb[0].mxu0
      %v2459 = vadd.f32 %v2332, %v2458
      %v2460 = vpop.f32.mrb[0].mxu0
      %v2461 = vpop.f32.mrb[0].mxu0
      %v2462 = vpop.f32.mrb[0].mxu0
      %2463 = vdwg.mxu0
      %v2464 = vpack.c.bf16 %v2139, %v2139
      %v2465 = vpack.c.bf16 %v2140, %v2140
      %s2466 = scalar_lea.vmem %s6, 224
      %v2467 = vld [vmem:[%s2466] sm:$0xf]
      %v2468 = vld [vmem:[%s2466 + $0x4] sm:$0xf]
      %v2469 = vld [vmem:[%s2466 + $0x8] sm:$0xf]
      %v2470 = vld [vmem:[%s2466 + $0xc] sm:$0xf]
      %v2471 = vld [vmem:[%s2466 + $0x10] sm:$0xf]
      %v2472 = vld [vmem:[%s2466 + $0x14] sm:$0xf]
      %v2473 = vld [vmem:[%s2466 + $0x18] sm:$0xf]
      %v2474 = vld [vmem:[%s2466 + $0x1c] sm:$0xf]
      %v2475 = vld [vmem:[%s2466 + $0x20] sm:$0xf]
      %v2476 = vld [vmem:[%s2466 + $0x24] sm:$0xf]
      %v2477 = vld [vmem:[%s2466 + $0x28] sm:$0xf]
      %v2478 = vld [vmem:[%s2466 + $0x2c] sm:$0xf]
      %v2479 = vld [vmem:[%s2466 + $0x30] sm:$0xf]
      %v2480 = vld [vmem:[%s2466 + $0x34] sm:$0xf]
      %v2481 = vld [vmem:[%s2466 + $0x38] sm:$0xf]
      %v2482 = vld [vmem:[%s2466 + $0x3c] sm:$0xf]
      %v2483 = vld [vmem:[%s2466 + $0x40] sm:$0xf]
      %v2484 = vld [vmem:[%s2466 + $0x44] sm:$0xf]
      %v2485 = vld [vmem:[%s2466 + $0x48] sm:$0xf]
      %v2486 = vld [vmem:[%s2466 + $0x4c] sm:$0xf]
      %v2487 = vld [vmem:[%s2466 + $0x50] sm:$0xf]
      %v2488 = vld [vmem:[%s2466 + $0x54] sm:$0xf]
      %v2489 = vld [vmem:[%s2466 + $0x58] sm:$0xf]
      %v2490 = vld [vmem:[%s2466 + $0x5c] sm:$0xf]
      %v2491 = vld [vmem:[%s2466 + $0x60] sm:$0xf]
      %v2492 = vld [vmem:[%s2466 + $0x64] sm:$0xf]
      %v2493 = vld [vmem:[%s2466 + $0x68] sm:$0xf]
      %v2494 = vld [vmem:[%s2466 + $0x6c] sm:$0xf]
      %v2523 = vunpack.c.l.b16 %v2467
      %v2524 = vunpack.c.l.b16 %v2468
      %v2525 = vunpack.c.l.b16 %v2469
      %v2526 = vunpack.c.l.b16 %v2470
      %v2527 = vunpack.c.l.b16 %v2471
      %v2528 = vunpack.c.l.b16 %v2472
      %v2529 = vunpack.c.l.b16 %v2473
      %v2530 = vunpack.c.l.b16 %v2474
      %v2531 = vunpack.c.l.b16 %v2475
      %v2532 = vunpack.c.l.b16 %v2476
      %v2533 = vunpack.c.l.b16 %v2477
      %v2534 = vunpack.c.l.b16 %v2478
      %v2535 = vunpack.c.l.b16 %v2479
      %v2536 = vunpack.c.l.b16 %v2480
      %v2537 = vunpack.c.l.b16 %v2481
      %v2538 = vunpack.c.l.b16 %v2482
      %v2539 = vunpack.c.l.b16 %v2483
      %v2540 = vunpack.c.l.b16 %v2484
      %v2541 = vunpack.c.l.b16 %v2485
      %v2542 = vunpack.c.l.b16 %v2486
      %v2543 = vunpack.c.l.b16 %v2487
      %v2544 = vunpack.c.l.b16 %v2488
      %v2545 = vunpack.c.l.b16 %v2489
      %v2546 = vunpack.c.l.b16 %v2490
      %v2547 = vunpack.c.l.b16 %v2491
      %v2548 = vunpack.c.l.b16 %v2492
      %v2549 = vunpack.c.l.b16 %v2493
      %v2550 = vunpack.c.l.b16 %v2494
      %v2551 = vpack.c.b16 %v2524, %v2523
      %v2552 = vpack.c.b16 %v2526, %v2525
      %v2553 = vpack.c.b16 %v2528, %v2527
      %v2554 = vpack.c.b16 %v2530, %v2529
      %v2555 = vpack.c.b16 %v2532, %v2531
      %v2556 = vpack.c.b16 %v2534, %v2533
      %v2557 = vpack.c.b16 %v2536, %v2535
      %v2558 = vpack.c.b16 %v2538, %v2537
      %v2559 = vpack.c.b16 %v2540, %v2539
      %v2560 = vpack.c.b16 %v2542, %v2541
      %v2561 = vpack.c.b16 %v2544, %v2543
      %v2562 = vpack.c.b16 %v2546, %v2545
      %v2563 = vpack.c.b16 %v2548, %v2547
      %v2564 = vpack.c.b16 %v2550, %v2549
      %v2580 = vsel %vm1528, %v2465, 0
      %2582 = vmatprep.subr.bf16.mxu0 0
      %2583 = vmatpush1.bf16.msra.mxu0 %v2551
      %2584 = vmatprep.subr.bf16.mxu0 0
      %2585 = vmatpush1.bf16.msra.mxu0 %v2552
      %2586 = vmatprep.subr.bf16.mxu0 0
      %2587 = vmatpush1.bf16.msra.mxu0 %v2553
      %2588 = vmatprep.subr.bf16.mxu0 0
      %2589 = vmatpush1.bf16.msra.mxu0 %v2554
      %2590 = vmatprep.subr.bf16.mxu0 0
      %2591 = vmatpush1.bf16.msra.mxu0 %v2555
      %2592 = vmatprep.subr.bf16.mxu0 0
      %2593 = vmatpush1.bf16.msra.mxu0 %v2556
      %2594 = vmatprep.subr.bf16.mxu0 0
      %2595 = vmatpush1.bf16.msra.mxu0 %v2557
      %2596 = vmatprep.subr.bf16.mxu0 0
      %2597 = vmatpush1.bf16.msra.mxu0 %v2558
      %2598 = vmatprep.subr.bf16.mxu0 0
      %2599 = vmatpush1.bf16.msra.mxu0 %v2559
      %2600 = vmatprep.subr.bf16.mxu0 0
      %2601 = vmatpush1.bf16.msra.mxu0 %v2560
      %2602 = vmatprep.subr.bf16.mxu0 0
      %2603 = vmatpush1.bf16.msra.mxu0 %v2561
      %2604 = vmatprep.subr.bf16.mxu0 0
      %2605 = vmatpush1.bf16.msra.mxu0 %v2562
      %2606 = vmatprep.subr.bf16.mxu0 0
      %2607 = vmatpush1.bf16.msra.mxu0 %v2563
      %2608 = vmatprep.subr.bf16.mxu0 0
      %2609 = vmatpush1.bf16.msra.mxu0 %v2564
      %2610 = vmatprep.subr.bf16.mxu0 0
      %2611 = vmatpush1.bf16.msra.mxu0 0
      %2612 = vmatprep.subr.bf16.mxu0 0
      %2613 = vmatpush1.bf16.msra.mxu0 0
      %2614 = vmatprep.mubr.bf16.mxu0 %v2580
      %2615 = vmatmul.mubr.bf16.gmra.mrb[0].mxu0 %v2464
      %v2616 = vpop.f32.mrb[0].mxu0
      %v2617 = vadd.f32 0.0, %v2616
      %v2618 = vpop.f32.mrb[0].mxu0
      %v2619 = vpop.f32.mrb[0].mxu0
      %v2620 = vpop.f32.mrb[0].mxu0
      %2621 = vdwg.mxu0
      %v2622 = vadd.f32 %v2459, %v2617
      %v2623 = vpack.c.bf16 %v2141, %v2141
      %v2624 = vpack.c.bf16 %v2142, %v2142
      %s2625 = scalar_lea.vmem %s6, 336
      %v2626 = vld [vmem:[%s2625] sm:$0xf]
      %v2627 = vld [vmem:[%s2625 + $0x4] sm:$0xf]
      %v2628 = vld [vmem:[%s2625 + $0x8] sm:$0xf]
      %v2629 = vld [vmem:[%s2625 + $0xc] sm:$0xf]
      %v2630 = vld [vmem:[%s2625 + $0x10] sm:$0xf]
      %v2631 = vld [vmem:[%s2625 + $0x14] sm:$0xf]
      %v2632 = vld [vmem:[%s2625 + $0x18] sm:$0xf]
      %v2633 = vld [vmem:[%s2625 + $0x1c] sm:$0xf]
      %v2634 = vld [vmem:[%s2625 + $0x20] sm:$0xf]
      %v2635 = vld [vmem:[%s2625 + $0x24] sm:$0xf]
      %v2636 = vld [vmem:[%s2625 + $0x28] sm:$0xf]
      %v2637 = vld [vmem:[%s2625 + $0x2c] sm:$0xf]
      %v2638 = vld [vmem:[%s2625 + $0x30] sm:$0xf]
      %v2639 = vld [vmem:[%s2625 + $0x34] sm:$0xf]
      %v2640 = vld [vmem:[%s2625 + $0x38] sm:$0xf]
      %v2641 = vld [vmem:[%s2625 + $0x3c] sm:$0xf]
      %v2642 = vld [vmem:[%s2625 + $0x40] sm:$0xf]
      %v2643 = vld [vmem:[%s2625 + $0x44] sm:$0xf]
      %v2644 = vld [vmem:[%s2625 + $0x48] sm:$0xf]
      %v2645 = vld [vmem:[%s2625 + $0x4c] sm:$0xf]
      %v2646 = vld [vmem:[%s2625 + $0x50] sm:$0xf]
      %v2647 = vld [vmem:[%s2625 + $0x54] sm:$0xf]
      %v2648 = vld [vmem:[%s2625 + $0x58] sm:$0xf]
      %v2649 = vld [vmem:[%s2625 + $0x5c] sm:$0xf]
      %v2650 = vld [vmem:[%s2625 + $0x60] sm:$0xf]
      %v2651 = vld [vmem:[%s2625 + $0x64] sm:$0xf]
      %v2652 = vld [vmem:[%s2625 + $0x68] sm:$0xf]
      %v2653 = vld [vmem:[%s2625 + $0x6c] sm:$0xf]
      %v2682 = vunpack.c.l.b16 %v2626
      %v2683 = vunpack.c.l.b16 %v2627
      %v2684 = vunpack.c.l.b16 %v2628
      %v2685 = vunpack.c.l.b16 %v2629
      %v2686 = vunpack.c.l.b16 %v2630
      %v2687 = vunpack.c.l.b16 %v2631
      %v2688 = vunpack.c.l.b16 %v2632
      %v2689 = vunpack.c.l.b16 %v2633
      %v2690 = vunpack.c.l.b16 %v2634
      %v2691 = vunpack.c.l.b16 %v2635
      %v2692 = vunpack.c.l.b16 %v2636
      %v2693 = vunpack.c.l.b16 %v2637
      %v2694 = vunpack.c.l.b16 %v2638
      %v2695 = vunpack.c.l.b16 %v2639
      %v2696 = vunpack.c.l.b16 %v2640
      %v2697 = vunpack.c.l.b16 %v2641
      %v2698 = vunpack.c.l.b16 %v2642
      %v2699 = vunpack.c.l.b16 %v2643
      %v2700 = vunpack.c.l.b16 %v2644
      %v2701 = vunpack.c.l.b16 %v2645
      %v2702 = vunpack.c.l.b16 %v2646
      %v2703 = vunpack.c.l.b16 %v2647
      %v2704 = vunpack.c.l.b16 %v2648
      %v2705 = vunpack.c.l.b16 %v2649
      %v2706 = vunpack.c.l.b16 %v2650
      %v2707 = vunpack.c.l.b16 %v2651
      %v2708 = vunpack.c.l.b16 %v2652
      %v2709 = vunpack.c.l.b16 %v2653
      %v2710 = vpack.c.b16 %v2683, %v2682
      %v2711 = vpack.c.b16 %v2685, %v2684
      %v2712 = vpack.c.b16 %v2687, %v2686
      %v2713 = vpack.c.b16 %v2689, %v2688
      %v2714 = vpack.c.b16 %v2691, %v2690
      %v2715 = vpack.c.b16 %v2693, %v2692
      %v2716 = vpack.c.b16 %v2695, %v2694
      %v2717 = vpack.c.b16 %v2697, %v2696
      %v2718 = vpack.c.b16 %v2699, %v2698
      %v2719 = vpack.c.b16 %v2701, %v2700
      %v2720 = vpack.c.b16 %v2703, %v2702
      %v2721 = vpack.c.b16 %v2705, %v2704
      %v2722 = vpack.c.b16 %v2707, %v2706
      %v2723 = vpack.c.b16 %v2709, %v2708
      %v2739 = vsel %vm1528, %v2624, 0
      %2741 = vmatprep.subr.bf16.mxu0 0
      %2742 = vmatpush1.bf16.msra.mxu0 %v2710
      %2743 = vmatprep.subr.bf16.mxu0 0
      %2744 = vmatpush1.bf16.msra.mxu0 %v2711
      %2745 = vmatprep.subr.bf16.mxu0 0
      %2746 = vmatpush1.bf16.msra.mxu0 %v2712
      %2747 = vmatprep.subr.bf16.mxu0 0
      %2748 = vmatpush1.bf16.msra.mxu0 %v2713
      %2749 = vmatprep.subr.bf16.mxu0 0
      %2750 = vmatpush1.bf16.msra.mxu0 %v2714
      %2751 = vmatprep.subr.bf16.mxu0 0
      %2752 = vmatpush1.bf16.msra.mxu0 %v2715
      %2753 = vmatprep.subr.bf16.mxu0 0
      %2754 = vmatpush1.bf16.msra.mxu0 %v2716
      %2755 = vmatprep.subr.bf16.mxu0 0
      %2756 = vmatpush1.bf16.msra.mxu0 %v2717
      %2757 = vmatprep.subr.bf16.mxu0 0
      %2758 = vmatpush1.bf16.msra.mxu0 %v2718
      %2759 = vmatprep.subr.bf16.mxu0 0
      %2760 = vmatpush1.bf16.msra.mxu0 %v2719
      %2761 = vmatprep.subr.bf16.mxu0 0
      %2762 = vmatpush1.bf16.msra.mxu0 %v2720
      %2763 = vmatprep.subr.bf16.mxu0 0
      %2764 = vmatpush1.bf16.msra.mxu0 %v2721
      %2765 = vmatprep.subr.bf16.mxu0 0
      %2766 = vmatpush1.bf16.msra.mxu0 %v2722
      %2767 = vmatprep.subr.bf16.mxu0 0
      %2768 = vmatpush1.bf16.msra.mxu0 %v2723
      %2769 = vmatprep.subr.bf16.mxu0 0
      %2770 = vmatpush1.bf16.msra.mxu0 0
      %2771 = vmatprep.subr.bf16.mxu0 0
      %2772 = vmatpush1.bf16.msra.mxu0 0
      %2773 = vmatprep.mubr.bf16.mxu0 %v2739
      %2774 = vmatmul.mubr.bf16.gmra.mrb[0].mxu0 %v2623
      %v2775 = vpop.f32.mrb[0].mxu0
      %v2776 = vadd.f32 0.0, %v2775
      %v2777 = vpop.f32.mrb[0].mxu0
      %v2778 = vpop.f32.mrb[0].mxu0
      %v2779 = vpop.f32.mrb[0].mxu0
      %2780 = vdwg.mxu0
      %v2781 = vadd.f32 %v2622, %v2776
      %v2782 = vpack.c.bf16 %v2143, %v2143
      %v2783 = vpack.c.bf16 %v2144, %v2144
      %s2784 = scalar_lea.vmem %s6, 448
      %v2785 = vld [vmem:[%s2784] sm:$0xf]
      %v2786 = vld [vmem:[%s2784 + $0x4] sm:$0xf]
      %v2787 = vld [vmem:[%s2784 + $0x8] sm:$0xf]
      %v2788 = vld [vmem:[%s2784 + $0xc] sm:$0xf]
      %v2789 = vld [vmem:[%s2784 + $0x10] sm:$0xf]
      %v2790 = vld [vmem:[%s2784 + $0x14] sm:$0xf]
      %v2791 = vld [vmem:[%s2784 + $0x18] sm:$0xf]
      %v2792 = vld [vmem:[%s2784 + $0x1c] sm:$0xf]
      %v2793 = vld [vmem:[%s2784 + $0x20] sm:$0xf]
      %v2794 = vld [vmem:[%s2784 + $0x24] sm:$0xf]
      %v2795 = vld [vmem:[%s2784 + $0x28] sm:$0xf]
      %v2796 = vld [vmem:[%s2784 + $0x2c] sm:$0xf]
      %v2797 = vld [vmem:[%s2784 + $0x30] sm:$0xf]
      %v2798 = vld [vmem:[%s2784 + $0x34] sm:$0xf]
      %v2799 = vld [vmem:[%s2784 + $0x38] sm:$0xf]
      %v2800 = vld [vmem:[%s2784 + $0x3c] sm:$0xf]
      %v2801 = vld [vmem:[%s2784 + $0x40] sm:$0xf]
      %v2802 = vld [vmem:[%s2784 + $0x44] sm:$0xf]
      %v2803 = vld [vmem:[%s2784 + $0x48] sm:$0xf]
      %v2804 = vld [vmem:[%s2784 + $0x4c] sm:$0xf]
      %v2805 = vld [vmem:[%s2784 + $0x50] sm:$0xf]
      %v2806 = vld [vmem:[%s2784 + $0x54] sm:$0xf]
      %v2807 = vld [vmem:[%s2784 + $0x58] sm:$0xf]
      %v2808 = vld [vmem:[%s2784 + $0x5c] sm:$0xf]
      %v2809 = vld [vmem:[%s2784 + $0x60] sm:$0xf]
      %v2810 = vld [vmem:[%s2784 + $0x64] sm:$0xf]
      %v2811 = vld [vmem:[%s2784 + $0x68] sm:$0xf]
      %v2812 = vld [vmem:[%s2784 + $0x6c] sm:$0xf]
      %v2841 = vunpack.c.l.b16 %v2785
      %v2842 = vunpack.c.l.b16 %v2786
      %v2843 = vunpack.c.l.b16 %v2787
      %v2844 = vunpack.c.l.b16 %v2788
      %v2845 = vunpack.c.l.b16 %v2789
      %v2846 = vunpack.c.l.b16 %v2790
      %v2847 = vunpack.c.l.b16 %v2791
      %v2848 = vunpack.c.l.b16 %v2792
      %v2849 = vunpack.c.l.b16 %v2793
      %v2850 = vunpack.c.l.b16 %v2794
      %v2851 = vunpack.c.l.b16 %v2795
      %v2852 = vunpack.c.l.b16 %v2796
      %v2853 = vunpack.c.l.b16 %v2797
      %v2854 = vunpack.c.l.b16 %v2798
      %v2855 = vunpack.c.l.b16 %v2799
      %v2856 = vunpack.c.l.b16 %v2800
      %v2857 = vunpack.c.l.b16 %v2801
      %v2858 = vunpack.c.l.b16 %v2802
      %v2859 = vunpack.c.l.b16 %v2803
      %v2860 = vunpack.c.l.b16 %v2804
      %v2861 = vunpack.c.l.b16 %v2805
      %v2862 = vunpack.c.l.b16 %v2806
      %v2863 = vunpack.c.l.b16 %v2807
      %v2864 = vunpack.c.l.b16 %v2808
      %v2865 = vunpack.c.l.b16 %v2809
      %v2866 = vunpack.c.l.b16 %v2810
      %v2867 = vunpack.c.l.b16 %v2811
      %v2868 = vunpack.c.l.b16 %v2812
      %v2869 = vpack.c.b16 %v2842, %v2841
      %v2870 = vpack.c.b16 %v2844, %v2843
      %v2871 = vpack.c.b16 %v2846, %v2845
      %v2872 = vpack.c.b16 %v2848, %v2847
      %v2873 = vpack.c.b16 %v2850, %v2849
      %v2874 = vpack.c.b16 %v2852, %v2851
      %v2875 = vpack.c.b16 %v2854, %v2853
      %v2876 = vpack.c.b16 %v2856, %v2855
      %v2877 = vpack.c.b16 %v2858, %v2857
      %v2878 = vpack.c.b16 %v2860, %v2859
      %v2879 = vpack.c.b16 %v2862, %v2861
      %v2880 = vpack.c.b16 %v2864, %v2863
      %v2881 = vpack.c.b16 %v2866, %v2865
      %v2882 = vpack.c.b16 %v2868, %v2867
      %v2898 = vsel %vm1528, %v2783, 0
      %2900 = vmatprep.subr.bf16.mxu0 0
      %2901 = vmatpush1.bf16.msra.mxu0 %v2869
      %2902 = vmatprep.subr.bf16.mxu0 0
      %2903 = vmatpush1.bf16.msra.mxu0 %v2870
      %2904 = vmatprep.subr.bf16.mxu0 0
      %2905 = vmatpush1.bf16.msra.mxu0 %v2871
      %2906 = vmatprep.subr.bf16.mxu0 0
      %2907 = vmatpush1.bf16.msra.mxu0 %v2872
      %2908 = vmatprep.subr.bf16.mxu0 0
      %2909 = vmatpush1.bf16.msra.mxu0 %v2873
      %2910 = vmatprep.subr.bf16.mxu0 0
      %2911 = vmatpush1.bf16.msra.mxu0 %v2874
      %2912 = vmatprep.subr.bf16.mxu0 0
      %2913 = vmatpush1.bf16.msra.mxu0 %v2875
      %2914 = vmatprep.subr.bf16.mxu0 0
      %2915 = vmatpush1.bf16.msra.mxu0 %v2876
      %2916 = vmatprep.subr.bf16.mxu0 0
      %2917 = vmatpush1.bf16.msra.mxu0 %v2877
      %2918 = vmatprep.subr.bf16.mxu0 0
      %2919 = vmatpush1.bf16.msra.mxu0 %v2878
      %2920 = vmatprep.subr.bf16.mxu0 0
      %2921 = vmatpush1.bf16.msra.mxu0 %v2879
      %2922 = vmatprep.subr.bf16.mxu0 0
      %2923 = vmatpush1.bf16.msra.mxu0 %v2880
      %2924 = vmatprep.subr.bf16.mxu0 0
      %2925 = vmatpush1.bf16.msra.mxu0 %v2881
      %2926 = vmatprep.subr.bf16.mxu0 0
      %2927 = vmatpush1.bf16.msra.mxu0 %v2882
      %2928 = vmatprep.subr.bf16.mxu0 0
      %2929 = vmatpush1.bf16.msra.mxu0 0
      %2930 = vmatprep.subr.bf16.mxu0 0
      %2931 = vmatpush1.bf16.msra.mxu0 0
      %2932 = vmatprep.mubr.bf16.mxu0 %v2898
      %2933 = vmatmul.mubr.bf16.gmra.mrb[0].mxu0 %v2782
      %v2934 = vpop.f32.mrb[0].mxu0
      %v2935 = vadd.f32 0.0, %v2934
      %v2936 = vpop.f32.mrb[0].mxu0
      %v2937 = vpop.f32.mrb[0].mxu0
      %v2938 = vpop.f32.mrb[0].mxu0
      %2939 = vdwg.mxu0
      %v2940 = vadd.f32 %v2781, %v2935
      %v2941 = vpack.c.bf16 %v2145, %v2145
      %v2942 = vpack.c.bf16 %v2146, %v2146
      %s2943 = scalar_lea.vmem %s6, 560
      %v2944 = vld [vmem:[%s2943] sm:$0xf]
      %v2945 = vld [vmem:[%s2943 + $0x4] sm:$0xf]
      %v2946 = vld [vmem:[%s2943 + $0x8] sm:$0xf]
      %v2947 = vld [vmem:[%s2943 + $0xc] sm:$0xf]
      %v2948 = vld [vmem:[%s2943 + $0x10] sm:$0xf]
      %v2949 = vld [vmem:[%s2943 + $0x14] sm:$0xf]
      %v2950 = vld [vmem:[%s2943 + $0x18] sm:$0xf]
      %v2951 = vld [vmem:[%s2943 + $0x1c] sm:$0xf]
      %v2952 = vld [vmem:[%s2943 + $0x20] sm:$0xf]
      %v2953 = vld [vmem:[%s2943 + $0x24] sm:$0xf]
      %v2954 = vld [vmem:[%s2943 + $0x28] sm:$0xf]
      %v2955 = vld [vmem:[%s2943 + $0x2c] sm:$0xf]
      %v2956 = vld [vmem:[%s2943 + $0x30] sm:$0xf]
      %v2957 = vld [vmem:[%s2943 + $0x34] sm:$0xf]
      %v2958 = vld [vmem:[%s2943 + $0x38] sm:$0xf]
      %v2959 = vld [vmem:[%s2943 + $0x3c] sm:$0xf]
      %v2960 = vld [vmem:[%s2943 + $0x40] sm:$0xf]
      %v2961 = vld [vmem:[%s2943 + $0x44] sm:$0xf]
      %v2962 = vld [vmem:[%s2943 + $0x48] sm:$0xf]
      %v2963 = vld [vmem:[%s2943 + $0x4c] sm:$0xf]
      %v2964 = vld [vmem:[%s2943 + $0x50] sm:$0xf]
      %v2965 = vld [vmem:[%s2943 + $0x54] sm:$0xf]
      %v2966 = vld [vmem:[%s2943 + $0x58] sm:$0xf]
      %v2967 = vld [vmem:[%s2943 + $0x5c] sm:$0xf]
      %v2968 = vld [vmem:[%s2943 + $0x60] sm:$0xf]
      %v2969 = vld [vmem:[%s2943 + $0x64] sm:$0xf]
      %v2970 = vld [vmem:[%s2943 + $0x68] sm:$0xf]
      %v2971 = vld [vmem:[%s2943 + $0x6c] sm:$0xf]
      %v3000 = vunpack.c.l.b16 %v2944
      %v3001 = vunpack.c.l.b16 %v2945
      %v3002 = vunpack.c.l.b16 %v2946
      %v3003 = vunpack.c.l.b16 %v2947
      %v3004 = vunpack.c.l.b16 %v2948
      %v3005 = vunpack.c.l.b16 %v2949
      %v3006 = vunpack.c.l.b16 %v2950
      %v3007 = vunpack.c.l.b16 %v2951
      %v3008 = vunpack.c.l.b16 %v2952
      %v3009 = vunpack.c.l.b16 %v2953
      %v3010 = vunpack.c.l.b16 %v2954
      %v3011 = vunpack.c.l.b16 %v2955
      %v3012 = vunpack.c.l.b16 %v2956
      %v3013 = vunpack.c.l.b16 %v2957
      %v3014 = vunpack.c.l.b16 %v2958
      %v3015 = vunpack.c.l.b16 %v2959
      %v3016 = vunpack.c.l.b16 %v2960
      %v3017 = vunpack.c.l.b16 %v2961
      %v3018 = vunpack.c.l.b16 %v2962
      %v3019 = vunpack.c.l.b16 %v2963
      %v3020 = vunpack.c.l.b16 %v2964
      %v3021 = vunpack.c.l.b16 %v2965
      %v3022 = vunpack.c.l.b16 %v2966
      %v3023 = vunpack.c.l.b16 %v2967
      %v3024 = vunpack.c.l.b16 %v2968
      %v3025 = vunpack.c.l.b16 %v2969
      %v3026 = vunpack.c.l.b16 %v2970
      %v3027 = vunpack.c.l.b16 %v2971
      %v3028 = vpack.c.b16 %v3001, %v3000
      %v3029 = vpack.c.b16 %v3003, %v3002
      %v3030 = vpack.c.b16 %v3005, %v3004
      %v3031 = vpack.c.b16 %v3007, %v3006
      %v3032 = vpack.c.b16 %v3009, %v3008
      %v3033 = vpack.c.b16 %v3011, %v3010
      %v3034 = vpack.c.b16 %v3013, %v3012
      %v3035 = vpack.c.b16 %v3015, %v3014
      %v3036 = vpack.c.b16 %v3017, %v3016
      %v3037 = vpack.c.b16 %v3019, %v3018
      %v3038 = vpack.c.b16 %v3021, %v3020
      %v3039 = vpack.c.b16 %v3023, %v3022
      %v3040 = vpack.c.b16 %v3025, %v3024
      %v3041 = vpack.c.b16 %v3027, %v3026
      %v3057 = vsel %vm1528, %v2942, 0
      %3059 = vmatprep.subr.bf16.mxu0 0
      %3060 = vmatpush1.bf16.msra.mxu0 %v3028
      %3061 = vmatprep.subr.bf16.mxu0 0
      %3062 = vmatpush1.bf16.msra.mxu0 %v3029
      %3063 = vmatprep.subr.bf16.mxu0 0
      %3064 = vmatpush1.bf16.msra.mxu0 %v3030
      %3065 = vmatprep.subr.bf16.mxu0 0
      %3066 = vmatpush1.bf16.msra.mxu0 %v3031
      %3067 = vmatprep.subr.bf16.mxu0 0
      %3068 = vmatpush1.bf16.msra.mxu0 %v3032
      %3069 = vmatprep.subr.bf16.mxu0 0
      %3070 = vmatpush1.bf16.msra.mxu0 %v3033
      %3071 = vmatprep.subr.bf16.mxu0 0
      %3072 = vmatpush1.bf16.msra.mxu0 %v3034
      %3073 = vmatprep.subr.bf16.mxu0 0
      %3074 = vmatpush1.bf16.msra.mxu0 %v3035
      %3075 = vmatprep.subr.bf16.mxu0 0
      %3076 = vmatpush1.bf16.msra.mxu0 %v3036
      %3077 = vmatprep.subr.bf16.mxu0 0
      %3078 = vmatpush1.bf16.msra.mxu0 %v3037
      %3079 = vmatprep.subr.bf16.mxu0 0
      %3080 = vmatpush1.bf16.msra.mxu0 %v3038
      %3081 = vmatprep.subr.bf16.mxu0 0
      %3082 = vmatpush1.bf16.msra.mxu0 %v3039
      %3083 = vmatprep.subr.bf16.mxu0 0
      %3084 = vmatpush1.bf16.msra.mxu0 %v3040
      %3085 = vmatprep.subr.bf16.mxu0 0
      %3086 = vmatpush1.bf16.msra.mxu0 %v3041
      %3087 = vmatprep.subr.bf16.mxu0 0
      %3088 = vmatpush1.bf16.msra.mxu0 0
      %3089 = vmatprep.subr.bf16.mxu0 0
      %3090 = vmatpush1.bf16.msra.mxu0 0
      %3091 = vmatprep.mubr.bf16.mxu0 %v3057
      %3092 = vmatmul.mubr.bf16.gmra.mrb[0].mxu0 %v2941
      %v3093 = vpop.f32.mrb[0].mxu0
      %v3094 = vadd.f32 0.0, %v3093
      %v3095 = vpop.f32.mrb[0].mxu0
      %v3096 = vpop.f32.mrb[0].mxu0
      %v3097 = vpop.f32.mrb[0].mxu0
      %3098 = vdwg.mxu0
      %v3099 = vadd.f32 %v2940, %v3094
      %v3100 = vpack.c.bf16 %v2147, %v2147
      %v3101 = vpack.c.bf16 %v2148, %v2148
      %s3102 = scalar_lea.vmem %s6, 672
      %v3103 = vld [vmem:[%s3102] sm:$0xf]
      %v3104 = vld [vmem:[%s3102 + $0x4] sm:$0xf]
      %v3105 = vld [vmem:[%s3102 + $0x8] sm:$0xf]
      %v3106 = vld [vmem:[%s3102 + $0xc] sm:$0xf]
      %v3107 = vld [vmem:[%s3102 + $0x10] sm:$0xf]
      %v3108 = vld [vmem:[%s3102 + $0x14] sm:$0xf]
      %v3109 = vld [vmem:[%s3102 + $0x18] sm:$0xf]
      %v3110 = vld [vmem:[%s3102 + $0x1c] sm:$0xf]
      %v3111 = vld [vmem:[%s3102 + $0x20] sm:$0xf]
      %v3112 = vld [vmem:[%s3102 + $0x24] sm:$0xf]
      %v3113 = vld [vmem:[%s3102 + $0x28] sm:$0xf]
      %v3114 = vld [vmem:[%s3102 + $0x2c] sm:$0xf]
      %v3115 = vld [vmem:[%s3102 + $0x30] sm:$0xf]
      %v3116 = vld [vmem:[%s3102 + $0x34] sm:$0xf]
      %v3117 = vld [vmem:[%s3102 + $0x38] sm:$0xf]
      %v3118 = vld [vmem:[%s3102 + $0x3c] sm:$0xf]
      %v3119 = vld [vmem:[%s3102 + $0x40] sm:$0xf]
      %v3120 = vld [vmem:[%s3102 + $0x44] sm:$0xf]
      %v3121 = vld [vmem:[%s3102 + $0x48] sm:$0xf]
      %v3122 = vld [vmem:[%s3102 + $0x4c] sm:$0xf]
      %v3123 = vld [vmem:[%s3102 + $0x50] sm:$0xf]
      %v3124 = vld [vmem:[%s3102 + $0x54] sm:$0xf]
      %v3125 = vld [vmem:[%s3102 + $0x58] sm:$0xf]
      %v3126 = vld [vmem:[%s3102 + $0x5c] sm:$0xf]
      %v3127 = vld [vmem:[%s3102 + $0x60] sm:$0xf]
      %v3128 = vld [vmem:[%s3102 + $0x64] sm:$0xf]
      %v3129 = vld [vmem:[%s3102 + $0x68] sm:$0xf]
      %v3130 = vld [vmem:[%s3102 + $0x6c] sm:$0xf]
      %v3159 = vunpack.c.l.b16 %v3103
      %v3160 = vunpack.c.l.b16 %v3104
      %v3161 = vunpack.c.l.b16 %v3105
      %v3162 = vunpack.c.l.b16 %v3106
      %v3163 = vunpack.c.l.b16 %v3107
      %v3164 = vunpack.c.l.b16 %v3108
      %v3165 = vunpack.c.l.b16 %v3109
      %v3166 = vunpack.c.l.b16 %v3110
      %v3167 = vunpack.c.l.b16 %v3111
      %v3168 = vunpack.c.l.b16 %v3112
      %v3169 = vunpack.c.l.b16 %v3113
      %v3170 = vunpack.c.l.b16 %v3114
      %v3171 = vunpack.c.l.b16 %v3115
      %v3172 = vunpack.c.l.b16 %v3116
      %v3173 = vunpack.c.l.b16 %v3117
      %v3174 = vunpack.c.l.b16 %v3118
      %v3175 = vunpack.c.l.b16 %v3119
      %v3176 = vunpack.c.l.b16 %v3120
      %v3177 = vunpack.c.l.b16 %v3121
      %v3178 = vunpack.c.l.b16 %v3122
      %v3179 = vunpack.c.l.b16 %v3123
      %v3180 = vunpack.c.l.b16 %v3124
      %v3181 = vunpack.c.l.b16 %v3125
      %v3182 = vunpack.c.l.b16 %v3126
      %v3183 = vunpack.c.l.b16 %v3127
      %v3184 = vunpack.c.l.b16 %v3128
      %v3185 = vunpack.c.l.b16 %v3129
      %v3186 = vunpack.c.l.b16 %v3130
      %v3187 = vpack.c.b16 %v3160, %v3159
      %v3188 = vpack.c.b16 %v3162, %v3161
      %v3189 = vpack.c.b16 %v3164, %v3163
      %v3190 = vpack.c.b16 %v3166, %v3165
      %v3191 = vpack.c.b16 %v3168, %v3167
      %v3192 = vpack.c.b16 %v3170, %v3169
      %v3193 = vpack.c.b16 %v3172, %v3171
      %v3194 = vpack.c.b16 %v3174, %v3173
      %v3195 = vpack.c.b16 %v3176, %v3175
      %v3196 = vpack.c.b16 %v3178, %v3177
      %v3197 = vpack.c.b16 %v3180, %v3179
      %v3198 = vpack.c.b16 %v3182, %v3181
      %v3199 = vpack.c.b16 %v3184, %v3183
      %v3200 = vpack.c.b16 %v3186, %v3185
      %v3216 = vsel %vm1528, %v3101, 0
      %3218 = vmatprep.subr.bf16.mxu0 0
      %3219 = vmatpush1.bf16.msra.mxu0 %v3187
      %3220 = vmatprep.subr.bf16.mxu0 0
      %3221 = vmatpush1.bf16.msra.mxu0 %v3188
      %3222 = vmatprep.subr.bf16.mxu0 0
      %3223 = vmatpush1.bf16.msra.mxu0 %v3189
      %3224 = vmatprep.subr.bf16.mxu0 0
      %3225 = vmatpush1.bf16.msra.mxu0 %v3190
      %3226 = vmatprep.subr.bf16.mxu0 0
      %3227 = vmatpush1.bf16.msra.mxu0 %v3191
      %3228 = vmatprep.subr.bf16.mxu0 0
      %3229 = vmatpush1.bf16.msra.mxu0 %v3192
      %3230 = vmatprep.subr.bf16.mxu0 0
      %3231 = vmatpush1.bf16.msra.mxu0 %v3193
      %3232 = vmatprep.subr.bf16.mxu0 0
      %3233 = vmatpush1.bf16.msra.mxu0 %v3194
      %3234 = vmatprep.subr.bf16.mxu0 0
      %3235 = vmatpush1.bf16.msra.mxu0 %v3195
      %3236 = vmatprep.subr.bf16.mxu0 0
      %3237 = vmatpush1.bf16.msra.mxu0 %v3196
      %3238 = vmatprep.subr.bf16.mxu0 0
      %3239 = vmatpush1.bf16.msra.mxu0 %v3197
      %3240 = vmatprep.subr.bf16.mxu0 0
      %3241 = vmatpush1.bf16.msra.mxu0 %v3198
      %3242 = vmatprep.subr.bf16.mxu0 0
      %3243 = vmatpush1.bf16.msra.mxu0 %v3199
      %3244 = vmatprep.subr.bf16.mxu0 0
      %3245 = vmatpush1.bf16.msra.mxu0 %v3200
      %3246 = vmatprep.subr.bf16.mxu0 0
      %3247 = vmatpush1.bf16.msra.mxu0 0
      %3248 = vmatprep.subr.bf16.mxu0 0
      %3249 = vmatpush1.bf16.msra.mxu0 0
      %3250 = vmatprep.mubr.bf16.mxu0 %v3216
      %3251 = vmatmul.mubr.bf16.gmra.mrb[0].mxu0 %v3100
      %v3252 = vpop.f32.mrb[0].mxu0
      %v3253 = vadd.f32 0.0, %v3252
      %v3254 = vpop.f32.mrb[0].mxu0
      %v3255 = vpop.f32.mrb[0].mxu0
      %v3256 = vpop.f32.mrb[0].mxu0
      %3257 = vdwg.mxu0
      %v3258 = vadd.f32 %v3099, %v3253
      %v3259 = vld [vmem:[%s7] sm:$0x1]
      %v3261 = vlaneseq
      %v3262 = vshrl.u32 %v3261, 7
      %v3263 = vsub.s32 0, %v3262
      %v3264 = vrot.slane %v3259, %v3263
      %v3266 = vadd.f32 %v3258, %v3264
      %v3267 = vmax.f32 %v3266, 0.0
      %v3268 = vpack.c.bf16 %v3267, %v3267
      %v3269 = vld [vmem:[%s8] sm:$0xf]
      %v3270 = vld [vmem:[%s8 + $0x4] sm:$0xf]
      %v3271 = vld [vmem:[%s8 + $0x8] sm:$0xf]
      %v3272 = vld [vmem:[%s8 + $0xc] sm:$0xf]
      %v3273 = vld [vmem:[%s8 + $0x10] sm:$0xf]
      %v3274 = vld [vmem:[%s8 + $0x14] sm:$0xf]
      %v3275 = vld [vmem:[%s8 + $0x18] sm:$0xf]
      %v3276 = vld [vmem:[%s8 + $0x1c] sm:$0xf]
      %v3277 = vld [vmem:[%s9] sm:$0x1]
      %v3279 = vlaneseq
      %v3280 = vshrl.u32 %v3279, 7
      %v3281 = vsub.s32 0, %v3280
      %v3282 = vrot.slane %v3277, %v3281
      %v3292 = vunpack.c.l.b16 %v3269
      %v3293 = vunpack.c.l.b16 %v3270
      %v3294 = vunpack.c.l.b16 %v3271
      %v3295 = vunpack.c.l.b16 %v3272
      %v3296 = vunpack.c.l.b16 %v3273
      %v3297 = vunpack.c.l.b16 %v3274
      %v3298 = vunpack.c.l.b16 %v3275
      %v3299 = vunpack.c.l.b16 %v3276
      %v3300 = vpack.c.b16 %v3293, %v3292
      %v3301 = vpack.c.b16 %v3295, %v3294
      %v3302 = vpack.c.b16 %v3297, %v3296
      %v3303 = vpack.c.b16 %v3299, %v3298
      %vm3308 = vcmask 523264
      %v3310 = vsel %vm3308, %v3268, 0
      %3312 = vmatprep.subr.bf16.mxu0 0
      %3313 = vmatpush1.bf16.msra.mxu0 %v3300
      %3314 = vmatprep.subr.bf16.mxu0 0
      %3315 = vmatpush1.bf16.msra.mxu0 %v3301
      %3316 = vmatprep.subr.bf16.mxu0 0
      %3317 = vmatpush1.bf16.msra.mxu0 %v3302
      %3318 = vmatprep.subr.bf16.mxu0 0
      %3319 = vmatpush1.bf16.msra.mxu0 %v3303
      %3320 = vmatprep.subr.bf16.mxu0 0
      %3321 = vmatpush1.bf16.msra.mxu0 0
      %3322 = vmatprep.subr.bf16.mxu0 0
      %3323 = vmatpush1.bf16.msra.mxu0 0
      %3324 = vmatprep.subr.bf16.mxu0 0
      %3325 = vmatpush1.bf16.msra.mxu0 0
      %3326 = vmatprep.subr.bf16.mxu0 0
      %3327 = vmatpush1.bf16.msra.mxu0 0
      %3328 = vmatprep.subr.bf16.mxu0 0
      %3329 = vmatpush1.bf16.msra.mxu0 0
      %3330 = vmatprep.subr.bf16.mxu0 0
      %3331 = vmatpush1.bf16.msra.mxu0 0
      %3332 = vmatprep.subr.bf16.mxu0 0
      %3333 = vmatpush1.bf16.msra.mxu0 0
      %3334 = vmatprep.subr.bf16.mxu0 0
      %3335 = vmatpush1.bf16.msra.mxu0 0
      %3336 = vmatprep.subr.bf16.mxu0 0
      %3337 = vmatpush1.bf16.msra.mxu0 0
      %3338 = vmatprep.subr.bf16.mxu0 0
      %3339 = vmatpush1.bf16.msra.mxu0 0
      %3340 = vmatprep.subr.bf16.mxu0 0
      %3341 = vmatpush1.bf16.msra.mxu0 0
      %3342 = vmatprep.subr.bf16.mxu0 0
      %3343 = vmatpush1.bf16.msra.mxu0 0
      %3344 = vmatprep.mubr.bf16.mxu0 0
      %3345 = vmatmul.mubr.bf16.gmra.mrb[0].mxu0 %v3310
      %v3346 = vpop.f32.mrb[0].mxu0
      %v3347 = vadd.f32 %v3282, %v3346
      %v3348 = vpop.f32.mrb[0].mxu0
      %v3349 = vpop.f32.mrb[0].mxu0
      %v3350 = vpop.f32.mrb[0].mxu0
      %3351 = vdwg.mxu0
      %vm3352 = vcmask 31744
      %3353 = vst.msk [vmem:[%s576] sm:$0xff] %vm3352, %v3347
      %v3354 = vld [vmem:[%s567] sm:$0xff]
      %v3355 = vmul.f32 %v3347, 0.5
      %v3356 = vmul.f32 %v3355, 1.442695
      %v3357 = vpow.pop %v3356
      %3359 = vrot.lane.b32.xlu0 %v3357, 126
      %v3360 = vpop.permute.xlu0 %3359
      %v3362 = vmul.f32 %v3354, %v3360
      %v3363 = vadd.f32 %v3347, %v3362
      %v3364 = vld [vmem:[%s10] sm:$0xf]
      %v3365 = vld [vmem:[%s11] sm:$0x3]
      %3367 = vset.pattern.permute.xlu0 0
      %3368 = vperm.xlu0 %3367, %v3363
      %v3369 = vpop.permute.xlu0 %3368
      %v3372 = vlaneseq
      %v3373 = vshrl.u32 %v3372, 7
      %v3374 = vsub.s32 0, %v3373
      %v3375 = vrot.slane %v3364, %v3374
      %v3376 = vlaneseq
      %v3377 = vshrl.u32 %v3376, 7
      %v3378 = vsub.s32 2, %v3377
      %v3379 = vrot.slane %v3364, %v3378
      %v3382 = vlaneseq
      %v3383 = vshrl.u32 %v3382, 7
      %v3384 = vsub.s32 0, %v3383
      %v3385 = vrot.slane %v3375, %v3384
      %v3386 = vlaneseq
      %v3387 = vshrl.u32 %v3386, 7
      %v3388 = vsub.s32 0, %v3387
      %v3389 = vrot.slane %v3379, %v3388
      %v3390 = vmul.f32 %v3369, %v3385
      %v3391 = vmul.f32 %v3369, %v3389
      %v3393 = vlaneseq
      %v3394 = vshrl.u32 %v3393, 7
      %v3395 = vsub.s32 0, %v3394
      %v3396 = vrot.slane %v3365, %v3395
      %v3397 = vlaneseq
      %v3398 = vshrl.u32 %v3397, 7
      %v3399 = vsub.s32 1, %v3398
      %v3400 = vrot.slane %v3365, %v3399
      %v3403 = vadd.f32 %v3396, %v3390
      %v3404 = vadd.f32 %v3400, %v3391
      %3405 = vset.pattern.permute.xlu0 1
      %3406 = vperm.xlu0 %3405, %v3363
      %v3407 = vpop.permute.xlu0 %3406
      %v3409 = vlaneseq
      %v3410 = vshrl.u32 %v3409, 7
      %v3411 = vsub.s32 1, %v3410
      %v3412 = vrot.slane %v3364, %v3411
      %v3413 = vlaneseq
      %v3414 = vshrl.u32 %v3413, 7
      %v3415 = vsub.s32 3, %v3414
      %v3416 = vrot.slane %v3364, %v3415
      %v3419 = vlaneseq
      %v3420 = vshrl.u32 %v3419, 7
      %v3421 = vsub.s32 1, %v3420
      %v3422 = vrot.slane %v3412, %v3421
      %v3423 = vlaneseq
      %v3424 = vshrl.u32 %v3423, 7
      %v3425 = vsub.s32 1, %v3424
      %v3426 = vrot.slane %v3416, %v3425
      %v3427 = vmul.f32 %v3407, %v3422
      %v3428 = vmul.f32 %v3407, %v3426
      %v3429 = vadd.f32 %v3403, %v3427
      %v3430 = vadd.f32 %v3404, %v3428
      %v3431 = vmax.f32 %v3429, 0.0
      %v3432 = vmax.f32 %v3430, 0.0
      %s3433 = scalar_lea.vmem %s10, 4
      %v3434 = vld [vmem:[%s3433] sm:$0xf]
      %s3435 = scalar_lea.vmem %s11, 2
      %v3436 = vld [vmem:[%s3435] sm:$0x3]
      %v3438 = vlaneseq
      %v3439 = vshrl.u32 %v3438, 7
      %v3440 = vsub.s32 0, %v3439
      %v3441 = vrot.slane %v3434, %v3440
      %v3442 = vlaneseq
      %v3443 = vshrl.u32 %v3442, 7
      %v3444 = vsub.s32 2, %v3443
      %v3445 = vrot.slane %v3434, %v3444
      %v3448 = vlaneseq
      %v3449 = vshrl.u32 %v3448, 7
      %v3450 = vsub.s32 0, %v3449
      %v3451 = vrot.slane %v3441, %v3450
      %v3452 = vlaneseq
      %v3453 = vshrl.u32 %v3452, 7
      %v3454 = vsub.s32 0, %v3453
      %v3455 = vrot.slane %v3445, %v3454
      %v3456 = vmul.f32 %v3369, %v3451
      %v3457 = vmul.f32 %v3369, %v3455
      %v3459 = vlaneseq
      %v3460 = vshrl.u32 %v3459, 7
      %v3461 = vsub.s32 0, %v3460
      %v3462 = vrot.slane %v3436, %v3461
      %v3463 = vlaneseq
      %v3464 = vshrl.u32 %v3463, 7
      %v3465 = vsub.s32 1, %v3464
      %v3466 = vrot.slane %v3436, %v3465
      %v3469 = vadd.f32 %v3462, %v3456
      %v3470 = vadd.f32 %v3466, %v3457
      %v3471 = vlaneseq
      %v3472 = vshrl.u32 %v3471, 7
      %v3473 = vsub.s32 1, %v3472
      %v3474 = vrot.slane %v3434, %v3473
      %v3475 = vlaneseq
      %v3476 = vshrl.u32 %v3475, 7
      %v3477 = vsub.s32 3, %v3476
      %v3478 = vrot.slane %v3434, %v3477
      %v3481 = vlaneseq
      %v3482 = vshrl.u32 %v3481, 7
      %v3483 = vsub.s32 1, %v3482
      %v3484 = vrot.slane %v3474, %v3483
      %v3485 = vlaneseq
      %v3486 = vshrl.u32 %v3485, 7
      %v3487 = vsub.s32 1, %v3486
      %v3488 = vrot.slane %v3478, %v3487
      %v3489 = vmul.f32 %v3407, %v3484
      %v3490 = vmul.f32 %v3407, %v3488
      %v3491 = vadd.f32 %v3469, %v3489
      %v3492 = vadd.f32 %v3470, %v3490
      %v3493 = vmax.f32 %v3491, 0.0
      %v3494 = vmax.f32 %v3492, 0.0
      %s3495 = scalar_lea.vmem %s10, 8
      %v3496 = vld [vmem:[%s3495] sm:$0xf]
      %s3497 = scalar_lea.vmem %s11, 4
      %v3498 = vld [vmem:[%s3497] sm:$0x3]
      %v3500 = vlaneseq
      %v3501 = vshrl.u32 %v3500, 7
      %v3502 = vsub.s32 0, %v3501
      %v3503 = vrot.slane %v3496, %v3502
      %v3504 = vlaneseq
      %v3505 = vshrl.u32 %v3504, 7
      %v3506 = vsub.s32 2, %v3505
      %v3507 = vrot.slane %v3496, %v3506
      %v3510 = vlaneseq
      %v3511 = vshrl.u32 %v3510, 7
      %v3512 = vsub.s32 0, %v3511
      %v3513 = vrot.slane %v3503, %v3512
      %v3514 = vlaneseq
      %v3515 = vshrl.u32 %v3514, 7
      %v3516 = vsub.s32 0, %v3515
      %v3517 = vrot.slane %v3507, %v3516
      %v3518 = vmul.f32 %v3369, %v3513
      %v3519 = vmul.f32 %v3369, %v3517
      %v3521 = vlaneseq
      %v3522 = vshrl.u32 %v3521, 7
      %v3523 = vsub.s32 0, %v3522
      %v3524 = vrot.slane %v3498, %v3523
      %v3525 = vlaneseq
      %v3526 = vshrl.u32 %v3525, 7
      %v3527 = vsub.s32 1, %v3526
      %v3528 = vrot.slane %v3498, %v3527
      %v3531 = vadd.f32 %v3524, %v3518
      %v3532 = vadd.f32 %v3528, %v3519
      %v3533 = vlaneseq
      %v3534 = vshrl.u32 %v3533, 7
      %v3535 = vsub.s32 1, %v3534
      %v3536 = vrot.slane %v3496, %v3535
      %v3537 = vlaneseq
      %v3538 = vshrl.u32 %v3537, 7
      %v3539 = vsub.s32 3, %v3538
      %v3540 = vrot.slane %v3496, %v3539
      %v3543 = vlaneseq
      %v3544 = vshrl.u32 %v3543, 7
      %v3545 = vsub.s32 1, %v3544
      %v3546 = vrot.slane %v3536, %v3545
      %v3547 = vlaneseq
      %v3548 = vshrl.u32 %v3547, 7
      %v3549 = vsub.s32 1, %v3548
      %v3550 = vrot.slane %v3540, %v3549
      %v3551 = vmul.f32 %v3407, %v3546
      %v3552 = vmul.f32 %v3407, %v3550
      %v3553 = vadd.f32 %v3531, %v3551
      %v3554 = vadd.f32 %v3532, %v3552
      %v3555 = vmax.f32 %v3553, 0.0
      %v3556 = vmax.f32 %v3554, 0.0
      %s3557 = scalar_lea.vmem %s10, 12
      %v3558 = vld [vmem:[%s3557] sm:$0xf]
      %s3559 = scalar_lea.vmem %s11, 6
      %v3560 = vld [vmem:[%s3559] sm:$0x3]
      %v3562 = vlaneseq
      %v3563 = vshrl.u32 %v3562, 7
      %v3564 = vsub.s32 0, %v3563
      %v3565 = vrot.slane %v3558, %v3564
      %v3566 = vlaneseq
      %v3567 = vshrl.u32 %v3566, 7
      %v3568 = vsub.s32 2, %v3567
      %v3569 = vrot.slane %v3558, %v3568
      %v3572 = vlaneseq
      %v3573 = vshrl.u32 %v3572, 7
      %v3574 = vsub.s32 0, %v3573
      %v3575 = vrot.slane %v3565, %v3574
      %v3576 = vlaneseq
      %v3577 = vshrl.u32 %v3576, 7
      %v3578 = vsub.s32 0, %v3577
      %v3579 = vrot.slane %v3569, %v3578
      %v3580 = vmul.f32 %v3369, %v3575
      %v3581 = vmul.f32 %v3369, %v3579
      %v3583 = vlaneseq
      %v3584 = vshrl.u32 %v3583, 7
      %v3585 = vsub.s32 0, %v3584
      %v3586 = vrot.slane %v3560, %v3585
      %v3587 = vlaneseq
      %v3588 = vshrl.u32 %v3587, 7
      %v3589 = vsub.s32 1, %v3588
      %v3590 = vrot.slane %v3560, %v3589
      %v3593 = vadd.f32 %v3586, %v3580
      %v3594 = vadd.f32 %v3590, %v3581
      %v3595 = vlaneseq
      %v3596 = vshrl.u32 %v3595, 7
      %v3597 = vsub.s32 1, %v3596
      %v3598 = vrot.slane %v3558, %v3597
      %v3599 = vlaneseq
      %v3600 = vshrl.u32 %v3599, 7
      %v3601 = vsub.s32 3, %v3600
      %v3602 = vrot.slane %v3558, %v3601
      %v3605 = vlaneseq
      %v3606 = vshrl.u32 %v3605, 7
      %v3607 = vsub.s32 1, %v3606
      %v3608 = vrot.slane %v3598, %v3607
      %v3609 = vlaneseq
      %v3610 = vshrl.u32 %v3609, 7
      %v3611 = vsub.s32 1, %v3610
      %v3612 = vrot.slane %v3602, %v3611
      %v3613 = vmul.f32 %v3407, %v3608
      %v3614 = vmul.f32 %v3407, %v3612
      %v3615 = vadd.f32 %v3593, %v3613
      %v3616 = vadd.f32 %v3594, %v3614
      %v3617 = vmax.f32 %v3615, 0.0
      %v3618 = vmax.f32 %v3616, 0.0
      %s3619 = scalar_lea.vmem %s10, 16
      %v3620 = vld [vmem:[%s3619] sm:$0xf]
      %s3621 = scalar_lea.vmem %s11, 8
      %v3622 = vld [vmem:[%s3621] sm:$0x3]
      %v3624 = vlaneseq
      %v3625 = vshrl.u32 %v3624, 7
      %v3626 = vsub.s32 0, %v3625
      %v3627 = vrot.slane %v3620, %v3626
      %v3628 = vlaneseq
      %v3629 = vshrl.u32 %v3628, 7
      %v3630 = vsub.s32 2, %v3629
      %v3631 = vrot.slane %v3620, %v3630
      %v3634 = vlaneseq
      %v3635 = vshrl.u32 %v3634, 7
      %v3636 = vsub.s32 0, %v3635
      %v3637 = vrot.slane %v3627, %v3636
      %v3638 = vlaneseq
      %v3639 = vshrl.u32 %v3638, 7
      %v3640 = vsub.s32 0, %v3639
      %v3641 = vrot.slane %v3631, %v3640
      %v3642 = vmul.f32 %v3369, %v3637
      %v3643 = vmul.f32 %v3369, %v3641
      %v3645 = vlaneseq
      %v3646 = vshrl.u32 %v3645, 7
      %v3647 = vsub.s32 0, %v3646
      %v3648 = vrot.slane %v3622, %v3647
      %v3649 = vlaneseq
      %v3650 = vshrl.u32 %v3649, 7
      %v3651 = vsub.s32 1, %v3650
      %v3652 = vrot.slane %v3622, %v3651
      %v3655 = vadd.f32 %v3648, %v3642
      %v3656 = vadd.f32 %v3652, %v3643
      %v3657 = vlaneseq
      %v3658 = vshrl.u32 %v3657, 7
      %v3659 = vsub.s32 1, %v3658
      %v3660 = vrot.slane %v3620, %v3659
      %v3661 = vlaneseq
      %v3662 = vshrl.u32 %v3661, 7
      %v3663 = vsub.s32 3, %v3662
      %v3664 = vrot.slane %v3620, %v3663
      %v3667 = vlaneseq
      %v3668 = vshrl.u32 %v3667, 7
      %v3669 = vsub.s32 1, %v3668
      %v3670 = vrot.slane %v3660, %v3669
      %v3671 = vlaneseq
      %v3672 = vshrl.u32 %v3671, 7
      %v3673 = vsub.s32 1, %v3672
      %v3674 = vrot.slane %v3664, %v3673
      %v3675 = vmul.f32 %v3407, %v3670
      %v3676 = vmul.f32 %v3407, %v3674
      %v3677 = vadd.f32 %v3655, %v3675
      %v3678 = vadd.f32 %v3656, %v3676
      %v3679 = vmax.f32 %v3677, 0.0
      %v3680 = vmax.f32 %v3678, 0.0
      %s3681 = scalar_lea.vmem %s10, 20
      %v3682 = vld [vmem:[%s3681] sm:$0xf]
      %s3683 = scalar_lea.vmem %s11, 10
      %v3684 = vld [vmem:[%s3683] sm:$0x3]
      %v3686 = vlaneseq
      %v3687 = vshrl.u32 %v3686, 7
      %v3688 = vsub.s32 0, %v3687
      %v3689 = vrot.slane %v3682, %v3688
      %v3690 = vlaneseq
      %v3691 = vshrl.u32 %v3690, 7
      %v3692 = vsub.s32 2, %v3691
      %v3693 = vrot.slane %v3682, %v3692
      %v3696 = vlaneseq
      %v3697 = vshrl.u32 %v3696, 7
      %v3698 = vsub.s32 0, %v3697
      %v3699 = vrot.slane %v3689, %v3698
      %v3700 = vlaneseq
      %v3701 = vshrl.u32 %v3700, 7
      %v3702 = vsub.s32 0, %v3701
      %v3703 = vrot.slane %v3693, %v3702
      %v3704 = vmul.f32 %v3369, %v3699
      %v3705 = vmul.f32 %v3369, %v3703
      %v3707 = vlaneseq
      %v3708 = vshrl.u32 %v3707, 7
      %v3709 = vsub.s32 0, %v3708
      %v3710 = vrot.slane %v3684, %v3709
      %v3711 = vlaneseq
      %v3712 = vshrl.u32 %v3711, 7
      %v3713 = vsub.s32 1, %v3712
      %v3714 = vrot.slane %v3684, %v3713
      %v3717 = vadd.f32 %v3710, %v3704
      %v3718 = vadd.f32 %v3714, %v3705
      %v3719 = vlaneseq
      %v3720 = vshrl.u32 %v3719, 7
      %v3721 = vsub.s32 1, %v3720
      %v3722 = vrot.slane %v3682, %v3721
      %v3723 = vlaneseq
      %v3724 = vshrl.u32 %v3723, 7
      %v3725 = vsub.s32 3, %v3724
      %v3726 = vrot.slane %v3682, %v3725
      %v3729 = vlaneseq
      %v3730 = vshrl.u32 %v3729, 7
      %v3731 = vsub.s32 1, %v3730
      %v3732 = vrot.slane %v3722, %v3731
      %v3733 = vlaneseq
      %v3734 = vshrl.u32 %v3733, 7
      %v3735 = vsub.s32 1, %v3734
      %v3736 = vrot.slane %v3726, %v3735
      %v3737 = vmul.f32 %v3407, %v3732
      %v3738 = vmul.f32 %v3407, %v3736
      %v3739 = vadd.f32 %v3717, %v3737
      %v3740 = vadd.f32 %v3718, %v3738
      %v3741 = vmax.f32 %v3739, 0.0
      %v3742 = vmax.f32 %v3740, 0.0
      %s3743 = scalar_lea.vmem %s10, 24
      %v3744 = vld [vmem:[%s3743] sm:$0xf]
      %s3745 = scalar_lea.vmem %s11, 12
      %v3746 = vld [vmem:[%s3745] sm:$0x3]
      %v3748 = vlaneseq
      %v3749 = vshrl.u32 %v3748, 7
      %v3750 = vsub.s32 0, %v3749
      %v3751 = vrot.slane %v3744, %v3750
      %v3752 = vlaneseq
      %v3753 = vshrl.u32 %v3752, 7
      %v3754 = vsub.s32 2, %v3753
      %v3755 = vrot.slane %v3744, %v3754
      %v3758 = vlaneseq
      %v3759 = vshrl.u32 %v3758, 7
      %v3760 = vsub.s32 0, %v3759
      %v3761 = vrot.slane %v3751, %v3760
      %v3762 = vlaneseq
      %v3763 = vshrl.u32 %v3762, 7
      %v3764 = vsub.s32 0, %v3763
      %v3765 = vrot.slane %v3755, %v3764
      %v3766 = vmul.f32 %v3369, %v3761
      %v3767 = vmul.f32 %v3369, %v3765
      %v3769 = vlaneseq
      %v3770 = vshrl.u32 %v3769, 7
      %v3771 = vsub.s32 0, %v3770
      %v3772 = vrot.slane %v3746, %v3771
      %v3773 = vlaneseq
      %v3774 = vshrl.u32 %v3773, 7
      %v3775 = vsub.s32 1, %v3774
      %v3776 = vrot.slane %v3746, %v3775
      %v3779 = vadd.f32 %v3772, %v3766
      %v3780 = vadd.f32 %v3776, %v3767
      %v3781 = vlaneseq
      %v3782 = vshrl.u32 %v3781, 7
      %v3783 = vsub.s32 1, %v3782
      %v3784 = vrot.slane %v3744, %v3783
      %v3785 = vlaneseq
      %v3786 = vshrl.u32 %v3785, 7
      %v3787 = vsub.s32 3, %v3786
      %v3788 = vrot.slane %v3744, %v3787
      %v3791 = vlaneseq
      %v3792 = vshrl.u32 %v3791, 7
      %v3793 = vsub.s32 1, %v3792
      %v3794 = vrot.slane %v3784, %v3793
      %v3795 = vlaneseq
      %v3796 = vshrl.u32 %v3795, 7
      %v3797 = vsub.s32 1, %v3796
      %v3798 = vrot.slane %v3788, %v3797
      %v3799 = vmul.f32 %v3407, %v3794
      %v3800 = vmul.f32 %v3407, %v3798
      %v3801 = vadd.f32 %v3779, %v3799
      %v3802 = vadd.f32 %v3780, %v3800
      %v3803 = vmax.f32 %v3801, 0.0
      %v3804 = vmax.f32 %v3802, 0.0
      %v3805 = vpack.c.bf16 %v3493, 0.0
      %v3806 = vpack.c.bf16 %v3494, 0.0
      %v3807 = vpack.c.bf16 %v3555, 0.0
      %v3808 = vpack.c.bf16 %v3556, 0.0
      %v3809 = vpack.c.bf16 %v3617, 0.0
      %v3810 = vpack.c.bf16 %v3618, 0.0
      %v3811 = vpack.c.bf16 %v3679, 0.0
      %v3812 = vpack.c.bf16 %v3680, 0.0
      %v3813 = vpack.c.bf16 %v3741, 0.0
      %v3814 = vpack.c.bf16 %v3742, 0.0
      %v3815 = vpack.c.bf16 %v3803, 0.0
      %v3816 = vpack.c.bf16 %v3804, 0.0
      %v3817 = vpack.c.bf16 0.0, 0.0
      %v3818 = vld [vmem:[%s12] sm:$0xff]
      %v3819 = vld [vmem:[%s12 + $0x8] sm:$0xff]
      %v3820 = vld [vmem:[%s12 + $0x10] sm:$0xff]
      %v3821 = vld [vmem:[%s12 + $0x18] sm:$0xff]
      %v3822 = vld [vmem:[%s12 + $0x20] sm:$0xff]
      %v3823 = vld [vmem:[%s12 + $0x28] sm:$0xff]
      %v3824 = vld [vmem:[%s12 + $0x30] sm:$0xff]
      %v3825 = vld [vmem:[%s12 + $0x38] sm:$0xff]
      %v3826 = vld [vmem:[%s12 + $0x40] sm:$0xff]
      %v3827 = vld [vmem:[%s12 + $0x48] sm:$0xff]
      %v3828 = vld [vmem:[%s12 + $0x50] sm:$0xff]
      %v3829 = vld [vmem:[%s12 + $0x58] sm:$0xff]
      %v3830 = vld [vmem:[%s12 + $0x60] sm:$0xff]
      %v3831 = vld [vmem:[%s12 + $0x68] sm:$0xff]
      %v3832 = vld [vmem:[%s12 + $0x70] sm:$0xff]
      %v3833 = vld [vmem:[%s12 + $0x78] sm:$0xff]
      %v3834 = vld [vmem:[%s12 + $0x80] sm:$0xff]
      %v3835 = vld [vmem:[%s12 + $0x88] sm:$0xff]
      %v3836 = vld [vmem:[%s12 + $0x90] sm:$0xff]
      %v3837 = vld [vmem:[%s12 + $0x98] sm:$0xff]
      %v3838 = vld [vmem:[%s12 + $0xa0] sm:$0xff]
      %v3839 = vld [vmem:[%s12 + $0xa8] sm:$0xff]
      %v3840 = vld [vmem:[%s12 + $0xb0] sm:$0xff]
      %v3841 = vld [vmem:[%s12 + $0xb8] sm:$0xff]
      %v3842 = vld [vmem:[%s12 + $0xc0] sm:$0xff]
      %v3843 = vld [vmem:[%s12 + $0xc8] sm:$0xff]
      %v3844 = vld [vmem:[%s12 + $0xd0] sm:$0xff]
      %v3845 = vld [vmem:[%s12 + $0xd8] sm:$0xff]
      %v3846 = vpack.c.bf16 0.0, %v3431
      %v3847 = vpack.c.bf16 0.0, %v3432
      %v3848 = vpack.c.bf16 0.0, %v3493
      %v3849 = vpack.c.bf16 0.0, %v3494
      %v3850 = vpack.c.bf16 0.0, %v3555
      %v3851 = vpack.c.bf16 0.0, %v3556
      %v3852 = vpack.c.bf16 0.0, %v3617
      %v3853 = vpack.c.bf16 0.0, %v3618
      %v3854 = vpack.c.bf16 0.0, %v3679
      %v3855 = vpack.c.bf16 0.0, %v3680
      %v3856 = vpack.c.bf16 0.0, %v3741
      %v3857 = vpack.c.bf16 0.0, %v3742
      %v3858 = vpack.c.bf16 0.0, %v3803
      %v3859 = vpack.c.bf16 0.0, %v3804
      %s3860 = scalar_lea.vmem %s12, 224
      %v3861 = vld [vmem:[%s3860] sm:$0xff]
      %v3862 = vld [vmem:[%s3860 + $0x8] sm:$0xff]
      %v3863 = vld [vmem:[%s3860 + $0x10] sm:$0xff]
      %v3864 = vld [vmem:[%s3860 + $0x18] sm:$0xff]
      %v3865 = vld [vmem:[%s3860 + $0x20] sm:$0xff]
      %v3866 = vld [vmem:[%s3860 + $0x28] sm:$0xff]
      %v3867 = vld [vmem:[%s3860 + $0x30] sm:$0xff]
      %v3868 = vld [vmem:[%s3860 + $0x38] sm:$0xff]
      %v3869 = vld [vmem:[%s3860 + $0x40] sm:$0xff]
      %v3870 = vld [vmem:[%s3860 + $0x48] sm:$0xff]
      %v3871 = vld [vmem:[%s3860 + $0x50] sm:$0xff]
      %v3872 = vld [vmem:[%s3860 + $0x58] sm:$0xff]
      %v3873 = vld [vmem:[%s3860 + $0x60] sm:$0xff]
      %v3874 = vld [vmem:[%s3860 + $0x68] sm:$0xff]
      %v3875 = vld [vmem:[%s3860 + $0x70] sm:$0xff]
      %v3876 = vld [vmem:[%s3860 + $0x78] sm:$0xff]
      %v3877 = vld [vmem:[%s3860 + $0x80] sm:$0xff]
      %v3878 = vld [vmem:[%s3860 + $0x88] sm:$0xff]
      %v3879 = vld [vmem:[%s3860 + $0x90] sm:$0xff]
      %v3880 = vld [vmem:[%s3860 + $0x98] sm:$0xff]
      %v3881 = vld [vmem:[%s3860 + $0xa0] sm:$0xff]
      %v3882 = vld [vmem:[%s3860 + $0xa8] sm:$0xff]
      %v3883 = vld [vmem:[%s3860 + $0xb0] sm:$0xff]
      %v3884 = vld [vmem:[%s3860 + $0xb8] sm:$0xff]
      %v3885 = vld [vmem:[%s3860 + $0xc0] sm:$0xff]
      %v3886 = vld [vmem:[%s3860 + $0xc8] sm:$0xff]
      %v3887 = vld [vmem:[%s3860 + $0xd0] sm:$0xff]
      %v3888 = vld [vmem:[%s3860 + $0xd8] sm:$0xff]
      %v3917 = vunpack.c.l.b16 %v3861
      %v3918 = vunpack.c.h.b16 %v3861
      %v3919 = vunpack.c.l.b16 %v3862
      %v3920 = vunpack.c.h.b16 %v3862
      %v3921 = vunpack.c.l.b16 %v3863
      %v3922 = vunpack.c.h.b16 %v3863
      %v3923 = vunpack.c.l.b16 %v3864
      %v3924 = vunpack.c.h.b16 %v3864
      %v3925 = vunpack.c.l.b16 %v3865
      %v3926 = vunpack.c.h.b16 %v3865
      %v3927 = vunpack.c.l.b16 %v3866
      %v3928 = vunpack.c.h.b16 %v3866
      %v3929 = vunpack.c.l.b16 %v3867
      %v3930 = vunpack.c.h.b16 %v3867
      %v3931 = vunpack.c.l.b16 %v3868
      %v3932 = vunpack.c.h.b16 %v3868
      %v3933 = vunpack.c.l.b16 %v3869
      %v3934 = vunpack.c.h.b16 %v3869
      %v3935 = vunpack.c.l.b16 %v3870
      %v3936 = vunpack.c.h.b16 %v3870
      %v3937 = vunpack.c.l.b16 %v3871
      %v3938 = vunpack.c.h.b16 %v3871
      %v3939 = vunpack.c.l.b16 %v3872
      %v3940 = vunpack.c.h.b16 %v3872
      %v3941 = vunpack.c.l.b16 %v3873
      %v3942 = vunpack.c.h.b16 %v3873
      %v3943 = vunpack.c.l.b16 %v3874
      %v3944 = vunpack.c.h.b16 %v3874
      %v3945 = vunpack.c.l.b16 %v3875
      %v3946 = vunpack.c.h.b16 %v3875
      %v3947 = vunpack.c.l.b16 %v3876
      %v3948 = vunpack.c.h.b16 %v3876
      %v3949 = vunpack.c.l.b16 %v3877
      %v3950 = vunpack.c.h.b16 %v3877
      %v3951 = vunpack.c.l.b16 %v3878
      %v3952 = vunpack.c.h.b16 %v3878
      %v3953 = vunpack.c.l.b16 %v3879
      %v3954 = vunpack.c.h.b16 %v3879
      %v3955 = vunpack.c.l.b16 %v3880
      %v3956 = vunpack.c.h.b16 %v3880
      %v3957 = vunpack.c.l.b16 %v3881
      %v3958 = vunpack.c.h.b16 %v3881
      %v3959 = vunpack.c.l.b16 %v3882
      %v3960 = vunpack.c.h.b16 %v3882
      %v3961 = vunpack.c.l.b16 %v3883
      %v3962 = vunpack.c.h.b16 %v3883
      %v3963 = vunpack.c.l.b16 %v3884
      %v3964 = vunpack.c.h.b16 %v3884
      %v3965 = vunpack.c.l.b16 %v3885
      %v3966 = vunpack.c.h.b16 %v3885
      %v3967 = vunpack.c.l.b16 %v3886
      %v3968 = vunpack.c.h.b16 %v3886
      %v3969 = vunpack.c.l.b16 %v3887
      %v3970 = vunpack.c.h.b16 %v3887
      %v3971 = vunpack.c.l.b16 %v3888
      %v3972 = vunpack.c.h.b16 %v3888
      %v3973 = vpack.c.b16 %v3919, %v3917
      %v3974 = vpack.c.b16 %v3920, %v3918
      %v3975 = vpack.c.b16 %v3923, %v3921
      %v3976 = vpack.c.b16 %v3924, %v3922
      %v3977 = vpack.c.b16 %v3927, %v3925
      %v3978 = vpack.c.b16 %v3928, %v3926
      %v3979 = vpack.c.b16 %v3931, %v3929
      %v3980 = vpack.c.b16 %v3932, %v3930
      %v3981 = vpack.c.b16 %v3935, %v3933
      %v3982 = vpack.c.b16 %v3936, %v3934
      %v3983 = vpack.c.b16 %v3939, %v3937
      %v3984 = vpack.c.b16 %v3940, %v3938
      %v3985 = vpack.c.b16 %v3943, %v3941
      %v3986 = vpack.c.b16 %v3944, %v3942
      %v3987 = vpack.c.b16 %v3947, %v3945
      %v3988 = vpack.c.b16 %v3948, %v3946
      %v3989 = vpack.c.b16 %v3951, %v3949
      %v3990 = vpack.c.b16 %v3952, %v3950
      %v3991 = vpack.c.b16 %v3955, %v3953
      %v3992 = vpack.c.b16 %v3956, %v3954
      %v3993 = vpack.c.b16 %v3959, %v3957
      %v3994 = vpack.c.b16 %v3960, %v3958
      %v3995 = vpack.c.b16 %v3963, %v3961
      %v3996 = vpack.c.b16 %v3964, %v3962
      %v3997 = vpack.c.b16 %v3967, %v3965
      %v3998 = vpack.c.b16 %v3968, %v3966
      %v3999 = vpack.c.b16 %v3971, %v3969
      %v4000 = vpack.c.b16 %v3972, %v3970
      %v4030 = vsel %vm1528, %v3847, 0
      %v4033 = vsel %vm1528, %v3849, 0
      %v4036 = vsel %vm1528, %v3851, 0
      %v4039 = vsel %vm1528, %v3853, 0
      %v4042 = vsel %vm1528, %v3855, 0
      %v4045 = vsel %vm1528, %v3857, 0
      %v4048 = vsel %vm1528, %v3859, 0
      %4050 = vmatprep.subr.bf16.mxu0 %v3974
      %4051 = vmatpush1.bf16.msra.mxu0 %v3973
      %4052 = vmatprep.subr.bf16.mxu0 %v3976
      %4053 = vmatpush1.bf16.msra.mxu0 %v3975
      %4054 = vmatprep.subr.bf16.mxu0 %v3978
      %4055 = vmatpush1.bf16.msra.mxu0 %v3977
      %4056 = vmatprep.subr.bf16.mxu0 %v3980
      %4057 = vmatpush1.bf16.msra.mxu0 %v3979
      %4058 = vmatprep.subr.bf16.mxu0 %v3982
      %4059 = vmatpush1.bf16.msra.mxu0 %v3981
      %4060 = vmatprep.subr.bf16.mxu0 %v3984
      %4061 = vmatpush1.bf16.msra.mxu0 %v3983
      %4062 = vmatprep.subr.bf16.mxu0 %v3986
      %4063 = vmatpush1.bf16.msra.mxu0 %v3985
      %4064 = vmatprep.subr.bf16.mxu0 %v3988
      %4065 = vmatpush1.bf16.msra.mxu0 %v3987
      %4066 = vmatprep.subr.bf16.mxu0 %v3990
      %4067 = vmatpush1.bf16.msra.mxu0 %v3989
      %4068 = vmatprep.subr.bf16.mxu0 %v3992
      %4069 = vmatpush1.bf16.msra.mxu0 %v3991
      %4070 = vmatprep.subr.bf16.mxu0 %v3994
      %4071 = vmatpush1.bf16.msra.mxu0 %v3993
      %4072 = vmatprep.subr.bf16.mxu0 %v3996
      %4073 = vmatpush1.bf16.msra.mxu0 %v3995
      %4074 = vmatprep.subr.bf16.mxu0 %v3998
      %4075 = vmatpush1.bf16.msra.mxu0 %v3997
      %4076 = vmatprep.subr.bf16.mxu0 %v4000
      %4077 = vmatpush1.bf16.msra.mxu0 %v3999
      %4078 = vmatprep.subr.bf16.mxu0 0
      %4079 = vmatpush1.bf16.msra.mxu0 0
      %4080 = vmatprep.subr.bf16.mxu0 0
      %4081 = vmatpush1.bf16.msra.mxu0 0
      %4082 = vmatprep.mubr.bf16.mxu0 %v4030
      %4083 = vmatmul.mubr.bf16.gmra.mrb[0].mxu0 %v3846
      %v4084 = vpop.f32.mrb[0].mxu0
      %v4085 = vadd.f32 0.0, %v4084
      %v4086 = vpop.f32.mrb[0].mxu0
      %v4087 = vadd.f32 0.0, %v4086
      %v4088 = vpop.f32.mrb[0].mxu0
      %v4089 = vadd.f32 0.0, %v4088
      %v4090 = vpop.f32.mrb[0].mxu0
      %v4091 = vadd.f32 0.0, %v4090
      %4092 = vmatprep.mubr.bf16.mxu0 %v4033
      %4093 = vmatmul.mubr.bf16.gmra.mrb[0].mxu0 %v3848
      %v4094 = vpop.f32.mrb[0].mxu0
      %v4095 = vadd.f32 0.0, %v4094
      %v4096 = vpop.f32.mrb[0].mxu0
      %v4097 = vadd.f32 0.0, %v4096
      %v4098 = vpop.f32.mrb[0].mxu0
      %v4099 = vadd.f32 0.0, %v4098
      %v4100 = vpop.f32.mrb[0].mxu0
      %v4101 = vadd.f32 0.0, %v4100
      %4102 = vmatprep.mubr.bf16.mxu0 %v4036
      %4103 = vmatmul.mubr.bf16.gmra.mrb[0].mxu0 %v3850
      %v4104 = vpop.f32.mrb[0].mxu0
      %v4105 = vadd.f32 0.0, %v4104
      %v4106 = vpop.f32.mrb[0].mxu0
      %v4107 = vadd.f32 0.0, %v4106
      %v4108 = vpop.f32.mrb[0].mxu0
      %v4109 = vadd.f32 0.0, %v4108
      %v4110 = vpop.f32.mrb[0].mxu0
      %v4111 = vadd.f32 0.0, %v4110
      %4112 = vmatprep.mubr.bf16.mxu0 %v4039
      %4113 = vmatmul.mubr.bf16.gmra.mrb[0].mxu0 %v3852
      %v4114 = vpop.f32.mrb[0].mxu0
      %v4115 = vadd.f32 0.0, %v4114
      %v4116 = vpop.f32.mrb[0].mxu0
      %v4117 = vadd.f32 0.0, %v4116
      %v4118 = vpop.f32.mrb[0].mxu0
      %v4119 = vadd.f32 0.0, %v4118
      %v4120 = vpop.f32.mrb[0].mxu0
      %v4121 = vadd.f32 0.0, %v4120
      %4122 = vmatprep.mubr.bf16.mxu0 %v4042
      %4123 = vmatmul.mubr.bf16.gmra.mrb[0].mxu0 %v3854
      %v4124 = vpop.f32.mrb[0].mxu0
      %v4125 = vadd.f32 0.0, %v4124
      %v4126 = vpop.f32.mrb[0].mxu0
      %v4127 = vadd.f32 0.0, %v4126
      %v4128 = vpop.f32.mrb[0].mxu0
      %v4129 = vadd.f32 0.0, %v4128
      %v4130 = vpop.f32.mrb[0].mxu0
      %v4131 = vadd.f32 0.0, %v4130
      %4132 = vmatprep.mubr.bf16.mxu0 %v4045
      %4133 = vmatmul.mubr.bf16.gmra.mrb[0].mxu0 %v3856
      %v4134 = vpop.f32.mrb[0].mxu0
      %v4135 = vadd.f32 0.0, %v4134
      %v4136 = vpop.f32.mrb[0].mxu0
      %v4137 = vadd.f32 0.0, %v4136
      %v4138 = vpop.f32.mrb[0].mxu0
      %v4139 = vadd.f32 0.0, %v4138
      %v4140 = vpop.f32.mrb[0].mxu0
      %v4141 = vadd.f32 0.0, %v4140
      %4142 = vmatprep.mubr.bf16.mxu0 %v4048
      %4143 = vmatmul.mubr.bf16.gmra.mrb[0].mxu0 %v3858
      %v4144 = vpop.f32.mrb[0].mxu0
      %v4145 = vadd.f32 0.0, %v4144
      %v4146 = vpop.f32.mrb[0].mxu0
      %v4147 = vadd.f32 0.0, %v4146
      %v4148 = vpop.f32.mrb[0].mxu0
      %v4149 = vadd.f32 0.0, %v4148
      %v4150 = vpop.f32.mrb[0].mxu0
      %v4151 = vadd.f32 0.0, %v4150
      %4152 = vdwg.mxu0
      %v4181 = vunpack.c.l.b16 %v3818
      %v4182 = vunpack.c.h.b16 %v3818
      %v4183 = vunpack.c.l.b16 %v3819
      %v4184 = vunpack.c.h.b16 %v3819
      %v4185 = vunpack.c.l.b16 %v3820
      %v4186 = vunpack.c.h.b16 %v3820
      %v4187 = vunpack.c.l.b16 %v3821
      %v4188 = vunpack.c.h.b16 %v3821
      %v4189 = vunpack.c.l.b16 %v3822
      %v4190 = vunpack.c.h.b16 %v3822
      %v4191 = vunpack.c.l.b16 %v3823
      %v4192 = vunpack.c.h.b16 %v3823
      %v4193 = vunpack.c.l.b16 %v3824
      %v4194 = vunpack.c.h.b16 %v3824
      %v4195 = vunpack.c.l.b16 %v3825
      %v4196 = vunpack.c.h.b16 %v3825
      %v4197 = vunpack.c.l.b16 %v3826
      %v4198 = vunpack.c.h.b16 %v3826
      %v4199 = vunpack.c.l.b16 %v3827
      %v4200 = vunpack.c.h.b16 %v3827
      %v4201 = vunpack.c.l.b16 %v3828
      %v4202 = vunpack.c.h.b16 %v3828
      %v4203 = vunpack.c.l.b16 %v3829
      %v4204 = vunpack.c.h.b16 %v3829
      %v4205 = vunpack.c.l.b16 %v3830
      %v4206 = vunpack.c.h.b16 %v3830
      %v4207 = vunpack.c.l.b16 %v3831
      %v4208 = vunpack.c.h.b16 %v3831
      %v4209 = vunpack.c.l.b16 %v3832
      %v4210 = vunpack.c.h.b16 %v3832
      %v4211 = vunpack.c.l.b16 %v3833
      %v4212 = vunpack.c.h.b16 %v3833
      %v4213 = vunpack.c.l.b16 %v3834
      %v4214 = vunpack.c.h.b16 %v3834
      %v4215 = vunpack.c.l.b16 %v3835
      %v4216 = vunpack.c.h.b16 %v3835
      %v4217 = vunpack.c.l.b16 %v3836
      %v4218 = vunpack.c.h.b16 %v3836
      %v4219 = vunpack.c.l.b16 %v3837
      %v4220 = vunpack.c.h.b16 %v3837
      %v4221 = vunpack.c.l.b16 %v3838
      %v4222 = vunpack.c.h.b16 %v3838
      %v4223 = vunpack.c.l.b16 %v3839
      %v4224 = vunpack.c.h.b16 %v3839
      %v4225 = vunpack.c.l.b16 %v3840
      %v4226 = vunpack.c.h.b16 %v3840
      %v4227 = vunpack.c.l.b16 %v3841
      %v4228 = vunpack.c.h.b16 %v3841
      %v4229 = vunpack.c.l.b16 %v3842
      %v4230 = vunpack.c.h.b16 %v3842
      %v4231 = vunpack.c.l.b16 %v3843
      %v4232 = vunpack.c.h.b16 %v3843
      %v4233 = vunpack.c.l.b16 %v3844
      %v4234 = vunpack.c.h.b16 %v3844
      %v4235 = vunpack.c.l.b16 %v3845
      %v4236 = vunpack.c.h.b16 %v3845
      %v4237 = vpack.c.b16 %v4183, %v4181
      %v4238 = vpack.c.b16 %v4184, %v4182
      %v4239 = vpack.c.b16 %v4187, %v4185
      %v4240 = vpack.c.b16 %v4188, %v4186
      %v4241 = vpack.c.b16 %v4191, %v4189
      %v4242 = vpack.c.b16 %v4192, %v4190
      %v4243 = vpack.c.b16 %v4195, %v4193
      %v4244 = vpack.c.b16 %v4196, %v4194
      %v4245 = vpack.c.b16 %v4199, %v4197
      %v4246 = vpack.c.b16 %v4200, %v4198
      %v4247 = vpack.c.b16 %v4203, %v4201
      %v4248 = vpack.c.b16 %v4204, %v4202
      %v4249 = vpack.c.b16 %v4207, %v4205
      %v4250 = vpack.c.b16 %v4208, %v4206
      %v4251 = vpack.c.b16 %v4211, %v4209
      %v4252 = vpack.c.b16 %v4212, %v4210
      %v4253 = vpack.c.b16 %v4215, %v4213
      %v4254 = vpack.c.b16 %v4216, %v4214
      %v4255 = vpack.c.b16 %v4219, %v4217
      %v4256 = vpack.c.b16 %v4220, %v4218
      %v4257 = vpack.c.b16 %v4223, %v4221
      %v4258 = vpack.c.b16 %v4224, %v4222
      %v4259 = vpack.c.b16 %v4227, %v4225
      %v4260 = vpack.c.b16 %v4228, %v4226
      %v4261 = vpack.c.b16 %v4231, %v4229
      %v4262 = vpack.c.b16 %v4232, %v4230
      %v4263 = vpack.c.b16 %v4235, %v4233
      %v4264 = vpack.c.b16 %v4236, %v4234
      %v4294 = vsel %vm1528, %v3806, 0
      %v4297 = vsel %vm1528, %v3808, 0
      %v4300 = vsel %vm1528, %v3810, 0
      %v4303 = vsel %vm1528, %v3812, 0
      %v4306 = vsel %vm1528, %v3814, 0
      %v4309 = vsel %vm1528, %v3816, 0
      %v4312 = vsel %vm1528, %v3817, 0
      %4314 = vmatprep.subr.bf16.mxu0 %v4238
      %4315 = vmatpush1.bf16.msra.mxu0 %v4237
      %4316 = vmatprep.subr.bf16.mxu0 %v4240
      %4317 = vmatpush1.bf16.msra.mxu0 %v4239
      %4318 = vmatprep.subr.bf16.mxu0 %v4242
      %4319 = vmatpush1.bf16.msra.mxu0 %v4241
      %4320 = vmatprep.subr.bf16.mxu0 %v4244
      %4321 = vmatpush1.bf16.msra.mxu0 %v4243
      %4322 = vmatprep.subr.bf16.mxu0 %v4246
      %4323 = vmatpush1.bf16.msra.mxu0 %v4245
      %4324 = vmatprep.subr.bf16.mxu0 %v4248
      %4325 = vmatpush1.bf16.msra.mxu0 %v4247
      %4326 = vmatprep.subr.bf16.mxu0 %v4250
      %4327 = vmatpush1.bf16.msra.mxu0 %v4249
      %4328 = vmatprep.subr.bf16.mxu0 %v4252
      %4329 = vmatpush1.bf16.msra.mxu0 %v4251
      %4330 = vmatprep.subr.bf16.mxu0 %v4254
      %4331 = vmatpush1.bf16.msra.mxu0 %v4253
      %4332 = vmatprep.subr.bf16.mxu0 %v4256
      %4333 = vmatpush1.bf16.msra.mxu0 %v4255
      %4334 = vmatprep.subr.bf16.mxu0 %v4258
      %4335 = vmatpush1.bf16.msra.mxu0 %v4257
      %4336 = vmatprep.subr.bf16.mxu0 %v4260
      %4337 = vmatpush1.bf16.msra.mxu0 %v4259
      %4338 = vmatprep.subr.bf16.mxu0 %v4262
      %4339 = vmatpush1.bf16.msra.mxu0 %v4261
      %4340 = vmatprep.subr.bf16.mxu0 %v4264
      %4341 = vmatpush1.bf16.msra.mxu0 %v4263
      %4342 = vmatprep.subr.bf16.mxu0 0
      %4343 = vmatpush1.bf16.msra.mxu0 0
      %4344 = vmatprep.subr.bf16.mxu0 0
      %4345 = vmatpush1.bf16.msra.mxu0 0
      %4346 = vmatprep.mubr.bf16.mxu0 %v4294
      %4347 = vmatmul.mubr.bf16.gmra.mrb[0].mxu0 %v3805
      %v4348 = vpop.f32.mrb[0].mxu0
      %v4349 = vadd.f32 %v4085, %v4348
      %v4350 = vpop.f32.mrb[0].mxu0
      %v4351 = vadd.f32 %v4087, %v4350
      %v4352 = vpop.f32.mrb[0].mxu0
      %v4353 = vadd.f32 %v4089, %v4352
      %v4354 = vpop.f32.mrb[0].mxu0
      %v4355 = vadd.f32 %v4091, %v4354
      %4356 = vmatprep.mubr.bf16.mxu0 %v4297
      %4357 = vmatmul.mubr.bf16.gmra.mrb[0].mxu0 %v3807
      %v4358 = vpop.f32.mrb[0].mxu0
      %v4359 = vadd.f32 %v4095, %v4358
      %v4360 = vpop.f32.mrb[0].mxu0
      %v4361 = vadd.f32 %v4097, %v4360
      %v4362 = vpop.f32.mrb[0].mxu0
      %v4363 = vadd.f32 %v4099, %v4362
      %v4364 = vpop.f32.mrb[0].mxu0
      %v4365 = vadd.f32 %v4101, %v4364
      %4366 = vmatprep.mubr.bf16.mxu0 %v4300
      %4367 = vmatmul.mubr.bf16.gmra.mrb[0].mxu0 %v3809
      %v4368 = vpop.f32.mrb[0].mxu0
      %v4369 = vadd.f32 %v4105, %v4368
      %v4370 = vpop.f32.mrb[0].mxu0
      %v4371 = vadd.f32 %v4107, %v4370
      %v4372 = vpop.f32.mrb[0].mxu0
      %v4373 = vadd.f32 %v4109, %v4372
      %v4374 = vpop.f32.mrb[0].mxu0
      %v4375 = vadd.f32 %v4111, %v4374
      %4376 = vmatprep.mubr.bf16.mxu0 %v4303
      %4377 = vmatmul.mubr.bf16.gmra.mrb[0].mxu0 %v3811
      %v4378 = vpop.f32.mrb[0].mxu0
      %v4379 = vadd.f32 %v4115, %v4378
      %v4380 = vpop.f32.mrb[0].mxu0
      %v4381 = vadd.f32 %v4117, %v4380
      %v4382 = vpop.f32.mrb[0].mxu0
      %v4383 = vadd.f32 %v4119, %v4382
      %v4384 = vpop.f32.mrb[0].mxu0
      %v4385 = vadd.f32 %v4121, %v4384
      %4386 = vmatprep.mubr.bf16.mxu0 %v4306
      %4387 = vmatmul.mubr.bf16.gmra.mrb[0].mxu0 %v3813
      %v4388 = vpop.f32.mrb[0].mxu0
      %v4389 = vadd.f32 %v4125, %v4388
      %v4390 = vpop.f32.mrb[0].mxu0
      %v4391 = vadd.f32 %v4127, %v4390
      %v4392 = vpop.f32.mrb[0].mxu0
      %v4393 = vadd.f32 %v4129, %v4392
      %v4394 = vpop.f32.mrb[0].mxu0
      %v4395 = vadd.f32 %v4131, %v4394
      %4396 = vmatprep.mubr.bf16.mxu0 %v4309
      %4397 = vmatmul.mubr.bf16.gmra.mrb[0].mxu0 %v3815
      %v4398 = vpop.f32.mrb[0].mxu0
      %v4399 = vadd.f32 %v4135, %v4398
      %v4400 = vpop.f32.mrb[0].mxu0
      %v4401 = vadd.f32 %v4137, %v4400
      %v4402 = vpop.f32.mrb[0].mxu0
      %v4403 = vadd.f32 %v4139, %v4402
      %v4404 = vpop.f32.mrb[0].mxu0
      %v4405 = vadd.f32 %v4141, %v4404
      %4406 = vmatprep.mubr.bf16.mxu0 %v4312
      %4407 = vmatmul.mubr.bf16.gmra.mrb[0].mxu0 %v3817
      %v4408 = vpop.f32.mrb[0].mxu0
      %v4409 = vadd.f32 %v4145, %v4408
      %v4410 = vpop.f32.mrb[0].mxu0
      %v4411 = vadd.f32 %v4147, %v4410
      %v4412 = vpop.f32.mrb[0].mxu0
      %v4413 = vadd.f32 %v4149, %v4412
      %v4414 = vpop.f32.mrb[0].mxu0
      %v4415 = vadd.f32 %v4151, %v4414
      %4416 = vdwg.mxu0
      %v4417 = vpack.c.bf16 %v3431, 0.0
      %v4418 = vpack.c.bf16 %v3432, 0.0
      %s4419 = scalar_lea.vmem %s12, 448
      %v4420 = vld [vmem:[%s4419] sm:$0xff]
      %v4421 = vld [vmem:[%s4419 + $0x8] sm:$0xff]
      %v4422 = vld [vmem:[%s4419 + $0x10] sm:$0xff]
      %v4423 = vld [vmem:[%s4419 + $0x18] sm:$0xff]
      %v4424 = vld [vmem:[%s4419 + $0x20] sm:$0xff]
      %v4425 = vld [vmem:[%s4419 + $0x28] sm:$0xff]
      %v4426 = vld [vmem:[%s4419 + $0x30] sm:$0xff]
      %v4427 = vld [vmem:[%s4419 + $0x38] sm:$0xff]
      %v4428 = vld [vmem:[%s4419 + $0x40] sm:$0xff]
      %v4429 = vld [vmem:[%s4419 + $0x48] sm:$0xff]
      %v4430 = vld [vmem:[%s4419 + $0x50] sm:$0xff]
      %v4431 = vld [vmem:[%s4419 + $0x58] sm:$0xff]
      %v4432 = vld [vmem:[%s4419 + $0x60] sm:$0xff]
      %v4433 = vld [vmem:[%s4419 + $0x68] sm:$0xff]
      %v4434 = vld [vmem:[%s4419 + $0x70] sm:$0xff]
      %v4435 = vld [vmem:[%s4419 + $0x78] sm:$0xff]
      %v4436 = vld [vmem:[%s4419 + $0x80] sm:$0xff]
      %v4437 = vld [vmem:[%s4419 + $0x88] sm:$0xff]
      %v4438 = vld [vmem:[%s4419 + $0x90] sm:$0xff]
      %v4439 = vld [vmem:[%s4419 + $0x98] sm:$0xff]
      %v4440 = vld [vmem:[%s4419 + $0xa0] sm:$0xff]
      %v4441 = vld [vmem:[%s4419 + $0xa8] sm:$0xff]
      %v4442 = vld [vmem:[%s4419 + $0xb0] sm:$0xff]
      %v4443 = vld [vmem:[%s4419 + $0xb8] sm:$0xff]
      %v4444 = vld [vmem:[%s4419 + $0xc0] sm:$0xff]
      %v4445 = vld [vmem:[%s4419 + $0xc8] sm:$0xff]
      %v4446 = vld [vmem:[%s4419 + $0xd0] sm:$0xff]
      %v4447 = vld [vmem:[%s4419 + $0xd8] sm:$0xff]
      %v4476 = vunpack.c.l.b16 %v4420
      %v4477 = vunpack.c.h.b16 %v4420
      %v4478 = vunpack.c.l.b16 %v4421
      %v4479 = vunpack.c.h.b16 %v4421
      %v4480 = vunpack.c.l.b16 %v4422
      %v4481 = vunpack.c.h.b16 %v4422
      %v4482 = vunpack.c.l.b16 %v4423
      %v4483 = vunpack.c.h.b16 %v4423
      %v4484 = vunpack.c.l.b16 %v4424
      %v4485 = vunpack.c.h.b16 %v4424
      %v4486 = vunpack.c.l.b16 %v4425
      %v4487 = vunpack.c.h.b16 %v4425
      %v4488 = vunpack.c.l.b16 %v4426
      %v4489 = vunpack.c.h.b16 %v4426
      %v4490 = vunpack.c.l.b16 %v4427
      %v4491 = vunpack.c.h.b16 %v4427
      %v4492 = vunpack.c.l.b16 %v4428
      %v4493 = vunpack.c.h.b16 %v4428
      %v4494 = vunpack.c.l.b16 %v4429
      %v4495 = vunpack.c.h.b16 %v4429
      %v4496 = vunpack.c.l.b16 %v4430
      %v4497 = vunpack.c.h.b16 %v4430
      %v4498 = vunpack.c.l.b16 %v4431
      %v4499 = vunpack.c.h.b16 %v4431
      %v4500 = vunpack.c.l.b16 %v4432
      %v4501 = vunpack.c.h.b16 %v4432
      %v4502 = vunpack.c.l.b16 %v4433
      %v4503 = vunpack.c.h.b16 %v4433
      %v4504 = vunpack.c.l.b16 %v4434
      %v4505 = vunpack.c.h.b16 %v4434
      %v4506 = vunpack.c.l.b16 %v4435
      %v4507 = vunpack.c.h.b16 %v4435
      %v4508 = vunpack.c.l.b16 %v4436
      %v4509 = vunpack.c.h.b16 %v4436
      %v4510 = vunpack.c.l.b16 %v4437
      %v4511 = vunpack.c.h.b16 %v4437
      %v4512 = vunpack.c.l.b16 %v4438
      %v4513 = vunpack.c.h.b16 %v4438
      %v4514 = vunpack.c.l.b16 %v4439
      %v4515 = vunpack.c.h.b16 %v4439
      %v4516 = vunpack.c.l.b16 %v4440
      %v4517 = vunpack.c.h.b16 %v4440
      %v4518 = vunpack.c.l.b16 %v4441
      %v4519 = vunpack.c.h.b16 %v4441
      %v4520 = vunpack.c.l.b16 %v4442
      %v4521 = vunpack.c.h.b16 %v4442
      %v4522 = vunpack.c.l.b16 %v4443
      %v4523 = vunpack.c.h.b16 %v4443
      %v4524 = vunpack.c.l.b16 %v4444
      %v4525 = vunpack.c.h.b16 %v4444
      %v4526 = vunpack.c.l.b16 %v4445
      %v4527 = vunpack.c.h.b16 %v4445
      %v4528 = vunpack.c.l.b16 %v4446
      %v4529 = vunpack.c.h.b16 %v4446
      %v4530 = vunpack.c.l.b16 %v4447
      %v4531 = vunpack.c.h.b16 %v4447
      %v4532 = vpack.c.b16 %v4478, %v4476
      %v4533 = vpack.c.b16 %v4479, %v4477
      %v4534 = vpack.c.b16 %v4482, %v4480
      %v4535 = vpack.c.b16 %v4483, %v4481
      %v4536 = vpack.c.b16 %v4486, %v4484
      %v4537 = vpack.c.b16 %v4487, %v4485
      %v4538 = vpack.c.b16 %v4490, %v4488
      %v4539 = vpack.c.b16 %v4491, %v4489
      %v4540 = vpack.c.b16 %v4494, %v4492
      %v4541 = vpack.c.b16 %v4495, %v4493
      %v4542 = vpack.c.b16 %v4498, %v4496
      %v4543 = vpack.c.b16 %v4499, %v4497
      %v4544 = vpack.c.b16 %v4502, %v4500
      %v4545 = vpack.c.b16 %v4503, %v4501
      %v4546 = vpack.c.b16 %v4506, %v4504
      %v4547 = vpack.c.b16 %v4507, %v4505
      %v4548 = vpack.c.b16 %v4510, %v4508
      %v4549 = vpack.c.b16 %v4511, %v4509
      %v4550 = vpack.c.b16 %v4514, %v4512
      %v4551 = vpack.c.b16 %v4515, %v4513
      %v4552 = vpack.c.b16 %v4518, %v4516
      %v4553 = vpack.c.b16 %v4519, %v4517
      %v4554 = vpack.c.b16 %v4522, %v4520
      %v4555 = vpack.c.b16 %v4523, %v4521
      %v4556 = vpack.c.b16 %v4526, %v4524
      %v4557 = vpack.c.b16 %v4527, %v4525
      %v4558 = vpack.c.b16 %v4530, %v4528
      %v4559 = vpack.c.b16 %v4531, %v4529
      %v4589 = vsel %vm1528, %v4418, 0
      %4591 = vmatprep.subr.bf16.mxu0 %v4533
      %4592 = vmatpush1.bf16.msra.mxu0 %v4532
      %4593 = vmatprep.subr.bf16.mxu0 %v4535
      %4594 = vmatpush1.bf16.msra.mxu0 %v4534
      %4595 = vmatprep.subr.bf16.mxu0 %v4537
      %4596 = vmatpush1.bf16.msra.mxu0 %v4536
      %4597 = vmatprep.subr.bf16.mxu0 %v4539
      %4598 = vmatpush1.bf16.msra.mxu0 %v4538
      %4599 = vmatprep.subr.bf16.mxu0 %v4541
      %4600 = vmatpush1.bf16.msra.mxu0 %v4540
      %4601 = vmatprep.subr.bf16.mxu0 %v4543
      %4602 = vmatpush1.bf16.msra.mxu0 %v4542
      %4603 = vmatprep.subr.bf16.mxu0 %v4545
      %4604 = vmatpush1.bf16.msra.mxu0 %v4544
      %4605 = vmatprep.subr.bf16.mxu0 %v4547
      %4606 = vmatpush1.bf16.msra.mxu0 %v4546
      %4607 = vmatprep.subr.bf16.mxu0 %v4549
      %4608 = vmatpush1.bf16.msra.mxu0 %v4548
      %4609 = vmatprep.subr.bf16.mxu0 %v4551
      %4610 = vmatpush1.bf16.msra.mxu0 %v4550
      %4611 = vmatprep.subr.bf16.mxu0 %v4553
      %4612 = vmatpush1.bf16.msra.mxu0 %v4552
      %4613 = vmatprep.subr.bf16.mxu0 %v4555
      %4614 = vmatpush1.bf16.msra.mxu0 %v4554
      %4615 = vmatprep.subr.bf16.mxu0 %v4557
      %4616 = vmatpush1.bf16.msra.mxu0 %v4556
      %4617 = vmatprep.subr.bf16.mxu0 %v4559
      %4618 = vmatpush1.bf16.msra.mxu0 %v4558
      %4619 = vmatprep.subr.bf16.mxu0 0
      %4620 = vmatpush1.bf16.msra.mxu0 0
      %4621 = vmatprep.subr.bf16.mxu0 0
      %4622 = vmatpush1.bf16.msra.mxu0 0
      %4623 = vmatprep.mubr.bf16.mxu0 %v4589
      %4624 = vmatmul.mubr.bf16.gmra.mrb[0].mxu0 %v4417
      %v4625 = vpop.f32.mrb[0].mxu0
      %v4626 = vadd.f32 0.0, %v4625
      %v4627 = vpop.f32.mrb[0].mxu0
      %v4628 = vadd.f32 0.0, %v4627
      %v4629 = vpop.f32.mrb[0].mxu0
      %v4630 = vadd.f32 0.0, %v4629
      %v4631 = vpop.f32.mrb[0].mxu0
      %v4632 = vadd.f32 0.0, %v4631
      %4633 = vmatprep.mubr.bf16.mxu0 %v4294
      %4634 = vmatmul.mubr.bf16.gmra.mrb[0].mxu0 %v3805
      %v4635 = vpop.f32.mrb[0].mxu0
      %v4636 = vadd.f32 0.0, %v4635
      %v4637 = vpop.f32.mrb[0].mxu0
      %v4638 = vadd.f32 0.0, %v4637
      %v4639 = vpop.f32.mrb[0].mxu0
      %v4640 = vadd.f32 0.0, %v4639
      %v4641 = vpop.f32.mrb[0].mxu0
      %v4642 = vadd.f32 0.0, %v4641
      %4643 = vmatprep.mubr.bf16.mxu0 %v4297
      %4644 = vmatmul.mubr.bf16.gmra.mrb[0].mxu0 %v3807
      %v4645 = vpop.f32.mrb[0].mxu0
      %v4646 = vadd.f32 0.0, %v4645
      %v4647 = vpop.f32.mrb[0].mxu0
      %v4648 = vadd.f32 0.0, %v4647
      %v4649 = vpop.f32.mrb[0].mxu0
      %v4650 = vadd.f32 0.0, %v4649
      %v4651 = vpop.f32.mrb[0].mxu0
      %v4652 = vadd.f32 0.0, %v4651
      %4653 = vmatprep.mubr.bf16.mxu0 %v4300
      %4654 = vmatmul.mubr.bf16.gmra.mrb[0].mxu0 %v3809
      %v4655 = vpop.f32.mrb[0].mxu0
      %v4656 = vadd.f32 0.0, %v4655
      %v4657 = vpop.f32.mrb[0].mxu0
      %v4658 = vadd.f32 0.0, %v4657
      %v4659 = vpop.f32.mrb[0].mxu0
      %v4660 = vadd.f32 0.0, %v4659
      %v4661 = vpop.f32.mrb[0].mxu0
      %v4662 = vadd.f32 0.0, %v4661
      %4663 = vmatprep.mubr.bf16.mxu0 %v4303
      %4664 = vmatmul.mubr.bf16.gmra.mrb[0].mxu0 %v3811
      %v4665 = vpop.f32.mrb[0].mxu0
      %v4666 = vadd.f32 0.0, %v4665
      %v4667 = vpop.f32.mrb[0].mxu0
      %v4668 = vadd.f32 0.0, %v4667
      %v4669 = vpop.f32.mrb[0].mxu0
      %v4670 = vadd.f32 0.0, %v4669
      %v4671 = vpop.f32.mrb[0].mxu0
      %v4672 = vadd.f32 0.0, %v4671
      %4673 = vmatprep.mubr.bf16.mxu0 %v4306
      %4674 = vmatmul.mubr.bf16.gmra.mrb[0].mxu0 %v3813
      %v4675 = vpop.f32.mrb[0].mxu0
      %v4676 = vadd.f32 0.0, %v4675
      %v4677 = vpop.f32.mrb[0].mxu0
      %v4678 = vadd.f32 0.0, %v4677
      %v4679 = vpop.f32.mrb[0].mxu0
      %v4680 = vadd.f32 0.0, %v4679
      %v4681 = vpop.f32.mrb[0].mxu0
      %v4682 = vadd.f32 0.0, %v4681
      %4683 = vmatprep.mubr.bf16.mxu0 %v4309
      %4684 = vmatmul.mubr.bf16.gmra.mrb[0].mxu0 %v3815
      %v4685 = vpop.f32.mrb[0].mxu0
      %v4686 = vadd.f32 0.0, %v4685
      %v4687 = vpop.f32.mrb[0].mxu0
      %v4688 = vadd.f32 0.0, %v4687
      %v4689 = vpop.f32.mrb[0].mxu0
      %v4690 = vadd.f32 0.0, %v4689
      %v4691 = vpop.f32.mrb[0].mxu0
      %v4692 = vadd.f32 0.0, %v4691
      %4693 = vdwg.mxu0
      %v4694 = vadd.f32 %v4349, %v4626
      %v4695 = vadd.f32 %v4351, %v4628
      %v4696 = vadd.f32 %v4353, %v4630
      %v4697 = vadd.f32 %v4355, %v4632
      %v4698 = vadd.f32 %v4359, %v4636
      %v4699 = vadd.f32 %v4361, %v4638
      %v4700 = vadd.f32 %v4363, %v4640
      %v4701 = vadd.f32 %v4365, %v4642
      %v4702 = vadd.f32 %v4369, %v4646
      %v4703 = vadd.f32 %v4371, %v4648
      %v4704 = vadd.f32 %v4373, %v4650
      %v4705 = vadd.f32 %v4375, %v4652
      %v4706 = vadd.f32 %v4379, %v4656
      %v4707 = vadd.f32 %v4381, %v4658
      %v4708 = vadd.f32 %v4383, %v4660
      %v4709 = vadd.f32 %v4385, %v4662
      %v4710 = vadd.f32 %v4389, %v4666
      %v4711 = vadd.f32 %v4391, %v4668
      %v4712 = vadd.f32 %v4393, %v4670
      %v4713 = vadd.f32 %v4395, %v4672
      %v4714 = vadd.f32 %v4399, %v4676
      %v4715 = vadd.f32 %v4401, %v4678
      %v4716 = vadd.f32 %v4403, %v4680
      %v4717 = vadd.f32 %v4405, %v4682
      %v4718 = vadd.f32 %v4409, %v4686
      %v4719 = vadd.f32 %v4411, %v4688
      %v4720 = vadd.f32 %v4413, %v4690
      %v4721 = vadd.f32 %v4415, %v4692
      %s4722 = scalar_lea.vmem %s12, 672
      %v4723 = vld [vmem:[%s4722] sm:$0xff]
      %v4724 = vld [vmem:[%s4722 + $0x8] sm:$0xff]
      %v4725 = vld [vmem:[%s4722 + $0x10] sm:$0xff]
      %v4726 = vld [vmem:[%s4722 + $0x18] sm:$0xff]
      %v4727 = vld [vmem:[%s4722 + $0x20] sm:$0xff]
      %v4728 = vld [vmem:[%s4722 + $0x28] sm:$0xff]
      %v4729 = vld [vmem:[%s4722 + $0x30] sm:$0xff]
      %v4730 = vld [vmem:[%s4722 + $0x38] sm:$0xff]
      %v4731 = vld [vmem:[%s4722 + $0x40] sm:$0xff]
      %v4732 = vld [vmem:[%s4722 + $0x48] sm:$0xff]
      %v4733 = vld [vmem:[%s4722 + $0x50] sm:$0xff]
      %v4734 = vld [vmem:[%s4722 + $0x58] sm:$0xff]
      %v4735 = vld [vmem:[%s4722 + $0x60] sm:$0xff]
      %v4736 = vld [vmem:[%s4722 + $0x68] sm:$0xff]
      %v4737 = vld [vmem:[%s4722 + $0x70] sm:$0xff]
      %v4738 = vld [vmem:[%s4722 + $0x78] sm:$0xff]
      %v4739 = vld [vmem:[%s4722 + $0x80] sm:$0xff]
      %v4740 = vld [vmem:[%s4722 + $0x88] sm:$0xff]
      %v4741 = vld [vmem:[%s4722 + $0x90] sm:$0xff]
      %v4742 = vld [vmem:[%s4722 + $0x98] sm:$0xff]
      %v4743 = vld [vmem:[%s4722 + $0xa0] sm:$0xff]
      %v4744 = vld [vmem:[%s4722 + $0xa8] sm:$0xff]
      %v4745 = vld [vmem:[%s4722 + $0xb0] sm:$0xff]
      %v4746 = vld [vmem:[%s4722 + $0xb8] sm:$0xff]
      %v4747 = vld [vmem:[%s4722 + $0xc0] sm:$0xff]
      %v4748 = vld [vmem:[%s4722 + $0xc8] sm:$0xff]
      %v4749 = vld [vmem:[%s4722 + $0xd0] sm:$0xff]
      %v4750 = vld [vmem:[%s4722 + $0xd8] sm:$0xff]
      %v4779 = vunpack.c.l.b16 %v4723
      %v4780 = vunpack.c.h.b16 %v4723
      %v4781 = vunpack.c.l.b16 %v4724
      %v4782 = vunpack.c.h.b16 %v4724
      %v4783 = vunpack.c.l.b16 %v4725
      %v4784 = vunpack.c.h.b16 %v4725
      %v4785 = vunpack.c.l.b16 %v4726
      %v4786 = vunpack.c.h.b16 %v4726
      %v4787 = vunpack.c.l.b16 %v4727
      %v4788 = vunpack.c.h.b16 %v4727
      %v4789 = vunpack.c.l.b16 %v4728
      %v4790 = vunpack.c.h.b16 %v4728
      %v4791 = vunpack.c.l.b16 %v4729
      %v4792 = vunpack.c.h.b16 %v4729
      %v4793 = vunpack.c.l.b16 %v4730
      %v4794 = vunpack.c.h.b16 %v4730
      %v4795 = vunpack.c.l.b16 %v4731
      %v4796 = vunpack.c.h.b16 %v4731
      %v4797 = vunpack.c.l.b16 %v4732
      %v4798 = vunpack.c.h.b16 %v4732
      %v4799 = vunpack.c.l.b16 %v4733
      %v4800 = vunpack.c.h.b16 %v4733
      %v4801 = vunpack.c.l.b16 %v4734
      %v4802 = vunpack.c.h.b16 %v4734
      %v4803 = vunpack.c.l.b16 %v4735
      %v4804 = vunpack.c.h.b16 %v4735
      %v4805 = vunpack.c.l.b16 %v4736
      %v4806 = vunpack.c.h.b16 %v4736
      %v4807 = vunpack.c.l.b16 %v4737
      %v4808 = vunpack.c.h.b16 %v4737
      %v4809 = vunpack.c.l.b16 %v4738
      %v4810 = vunpack.c.h.b16 %v4738
      %v4811 = vunpack.c.l.b16 %v4739
      %v4812 = vunpack.c.h.b16 %v4739
      %v4813 = vunpack.c.l.b16 %v4740
      %v4814 = vunpack.c.h.b16 %v4740
      %v4815 = vunpack.c.l.b16 %v4741
      %v4816 = vunpack.c.h.b16 %v4741
      %v4817 = vunpack.c.l.b16 %v4742
      %v4818 = vunpack.c.h.b16 %v4742
      %v4819 = vunpack.c.l.b16 %v4743
      %v4820 = vunpack.c.h.b16 %v4743
      %v4821 = vunpack.c.l.b16 %v4744
      %v4822 = vunpack.c.h.b16 %v4744
      %v4823 = vunpack.c.l.b16 %v4745
      %v4824 = vunpack.c.h.b16 %v4745
      %v4825 = vunpack.c.l.b16 %v4746
      %v4826 = vunpack.c.h.b16 %v4746
      %v4827 = vunpack.c.l.b16 %v4747
      %v4828 = vunpack.c.h.b16 %v4747
      %v4829 = vunpack.c.l.b16 %v4748
      %v4830 = vunpack.c.h.b16 %v4748
      %v4831 = vunpack.c.l.b16 %v4749
      %v4832 = vunpack.c.h.b16 %v4749
      %v4833 = vunpack.c.l.b16 %v4750
      %v4834 = vunpack.c.h.b16 %v4750
      %v4835 = vpack.c.b16 %v4781, %v4779
      %v4836 = vpack.c.b16 %v4782, %v4780
      %v4837 = vpack.c.b16 %v4785, %v4783
      %v4838 = vpack.c.b16 %v4786, %v4784
      %v4839 = vpack.c.b16 %v4789, %v4787
      %v4840 = vpack.c.b16 %v4790, %v4788
      %v4841 = vpack.c.b16 %v4793, %v4791
      %v4842 = vpack.c.b16 %v4794, %v4792
      %v4843 = vpack.c.b16 %v4797, %v4795
      %v4844 = vpack.c.b16 %v4798, %v4796
      %v4845 = vpack.c.b16 %v4801, %v4799
      %v4846 = vpack.c.b16 %v4802, %v4800
      %v4847 = vpack.c.b16 %v4805, %v4803
      %v4848 = vpack.c.b16 %v4806, %v4804
      %v4849 = vpack.c.b16 %v4809, %v4807
      %v4850 = vpack.c.b16 %v4810, %v4808
      %v4851 = vpack.c.b16 %v4813, %v4811
      %v4852 = vpack.c.b16 %v4814, %v4812
      %v4853 = vpack.c.b16 %v4817, %v4815
      %v4854 = vpack.c.b16 %v4818, %v4816
      %v4855 = vpack.c.b16 %v4821, %v4819
      %v4856 = vpack.c.b16 %v4822, %v4820
      %v4857 = vpack.c.b16 %v4825, %v4823
      %v4858 = vpack.c.b16 %v4826, %v4824
      %v4859 = vpack.c.b16 %v4829, %v4827
      %v4860 = vpack.c.b16 %v4830, %v4828
      %v4861 = vpack.c.b16 %v4833, %v4831
      %v4862 = vpack.c.b16 %v4834, %v4832
      %4891 = vmatprep.subr.bf16.mxu0 %v4836
      %4892 = vmatpush1.bf16.msra.mxu0 %v4835
      %4893 = vmatprep.subr.bf16.mxu0 %v4838
      %4894 = vmatpush1.bf16.msra.mxu0 %v4837
      %4895 = vmatprep.subr.bf16.mxu0 %v4840
      %4896 = vmatpush1.bf16.msra.mxu0 %v4839
      %4897 = vmatprep.subr.bf16.mxu0 %v4842
      %4898 = vmatpush1.bf16.msra.mxu0 %v4841
      %4899 = vmatprep.subr.bf16.mxu0 %v4844
      %4900 = vmatpush1.bf16.msra.mxu0 %v4843
      %4901 = vmatprep.subr.bf16.mxu0 %v4846
      %4902 = vmatpush1.bf16.msra.mxu0 %v4845
      %4903 = vmatprep.subr.bf16.mxu0 %v4848
      %4904 = vmatpush1.bf16.msra.mxu0 %v4847
      %4905 = vmatprep.subr.bf16.mxu0 %v4850
      %4906 = vmatpush1.bf16.msra.mxu0 %v4849
      %4907 = vmatprep.subr.bf16.mxu0 %v4852
      %4908 = vmatpush1.bf16.msra.mxu0 %v4851
      %4909 = vmatprep.subr.bf16.mxu0 %v4854
      %4910 = vmatpush1.bf16.msra.mxu0 %v4853
      %4911 = vmatprep.subr.bf16.mxu0 %v4856
      %4912 = vmatpush1.bf16.msra.mxu0 %v4855
      %4913 = vmatprep.subr.bf16.mxu0 %v4858
      %4914 = vmatpush1.bf16.msra.mxu0 %v4857
      %4915 = vmatprep.subr.bf16.mxu0 %v4860
      %4916 = vmatpush1.bf16.msra.mxu0 %v4859
      %4917 = vmatprep.subr.bf16.mxu0 %v4862
      %4918 = vmatpush1.bf16.msra.mxu0 %v4861
      %4919 = vmatprep.subr.bf16.mxu0 0
      %4920 = vmatpush1.bf16.msra.mxu0 0
      %4921 = vmatprep.subr.bf16.mxu0 0
      %4922 = vmatpush1.bf16.msra.mxu0 0
      %4923 = vmatprep.mubr.bf16.mxu0 %v4312
      %4924 = vmatmul.mubr.bf16.gmra.mrb[0].mxu0 %v3817
      %v4925 = vpop.f32.mrb[0].mxu0
      %v4926 = vadd.f32 0.0, %v4925
      %v4927 = vpop.f32.mrb[0].mxu0
      %v4928 = vadd.f32 0.0, %v4927
      %v4929 = vpop.f32.mrb[0].mxu0
      %v4930 = vadd.f32 0.0, %v4929
      %v4931 = vpop.f32.mrb[0].mxu0
      %v4932 = vadd.f32 0.0, %v4931
      %4933 = vmatprep.mubr.bf16.mxu0 %v4030
      %4934 = vmatmul.mubr.bf16.gmra.mrb[0].mxu0 %v3846
      %v4935 = vpop.f32.mrb[0].mxu0
      %v4936 = vadd.f32 0.0, %v4935
      %v4937 = vpop.f32.mrb[0].mxu0
      %v4938 = vadd.f32 0.0, %v4937
      %v4939 = vpop.f32.mrb[0].mxu0
      %v4940 = vadd.f32 0.0, %v4939
      %v4941 = vpop.f32.mrb[0].mxu0
      %v4942 = vadd.f32 0.0, %v4941
      %4943 = vmatprep.mubr.bf16.mxu0 %v4033
      %4944 = vmatmul.mubr.bf16.gmra.mrb[0].mxu0 %v3848
      %v4945 = vpop.f32.mrb[0].mxu0
      %v4946 = vadd.f32 0.0, %v4945
      %v4947 = vpop.f32.mrb[0].mxu0
      %v4948 = vadd.f32 0.0, %v4947
      %v4949 = vpop.f32.mrb[0].mxu0
      %v4950 = vadd.f32 0.0, %v4949
      %v4951 = vpop.f32.mrb[0].mxu0
      %v4952 = vadd.f32 0.0, %v4951
      %4953 = vmatprep.mubr.bf16.mxu0 %v4036
      %4954 = vmatmul.mubr.bf16.gmra.mrb[0].mxu0 %v3850
      %v4955 = vpop.f32.mrb[0].mxu0
      %v4956 = vadd.f32 0.0, %v4955
      %v4957 = vpop.f32.mrb[0].mxu0
      %v4958 = vadd.f32 0.0, %v4957
      %v4959 = vpop.f32.mrb[0].mxu0
      %v4960 = vadd.f32 0.0, %v4959
      %v4961 = vpop.f32.mrb[0].mxu0
      %v4962 = vadd.f32 0.0, %v4961
      %4963 = vmatprep.mubr.bf16.mxu0 %v4039
      %4964 = vmatmul.mubr.bf16.gmra.mrb[0].mxu0 %v3852
      %v4965 = vpop.f32.mrb[0].mxu0
      %v4966 = vadd.f32 0.0, %v4965
      %v4967 = vpop.f32.mrb[0].mxu0
      %v4968 = vadd.f32 0.0, %v4967
      %v4969 = vpop.f32.mrb[0].mxu0
      %v4970 = vadd.f32 0.0, %v4969
      %v4971 = vpop.f32.mrb[0].mxu0
      %v4972 = vadd.f32 0.0, %v4971
      %4973 = vmatprep.mubr.bf16.mxu0 %v4042
      %4974 = vmatmul.mubr.bf16.gmra.mrb[0].mxu0 %v3854
      %v4975 = vpop.f32.mrb[0].mxu0
      %v4976 = vadd.f32 0.0, %v4975
      %v4977 = vpop.f32.mrb[0].mxu0
      %v4978 = vadd.f32 0.0, %v4977
      %v4979 = vpop.f32.mrb[0].mxu0
      %v4980 = vadd.f32 0.0, %v4979
      %v4981 = vpop.f32.mrb[0].mxu0
      %v4982 = vadd.f32 0.0, %v4981
      %4983 = vmatprep.mubr.bf16.mxu0 %v4045
      %4984 = vmatmul.mubr.bf16.gmra.mrb[0].mxu0 %v3856
      %v4985 = vpop.f32.mrb[0].mxu0
      %v4986 = vadd.f32 0.0, %v4985
      %v4987 = vpop.f32.mrb[0].mxu0
      %v4988 = vadd.f32 0.0, %v4987
      %v4989 = vpop.f32.mrb[0].mxu0
      %v4990 = vadd.f32 0.0, %v4989
      %v4991 = vpop.f32.mrb[0].mxu0
      %v4992 = vadd.f32 0.0, %v4991
      %4993 = vdwg.mxu0
      %v4994 = vadd.f32 %v4694, %v4926
      %v4995 = vadd.f32 %v4695, %v4928
      %v4996 = vadd.f32 %v4696, %v4930
      %v4997 = vadd.f32 %v4697, %v4932
      %v4998 = vadd.f32 %v4698, %v4936
      %v4999 = vadd.f32 %v4699, %v4938
      %v5000 = vadd.f32 %v4700, %v4940
      %v5001 = vadd.f32 %v4701, %v4942
      %v5002 = vadd.f32 %v4702, %v4946
      %v5003 = vadd.f32 %v4703, %v4948
      %v5004 = vadd.f32 %v4704, %v4950
      %v5005 = vadd.f32 %v4705, %v4952
      %v5006 = vadd.f32 %v4706, %v4956
      %v5007 = vadd.f32 %v4707, %v4958
      %v5008 = vadd.f32 %v4708, %v4960
      %v5009 = vadd.f32 %v4709, %v4962
      %v5010 = vadd.f32 %v4710, %v4966
      %v5011 = vadd.f32 %v4711, %v4968
      %v5012 = vadd.f32 %v4712, %v4970
      %v5013 = vadd.f32 %v4713, %v4972
      %v5014 = vadd.f32 %v4714, %v4976
      %v5015 = vadd.f32 %v4715, %v4978
      %v5016 = vadd.f32 %v4716, %v4980
      %v5017 = vadd.f32 %v4717, %v4982
      %v5018 = vadd.f32 %v4718, %v4986
      %v5019 = vadd.f32 %v4719, %v4988
      %v5020 = vadd.f32 %v4720, %v4990
      %v5021 = vadd.f32 %v4721, %v4992
      %v5022 = vld [vmem:[%s13] sm:$0x3]
      %v5024 = vlaneseq
      %v5025 = vshrl.u32 %v5024, 7
      %v5026 = vsub.s32 0, %v5025
      %v5027 = vrot.slane %v5022, %v5026
      %v5028 = vlaneseq
      %v5029 = vshrl.u32 %v5028, 7
      %v5030 = vsub.s32 1, %v5029
      %v5031 = vrot.slane %v5022, %v5030
      %v5034 = vadd.f32 %v4994, %v5027
      %v5035 = vadd.f32 %v4995, %v5031
      %v5036 = vadd.f32 %v4996, %v5027
      %v5037 = vadd.f32 %v4997, %v5031
      %v5038 = vadd.f32 %v4998, %v5027
      %v5039 = vadd.f32 %v4999, %v5031
      %v5040 = vadd.f32 %v5000, %v5027
      %v5041 = vadd.f32 %v5001, %v5031
      %v5042 = vadd.f32 %v5002, %v5027
      %v5043 = vadd.f32 %v5003, %v5031
      %v5044 = vadd.f32 %v5004, %v5027
      %v5045 = vadd.f32 %v5005, %v5031
      %v5046 = vadd.f32 %v5006, %v5027
      %v5047 = vadd.f32 %v5007, %v5031
      %v5048 = vadd.f32 %v5008, %v5027
      %v5049 = vadd.f32 %v5009, %v5031
      %v5050 = vadd.f32 %v5010, %v5027
      %v5051 = vadd.f32 %v5011, %v5031
      %v5052 = vadd.f32 %v5012, %v5027
      %v5053 = vadd.f32 %v5013, %v5031
      %v5054 = vadd.f32 %v5014, %v5027
      %v5055 = vadd.f32 %v5015, %v5031
      %v5056 = vadd.f32 %v5016, %v5027
      %v5057 = vadd.f32 %v5017, %v5031
      %v5058 = vadd.f32 %v5018, %v5027
      %v5059 = vadd.f32 %v5019, %v5031
      %v5060 = vadd.f32 %v5020, %v5027
      %v5061 = vadd.f32 %v5021, %v5031
      %v5062 = vmax.f32 %v5034, 0.0
      %v5063 = vmax.f32 %v5035, 0.0
      %v5064 = vmax.f32 %v5036, 0.0
      %v5065 = vmax.f32 %v5037, 0.0
      %v5066 = vmax.f32 %v5038, 0.0
      %v5067 = vmax.f32 %v5039, 0.0
      %v5068 = vmax.f32 %v5040, 0.0
      %v5069 = vmax.f32 %v5041, 0.0
      %v5070 = vmax.f32 %v5042, 0.0
      %v5071 = vmax.f32 %v5043, 0.0
      %v5072 = vmax.f32 %v5044, 0.0
      %v5073 = vmax.f32 %v5045, 0.0
      %v5074 = vmax.f32 %v5046, 0.0
      %v5075 = vmax.f32 %v5047, 0.0
      %v5076 = vmax.f32 %v5048, 0.0
      %v5077 = vmax.f32 %v5049, 0.0
      %v5078 = vmax.f32 %v5050, 0.0
      %v5079 = vmax.f32 %v5051, 0.0
      %v5080 = vmax.f32 %v5052, 0.0
      %v5081 = vmax.f32 %v5053, 0.0
      %v5082 = vmax.f32 %v5054, 0.0
      %v5083 = vmax.f32 %v5055, 0.0
      %v5084 = vmax.f32 %v5056, 0.0
      %v5085 = vmax.f32 %v5057, 0.0
      %v5086 = vmax.f32 %v5058, 0.0
      %v5087 = vmax.f32 %v5059, 0.0
      %v5088 = vmax.f32 %v5060, 0.0
      %v5089 = vmax.f32 %v5061, 0.0
      %v5090 = vpack.c.bf16 %v5064, 0.0
      %v5091 = vpack.c.bf16 %v5065, 0.0
      %v5092 = vpack.c.bf16 %v5066, 0.0
      %v5093 = vpack.c.bf16 %v5067, 0.0
      %v5094 = vpack.c.bf16 %v5068, 0.0
      %v5095 = vpack.c.bf16 %v5069, 0.0
      %v5096 = vpack.c.bf16 %v5070, 0.0
      %v5097 = vpack.c.bf16 %v5071, 0.0
      %v5098 = vpack.c.bf16 %v5072, 0.0
      %v5099 = vpack.c.bf16 %v5073, 0.0
      %v5100 = vpack.c.bf16 %v5074, 0.0
      %v5101 = vpack.c.bf16 %v5075, 0.0
      %v5102 = vpack.c.bf16 %v5076, 0.0
      %v5103 = vpack.c.bf16 %v5077, 0.0
      %v5104 = vpack.c.bf16 %v5078, 0.0
      %v5105 = vpack.c.bf16 %v5079, 0.0
      %v5106 = vpack.c.bf16 %v5080, 0.0
      %v5107 = vpack.c.bf16 %v5081, 0.0
      %v5108 = vpack.c.bf16 %v5082, 0.0
      %v5109 = vpack.c.bf16 %v5083, 0.0
      %v5110 = vpack.c.bf16 %v5084, 0.0
      %v5111 = vpack.c.bf16 %v5085, 0.0
      %v5112 = vpack.c.bf16 %v5086, 0.0
      %v5113 = vpack.c.bf16 %v5087, 0.0
      %v5114 = vpack.c.bf16 %v5088, 0.0
      %v5115 = vpack.c.bf16 %v5089, 0.0
      %v5116 = vld [vmem:[%s14] sm:$0xf]
      %v5117 = vld [vmem:[%s14 + $0x4] sm:$0xf]
      %v5118 = vld [vmem:[%s14 + $0x8] sm:$0xf]
      %v5119 = vld [vmem:[%s14 + $0xc] sm:$0xf]
      %v5120 = vld [vmem:[%s14 + $0x10] sm:$0xf]
      %v5121 = vld [vmem:[%s14 + $0x14] sm:$0xf]
      %v5122 = vld [vmem:[%s14 + $0x18] sm:$0xf]
      %v5123 = vld [vmem:[%s14 + $0x1c] sm:$0xf]
      %v5124 = vld [vmem:[%s14 + $0x20] sm:$0xf]
      %v5125 = vld [vmem:[%s14 + $0x24] sm:$0xf]
      %v5126 = vld [vmem:[%s14 + $0x28] sm:$0xf]
      %v5127 = vld [vmem:[%s14 + $0x2c] sm:$0xf]
      %v5128 = vld [vmem:[%s14 + $0x30] sm:$0xf]
      %v5129 = vld [vmem:[%s14 + $0x34] sm:$0xf]
      %v5130 = vld [vmem:[%s14 + $0x38] sm:$0xf]
      %v5131 = vld [vmem:[%s14 + $0x3c] sm:$0xf]
      %v5132 = vld [vmem:[%s14 + $0x40] sm:$0xf]
      %v5133 = vld [vmem:[%s14 + $0x44] sm:$0xf]
      %v5134 = vld [vmem:[%s14 + $0x48] sm:$0xf]
      %v5135 = vld [vmem:[%s14 + $0x4c] sm:$0xf]
      %v5136 = vld [vmem:[%s14 + $0x50] sm:$0xf]
      %v5137 = vld [vmem:[%s14 + $0x54] sm:$0xf]
      %v5138 = vld [vmem:[%s14 + $0x58] sm:$0xf]
      %v5139 = vld [vmem:[%s14 + $0x5c] sm:$0xf]
      %v5140 = vld [vmem:[%s14 + $0x60] sm:$0xf]
      %v5141 = vld [vmem:[%s14 + $0x64] sm:$0xf]
      %v5142 = vld [vmem:[%s14 + $0x68] sm:$0xf]
      %v5143 = vld [vmem:[%s14 + $0x6c] sm:$0xf]
      %v5144 = vpack.c.bf16 0.0, %v5062
      %v5145 = vpack.c.bf16 0.0, %v5063
      %v5146 = vpack.c.bf16 0.0, %v5064
      %v5147 = vpack.c.bf16 0.0, %v5065
      %v5148 = vpack.c.bf16 0.0, %v5066
      %v5149 = vpack.c.bf16 0.0, %v5067
      %v5150 = vpack.c.bf16 0.0, %v5068
      %v5151 = vpack.c.bf16 0.0, %v5069
      %v5152 = vpack.c.bf16 0.0, %v5070
      %v5153 = vpack.c.bf16 0.0, %v5071
      %v5154 = vpack.c.bf16 0.0, %v5072
      %v5155 = vpack.c.bf16 0.0, %v5073
      %v5156 = vpack.c.bf16 0.0, %v5074
      %v5157 = vpack.c.bf16 0.0, %v5075
      %v5158 = vpack.c.bf16 0.0, %v5076
      %v5159 = vpack.c.bf16 0.0, %v5077
      %v5160 = vpack.c.bf16 0.0, %v5078
      %v5161 = vpack.c.bf16 0.0, %v5079
      %v5162 = vpack.c.bf16 0.0, %v5080
      %v5163 = vpack.c.bf16 0.0, %v5081
      %v5164 = vpack.c.bf16 0.0, %v5082
      %v5165 = vpack.c.bf16 0.0, %v5083
      %v5166 = vpack.c.bf16 0.0, %v5084
      %v5167 = vpack.c.bf16 0.0, %v5085
      %v5168 = vpack.c.bf16 0.0, %v5086
      %v5169 = vpack.c.bf16 0.0, %v5087
      %v5170 = vpack.c.bf16 0.0, %v5088
      %v5171 = vpack.c.bf16 0.0, %v5089
      %s5172 = scalar_lea.vmem %s14, 112
      %v5173 = vld [vmem:[%s5172] sm:$0xf]
      %v5174 = vld [vmem:[%s5172 + $0x4] sm:$0xf]
      %v5175 = vld [vmem:[%s5172 + $0x8] sm:$0xf]
      %v5176 = vld [vmem:[%s5172 + $0xc] sm:$0xf]
      %v5177 = vld [vmem:[%s5172 + $0x10] sm:$0xf]
      %v5178 = vld [vmem:[%s5172 + $0x14] sm:$0xf]
      %v5179 = vld [vmem:[%s5172 + $0x18] sm:$0xf]
      %v5180 = vld [vmem:[%s5172 + $0x1c] sm:$0xf]
      %v5181 = vld [vmem:[%s5172 + $0x20] sm:$0xf]
      %v5182 = vld [vmem:[%s5172 + $0x24] sm:$0xf]
      %v5183 = vld [vmem:[%s5172 + $0x28] sm:$0xf]
      %v5184 = vld [vmem:[%s5172 + $0x2c] sm:$0xf]
      %v5185 = vld [vmem:[%s5172 + $0x30] sm:$0xf]
      %v5186 = vld [vmem:[%s5172 + $0x34] sm:$0xf]
      %v5187 = vld [vmem:[%s5172 + $0x38] sm:$0xf]
      %v5188 = vld [vmem:[%s5172 + $0x3c] sm:$0xf]
      %v5189 = vld [vmem:[%s5172 + $0x40] sm:$0xf]
      %v5190 = vld [vmem:[%s5172 + $0x44] sm:$0xf]
      %v5191 = vld [vmem:[%s5172 + $0x48] sm:$0xf]
      %v5192 = vld [vmem:[%s5172 + $0x4c] sm:$0xf]
      %v5193 = vld [vmem:[%s5172 + $0x50] sm:$0xf]
      %v5194 = vld [vmem:[%s5172 + $0x54] sm:$0xf]
      %v5195 = vld [vmem:[%s5172 + $0x58] sm:$0xf]
      %v5196 = vld [vmem:[%s5172 + $0x5c] sm:$0xf]
      %v5197 = vld [vmem:[%s5172 + $0x60] sm:$0xf]
      %v5198 = vld [vmem:[%s5172 + $0x64] sm:$0xf]
      %v5199 = vld [vmem:[%s5172 + $0x68] sm:$0xf]
      %v5200 = vld [vmem:[%s5172 + $0x6c] sm:$0xf]
      %v5229 = vunpack.c.l.b16 %v5173
      %v5230 = vunpack.c.l.b16 %v5174
      %v5231 = vunpack.c.l.b16 %v5175
      %v5232 = vunpack.c.l.b16 %v5176
      %v5233 = vunpack.c.l.b16 %v5177
      %v5234 = vunpack.c.l.b16 %v5178
      %v5235 = vunpack.c.l.b16 %v5179
      %v5236 = vunpack.c.l.b16 %v5180
      %v5237 = vunpack.c.l.b16 %v5181
      %v5238 = vunpack.c.l.b16 %v5182
      %v5239 = vunpack.c.l.b16 %v5183
      %v5240 = vunpack.c.l.b16 %v5184
      %v5241 = vunpack.c.l.b16 %v5185
      %v5242 = vunpack.c.l.b16 %v5186
      %v5243 = vunpack.c.l.b16 %v5187
      %v5244 = vunpack.c.l.b16 %v5188
      %v5245 = vunpack.c.l.b16 %v5189
      %v5246 = vunpack.c.l.b16 %v5190
      %v5247 = vunpack.c.l.b16 %v5191
      %v5248 = vunpack.c.l.b16 %v5192
      %v5249 = vunpack.c.l.b16 %v5193
      %v5250 = vunpack.c.l.b16 %v5194
      %v5251 = vunpack.c.l.b16 %v5195
      %v5252 = vunpack.c.l.b16 %v5196
      %v5253 = vunpack.c.l.b16 %v5197
      %v5254 = vunpack.c.l.b16 %v5198
      %v5255 = vunpack.c.l.b16 %v5199
      %v5256 = vunpack.c.l.b16 %v5200
      %v5257 = vpack.c.b16 %v5230, %v5229
      %v5258 = vpack.c.b16 %v5232, %v5231
      %v5259 = vpack.c.b16 %v5234, %v5233
      %v5260 = vpack.c.b16 %v5236, %v5235
      %v5261 = vpack.c.b16 %v5238, %v5237
      %v5262 = vpack.c.b16 %v5240, %v5239
      %v5263 = vpack.c.b16 %v5242, %v5241
      %v5264 = vpack.c.b16 %v5244, %v5243
      %v5265 = vpack.c.b16 %v5246, %v5245
      %v5266 = vpack.c.b16 %v5248, %v5247
      %v5267 = vpack.c.b16 %v5250, %v5249
      %v5268 = vpack.c.b16 %v5252, %v5251
      %v5269 = vpack.c.b16 %v5254, %v5253
      %v5270 = vpack.c.b16 %v5256, %v5255
      %v5286 = vsel %vm1528, %v5145, 0
      %v5289 = vsel %vm1528, %v5147, 0
      %v5292 = vsel %vm1528, %v5149, 0
      %v5295 = vsel %vm1528, %v5151, 0
      %v5298 = vsel %vm1528, %v5153, 0
      %v5301 = vsel %vm1528, %v5155, 0
      %v5304 = vsel %vm1528, %v5157, 0
      %v5307 = vsel %vm1528, %v5159, 0
      %v5310 = vsel %vm1528, %v5161, 0
      %v5313 = vsel %vm1528, %v5163, 0
      %v5316 = vsel %vm1528, %v5165, 0
      %v5319 = vsel %vm1528, %v5167, 0
      %v5322 = vsel %vm1528, %v5169, 0
      %v5325 = vsel %vm1528, %v5171, 0
      %5327 = vmatprep.subr.bf16.mxu0 0
      %5328 = vmatpush1.bf16.msra.mxu0 %v5257
      %5329 = vmatprep.subr.bf16.mxu0 0
      %5330 = vmatpush1.bf16.msra.mxu0 %v5258
      %5331 = vmatprep.subr.bf16.mxu0 0
      %5332 = vmatpush1.bf16.msra.mxu0 %v5259
      %5333 = vmatprep.subr.bf16.mxu0 0
      %5334 = vmatpush1.bf16.msra.mxu0 %v5260
      %5335 = vmatprep.subr.bf16.mxu0 0
      %5336 = vmatpush1.bf16.msra.mxu0 %v5261
      %5337 = vmatprep.subr.bf16.mxu0 0
      %5338 = vmatpush1.bf16.msra.mxu0 %v5262
      %5339 = vmatprep.subr.bf16.mxu0 0
      %5340 = vmatpush1.bf16.msra.mxu0 %v5263
      %5341 = vmatprep.subr.bf16.mxu0 0
      %5342 = vmatpush1.bf16.msra.mxu0 %v5264
      %5343 = vmatprep.subr.bf16.mxu0 0
      %5344 = vmatpush1.bf16.msra.mxu0 %v5265
      %5345 = vmatprep.subr.bf16.mxu0 0
      %5346 = vmatpush1.bf16.msra.mxu0 %v5266
      %5347 = vmatprep.subr.bf16.mxu0 0
      %5348 = vmatpush1.bf16.msra.mxu0 %v5267
      %5349 = vmatprep.subr.bf16.mxu0 0
      %5350 = vmatpush1.bf16.msra.mxu0 %v5268
      %5351 = vmatprep.subr.bf16.mxu0 0
      %5352 = vmatpush1.bf16.msra.mxu0 %v5269
      %5353 = vmatprep.subr.bf16.mxu0 0
      %5354 = vmatpush1.bf16.msra.mxu0 %v5270
      %5355 = vmatprep.subr.bf16.mxu0 0
      %5356 = vmatpush1.bf16.msra.mxu0 0
      %5357 = vmatprep.subr.bf16.mxu0 0
      %5358 = vmatpush1.bf16.msra.mxu0 0
      %5359 = vmatprep.mubr.bf16.mxu0 %v5286
      %5360 = vmatmul.mubr.bf16.gmra.mrb[0].mxu0 %v5144
      %v5361 = vpop.f32.mrb[0].mxu0
      %v5362 = vadd.f32 0.0, %v5361
      %v5363 = vpop.f32.mrb[0].mxu0
      %v5364 = vpop.f32.mrb[0].mxu0
      %v5365 = vadd.f32 0.0, %v5364
      %v5366 = vpop.f32.mrb[0].mxu0
      %5367 = vmatprep.mubr.bf16.mxu0 %v5289
      %5368 = vmatmul.mubr.bf16.gmra.mrb[0].mxu0 %v5146
      %v5369 = vpop.f32.mrb[0].mxu0
      %v5370 = vadd.f32 0.0, %v5369
      %v5371 = vpop.f32.mrb[0].mxu0
      %v5372 = vpop.f32.mrb[0].mxu0
      %v5373 = vadd.f32 0.0, %v5372
      %v5374 = vpop.f32.mrb[0].mxu0
      %5375 = vmatprep.mubr.bf16.mxu0 %v5292
      %5376 = vmatmul.mubr.bf16.gmra.mrb[0].mxu0 %v5148
      %v5377 = vpop.f32.mrb[0].mxu0
      %v5378 = vadd.f32 0.0, %v5377
      %v5379 = vpop.f32.mrb[0].mxu0
      %v5380 = vpop.f32.mrb[0].mxu0
      %v5381 = vadd.f32 0.0, %v5380
      %v5382 = vpop.f32.mrb[0].mxu0
      %5383 = vmatprep.mubr.bf16.mxu0 %v5295
      %5384 = vmatmul.mubr.bf16.gmra.mrb[0].mxu0 %v5150
      %v5385 = vpop.f32.mrb[0].mxu0
      %v5386 = vadd.f32 0.0, %v5385
      %v5387 = vpop.f32.mrb[0].mxu0
      %v5388 = vpop.f32.mrb[0].mxu0
      %v5389 = vadd.f32 0.0, %v5388
      %v5390 = vpop.f32.mrb[0].mxu0
      %5391 = vmatprep.mubr.bf16.mxu0 %v5298
      %5392 = vmatmul.mubr.bf16.gmra.mrb[0].mxu0 %v5152
      %v5393 = vpop.f32.mrb[0].mxu0
      %v5394 = vadd.f32 0.0, %v5393
      %v5395 = vpop.f32.mrb[0].mxu0
      %v5396 = vpop.f32.mrb[0].mxu0
      %v5397 = vadd.f32 0.0, %v5396
      %v5398 = vpop.f32.mrb[0].mxu0
      %5399 = vmatprep.mubr.bf16.mxu0 %v5301
      %5400 = vmatmul.mubr.bf16.gmra.mrb[0].mxu0 %v5154
      %v5401 = vpop.f32.mrb[0].mxu0
      %v5402 = vadd.f32 0.0, %v5401
      %v5403 = vpop.f32.mrb[0].mxu0
      %v5404 = vpop.f32.mrb[0].mxu0
      %v5405 = vadd.f32 0.0, %v5404
      %v5406 = vpop.f32.mrb[0].mxu0
      %5407 = vmatprep.mubr.bf16.mxu0 %v5304
      %5408 = vmatmul.mubr.bf16.gmra.mrb[0].mxu0 %v5156
      %v5409 = vpop.f32.mrb[0].mxu0
      %v5410 = vadd.f32 0.0, %v5409
      %v5411 = vpop.f32.mrb[0].mxu0
      %v5412 = vpop.f32.mrb[0].mxu0
      %v5413 = vadd.f32 0.0, %v5412
      %v5414 = vpop.f32.mrb[0].mxu0
      %5415 = vmatprep.mubr.bf16.mxu0 %v5307
      %5416 = vmatmul.mubr.bf16.gmra.mrb[0].mxu0 %v5158
      %v5417 = vpop.f32.mrb[0].mxu0
      %v5418 = vadd.f32 0.0, %v5417
      %v5419 = vpop.f32.mrb[0].mxu0
      %v5420 = vpop.f32.mrb[0].mxu0
      %v5421 = vadd.f32 0.0, %v5420
      %v5422 = vpop.f32.mrb[0].mxu0
      %5423 = vmatprep.mubr.bf16.mxu0 %v5310
      %5424 = vmatmul.mubr.bf16.gmra.mrb[0].mxu0 %v5160
      %v5425 = vpop.f32.mrb[0].mxu0
      %v5426 = vadd.f32 0.0, %v5425
      %v5427 = vpop.f32.mrb[0].mxu0
      %v5428 = vpop.f32.mrb[0].mxu0
      %v5429 = vadd.f32 0.0, %v5428
      %v5430 = vpop.f32.mrb[0].mxu0
      %5431 = vmatprep.mubr.bf16.mxu0 %v5313
      %5432 = vmatmul.mubr.bf16.gmra.mrb[0].mxu0 %v5162
      %v5433 = vpop.f32.mrb[0].mxu0
      %v5434 = vadd.f32 0.0, %v5433
      %v5435 = vpop.f32.mrb[0].mxu0
      %v5436 = vpop.f32.mrb[0].mxu0
      %v5437 = vadd.f32 0.0, %v5436
      %v5438 = vpop.f32.mrb[0].mxu0
      %5439 = vmatprep.mubr.bf16.mxu0 %v5316
      %5440 = vmatmul.mubr.bf16.gmra.mrb[0].mxu0 %v5164
      %v5441 = vpop.f32.mrb[0].mxu0
      %v5442 = vadd.f32 0.0, %v5441
      %v5443 = vpop.f32.mrb[0].mxu0
      %v5444 = vpop.f32.mrb[0].mxu0
      %v5445 = vadd.f32 0.0, %v5444
      %v5446 = vpop.f32.mrb[0].mxu0
      %5447 = vmatprep.mubr.bf16.mxu0 %v5319
      %5448 = vmatmul.mubr.bf16.gmra.mrb[0].mxu0 %v5166
      %v5449 = vpop.f32.mrb[0].mxu0
      %v5450 = vadd.f32 0.0, %v5449
      %v5451 = vpop.f32.mrb[0].mxu0
      %v5452 = vpop.f32.mrb[0].mxu0
      %v5453 = vadd.f32 0.0, %v5452
      %v5454 = vpop.f32.mrb[0].mxu0
      %5455 = vmatprep.mubr.bf16.mxu0 %v5322
      %5456 = vmatmul.mubr.bf16.gmra.mrb[0].mxu0 %v5168
      %v5457 = vpop.f32.mrb[0].mxu0
      %v5458 = vadd.f32 0.0, %v5457
      %v5459 = vpop.f32.mrb[0].mxu0
      %v5460 = vpop.f32.mrb[0].mxu0
      %v5461 = vadd.f32 0.0, %v5460
      %v5462 = vpop.f32.mrb[0].mxu0
      %5463 = vmatprep.mubr.bf16.mxu0 %v5325
      %5464 = vmatmul.mubr.bf16.gmra.mrb[0].mxu0 %v5170
      %v5465 = vpop.f32.mrb[0].mxu0
      %v5466 = vadd.f32 0.0, %v5465
      %v5467 = vpop.f32.mrb[0].mxu0
      %v5468 = vpop.f32.mrb[0].mxu0
      %v5469 = vadd.f32 0.0, %v5468
      %v5470 = vpop.f32.mrb[0].mxu0
      %5471 = vdwg.mxu0
      %v5500 = vunpack.c.l.b16 %v5116
      %v5501 = vunpack.c.l.b16 %v5117
      %v5502 = vunpack.c.l.b16 %v5118
      %v5503 = vunpack.c.l.b16 %v5119
      %v5504 = vunpack.c.l.b16 %v5120
      %v5505 = vunpack.c.l.b16 %v5121
      %v5506 = vunpack.c.l.b16 %v5122
      %v5507 = vunpack.c.l.b16 %v5123
      %v5508 = vunpack.c.l.b16 %v5124
      %v5509 = vunpack.c.l.b16 %v5125
      %v5510 = vunpack.c.l.b16 %v5126
      %v5511 = vunpack.c.l.b16 %v5127
      %v5512 = vunpack.c.l.b16 %v5128
      %v5513 = vunpack.c.l.b16 %v5129
      %v5514 = vunpack.c.l.b16 %v5130
      %v5515 = vunpack.c.l.b16 %v5131
      %v5516 = vunpack.c.l.b16 %v5132
      %v5517 = vunpack.c.l.b16 %v5133
      %v5518 = vunpack.c.l.b16 %v5134
      %v5519 = vunpack.c.l.b16 %v5135
      %v5520 = vunpack.c.l.b16 %v5136
      %v5521 = vunpack.c.l.b16 %v5137
      %v5522 = vunpack.c.l.b16 %v5138
      %v5523 = vunpack.c.l.b16 %v5139
      %v5524 = vunpack.c.l.b16 %v5140
      %v5525 = vunpack.c.l.b16 %v5141
      %v5526 = vunpack.c.l.b16 %v5142
      %v5527 = vunpack.c.l.b16 %v5143
      %v5528 = vpack.c.b16 %v5501, %v5500
      %v5529 = vpack.c.b16 %v5503, %v5502
      %v5530 = vpack.c.b16 %v5505, %v5504
      %v5531 = vpack.c.b16 %v5507, %v5506
      %v5532 = vpack.c.b16 %v5509, %v5508
      %v5533 = vpack.c.b16 %v5511, %v5510
      %v5534 = vpack.c.b16 %v5513, %v5512
      %v5535 = vpack.c.b16 %v5515, %v5514
      %v5536 = vpack.c.b16 %v5517, %v5516
      %v5537 = vpack.c.b16 %v5519, %v5518
      %v5538 = vpack.c.b16 %v5521, %v5520
      %v5539 = vpack.c.b16 %v5523, %v5522
      %v5540 = vpack.c.b16 %v5525, %v5524
      %v5541 = vpack.c.b16 %v5527, %v5526
      %v5557 = vsel %vm1528, %v5091, 0
      %v5560 = vsel %vm1528, %v5093, 0
      %v5563 = vsel %vm1528, %v5095, 0
      %v5566 = vsel %vm1528, %v5097, 0
      %v5569 = vsel %vm1528, %v5099, 0
      %v5572 = vsel %vm1528, %v5101, 0
      %v5575 = vsel %vm1528, %v5103, 0
      %v5578 = vsel %vm1528, %v5105, 0
      %v5581 = vsel %vm1528, %v5107, 0
      %v5584 = vsel %vm1528, %v5109, 0
      %v5587 = vsel %vm1528, %v5111, 0
      %v5590 = vsel %vm1528, %v5113, 0
      %v5593 = vsel %vm1528, %v5115, 0
      %5595 = vmatprep.subr.bf16.mxu0 0
      %5596 = vmatpush1.bf16.msra.mxu0 %v5528
      %5597 = vmatprep.subr.bf16.mxu0 0
      %5598 = vmatpush1.bf16.msra.mxu0 %v5529
      %5599 = vmatprep.subr.bf16.mxu0 0
      %5600 = vmatpush1.bf16.msra.mxu0 %v5530
      %5601 = vmatprep.subr.bf16.mxu0 0
      %5602 = vmatpush1.bf16.msra.mxu0 %v5531
      %5603 = vmatprep.subr.bf16.mxu0 0
      %5604 = vmatpush1.bf16.msra.mxu0 %v5532
      %5605 = vmatprep.subr.bf16.mxu0 0
      %5606 = vmatpush1.bf16.msra.mxu0 %v5533
      %5607 = vmatprep.subr.bf16.mxu0 0
      %5608 = vmatpush1.bf16.msra.mxu0 %v5534
      %5609 = vmatprep.subr.bf16.mxu0 0
      %5610 = vmatpush1.bf16.msra.mxu0 %v5535
      %5611 = vmatprep.subr.bf16.mxu0 0
      %5612 = vmatpush1.bf16.msra.mxu0 %v5536
      %5613 = vmatprep.subr.bf16.mxu0 0
      %5614 = vmatpush1.bf16.msra.mxu0 %v5537
      %5615 = vmatprep.subr.bf16.mxu0 0
      %5616 = vmatpush1.bf16.msra.mxu0 %v5538
      %5617 = vmatprep.subr.bf16.mxu0 0
      %5618 = vmatpush1.bf16.msra.mxu0 %v5539
      %5619 = vmatprep.subr.bf16.mxu0 0
      %5620 = vmatpush1.bf16.msra.mxu0 %v5540
      %5621 = vmatprep.subr.bf16.mxu0 0
      %5622 = vmatpush1.bf16.msra.mxu0 %v5541
      %5623 = vmatprep.subr.bf16.mxu0 0
      %5624 = vmatpush1.bf16.msra.mxu0 0
      %5625 = vmatprep.subr.bf16.mxu0 0
      %5626 = vmatpush1.bf16.msra.mxu0 0
      %5627 = vmatprep.mubr.bf16.mxu0 %v5557
      %5628 = vmatmul.mubr.bf16.gmra.mrb[0].mxu0 %v5090
      %v5629 = vpop.f32.mrb[0].mxu0
      %v5630 = vadd.f32 %v5362, %v5629
      %v5631 = vpop.f32.mrb[0].mxu0
      %v5632 = vpop.f32.mrb[0].mxu0
      %v5633 = vadd.f32 %v5365, %v5632
      %v5634 = vpop.f32.mrb[0].mxu0
      %5635 = vmatprep.mubr.bf16.mxu0 %v5560
      %5636 = vmatmul.mubr.bf16.gmra.mrb[0].mxu0 %v5092
      %v5637 = vpop.f32.mrb[0].mxu0
      %v5638 = vadd.f32 %v5370, %v5637
      %v5639 = vpop.f32.mrb[0].mxu0
      %v5640 = vpop.f32.mrb[0].mxu0
      %v5641 = vadd.f32 %v5373, %v5640
      %v5642 = vpop.f32.mrb[0].mxu0
      %5643 = vmatprep.mubr.bf16.mxu0 %v5563
      %5644 = vmatmul.mubr.bf16.gmra.mrb[0].mxu0 %v5094
      %v5645 = vpop.f32.mrb[0].mxu0
      %v5646 = vadd.f32 %v5378, %v5645
      %v5647 = vpop.f32.mrb[0].mxu0
      %v5648 = vpop.f32.mrb[0].mxu0
      %v5649 = vadd.f32 %v5381, %v5648
      %v5650 = vpop.f32.mrb[0].mxu0
      %5651 = vmatprep.mubr.bf16.mxu0 %v5566
      %5652 = vmatmul.mubr.bf16.gmra.mrb[0].mxu0 %v5096
      %v5653 = vpop.f32.mrb[0].mxu0
      %v5654 = vadd.f32 %v5386, %v5653
      %v5655 = vpop.f32.mrb[0].mxu0
      %v5656 = vpop.f32.mrb[0].mxu0
      %v5657 = vadd.f32 %v5389, %v5656
      %v5658 = vpop.f32.mrb[0].mxu0
      %5659 = vmatprep.mubr.bf16.mxu0 %v5569
      %5660 = vmatmul.mubr.bf16.gmra.mrb[0].mxu0 %v5098
      %v5661 = vpop.f32.mrb[0].mxu0
      %v5662 = vadd.f32 %v5394, %v5661
      %v5663 = vpop.f32.mrb[0].mxu0
      %v5664 = vpop.f32.mrb[0].mxu0
      %v5665 = vadd.f32 %v5397, %v5664
      %v5666 = vpop.f32.mrb[0].mxu0
      %5667 = vmatprep.mubr.bf16.mxu0 %v5572
      %5668 = vmatmul.mubr.bf16.gmra.mrb[0].mxu0 %v5100
      %v5669 = vpop.f32.mrb[0].mxu0
      %v5670 = vadd.f32 %v5402, %v5669
      %v5671 = vpop.f32.mrb[0].mxu0
      %v5672 = vpop.f32.mrb[0].mxu0
      %v5673 = vadd.f32 %v5405, %v5672
      %v5674 = vpop.f32.mrb[0].mxu0
      %5675 = vmatprep.mubr.bf16.mxu0 %v5575
      %5676 = vmatmul.mubr.bf16.gmra.mrb[0].mxu0 %v5102
      %v5677 = vpop.f32.mrb[0].mxu0
      %v5678 = vadd.f32 %v5410, %v5677
      %v5679 = vpop.f32.mrb[0].mxu0
      %v5680 = vpop.f32.mrb[0].mxu0
      %v5681 = vadd.f32 %v5413, %v5680
      %v5682 = vpop.f32.mrb[0].mxu0
      %5683 = vmatprep.mubr.bf16.mxu0 %v5578
      %5684 = vmatmul.mubr.bf16.gmra.mrb[0].mxu0 %v5104
      %v5685 = vpop.f32.mrb[0].mxu0
      %v5686 = vadd.f32 %v5418, %v5685
      %v5687 = vpop.f32.mrb[0].mxu0
      %v5688 = vpop.f32.mrb[0].mxu0
      %v5689 = vadd.f32 %v5421, %v5688
      %v5690 = vpop.f32.mrb[0].mxu0
      %5691 = vmatprep.mubr.bf16.mxu0 %v5581
      %5692 = vmatmul.mubr.bf16.gmra.mrb[0].mxu0 %v5106
      %v5693 = vpop.f32.mrb[0].mxu0
      %v5694 = vadd.f32 %v5426, %v5693
      %v5695 = vpop.f32.mrb[0].mxu0
      %v5696 = vpop.f32.mrb[0].mxu0
      %v5697 = vadd.f32 %v5429, %v5696
      %v5698 = vpop.f32.mrb[0].mxu0
      %5699 = vmatprep.mubr.bf16.mxu0 %v5584
      %5700 = vmatmul.mubr.bf16.gmra.mrb[0].mxu0 %v5108
      %v5701 = vpop.f32.mrb[0].mxu0
      %v5702 = vadd.f32 %v5434, %v5701
      %v5703 = vpop.f32.mrb[0].mxu0
      %v5704 = vpop.f32.mrb[0].mxu0
      %v5705 = vadd.f32 %v5437, %v5704
      %v5706 = vpop.f32.mrb[0].mxu0
      %5707 = vmatprep.mubr.bf16.mxu0 %v5587
      %5708 = vmatmul.mubr.bf16.gmra.mrb[0].mxu0 %v5110
      %v5709 = vpop.f32.mrb[0].mxu0
      %v5710 = vadd.f32 %v5442, %v5709
      %v5711 = vpop.f32.mrb[0].mxu0
      %v5712 = vpop.f32.mrb[0].mxu0
      %v5713 = vadd.f32 %v5445, %v5712
      %v5714 = vpop.f32.mrb[0].mxu0
      %5715 = vmatprep.mubr.bf16.mxu0 %v5590
      %5716 = vmatmul.mubr.bf16.gmra.mrb[0].mxu0 %v5112
      %v5717 = vpop.f32.mrb[0].mxu0
      %v5718 = vadd.f32 %v5450, %v5717
      %v5719 = vpop.f32.mrb[0].mxu0
      %v5720 = vpop.f32.mrb[0].mxu0
      %v5721 = vadd.f32 %v5453, %v5720
      %v5722 = vpop.f32.mrb[0].mxu0
      %5723 = vmatprep.mubr.bf16.mxu0 %v5593
      %5724 = vmatmul.mubr.bf16.gmra.mrb[0].mxu0 %v5114
      %v5725 = vpop.f32.mrb[0].mxu0
      %v5726 = vadd.f32 %v5458, %v5725
      %v5727 = vpop.f32.mrb[0].mxu0
      %v5728 = vpop.f32.mrb[0].mxu0
      %v5729 = vadd.f32 %v5461, %v5728
      %v5730 = vpop.f32.mrb[0].mxu0
      %5731 = vmatprep.mubr.bf16.mxu0 %v4312
      %5732 = vmatmul.mubr.bf16.gmra.mrb[0].mxu0 %v3817
      %v5733 = vpop.f32.mrb[0].mxu0
      %v5734 = vadd.f32 %v5466, %v5733
      %v5735 = vpop.f32.mrb[0].mxu0
      %v5736 = vpop.f32.mrb[0].mxu0
      %v5737 = vadd.f32 %v5469, %v5736
      %v5738 = vpop.f32.mrb[0].mxu0
      %5739 = vdwg.mxu0
      %v5740 = vpack.c.bf16 %v5062, 0.0
      %v5741 = vpack.c.bf16 %v5063, 0.0
      %s5742 = scalar_lea.vmem %s14, 224
      %v5743 = vld [vmem:[%s5742] sm:$0xf]
      %v5744 = vld [vmem:[%s5742 + $0x4] sm:$0xf]
      %v5745 = vld [vmem:[%s5742 + $0x8] sm:$0xf]
      %v5746 = vld [vmem:[%s5742 + $0xc] sm:$0xf]
      %v5747 = vld [vmem:[%s5742 + $0x10] sm:$0xf]
      %v5748 = vld [vmem:[%s5742 + $0x14] sm:$0xf]
      %v5749 = vld [vmem:[%s5742 + $0x18] sm:$0xf]
      %v5750 = vld [vmem:[%s5742 + $0x1c] sm:$0xf]
      %v5751 = vld [vmem:[%s5742 + $0x20] sm:$0xf]
      %v5752 = vld [vmem:[%s5742 + $0x24] sm:$0xf]
      %v5753 = vld [vmem:[%s5742 + $0x28] sm:$0xf]
      %v5754 = vld [vmem:[%s5742 + $0x2c] sm:$0xf]
      %v5755 = vld [vmem:[%s5742 + $0x30] sm:$0xf]
      %v5756 = vld [vmem:[%s5742 + $0x34] sm:$0xf]
      %v5757 = vld [vmem:[%s5742 + $0x38] sm:$0xf]
      %v5758 = vld [vmem:[%s5742 + $0x3c] sm:$0xf]
      %v5759 = vld [vmem:[%s5742 + $0x40] sm:$0xf]
      %v5760 = vld [vmem:[%s5742 + $0x44] sm:$0xf]
      %v5761 = vld [vmem:[%s5742 + $0x48] sm:$0xf]
      %v5762 = vld [vmem:[%s5742 + $0x4c] sm:$0xf]
      %v5763 = vld [vmem:[%s5742 + $0x50] sm:$0xf]
      %v5764 = vld [vmem:[%s5742 + $0x54] sm:$0xf]
      %v5765 = vld [vmem:[%s5742 + $0x58] sm:$0xf]
      %v5766 = vld [vmem:[%s5742 + $0x5c] sm:$0xf]
      %v5767 = vld [vmem:[%s5742 + $0x60] sm:$0xf]
      %v5768 = vld [vmem:[%s5742 + $0x64] sm:$0xf]
      %v5769 = vld [vmem:[%s5742 + $0x68] sm:$0xf]
      %v5770 = vld [vmem:[%s5742 + $0x6c] sm:$0xf]
      %v5799 = vunpack.c.l.b16 %v5743
      %v5800 = vunpack.c.l.b16 %v5744
      %v5801 = vunpack.c.l.b16 %v5745
      %v5802 = vunpack.c.l.b16 %v5746
      %v5803 = vunpack.c.l.b16 %v5747
      %v5804 = vunpack.c.l.b16 %v5748
      %v5805 = vunpack.c.l.b16 %v5749
      %v5806 = vunpack.c.l.b16 %v5750
      %v5807 = vunpack.c.l.b16 %v5751
      %v5808 = vunpack.c.l.b16 %v5752
      %v5809 = vunpack.c.l.b16 %v5753
      %v5810 = vunpack.c.l.b16 %v5754
      %v5811 = vunpack.c.l.b16 %v5755
      %v5812 = vunpack.c.l.b16 %v5756
      %v5813 = vunpack.c.l.b16 %v5757
      %v5814 = vunpack.c.l.b16 %v5758
      %v5815 = vunpack.c.l.b16 %v5759
      %v5816 = vunpack.c.l.b16 %v5760
      %v5817 = vunpack.c.l.b16 %v5761
      %v5818 = vunpack.c.l.b16 %v5762
      %v5819 = vunpack.c.l.b16 %v5763
      %v5820 = vunpack.c.l.b16 %v5764
      %v5821 = vunpack.c.l.b16 %v5765
      %v5822 = vunpack.c.l.b16 %v5766
      %v5823 = vunpack.c.l.b16 %v5767
      %v5824 = vunpack.c.l.b16 %v5768
      %v5825 = vunpack.c.l.b16 %v5769
      %v5826 = vunpack.c.l.b16 %v5770
      %v5827 = vpack.c.b16 %v5800, %v5799
      %v5828 = vpack.c.b16 %v5802, %v5801
      %v5829 = vpack.c.b16 %v5804, %v5803
      %v5830 = vpack.c.b16 %v5806, %v5805
      %v5831 = vpack.c.b16 %v5808, %v5807
      %v5832 = vpack.c.b16 %v5810, %v5809
      %v5833 = vpack.c.b16 %v5812, %v5811
      %v5834 = vpack.c.b16 %v5814, %v5813
      %v5835 = vpack.c.b16 %v5816, %v5815
      %v5836 = vpack.c.b16 %v5818, %v5817
      %v5837 = vpack.c.b16 %v5820, %v5819
      %v5838 = vpack.c.b16 %v5822, %v5821
      %v5839 = vpack.c.b16 %v5824, %v5823
      %v5840 = vpack.c.b16 %v5826, %v5825
      %v5856 = vsel %vm1528, %v5741, 0
      %5858 = vmatprep.subr.bf16.mxu0 0
      %5859 = vmatpush1.bf16.msra.mxu0 %v5827
      %5860 = vmatprep.subr.bf16.mxu0 0
      %5861 = vmatpush1.bf16.msra.mxu0 %v5828
      %5862 = vmatprep.subr.bf16.mxu0 0
      %5863 = vmatpush1.bf16.msra.mxu0 %v5829
      %5864 = vmatprep.subr.bf16.mxu0 0
      %5865 = vmatpush1.bf16.msra.mxu0 %v5830
      %5866 = vmatprep.subr.bf16.mxu0 0
      %5867 = vmatpush1.bf16.msra.mxu0 %v5831
      %5868 = vmatprep.subr.bf16.mxu0 0
      %5869 = vmatpush1.bf16.msra.mxu0 %v5832
      %5870 = vmatprep.subr.bf16.mxu0 0
      %5871 = vmatpush1.bf16.msra.mxu0 %v5833
      %5872 = vmatprep.subr.bf16.mxu0 0
      %5873 = vmatpush1.bf16.msra.mxu0 %v5834
      %5874 = vmatprep.subr.bf16.mxu0 0
      %5875 = vmatpush1.bf16.msra.mxu0 %v5835
      %5876 = vmatprep.subr.bf16.mxu0 0
      %5877 = vmatpush1.bf16.msra.mxu0 %v5836
      %5878 = vmatprep.subr.bf16.mxu0 0
      %5879 = vmatpush1.bf16.msra.mxu0 %v5837
      %5880 = vmatprep.subr.bf16.mxu0 0
      %5881 = vmatpush1.bf16.msra.mxu0 %v5838
      %5882 = vmatprep.subr.bf16.mxu0 0
      %5883 = vmatpush1.bf16.msra.mxu0 %v5839
      %5884 = vmatprep.subr.bf16.mxu0 0
      %5885 = vmatpush1.bf16.msra.mxu0 %v5840
      %5886 = vmatprep.subr.bf16.mxu0 0
      %5887 = vmatpush1.bf16.msra.mxu0 0
      %5888 = vmatprep.subr.bf16.mxu0 0
      %5889 = vmatpush1.bf16.msra.mxu0 0
      %5890 = vmatprep.mubr.bf16.mxu0 %v5856
      %5891 = vmatmul.mubr.bf16.gmra.mrb[0].mxu0 %v5740
      %v5892 = vpop.f32.mrb[0].mxu0
      %v5893 = vadd.f32 0.0, %v5892
      %v5894 = vpop.f32.mrb[0].mxu0
      %v5895 = vpop.f32.mrb[0].mxu0
      %v5896 = vadd.f32 0.0, %v5895
      %v5897 = vpop.f32.mrb[0].mxu0
      %5898 = vmatprep.mubr.bf16.mxu0 %v5557
      %5899 = vmatmul.mubr.bf16.gmra.mrb[0].mxu0 %v5090
      %v5900 = vpop.f32.mrb[0].mxu0
      %v5901 = vadd.f32 0.0, %v5900
      %v5902 = vpop.f32.mrb[0].mxu0
      %v5903 = vpop.f32.mrb[0].mxu0
      %v5904 = vadd.f32 0.0, %v5903
      %v5905 = vpop.f32.mrb[0].mxu0
      %5906 = vmatprep.mubr.bf16.mxu0 %v5560
      %5907 = vmatmul.mubr.bf16.gmra.mrb[0].mxu0 %v5092
      %v5908 = vpop.f32.mrb[0].mxu0
      %v5909 = vadd.f32 0.0, %v5908
      %v5910 = vpop.f32.mrb[0].mxu0
      %v5911 = vpop.f32.mrb[0].mxu0
      %v5912 = vadd.f32 0.0, %v5911
      %v5913 = vpop.f32.mrb[0].mxu0
      %5914 = vmatprep.mubr.bf16.mxu0 %v5563
      %5915 = vmatmul.mubr.bf16.gmra.mrb[0].mxu0 %v5094
      %v5916 = vpop.f32.mrb[0].mxu0
      %v5917 = vadd.f32 0.0, %v5916
      %v5918 = vpop.f32.mrb[0].mxu0
      %v5919 = vpop.f32.mrb[0].mxu0
      %v5920 = vadd.f32 0.0, %v5919
      %v5921 = vpop.f32.mrb[0].mxu0
      %5922 = vmatprep.mubr.bf16.mxu0 %v5566
      %5923 = vmatmul.mubr.bf16.gmra.mrb[0].mxu0 %v5096
      %v5924 = vpop.f32.mrb[0].mxu0
      %v5925 = vadd.f32 0.0, %v5924
      %v5926 = vpop.f32.mrb[0].mxu0
      %v5927 = vpop.f32.mrb[0].mxu0
      %v5928 = vadd.f32 0.0, %v5927
      %v5929 = vpop.f32.mrb[0].mxu0
      %5930 = vmatprep.mubr.bf16.mxu0 %v5569
      %5931 = vmatmul.mubr.bf16.gmra.mrb[0].mxu0 %v5098
      %v5932 = vpop.f32.mrb[0].mxu0
      %v5933 = vadd.f32 0.0, %v5932
      %v5934 = vpop.f32.mrb[0].mxu0
      %v5935 = vpop.f32.mrb[0].mxu0
      %v5936 = vadd.f32 0.0, %v5935
      %v5937 = vpop.f32.mrb[0].mxu0
      %5938 = vmatprep.mubr.bf16.mxu0 %v5572
      %5939 = vmatmul.mubr.bf16.gmra.mrb[0].mxu0 %v5100
      %v5940 = vpop.f32.mrb[0].mxu0
      %v5941 = vadd.f32 0.0, %v5940
      %v5942 = vpop.f32.mrb[0].mxu0
      %v5943 = vpop.f32.mrb[0].mxu0
      %v5944 = vadd.f32 0.0, %v5943
      %v5945 = vpop.f32.mrb[0].mxu0
      %5946 = vmatprep.mubr.bf16.mxu0 %v5575
      %5947 = vmatmul.mubr.bf16.gmra.mrb[0].mxu0 %v5102
      %v5948 = vpop.f32.mrb[0].mxu0
      %v5949 = vadd.f32 0.0, %v5948
      %v5950 = vpop.f32.mrb[0].mxu0
      %v5951 = vpop.f32.mrb[0].mxu0
      %v5952 = vadd.f32 0.0, %v5951
      %v5953 = vpop.f32.mrb[0].mxu0
      %5954 = vmatprep.mubr.bf16.mxu0 %v5578
      %5955 = vmatmul.mubr.bf16.gmra.mrb[0].mxu0 %v5104
      %v5956 = vpop.f32.mrb[0].mxu0
      %v5957 = vadd.f32 0.0, %v5956
      %v5958 = vpop.f32.mrb[0].mxu0
      %v5959 = vpop.f32.mrb[0].mxu0
      %v5960 = vadd.f32 0.0, %v5959
      %v5961 = vpop.f32.mrb[0].mxu0
      %5962 = vmatprep.mubr.bf16.mxu0 %v5581
      %5963 = vmatmul.mubr.bf16.gmra.mrb[0].mxu0 %v5106
      %v5964 = vpop.f32.mrb[0].mxu0
      %v5965 = vadd.f32 0.0, %v5964
      %v5966 = vpop.f32.mrb[0].mxu0
      %v5967 = vpop.f32.mrb[0].mxu0
      %v5968 = vadd.f32 0.0, %v5967
      %v5969 = vpop.f32.mrb[0].mxu0
      %5970 = vmatprep.mubr.bf16.mxu0 %v5584
      %5971 = vmatmul.mubr.bf16.gmra.mrb[0].mxu0 %v5108
      %v5972 = vpop.f32.mrb[0].mxu0
      %v5973 = vadd.f32 0.0, %v5972
      %v5974 = vpop.f32.mrb[0].mxu0
      %v5975 = vpop.f32.mrb[0].mxu0
      %v5976 = vadd.f32 0.0, %v5975
      %v5977 = vpop.f32.mrb[0].mxu0
      %5978 = vmatprep.mubr.bf16.mxu0 %v5587
      %5979 = vmatmul.mubr.bf16.gmra.mrb[0].mxu0 %v5110
      %v5980 = vpop.f32.mrb[0].mxu0
      %v5981 = vadd.f32 0.0, %v5980
      %v5982 = vpop.f32.mrb[0].mxu0
      %v5983 = vpop.f32.mrb[0].mxu0
      %v5984 = vadd.f32 0.0, %v5983
      %v5985 = vpop.f32.mrb[0].mxu0
      %5986 = vmatprep.mubr.bf16.mxu0 %v5590
      %5987 = vmatmul.mubr.bf16.gmra.mrb[0].mxu0 %v5112
      %v5988 = vpop.f32.mrb[0].mxu0
      %v5989 = vadd.f32 0.0, %v5988
      %v5990 = vpop.f32.mrb[0].mxu0
      %v5991 = vpop.f32.mrb[0].mxu0
      %v5992 = vadd.f32 0.0, %v5991
      %v5993 = vpop.f32.mrb[0].mxu0
      %5994 = vmatprep.mubr.bf16.mxu0 %v5593
      %5995 = vmatmul.mubr.bf16.gmra.mrb[0].mxu0 %v5114
      %v5996 = vpop.f32.mrb[0].mxu0
      %v5997 = vadd.f32 0.0, %v5996
      %v5998 = vpop.f32.mrb[0].mxu0
      %v5999 = vpop.f32.mrb[0].mxu0
      %v6000 = vadd.f32 0.0, %v5999
      %v6001 = vpop.f32.mrb[0].mxu0
      %6002 = vdwg.mxu0
      %v6003 = vadd.f32 %v5630, %v5893
      %v6004 = vadd.f32 %v5633, %v5896
      %v6005 = vadd.f32 %v5638, %v5901
      %v6006 = vadd.f32 %v5641, %v5904
      %v6007 = vadd.f32 %v5646, %v5909
      %v6008 = vadd.f32 %v5649, %v5912
      %v6009 = vadd.f32 %v5654, %v5917
      %v6010 = vadd.f32 %v5657, %v5920
      %v6011 = vadd.f32 %v5662, %v5925
      %v6012 = vadd.f32 %v5665, %v5928
      %v6013 = vadd.f32 %v5670, %v5933
      %v6014 = vadd.f32 %v5673, %v5936
      %v6015 = vadd.f32 %v5678, %v5941
      %v6016 = vadd.f32 %v5681, %v5944
      %v6017 = vadd.f32 %v5686, %v5949
      %v6018 = vadd.f32 %v5689, %v5952
      %v6019 = vadd.f32 %v5694, %v5957
      %v6020 = vadd.f32 %v5697, %v5960
      %v6021 = vadd.f32 %v5702, %v5965
      %v6022 = vadd.f32 %v5705, %v5968
      %v6023 = vadd.f32 %v5710, %v5973
      %v6024 = vadd.f32 %v5713, %v5976
      %v6025 = vadd.f32 %v5718, %v5981
      %v6026 = vadd.f32 %v5721, %v5984
      %v6027 = vadd.f32 %v5726, %v5989
      %v6028 = vadd.f32 %v5729, %v5992
      %v6029 = vadd.f32 %v5734, %v5997
      %v6030 = vadd.f32 %v5737, %v6000
      %s6031 = scalar_lea.vmem %s14, 336
      %v6032 = vld [vmem:[%s6031] sm:$0xf]
      %v6033 = vld [vmem:[%s6031 + $0x4] sm:$0xf]
      %v6034 = vld [vmem:[%s6031 + $0x8] sm:$0xf]
      %v6035 = vld [vmem:[%s6031 + $0xc] sm:$0xf]
      %v6036 = vld [vmem:[%s6031 + $0x10] sm:$0xf]
      %v6037 = vld [vmem:[%s6031 + $0x14] sm:$0xf]
      %v6038 = vld [vmem:[%s6031 + $0x18] sm:$0xf]
      %v6039 = vld [vmem:[%s6031 + $0x1c] sm:$0xf]
      %v6040 = vld [vmem:[%s6031 + $0x20] sm:$0xf]
      %v6041 = vld [vmem:[%s6031 + $0x24] sm:$0xf]
      %v6042 = vld [vmem:[%s6031 + $0x28] sm:$0xf]
      %v6043 = vld [vmem:[%s6031 + $0x2c] sm:$0xf]
      %v6044 = vld [vmem:[%s6031 + $0x30] sm:$0xf]
      %v6045 = vld [vmem:[%s6031 + $0x34] sm:$0xf]
      %v6046 = vld [vmem:[%s6031 + $0x38] sm:$0xf]
      %v6047 = vld [vmem:[%s6031 + $0x3c] sm:$0xf]
      %v6048 = vld [vmem:[%s6031 + $0x40] sm:$0xf]
      %v6049 = vld [vmem:[%s6031 + $0x44] sm:$0xf]
      %v6050 = vld [vmem:[%s6031 + $0x48] sm:$0xf]
      %v6051 = vld [vmem:[%s6031 + $0x4c] sm:$0xf]
      %v6052 = vld [vmem:[%s6031 + $0x50] sm:$0xf]
      %v6053 = vld [vmem:[%s6031 + $0x54] sm:$0xf]
      %v6054 = vld [vmem:[%s6031 + $0x58] sm:$0xf]
      %v6055 = vld [vmem:[%s6031 + $0x5c] sm:$0xf]
      %v6056 = vld [vmem:[%s6031 + $0x60] sm:$0xf]
      %v6057 = vld [vmem:[%s6031 + $0x64] sm:$0xf]
      %v6058 = vld [vmem:[%s6031 + $0x68] sm:$0xf]
      %v6059 = vld [vmem:[%s6031 + $0x6c] sm:$0xf]
      %v6088 = vunpack.c.l.b16 %v6032
      %v6089 = vunpack.c.l.b16 %v6033
      %v6090 = vunpack.c.l.b16 %v6034
      %v6091 = vunpack.c.l.b16 %v6035
      %v6092 = vunpack.c.l.b16 %v6036
      %v6093 = vunpack.c.l.b16 %v6037
      %v6094 = vunpack.c.l.b16 %v6038
      %v6095 = vunpack.c.l.b16 %v6039
      %v6096 = vunpack.c.l.b16 %v6040
      %v6097 = vunpack.c.l.b16 %v6041
      %v6098 = vunpack.c.l.b16 %v6042
      %v6099 = vunpack.c.l.b16 %v6043
      %v6100 = vunpack.c.l.b16 %v6044
      %v6101 = vunpack.c.l.b16 %v6045
      %v6102 = vunpack.c.l.b16 %v6046
      %v6103 = vunpack.c.l.b16 %v6047
      %v6104 = vunpack.c.l.b16 %v6048
      %v6105 = vunpack.c.l.b16 %v6049
      %v6106 = vunpack.c.l.b16 %v6050
      %v6107 = vunpack.c.l.b16 %v6051
      %v6108 = vunpack.c.l.b16 %v6052
      %v6109 = vunpack.c.l.b16 %v6053
      %v6110 = vunpack.c.l.b16 %v6054
      %v6111 = vunpack.c.l.b16 %v6055
      %v6112 = vunpack.c.l.b16 %v6056
      %v6113 = vunpack.c.l.b16 %v6057
      %v6114 = vunpack.c.l.b16 %v6058
      %v6115 = vunpack.c.l.b16 %v6059
      %v6116 = vpack.c.b16 %v6089, %v6088
      %v6117 = vpack.c.b16 %v6091, %v6090
      %v6118 = vpack.c.b16 %v6093, %v6092
      %v6119 = vpack.c.b16 %v6095, %v6094
      %v6120 = vpack.c.b16 %v6097, %v6096
      %v6121 = vpack.c.b16 %v6099, %v6098
      %v6122 = vpack.c.b16 %v6101, %v6100
      %v6123 = vpack.c.b16 %v6103, %v6102
      %v6124 = vpack.c.b16 %v6105, %v6104
      %v6125 = vpack.c.b16 %v6107, %v6106
      %v6126 = vpack.c.b16 %v6109, %v6108
      %v6127 = vpack.c.b16 %v6111, %v6110
      %v6128 = vpack.c.b16 %v6113, %v6112
      %v6129 = vpack.c.b16 %v6115, %v6114
      %6144 = vmatprep.subr.bf16.mxu0 0
      %6145 = vmatpush1.bf16.msra.mxu0 %v6116
      %6146 = vmatprep.subr.bf16.mxu0 0
      %6147 = vmatpush1.bf16.msra.mxu0 %v6117
      %6148 = vmatprep.subr.bf16.mxu0 0
      %6149 = vmatpush1.bf16.msra.mxu0 %v6118
      %6150 = vmatprep.subr.bf16.mxu0 0
      %6151 = vmatpush1.bf16.msra.mxu0 %v6119
      %6152 = vmatprep.subr.bf16.mxu0 0
      %6153 = vmatpush1.bf16.msra.mxu0 %v6120
      %6154 = vmatprep.subr.bf16.mxu0 0
      %6155 = vmatpush1.bf16.msra.mxu0 %v6121
      %6156 = vmatprep.subr.bf16.mxu0 0
      %6157 = vmatpush1.bf16.msra.mxu0 %v6122
      %6158 = vmatprep.subr.bf16.mxu0 0
      %6159 = vmatpush1.bf16.msra.mxu0 %v6123
      %6160 = vmatprep.subr.bf16.mxu0 0
      %6161 = vmatpush1.bf16.msra.mxu0 %v6124
      %6162 = vmatprep.subr.bf16.mxu0 0
      %6163 = vmatpush1.bf16.msra.mxu0 %v6125
      %6164 = vmatprep.subr.bf16.mxu0 0
      %6165 = vmatpush1.bf16.msra.mxu0 %v6126
      %6166 = vmatprep.subr.bf16.mxu0 0
      %6167 = vmatpush1.bf16.msra.mxu0 %v6127
      %6168 = vmatprep.subr.bf16.mxu0 0
      %6169 = vmatpush1.bf16.msra.mxu0 %v6128
      %6170 = vmatprep.subr.bf16.mxu0 0
      %6171 = vmatpush1.bf16.msra.mxu0 %v6129
      %6172 = vmatprep.subr.bf16.mxu0 0
      %6173 = vmatpush1.bf16.msra.mxu0 0
      %6174 = vmatprep.subr.bf16.mxu0 0
      %6175 = vmatpush1.bf16.msra.mxu0 0
      %6176 = vmatprep.mubr.bf16.mxu0 %v4312
      %6177 = vmatmul.mubr.bf16.gmra.mrb[0].mxu0 %v3817
      %v6178 = vpop.f32.mrb[0].mxu0
      %v6179 = vadd.f32 0.0, %v6178
      %v6180 = vpop.f32.mrb[0].mxu0
      %v6181 = vpop.f32.mrb[0].mxu0
      %v6182 = vadd.f32 0.0, %v6181
      %v6183 = vpop.f32.mrb[0].mxu0
      %6184 = vmatprep.mubr.bf16.mxu0 %v5286
      %6185 = vmatmul.mubr.bf16.gmra.mrb[0].mxu0 %v5144
      %v6186 = vpop.f32.mrb[0].mxu0
      %v6187 = vadd.f32 0.0, %v6186
      %v6188 = vpop.f32.mrb[0].mxu0
      %v6189 = vpop.f32.mrb[0].mxu0
      %v6190 = vadd.f32 0.0, %v6189
      %v6191 = vpop.f32.mrb[0].mxu0
      %6192 = vmatprep.mubr.bf16.mxu0 %v5289
      %6193 = vmatmul.mubr.bf16.gmra.mrb[0].mxu0 %v5146
      %v6194 = vpop.f32.mrb[0].mxu0
      %v6195 = vadd.f32 0.0, %v6194
      %v6196 = vpop.f32.mrb[0].mxu0
      %v6197 = vpop.f32.mrb[0].mxu0
      %v6198 = vadd.f32 0.0, %v6197
      %v6199 = vpop.f32.mrb[0].mxu0
      %6200 = vmatprep.mubr.bf16.mxu0 %v5292
      %6201 = vmatmul.mubr.bf16.gmra.mrb[0].mxu0 %v5148
      %v6202 = vpop.f32.mrb[0].mxu0
      %v6203 = vadd.f32 0.0, %v6202
      %v6204 = vpop.f32.mrb[0].mxu0
      %v6205 = vpop.f32.mrb[0].mxu0
      %v6206 = vadd.f32 0.0, %v6205
      %v6207 = vpop.f32.mrb[0].mxu0
      %6208 = vmatprep.mubr.bf16.mxu0 %v5295
      %6209 = vmatmul.mubr.bf16.gmra.mrb[0].mxu0 %v5150
      %v6210 = vpop.f32.mrb[0].mxu0
      %v6211 = vadd.f32 0.0, %v6210
      %v6212 = vpop.f32.mrb[0].mxu0
      %v6213 = vpop.f32.mrb[0].mxu0
      %v6214 = vadd.f32 0.0, %v6213
      %v6215 = vpop.f32.mrb[0].mxu0
      %6216 = vmatprep.mubr.bf16.mxu0 %v5298
      %6217 = vmatmul.mubr.bf16.gmra.mrb[0].mxu0 %v5152
      %v6218 = vpop.f32.mrb[0].mxu0
      %v6219 = vadd.f32 0.0, %v6218
      %v6220 = vpop.f32.mrb[0].mxu0
      %v6221 = vpop.f32.mrb[0].mxu0
      %v6222 = vadd.f32 0.0, %v6221
      %v6223 = vpop.f32.mrb[0].mxu0
      %6224 = vmatprep.mubr.bf16.mxu0 %v5301
      %6225 = vmatmul.mubr.bf16.gmra.mrb[0].mxu0 %v5154
      %v6226 = vpop.f32.mrb[0].mxu0
      %v6227 = vadd.f32 0.0, %v6226
      %v6228 = vpop.f32.mrb[0].mxu0
      %v6229 = vpop.f32.mrb[0].mxu0
      %v6230 = vadd.f32 0.0, %v6229
      %v6231 = vpop.f32.mrb[0].mxu0
      %6232 = vmatprep.mubr.bf16.mxu0 %v5304
      %6233 = vmatmul.mubr.bf16.gmra.mrb[0].mxu0 %v5156
      %v6234 = vpop.f32.mrb[0].mxu0
      %v6235 = vadd.f32 0.0, %v6234
      %v6236 = vpop.f32.mrb[0].mxu0
      %v6237 = vpop.f32.mrb[0].mxu0
      %v6238 = vadd.f32 0.0, %v6237
      %v6239 = vpop.f32.mrb[0].mxu0
      %6240 = vmatprep.mubr.bf16.mxu0 %v5307
      %6241 = vmatmul.mubr.bf16.gmra.mrb[0].mxu0 %v5158
      %v6242 = vpop.f32.mrb[0].mxu0
      %v6243 = vadd.f32 0.0, %v6242
      %v6244 = vpop.f32.mrb[0].mxu0
      %v6245 = vpop.f32.mrb[0].mxu0
      %v6246 = vadd.f32 0.0, %v6245
      %v6247 = vpop.f32.mrb[0].mxu0
      %6248 = vmatprep.mubr.bf16.mxu0 %v5310
      %6249 = vmatmul.mubr.bf16.gmra.mrb[0].mxu0 %v5160
      %v6250 = vpop.f32.mrb[0].mxu0
      %v6251 = vadd.f32 0.0, %v6250
      %v6252 = vpop.f32.mrb[0].mxu0
      %v6253 = vpop.f32.mrb[0].mxu0
      %v6254 = vadd.f32 0.0, %v6253
      %v6255 = vpop.f32.mrb[0].mxu0
      %6256 = vmatprep.mubr.bf16.mxu0 %v5313
      %6257 = vmatmul.mubr.bf16.gmra.mrb[0].mxu0 %v5162
      %v6258 = vpop.f32.mrb[0].mxu0
      %v6259 = vadd.f32 0.0, %v6258
      %v6260 = vpop.f32.mrb[0].mxu0
      %v6261 = vpop.f32.mrb[0].mxu0
      %v6262 = vadd.f32 0.0, %v6261
      %v6263 = vpop.f32.mrb[0].mxu0
      %6264 = vmatprep.mubr.bf16.mxu0 %v5316
      %6265 = vmatmul.mubr.bf16.gmra.mrb[0].mxu0 %v5164
      %v6266 = vpop.f32.mrb[0].mxu0
      %v6267 = vadd.f32 0.0, %v6266
      %v6268 = vpop.f32.mrb[0].mxu0
      %v6269 = vpop.f32.mrb[0].mxu0
      %v6270 = vadd.f32 0.0, %v6269
      %v6271 = vpop.f32.mrb[0].mxu0
      %6272 = vmatprep.mubr.bf16.mxu0 %v5319
      %6273 = vmatmul.mubr.bf16.gmra.mrb[0].mxu0 %v5166
      %v6274 = vpop.f32.mrb[0].mxu0
      %v6275 = vadd.f32 0.0, %v6274
      %v6276 = vpop.f32.mrb[0].mxu0
      %v6277 = vpop.f32.mrb[0].mxu0
      %v6278 = vadd.f32 0.0, %v6277
      %v6279 = vpop.f32.mrb[0].mxu0
      %6280 = vmatprep.mubr.bf16.mxu0 %v5322
      %6281 = vmatmul.mubr.bf16.gmra.mrb[0].mxu0 %v5168
      %v6282 = vpop.f32.mrb[0].mxu0
      %v6283 = vadd.f32 0.0, %v6282
      %v6284 = vpop.f32.mrb[0].mxu0
      %v6285 = vpop.f32.mrb[0].mxu0
      %v6286 = vadd.f32 0.0, %v6285
      %v6287 = vpop.f32.mrb[0].mxu0
      %6288 = vdwg.mxu0
      %v6289 = vadd.f32 %v6003, %v6179
      %v6290 = vadd.f32 %v6004, %v6182
      %v6291 = vadd.f32 %v6005, %v6187
      %v6292 = vadd.f32 %v6006, %v6190
      %v6293 = vadd.f32 %v6007, %v6195
      %v6294 = vadd.f32 %v6008, %v6198
      %v6295 = vadd.f32 %v6009, %v6203
      %v6296 = vadd.f32 %v6010, %v6206
      %v6297 = vadd.f32 %v6011, %v6211
      %v6298 = vadd.f32 %v6012, %v6214
      %v6299 = vadd.f32 %v6013, %v6219
      %v6300 = vadd.f32 %v6014, %v6222
      %v6301 = vadd.f32 %v6015, %v6227
      %v6302 = vadd.f32 %v6016, %v6230
      %v6303 = vadd.f32 %v6017, %v6235
      %v6304 = vadd.f32 %v6018, %v6238
      %v6305 = vadd.f32 %v6019, %v6243
      %v6306 = vadd.f32 %v6020, %v6246
      %v6307 = vadd.f32 %v6021, %v6251
      %v6308 = vadd.f32 %v6022, %v6254
      %v6309 = vadd.f32 %v6023, %v6259
      %v6310 = vadd.f32 %v6024, %v6262
      %v6311 = vadd.f32 %v6025, %v6267
      %v6312 = vadd.f32 %v6026, %v6270
      %v6313 = vadd.f32 %v6027, %v6275
      %v6314 = vadd.f32 %v6028, %v6278
      %v6315 = vadd.f32 %v6029, %v6283
      %v6316 = vadd.f32 %v6030, %v6286
      %v6317 = vld [vmem:[%s15] sm:$0x1]
      %v6319 = vlaneseq
      %v6320 = vshrl.u32 %v6319, 7
      %v6321 = vsub.s32 0, %v6320
      %v6322 = vrot.slane %v6317, %v6321
      %v6324 = vadd.f32 %v6289, %v6322
      %v6325 = vadd.f32 %v6290, %v6322
      %v6326 = vadd.f32 %v6291, %v6322
      %v6327 = vadd.f32 %v6292, %v6322
      %v6328 = vadd.f32 %v6293, %v6322
      %v6329 = vadd.f32 %v6294, %v6322
      %v6330 = vadd.f32 %v6295, %v6322
      %v6331 = vadd.f32 %v6296, %v6322
      %v6332 = vadd.f32 %v6297, %v6322
      %v6333 = vadd.f32 %v6298, %v6322
      %v6334 = vadd.f32 %v6299, %v6322
      %v6335 = vadd.f32 %v6300, %v6322
      %v6336 = vadd.f32 %v6301, %v6322
      %v6337 = vadd.f32 %v6302, %v6322
      %v6338 = vadd.f32 %v6303, %v6322
      %v6339 = vadd.f32 %v6304, %v6322
      %v6340 = vadd.f32 %v6305, %v6322
      %v6341 = vadd.f32 %v6306, %v6322
      %v6342 = vadd.f32 %v6307, %v6322
      %v6343 = vadd.f32 %v6308, %v6322
      %v6344 = vadd.f32 %v6309, %v6322
      %v6345 = vadd.f32 %v6310, %v6322
      %v6346 = vadd.f32 %v6311, %v6322
      %v6347 = vadd.f32 %v6312, %v6322
      %v6348 = vadd.f32 %v6313, %v6322
      %v6349 = vadd.f32 %v6314, %v6322
      %v6350 = vadd.f32 %v6315, %v6322
      %v6351 = vadd.f32 %v6316, %v6322
      %6352 = vst [vmem:[%s572] sm:$0xff] %v6324
      %6353 = vst [vmem:[%s572 + $0x8] sm:$0xff] %v6325
      %6354 = vst [vmem:[%s572 + $0x10] sm:$0xff] %v6326
      %6355 = vst [vmem:[%s572 + $0x18] sm:$0xff] %v6327
      %6356 = vst [vmem:[%s572 + $0x20] sm:$0xff] %v6328
      %6357 = vst [vmem:[%s572 + $0x28] sm:$0xff] %v6329
      %6358 = vst [vmem:[%s572 + $0x30] sm:$0xff] %v6330
      %6359 = vst [vmem:[%s572 + $0x38] sm:$0xff] %v6331
      %6360 = vst [vmem:[%s572 + $0x40] sm:$0xff] %v6332
      %6361 = vst [vmem:[%s572 + $0x48] sm:$0xff] %v6333
      %6362 = vst [vmem:[%s572 + $0x50] sm:$0xff] %v6334
      %6363 = vst [vmem:[%s572 + $0x58] sm:$0xff] %v6335
      %6364 = vst [vmem:[%s572 + $0x60] sm:$0xff] %v6336
      %6365 = vst [vmem:[%s572 + $0x68] sm:$0xff] %v6337
      %6366 = vst [vmem:[%s572 + $0x70] sm:$0xff] %v6338
      %6367 = vst [vmem:[%s572 + $0x78] sm:$0xff] %v6339
      %6368 = vst [vmem:[%s572 + $0x80] sm:$0xff] %v6340
      %6369 = vst [vmem:[%s572 + $0x88] sm:$0xff] %v6341
      %6370 = vst [vmem:[%s572 + $0x90] sm:$0xff] %v6342
      %6371 = vst [vmem:[%s572 + $0x98] sm:$0xff] %v6343
      %6372 = vst [vmem:[%s572 + $0xa0] sm:$0xff] %v6344
      %6373 = vst [vmem:[%s572 + $0xa8] sm:$0xff] %v6345
      %6374 = vst [vmem:[%s572 + $0xb0] sm:$0xff] %v6346
      %6375 = vst [vmem:[%s572 + $0xb8] sm:$0xff] %v6347
      %6376 = vst [vmem:[%s572 + $0xc0] sm:$0xff] %v6348
      %6377 = vst [vmem:[%s572 + $0xc8] sm:$0xff] %v6349
      %6378 = vst [vmem:[%s572 + $0xd0] sm:$0xff] %v6350
      %6379 = vst [vmem:[%s572 + $0xd8] sm:$0xff] %v6351
      %p6380 = scmp.lt.s32.totalorder %s29, 1
      %s6381 = scalar_select %p6380, %s29, 1
      %s6382 = smul.addr %s6381, 28
      %s6383 = smul.addr %s6382, 8
      %s6384 = scalar_lea.vmem %s16, %s6383
      %p6385 = scmp.lt.s32.totalorder %s29, 1
      %s6386 = scalar_select %p6385, %s29, 1
      %s6387 = smul.addr %s6386, 8
      %s6388 = scalar_lea.vmem %s17, %s6387
      // Predicated region
      $region85: #{convvae_forward.1} parent=83 // pred_check
        %p6389 = pneg %p393
      $region86: #{convvae_forward.1} parent=83 // pred_check_branch
        %6391 = sbr.rel (%p6389) target = $region88
      $region87: #{convvae_forward.1} parent=83 // pred_region
        _
      $region88: #{convvae_forward.1} parent=83 // pred_fallthru
        _
      // Predicated region
      $region89: #{convvae_forward.1} parent=83 // pred_check
        %p6392 = pneg %p419
      $region90: #{convvae_forward.1} parent=83 // pred_check_branch
        %6394 = sbr.rel (%p6392) target = $region92
      $region91: #{convvae_forward.1} parent=83 // pred_region
        _
      $region92: #{convvae_forward.1} parent=83 // pred_fallthru
        _
    $region84: #{convvae_forward.1} parent=5 // pred_fallthru
      _
    %p6395 = scmp.le.s32.totalorder 2, %s24
    // Predicated region
    $region93: #{convvae_forward.1} parent=5 // pred_check
      %p6396 = pneg %p6395
    $region94: #{convvae_forward.1} parent=5 // pred_check_branch
      %6398 = sbr.rel (%p6396) target = $region96
    $region95: #{convvae_forward.1} parent=5 // pred_region
      %s6399 = ssub.s32 %s24, 2
      // Predicated region
      $region97: #{convvae_forward.1} parent=95 // pred_check
        %p6400 = pneg %p399
      $region98: #{convvae_forward.1} parent=95 // pred_check_branch
        %6402 = sbr.rel (%p6400) target = $region100
      $region99: #{convvae_forward.1} parent=95 // pred_region
        %p6403 = scmp.lt.s32.totalorder %s30, 1
        %s6404 = scalar_select %p6403, %s30, 1
        %s6405 = smul.addr %s6404, 28
        %s6406 = smul.addr %s6405, 8
        %s6407 = scalar_lea.vmem %s16, %s6406
      $region100: #{convvae_forward.1} parent=95 // pred_fallthru
        _
      // Predicated region
      $region101: #{convvae_forward.1} parent=95 // pred_check
        %p6408 = pneg %p425
      $region102: #{convvae_forward.1} parent=95 // pred_check_branch
        %6410 = sbr.rel (%p6408) target = $region104
      $region103: #{convvae_forward.1} parent=95 // pred_region
        %p6411 = scmp.lt.s32.totalorder %s30, 1
        %s6412 = scalar_select %p6411, %s30, 1
        %s6413 = smul.addr %s6412, 8
        %s6414 = scalar_lea.vmem %s17, %s6413
      $region104: #{convvae_forward.1} parent=95 // pred_fallthru
        _
    $region96: #{convvae_forward.1} parent=5 // pred_fallthru
      _
  $region6: #{convvae_forward.1} parent=0 // loop_footer
    %s28 = sadd.s32 1, %s24
  $region7: #{convvae_forward.1} parent=0 // loop_footer_branch
    %23 = sbr.rel target = $region3
  $region8: #{convvae_forward.1} parent=0 // loop_exit
    _

</llo_original>
